<compile_context>
chip_gen: v7x
topology: tpu7x:2x2x1
jax: 0.10.0
libtpu: 0.0.40
codegen_flags: <defaults>
</compile_context>

<pallas_src>
import functools

import jax
import jax.numpy as jnp
from jax.experimental import pallas as pl
from jax.experimental.pallas import tpu as pltpu


_VMEM = pl.BlockSpec(memory_space=pltpu.MemorySpace.VMEM)

# lane-padding constants (multiples of 128 -> lane-dense vreg stores)
_COUT_PAD = 128      # conv stem channels 32  -> 128
_FEAT_PAD = 1024     # inception feature 1000 -> 1024
_CLS_PAD = 128       # num_classes 6          -> 128


# ----------------------------------------------------------------------------
# Kernel 1: fused 3x3 conv (in-kernel shift-and-accumulate im2col)
#           + folded BatchNorm + ReLU + global average pool.
#           One grid step per batch image; grid axis is "parallel".
# ----------------------------------------------------------------------------

def _conv_bn_relu_pool_kernel(x_ref, wt_ref, s_ref, b_ref, o_ref, *, h, w):
    # x_ref:  (1, h+2, w+2, cin)   zero-padded NHWC image tile (bf16)
    # wt_ref: (9, cin, cout_pad)   conv weight per 3x3 tap (bf16)
    # s_ref:  (1, cout_pad)        folded-BN scale (f32)
    # b_ref:  (1, cout_pad)        folded-BN bias  (f32)
    # o_ref:  (1, 1, cout_pad)     pooled features (f32)
    hw = h * w
    cout = wt_ref.shape[-1]

    acc = jnp.zeros((hw, cout), jnp.float32)
    # in-kernel im2col: 9 shifted (hw, cin) @ (cin, cout) matmuls; no 9x HBM blowup
    for dh in range(3):
        for dw in range(3):
            patch = x_ref[0, dh:dh + h, dw:dw + w, :].reshape(hw, -1)
            acc = acc + jnp.dot(patch, wt_ref[dh * 3 + dw],
                                preferred_element_type=jnp.float32)

    y = jnp.maximum(acc * s_ref[...] + b_ref[...], 0.0)          # folded BN + ReLU

    # fused global average pool as a (1, hw) @ (hw, cout) matmul (rides the MXU)
    ones = jnp.full((1, hw), 1.0 / hw, dtype=jnp.float32)
    pooled = jnp.dot(ones, y, preferred_element_type=jnp.float32)
    o_ref[...] = pooled.reshape(1, 1, cout).astype(o_ref.dtype)


def _pallas_conv_bn_relu_pool(xp, wt, scale, bias, *, h, w):
    n, hp, wp, cin = xp.shape
    cout = wt.shape[-1]
    kernel = functools.partial(_conv_bn_relu_pool_kernel, h=h, w=w)
    out = pl.pallas_call(
        kernel,
        out_shape=jax.ShapeDtypeStruct((n, 1, cout), jnp.float32),
        grid=(n,),
        in_specs=[
            pl.BlockSpec((1, hp, wp, cin), lambda b: (b, 0, 0, 0)),  # per-image tile
            pl.BlockSpec((9, cin, cout), lambda b: (0, 0, 0)),       # weights pinned
            pl.BlockSpec((1, cout), lambda b: (0, 0)),               # BN scale pinned
            pl.BlockSpec((1, cout), lambda b: (0, 0)),               # BN bias pinned
        ],
        out_specs=pl.BlockSpec((1, 1, cout), lambda b: (b, 0, 0)),
        compiler_params=pltpu.CompilerParams(
            dimension_semantics=("parallel",)),
    )(xp, wt, scale, bias)
    return out.reshape(n, cout)


# ----------------------------------------------------------------------------
# Kernel 2: fully fused FC head.
#   backbone_fc (Cout_pad -> 1024)              [inception logits, no ReLU]
#   fc1 (1024 -> 1024) + ReLU   (dropout = identity at inference)
#   fc2 (1024 ->  512) + ReLU
#   fc3 ( 512 ->  256) + ReLU
#   fc4 ( 256 ->  128)          [padded classes, sliced to num_classes outside]
# All weights resident in VMEM (bf16, ~3.7 MB total); activations never leave
# the kernel between layers; single launch.
# ----------------------------------------------------------------------------

def _fused_head_kernel(x_ref,
                       wbb_ref, bbb_ref,
                       w1_ref, b1_ref,
                       w2_ref, b2_ref,
                       w3_ref, b3_ref,
                       w4_ref, b4_ref,
                       logits_ref, x1_ref, x2_ref, x3_ref, x4_ref):
    def dense(a, w_ref, b_ref, relu):
        y = jnp.dot(a.astype(jnp.bfloat16), w_ref[...],
                    preferred_element_type=jnp.float32) + b_ref[...]
        return jnp.maximum(y, 0.0) if relu else y

    x = x_ref[...].astype(jnp.float32)
    logits = dense(x, wbb_ref, bbb_ref, relu=False)   # "inception output" (padded 1024)
    x1 = dense(logits, w1_ref, b1_ref, relu=True)     # fc1 + ReLU (+ dropout=identity)
    x2 = dense(x1, w2_ref, b2_ref, relu=True)         # fc2 + ReLU
    x3 = dense(x2, w3_ref, b3_ref, relu=True)         # fc3 + ReLU
    x4 = dense(x3, w4_ref, b4_ref, relu=False)        # fc4

    logits_ref[...] = logits
    x1_ref[...] = x1
    x2_ref[...] = x2
    x3_ref[...] = x3
    x4_ref[...] = x4


def _pallas_fused_head(pooled, params):
    n = pooled.shape[0]
    args = (pooled,
            params["bb_w"], params["bb_b"],
            params["fc1_w"], params["fc1_b"],
            params["fc2_w"], params["fc2_b"],
            params["fc3_w"], params["fc3_b"],
            params["fc4_w"], params["fc4_b"])
    out_shape = (
        jax.ShapeDtypeStruct((n, params["bb_w"].shape[1]), jnp.float32),
        jax.ShapeDtypeStruct((n, params["fc1_w"].shape[1]), jnp.float32),
        jax.ShapeDtypeStruct((n, params["fc2_w"].shape[1]), jnp.float32),
        jax.ShapeDtypeStruct((n, params["fc3_w"].shape[1]), jnp.float32),
        jax.ShapeDtypeStruct((n, params["fc4_w"].shape[1]), jnp.float32),
    )
    return pl.pallas_call(
        _fused_head_kernel,
        out_shape=out_shape,
        in_specs=[_VMEM] * len(args),
        out_specs=(_VMEM,) * 5,
    )(*args)


# ----------------------------------------------------------------------------
# Parameters (deterministic synthetic; shapes follow the module, pre-padded)
# ----------------------------------------------------------------------------

def init_params(key, in_channels=4, stem_channels=32, num_classes=6):
    ks = jax.random.split(key, 10)
    std = 0.02

    def dense_padded(k, fan_in, fan_out, pad_in, pad_out):
        # torch Linear is (out, in); stored pre-transposed (in, out), zero-padded, bf16
        wmat = jax.random.normal(k, (fan_in, fan_out), jnp.float32) * std
        wmat = jnp.pad(wmat, ((0, pad_in - fan_in), (0, pad_out - fan_out)))
        bias = jnp.zeros((1, pad_out), jnp.float32)
        return wmat.astype(jnp.bfloat16), bias

    params = {"num_classes": num_classes}

    # backbone stand-in: conv3x3 (torch OIHW -> (kh*kw, Cin, Cout_pad)) + folded BN
    wconv = jax.random.normal(
        ks[0], (stem_channels, in_channels, 3, 3), jnp.float32) * std
    w_kkio = jnp.transpose(wconv, (2, 3, 1, 0)).reshape(
        9, in_channels, stem_channels)
    params["conv_w"] = jnp.pad(
        w_kkio, ((0, 0), (0, 0), (0, _COUT_PAD - stem_channels))
    ).astype(jnp.bfloat16)

    gamma = 1.0 + 0.1 * jax.random.normal(ks[1], (stem_channels,), jnp.float32)
    beta = 0.1 * jax.random.normal(ks[2], (stem_channels,), jnp.float32)
    mean = 0.1 * jax.random.normal(ks[3], (stem_channels,), jnp.float32)
    var = jnp.abs(jax.random.normal(ks[4], (stem_channels,), jnp.float32)) + 1.0
    scale = gamma / jnp.sqrt(var + 1e-3)
    bias = beta - mean * scale
    params["bn_scale"] = jnp.pad(
        scale, (0, _COUT_PAD - stem_channels)).reshape(1, _COUT_PAD)
    params["bn_bias"] = jnp.pad(
        bias, (0, _COUT_PAD - stem_channels)).reshape(1, _COUT_PAD)

    # backbone fc: stem_channels -> 1000, padded to (128, 1024)
    params["bb_w"], params["bb_b"] = dense_padded(
        ks[5], stem_channels, 1000, _COUT_PAD, _FEAT_PAD)
    # MLP head fc1..fc4
    params["fc1_w"], params["fc1_b"] = dense_padded(ks[6], 1000, 1024, _FEAT_PAD, 1024)
    params["fc2_w"], params["fc2_b"] = dense_padded(ks[7], 1024, 512, 1024, 512)
    params["fc3_w"], params["fc3_b"] = dense_padded(ks[8], 512, 256, 512, 256)
    params["fc4_w"], params["fc4_b"] = dense_padded(ks[9], 256, num_classes,
                                                    256, _CLS_PAD)
    return params


# ----------------------------------------------------------------------------
# Forward pass
# ----------------------------------------------------------------------------

def custom_inception_v3_forward(params, x_nchw, return_intermediate=False):
    n, c, h, w = x_nchw.shape
    x_nhwc = jnp.transpose(x_nchw, (0, 2, 3, 1)).astype(jnp.bfloat16)
    xp = jnp.pad(x_nhwc, ((0, 0), (1, 1), (1, 1), (0, 0)))   # 3x3 'same' halo

    # backbone stand-in: fused conv + BN + ReLU + global-avg-pool (one kernel)
    pooled = _pallas_conv_bn_relu_pool(
        xp, params["conv_w"], params["bn_scale"], params["bn_bias"], h=h, w=w)

    # fused head: backbone fc -> 1000-dim "inception output", then fc1..fc4
    logits_p, x1, x2, x3, x4_p = _pallas_fused_head(pooled, params)

    num_classes = params["num_classes"]
    x4 = x4_p[:, :num_classes]
    if return_intermediate:
        return (x4, x3, x2, x1, logits_p[:, :1000])
    return x4


# ----------------------------------------------------------------------------
# Entry point
# ----------------------------------------------------------------------------

if __name__ == "__main__":
    key = jax.random.PRNGKey(0)
    k_param, k_input = jax.random.split(key)

    num_classes = 6
    params = init_params(k_param, in_channels=4, stem_channels=32,
                         num_classes=num_classes)

    # small-shape input consistent with the module's NCHW image input
    x = jax.random.normal(k_input, (2, 4, 16, 16), jnp.float32)

    fwd = jax.jit(functools.partial(custom_inception_v3_forward, params))
    out = fwd(x)
    jax.block_until_ready(out)

    assert out.shape == (2, num_classes), out.shape
    assert out.dtype == jnp.float32
    assert bool(jnp.all(jnp.isfinite(out)))
    print("KERNEL_OK")
</pallas_src>

<mosaic_0001>
module attributes {stable_mosaic.version = 11 : i64} {
  func.func @_conv_bn_relu_pool_kernel(%arg0: i32, %arg1: memref<1x18x18x4xbf16, #tpu.memory_space<vmem>>, %arg2: memref<9x4x128xbf16, #tpu.memory_space<vmem>>, %arg3: memref<1x128xf32, #tpu.memory_space<vmem>>, %arg4: memref<1x128xf32, #tpu.memory_space<vmem>>, %arg5: memref<1x1x128xf32, #tpu.memory_space<vmem>>) attributes {dimension_semantics = [#tpu.dimension_semantics<parallel>], iteration_bounds = array<i64: 2>, scalar_prefetch = 0 : i64, scratch_operands = 0 : i64, tpu.core_type = #tpu.core_type<tc>, window_params = [{transform_indices = @transform_0, window_bounds = array<i64: 1, 18, 18, 4>}, {pipeline_mode = #tpu.pipeline_mode<synchronous>, transform_indices = @transform_1, window_bounds = array<i64: 9, 4, 128>}, {pipeline_mode = #tpu.pipeline_mode<synchronous>, transform_indices = @transform_2, window_bounds = array<i64: 1, 128>}, {pipeline_mode = #tpu.pipeline_mode<synchronous>, transform_indices = @transform_3, window_bounds = array<i64: 1, 128>}, {transform_indices = @transform_4, window_bounds = array<i64: 1, 1, 128>}]} {
    %cst = arith.constant 0.000000e+00 : f32
    %0 = vector.broadcast %cst : f32 to vector<256x128xf32>
    %c0 = arith.constant 0 : index
    %c0_0 = arith.constant 0 : index
    %c0_1 = arith.constant 0 : index
    %c0_2 = arith.constant 0 : index
    %1 = vector.load %arg1[%c0, %c0_0, %c0_1, %c0_2] : memref<1x18x18x4xbf16, #tpu.memory_space<vmem>>, vector<1x16x16x4xbf16>
    %2 = vector.shape_cast %1 : vector<1x16x16x4xbf16> to vector<16x16x4xbf16>
    %3 = vector.shape_cast %2 : vector<16x16x4xbf16> to vector<256x4xbf16>
    %c0_3 = arith.constant 0 : index
    %c0_4 = arith.constant 0 : index
    %c0_5 = arith.constant 0 : index
    %4 = vector.load %arg2[%c0_3, %c0_4, %c0_5] : memref<9x4x128xbf16, #tpu.memory_space<vmem>>, vector<1x4x128xbf16>
    %5 = vector.shape_cast %4 : vector<1x4x128xbf16> to vector<4x128xbf16>
    %cst_6 = arith.constant dense<0.000000e+00> : vector<256x128xf32>
    %6 = tpu.matmul %3, %5, %cst_6 {dimension_numbers = #tpu.dot_dimension_numbers<[1], [0], [0], [1], [0, 0, 1, 1], [], []>} : vector<256x4xbf16>, vector<4x128xbf16>, vector<256x128xf32> -> vector<256x128xf32>
    %7 = arith.addf %0, %6 : vector<256x128xf32>
    %c0_7 = arith.constant 0 : index
    %c0_8 = arith.constant 0 : index
    %c1 = arith.constant 1 : index
    %c0_9 = arith.constant 0 : index
    %8 = vector.load %arg1[%c0_7, %c0_8, %c1, %c0_9] : memref<1x18x18x4xbf16, #tpu.memory_space<vmem>>, vector<1x16x16x4xbf16>
    %9 = vector.shape_cast %8 : vector<1x16x16x4xbf16> to vector<16x16x4xbf16>
    %10 = vector.shape_cast %9 : vector<16x16x4xbf16> to vector<256x4xbf16>
    %c1_10 = arith.constant 1 : index
    %c0_11 = arith.constant 0 : index
    %c0_12 = arith.constant 0 : index
    %11 = vector.load %arg2[%c1_10, %c0_11, %c0_12] : memref<9x4x128xbf16, #tpu.memory_space<vmem>>, vector<1x4x128xbf16>
    %12 = vector.shape_cast %11 : vector<1x4x128xbf16> to vector<4x128xbf16>
    %cst_13 = arith.constant dense<0.000000e+00> : vector<256x128xf32>
    %13 = tpu.matmul %10, %12, %cst_13 {dimension_numbers = #tpu.dot_dimension_numbers<[1], [0], [0], [1], [0, 0, 1, 1], [], []>} : vector<256x4xbf16>, vector<4x128xbf16>, vector<256x128xf32> -> vector<256x128xf32>
    %14 = arith.addf %7, %13 : vector<256x128xf32>
    %c0_14 = arith.constant 0 : index
    %c0_15 = arith.constant 0 : index
    %c2 = arith.constant 2 : index
    %c0_16 = arith.constant 0 : index
    %15 = vector.load %arg1[%c0_14, %c0_15, %c2, %c0_16] : memref<1x18x18x4xbf16, #tpu.memory_space<vmem>>, vector<1x16x16x4xbf16>
    %16 = vector.shape_cast %15 : vector<1x16x16x4xbf16> to vector<16x16x4xbf16>
    %17 = vector.shape_cast %16 : vector<16x16x4xbf16> to vector<256x4xbf16>
    %c2_17 = arith.constant 2 : index
    %c0_18 = arith.constant 0 : index
    %c0_19 = arith.constant 0 : index
    %18 = vector.load %arg2[%c2_17, %c0_18, %c0_19] : memref<9x4x128xbf16, #tpu.memory_space<vmem>>, vector<1x4x128xbf16>
    %19 = vector.shape_cast %18 : vector<1x4x128xbf16> to vector<4x128xbf16>
    %cst_20 = arith.constant dense<0.000000e+00> : vector<256x128xf32>
    %20 = tpu.matmul %17, %19, %cst_20 {dimension_numbers = #tpu.dot_dimension_numbers<[1], [0], [0], [1], [0, 0, 1, 1], [], []>} : vector<256x4xbf16>, vector<4x128xbf16>, vector<256x128xf32> -> vector<256x128xf32>
    %21 = arith.addf %14, %20 : vector<256x128xf32>
    %c0_21 = arith.constant 0 : index
    %c1_22 = arith.constant 1 : index
    %c0_23 = arith.constant 0 : index
    %c0_24 = arith.constant 0 : index
    %22 = vector.load %arg1[%c0_21, %c1_22, %c0_23, %c0_24] : memref<1x18x18x4xbf16, #tpu.memory_space<vmem>>, vector<1x16x16x4xbf16>
    %23 = vector.shape_cast %22 : vector<1x16x16x4xbf16> to vector<16x16x4xbf16>
    %24 = vector.shape_cast %23 : vector<16x16x4xbf16> to vector<256x4xbf16>
    %c3 = arith.constant 3 : index
    %c0_25 = arith.constant 0 : index
    %c0_26 = arith.constant 0 : index
    %25 = vector.load %arg2[%c3, %c0_25, %c0_26] : memref<9x4x128xbf16, #tpu.memory_space<vmem>>, vector<1x4x128xbf16>
    %26 = vector.shape_cast %25 : vector<1x4x128xbf16> to vector<4x128xbf16>
    %cst_27 = arith.constant dense<0.000000e+00> : vector<256x128xf32>
    %27 = tpu.matmul %24, %26, %cst_27 {dimension_numbers = #tpu.dot_dimension_numbers<[1], [0], [0], [1], [0, 0, 1, 1], [], []>} : vector<256x4xbf16>, vector<4x128xbf16>, vector<256x128xf32> -> vector<256x128xf32>
    %28 = arith.addf %21, %27 : vector<256x128xf32>
    %c0_28 = arith.constant 0 : index
    %c1_29 = arith.constant 1 : index
    %c1_30 = arith.constant 1 : index
    %c0_31 = arith.constant 0 : index
    %29 = vector.load %arg1[%c0_28, %c1_29, %c1_30, %c0_31] : memref<1x18x18x4xbf16, #tpu.memory_space<vmem>>, vector<1x16x16x4xbf16>
    %30 = vector.shape_cast %29 : vector<1x16x16x4xbf16> to vector<16x16x4xbf16>
    %31 = vector.shape_cast %30 : vector<16x16x4xbf16> to vector<256x4xbf16>
    %c4 = arith.constant 4 : index
    %c0_32 = arith.constant 0 : index
    %c0_33 = arith.constant 0 : index
    %32 = vector.load %arg2[%c4, %c0_32, %c0_33] : memref<9x4x128xbf16, #tpu.memory_space<vmem>>, vector<1x4x128xbf16>
    %33 = vector.shape_cast %32 : vector<1x4x128xbf16> to vector<4x128xbf16>
    %cst_34 = arith.constant dense<0.000000e+00> : vector<256x128xf32>
    %34 = tpu.matmul %31, %33, %cst_34 {dimension_numbers = #tpu.dot_dimension_numbers<[1], [0], [0], [1], [0, 0, 1, 1], [], []>} : vector<256x4xbf16>, vector<4x128xbf16>, vector<256x128xf32> -> vector<256x128xf32>
    %35 = arith.addf %28, %34 : vector<256x128xf32>
    %c0_35 = arith.constant 0 : index
    %c1_36 = arith.constant 1 : index
    %c2_37 = arith.constant 2 : index
    %c0_38 = arith.constant 0 : index
    %36 = vector.load %arg1[%c0_35, %c1_36, %c2_37, %c0_38] : memref<1x18x18x4xbf16, #tpu.memory_space<vmem>>, vector<1x16x16x4xbf16>
    %37 = vector.shape_cast %36 : vector<1x16x16x4xbf16> to vector<16x16x4xbf16>
    %38 = vector.shape_cast %37 : vector<16x16x4xbf16> to vector<256x4xbf16>
    %c5 = arith.constant 5 : index
    %c0_39 = arith.constant 0 : index
    %c0_40 = arith.constant 0 : index
    %39 = vector.load %arg2[%c5, %c0_39, %c0_40] : memref<9x4x128xbf16, #tpu.memory_space<vmem>>, vector<1x4x128xbf16>
    %40 = vector.shape_cast %39 : vector<1x4x128xbf16> to vector<4x128xbf16>
    %cst_41 = arith.constant dense<0.000000e+00> : vector<256x128xf32>
    %41 = tpu.matmul %38, %40, %cst_41 {dimension_numbers = #tpu.dot_dimension_numbers<[1], [0], [0], [1], [0, 0, 1, 1], [], []>} : vector<256x4xbf16>, vector<4x128xbf16>, vector<256x128xf32> -> vector<256x128xf32>
    %42 = arith.addf %35, %41 : vector<256x128xf32>
    %c0_42 = arith.constant 0 : index
    %c2_43 = arith.constant 2 : index
    %c0_44 = arith.constant 0 : index
    %c0_45 = arith.constant 0 : index
    %43 = vector.load %arg1[%c0_42, %c2_43, %c0_44, %c0_45] : memref<1x18x18x4xbf16, #tpu.memory_space<vmem>>, vector<1x16x16x4xbf16>
    %44 = vector.shape_cast %43 : vector<1x16x16x4xbf16> to vector<16x16x4xbf16>
    %45 = vector.shape_cast %44 : vector<16x16x4xbf16> to vector<256x4xbf16>
    %c6 = arith.constant 6 : index
    %c0_46 = arith.constant 0 : index
    %c0_47 = arith.constant 0 : index
    %46 = vector.load %arg2[%c6, %c0_46, %c0_47] : memref<9x4x128xbf16, #tpu.memory_space<vmem>>, vector<1x4x128xbf16>
    %47 = vector.shape_cast %46 : vector<1x4x128xbf16> to vector<4x128xbf16>
    %cst_48 = arith.constant dense<0.000000e+00> : vector<256x128xf32>
    %48 = tpu.matmul %45, %47, %cst_48 {dimension_numbers = #tpu.dot_dimension_numbers<[1], [0], [0], [1], [0, 0, 1, 1], [], []>} : vector<256x4xbf16>, vector<4x128xbf16>, vector<256x128xf32> -> vector<256x128xf32>
    %49 = arith.addf %42, %48 : vector<256x128xf32>
    %c0_49 = arith.constant 0 : index
    %c2_50 = arith.constant 2 : index
    %c1_51 = arith.constant 1 : index
    %c0_52 = arith.constant 0 : index
    %50 = vector.load %arg1[%c0_49, %c2_50, %c1_51, %c0_52] : memref<1x18x18x4xbf16, #tpu.memory_space<vmem>>, vector<1x16x16x4xbf16>
    %51 = vector.shape_cast %50 : vector<1x16x16x4xbf16> to vector<16x16x4xbf16>
    %52 = vector.shape_cast %51 : vector<16x16x4xbf16> to vector<256x4xbf16>
    %c7 = arith.constant 7 : index
    %c0_53 = arith.constant 0 : index
    %c0_54 = arith.constant 0 : index
    %53 = vector.load %arg2[%c7, %c0_53, %c0_54] : memref<9x4x128xbf16, #tpu.memory_space<vmem>>, vector<1x4x128xbf16>
    %54 = vector.shape_cast %53 : vector<1x4x128xbf16> to vector<4x128xbf16>
    %cst_55 = arith.constant dense<0.000000e+00> : vector<256x128xf32>
    %55 = tpu.matmul %52, %54, %cst_55 {dimension_numbers = #tpu.dot_dimension_numbers<[1], [0], [0], [1], [0, 0, 1, 1], [], []>} : vector<256x4xbf16>, vector<4x128xbf16>, vector<256x128xf32> -> vector<256x128xf32>
    %56 = arith.addf %49, %55 : vector<256x128xf32>
    %c0_56 = arith.constant 0 : index
    %c2_57 = arith.constant 2 : index
    %c2_58 = arith.constant 2 : index
    %c0_59 = arith.constant 0 : index
    %57 = vector.load %arg1[%c0_56, %c2_57, %c2_58, %c0_59] : memref<1x18x18x4xbf16, #tpu.memory_space<vmem>>, vector<1x16x16x4xbf16>
    %58 = vector.shape_cast %57 : vector<1x16x16x4xbf16> to vector<16x16x4xbf16>
    %59 = vector.shape_cast %58 : vector<16x16x4xbf16> to vector<256x4xbf16>
    %c8 = arith.constant 8 : index
    %c0_60 = arith.constant 0 : index
    %c0_61 = arith.constant 0 : index
    %60 = vector.load %arg2[%c8, %c0_60, %c0_61] : memref<9x4x128xbf16, #tpu.memory_space<vmem>>, vector<1x4x128xbf16>
    %61 = vector.shape_cast %60 : vector<1x4x128xbf16> to vector<4x128xbf16>
    %cst_62 = arith.constant dense<0.000000e+00> : vector<256x128xf32>
    %62 = tpu.matmul %59, %61, %cst_62 {dimension_numbers = #tpu.dot_dimension_numbers<[1], [0], [0], [1], [0, 0, 1, 1], [], []>} : vector<256x4xbf16>, vector<4x128xbf16>, vector<256x128xf32> -> vector<256x128xf32>
    %63 = arith.addf %56, %62 : vector<256x128xf32>
    %c0_63 = arith.constant 0 : index
    %c0_64 = arith.constant 0 : index
    %64 = vector.load %arg3[%c0_63, %c0_64] : memref<1x128xf32, #tpu.memory_space<vmem>>, vector<1x128xf32>
    %65 = vector.broadcast %64 : vector<1x128xf32> to vector<256x128xf32>
    %66 = arith.mulf %63, %65 : vector<256x128xf32>
    %c0_65 = arith.constant 0 : index
    %c0_66 = arith.constant 0 : index
    %67 = vector.load %arg4[%c0_65, %c0_66] : memref<1x128xf32, #tpu.memory_space<vmem>>, vector<1x128xf32>
    %68 = vector.broadcast %67 : vector<1x128xf32> to vector<256x128xf32>
    %69 = arith.addf %66, %68 : vector<256x128xf32>
    %cst_67 = arith.constant 0.000000e+00 : f32
    %70 = vector.broadcast %cst_67 : f32 to vector<256x128xf32>
    %71 = arith.maximumf %69, %70 : vector<256x128xf32>
    %cst_68 = arith.constant 3.906250e-03 : f32
    %72 = vector.broadcast %cst_68 : f32 to vector<1x256xf32>
    %cst_69 = arith.constant dense<0.000000e+00> : vector<1x128xf32>
    %73 = tpu.matmul %72, %71, %cst_69 {dimension_numbers = #tpu.dot_dimension_numbers<[1], [0], [0], [1], [0, 0, 1, 1], [], []>} : vector<1x256xf32>, vector<256x128xf32>, vector<1x128xf32> -> vector<1x128xf32>
    %74 = vector.shape_cast %73 : vector<1x128xf32> to vector<1x1x128xf32>
    %c0_70 = arith.constant 0 : index
    %c0_71 = arith.constant 0 : index
    %c0_72 = arith.constant 0 : index
    %75 = vector.load %arg5[%c0_70, %c0_71, %c0_72] : memref<1x1x128xf32, #tpu.memory_space<vmem>>, vector<1x1x128xf32>
    tpu.vector_store %arg5[%c0_70, %c0_71, %c0_72], %74 {strides = array<i32>} : memref<1x1x128xf32, #tpu.memory_space<vmem>>, vector<1x1x128xf32>,
    return
  }
  func.func @transform_0(%arg0: i32) -> (i32, i32, i32, i32) {
    %c0_i32 = arith.constant 0 : i32
    %c0_i32_0 = arith.constant 0 : i32
    %c0_i32_1 = arith.constant 0 : i32
    %c0_i32_2 = arith.constant 0 : i32
    return %arg0, %c0_i32, %c0_i32_0, %c0_i32_1 : i32, i32, i32, i32
  }
  func.func @transform_1(%arg0: i32) -> (i32, i32, i32) {
    %c0_i32 = arith.constant 0 : i32
    %c0_i32_0 = arith.constant 0 : i32
    %c0_i32_1 = arith.constant 0 : i32
    %c0_i32_2 = arith.constant 0 : i32
    return %c0_i32, %c0_i32_0, %c0_i32_1 : i32, i32, i32
  }
  func.func @transform_2(%arg0: i32) -> (i32, i32) {
    %c0_i32 = arith.constant 0 : i32
    %c0_i32_0 = arith.constant 0 : i32
    %c0_i32_1 = arith.constant 0 : i32
    return %c0_i32, %c0_i32_0 : i32, i32
  }
  func.func @transform_3(%arg0: i32) -> (i32, i32) {
    %c0_i32 = arith.constant 0 : i32
    %c0_i32_0 = arith.constant 0 : i32
    %c0_i32_1 = arith.constant 0 : i32
    return %c0_i32, %c0_i32_0 : i32, i32
  }
  func.func @transform_4(%arg0: i32) -> (i32, i32, i32) {
    %c0_i32 = arith.constant 0 : i32
    %c0_i32_0 = arith.constant 0 : i32
    %c0_i32_1 = arith.constant 0 : i32
    return %arg0, %c0_i32, %c0_i32_0 : i32, i32, i32
  }
}

module attributes {stable_mosaic.version = 11 : i64} {
  func.func @_fused_head_kernel(%arg0: memref<2x128xf32, #tpu.memory_space<vmem>>, %arg1: memref<128x1024xbf16, #tpu.memory_space<vmem>>, %arg2: memref<1x1024xf32, #tpu.memory_space<vmem>>, %arg3: memref<1024x1024xbf16, #tpu.memory_space<vmem>>, %arg4: memref<1x1024xf32, #tpu.memory_space<vmem>>, %arg5: memref<1024x512xbf16, #tpu.memory_space<vmem>>, %arg6: memref<1x512xf32, #tpu.memory_space<vmem>>, %arg7: memref<512x256xbf16, #tpu.memory_space<vmem>>, %arg8: memref<1x256xf32, #tpu.memory_space<vmem>>, %arg9: memref<256x128xbf16, #tpu.memory_space<vmem>>, %arg10: memref<1x128xf32, #tpu.memory_space<vmem>>, %arg11: memref<2x1024xf32, #tpu.memory_space<vmem>>, %arg12: memref<2x1024xf32, #tpu.memory_space<vmem>>, %arg13: memref<2x512xf32, #tpu.memory_space<vmem>>, %arg14: memref<2x256xf32, #tpu.memory_space<vmem>>, %arg15: memref<2x128xf32, #tpu.memory_space<vmem>>) attributes {dimension_semantics = [], scalar_prefetch = 0 : i64, scratch_operands = 0 : i64, tpu.core_type = #tpu.core_type<tc>} {
    %c0 = arith.constant 0 : index
    %c0_0 = arith.constant 0 : index
    %0 = vector.load %arg0[%c0, %c0_0] : memref<2x128xf32, #tpu.memory_space<vmem>>, vector<2x128xf32>
    %1 = arith.truncf %0 : vector<2x128xf32> to vector<2x128xbf16>
    %c0_1 = arith.constant 0 : index
    %c0_2 = arith.constant 0 : index
    %2 = vector.load %arg1[%c0_1, %c0_2] : memref<128x1024xbf16, #tpu.memory_space<vmem>>, vector<128x1024xbf16>
    %cst = arith.constant dense<0.000000e+00> : vector<2x1024xf32>
    %3 = tpu.matmul %1, %2, %cst {dimension_numbers = #tpu.dot_dimension_numbers<[1], [0], [0], [1], [0, 0, 1, 1], [], []>} : vector<2x128xbf16>, vector<128x1024xbf16>, vector<2x1024xf32> -> vector<2x1024xf32>
    %c0_3 = arith.constant 0 : index
    %c0_4 = arith.constant 0 : index
    %4 = vector.load %arg2[%c0_3, %c0_4] : memref<1x1024xf32, #tpu.memory_space<vmem>>, vector<1x1024xf32>
    %5 = vector.broadcast %4 : vector<1x1024xf32> to vector<2x1024xf32>
    %6 = arith.addf %3, %5 : vector<2x1024xf32>
    %7 = arith.truncf %6 : vector<2x1024xf32> to vector<2x1024xbf16>
    %c0_5 = arith.constant 0 : index
    %c0_6 = arith.constant 0 : index
    %8 = vector.load %arg3[%c0_5, %c0_6] : memref<1024x1024xbf16, #tpu.memory_space<vmem>>, vector<1024x1024xbf16>
    %cst_7 = arith.constant dense<0.000000e+00> : vector<2x1024xf32>
    %9 = tpu.matmul %7, %8, %cst_7 {dimension_numbers = #tpu.dot_dimension_numbers<[1], [0], [0], [1], [0, 0, 1, 1], [], []>} : vector<2x1024xbf16>, vector<1024x1024xbf16>, vector<2x1024xf32> -> vector<2x1024xf32>
    %c0_8 = arith.constant 0 : index
    %c0_9 = arith.constant 0 : index
    %10 = vector.load %arg4[%c0_8, %c0_9] : memref<1x1024xf32, #tpu.memory_space<vmem>>, vector<1x1024xf32>
    %11 = vector.broadcast %10 : vector<1x1024xf32> to vector<2x1024xf32>
    %12 = arith.addf %9, %11 : vector<2x1024xf32>
    %cst_10 = arith.constant 0.000000e+00 : f32
    %13 = vector.broadcast %cst_10 : f32 to vector<2x1024xf32>
    %14 = arith.maximumf %12, %13 : vector<2x1024xf32>
    %15 = arith.truncf %14 : vector<2x1024xf32> to vector<2x1024xbf16>
    %c0_11 = arith.constant 0 : index
    %c0_12 = arith.constant 0 : index
    %16 = vector.load %arg5[%c0_11, %c0_12] : memref<1024x512xbf16, #tpu.memory_space<vmem>>, vector<1024x512xbf16>
    %cst_13 = arith.constant dense<0.000000e+00> : vector<2x512xf32>
    %17 = tpu.matmul %15, %16, %cst_13 {dimension_numbers = #tpu.dot_dimension_numbers<[1], [0], [0], [1], [0, 0, 1, 1], [], []>} : vector<2x1024xbf16>, vector<1024x512xbf16>, vector<2x512xf32> -> vector<2x512xf32>
    %c0_14 = arith.constant 0 : index
    %c0_15 = arith.constant 0 : index
    %18 = vector.load %arg6[%c0_14, %c0_15] : memref<1x512xf32, #tpu.memory_space<vmem>>, vector<1x512xf32>
    %19 = vector.broadcast %18 : vector<1x512xf32> to vector<2x512xf32>
    %20 = arith.addf %17, %19 : vector<2x512xf32>
    %cst_16 = arith.constant 0.000000e+00 : f32
    %21 = vector.broadcast %cst_16 : f32 to vector<2x512xf32>
    %22 = arith.maximumf %20, %21 : vector<2x512xf32>
    %23 = arith.truncf %22 : vector<2x512xf32> to vector<2x512xbf16>
    %c0_17 = arith.constant 0 : index
    %c0_18 = arith.constant 0 : index
    %24 = vector.load %arg7[%c0_17, %c0_18] : memref<512x256xbf16, #tpu.memory_space<vmem>>, vector<512x256xbf16>
    %cst_19 = arith.constant dense<0.000000e+00> : vector<2x256xf32>
    %25 = tpu.matmul %23, %24, %cst_19 {dimension_numbers = #tpu.dot_dimension_numbers<[1], [0], [0], [1], [0, 0, 1, 1], [], []>} : vector<2x512xbf16>, vector<512x256xbf16>, vector<2x256xf32> -> vector<2x256xf32>
    %c0_20 = arith.constant 0 : index
    %c0_21 = arith.constant 0 : index
    %26 = vector.load %arg8[%c0_20, %c0_21] : memref<1x256xf32, #tpu.memory_space<vmem>>, vector<1x256xf32>
    %27 = vector.broadcast %26 : vector<1x256xf32> to vector<2x256xf32>
    %28 = arith.addf %25, %27 : vector<2x256xf32>
    %cst_22 = arith.constant 0.000000e+00 : f32
    %29 = vector.broadcast %cst_22 : f32 to vector<2x256xf32>
    %30 = arith.maximumf %28, %29 : vector<2x256xf32>
    %31 = arith.truncf %30 : vector<2x256xf32> to vector<2x256xbf16>
    %c0_23 = arith.constant 0 : index
    %c0_24 = arith.constant 0 : index
    %32 = vector.load %arg9[%c0_23, %c0_24] : memref<256x128xbf16, #tpu.memory_space<vmem>>, vector<256x128xbf16>
    %cst_25 = arith.constant dense<0.000000e+00> : vector<2x128xf32>
    %33 = tpu.matmul %31, %32, %cst_25 {dimension_numbers = #tpu.dot_dimension_numbers<[1], [0], [0], [1], [0, 0, 1, 1], [], []>} : vector<2x256xbf16>, vector<256x128xbf16>, vector<2x128xf32> -> vector<2x128xf32>
    %c0_26 = arith.constant 0 : index
    %c0_27 = arith.constant 0 : index
    %34 = vector.load %arg10[%c0_26, %c0_27] : memref<1x128xf32, #tpu.memory_space<vmem>>, vector<1x128xf32>
    %35 = vector.broadcast %34 : vector<1x128xf32> to vector<2x128xf32>
    %36 = arith.addf %33, %35 : vector<2x128xf32>
    %c0_28 = arith.constant 0 : index
    %c0_29 = arith.constant 0 : index
    %37 = vector.load %arg11[%c0_28, %c0_29] : memref<2x1024xf32, #tpu.memory_space<vmem>>, vector<2x1024xf32>
    tpu.vector_store %arg11[%c0_28, %c0_29], %6 {strides = array<i32>} : memref<2x1024xf32, #tpu.memory_space<vmem>>, vector<2x1024xf32>,
    %c0_30 = arith.constant 0 : index
    %c0_31 = arith.constant 0 : index
    %38 = vector.load %arg12[%c0_30, %c0_31] : memref<2x1024xf32, #tpu.memory_space<vmem>>, vector<2x1024xf32>
    tpu.vector_store %arg12[%c0_30, %c0_31], %14 {strides = array<i32>} : memref<2x1024xf32, #tpu.memory_space<vmem>>, vector<2x1024xf32>,
    %c0_32 = arith.constant 0 : index
    %c0_33 = arith.constant 0 : index
    %39 = vector.load %arg13[%c0_32, %c0_33] : memref<2x512xf32, #tpu.memory_space<vmem>>, vector<2x512xf32>
    tpu.vector_store %arg13[%c0_32, %c0_33], %22 {strides = array<i32>} : memref<2x512xf32, #tpu.memory_space<vmem>>, vector<2x512xf32>,
    %c0_34 = arith.constant 0 : index
    %c0_35 = arith.constant 0 : index
    %40 = vector.load %arg14[%c0_34, %c0_35] : memref<2x256xf32, #tpu.memory_space<vmem>>, vector<2x256xf32>
    tpu.vector_store %arg14[%c0_34, %c0_35], %30 {strides = array<i32>} : memref<2x256xf32, #tpu.memory_space<vmem>>, vector<2x256xf32>,
    %c0_36 = arith.constant 0 : index
    %c0_37 = arith.constant 0 : index
    %41 = vector.load %arg15[%c0_36, %c0_37] : memref<2x128xf32, #tpu.memory_space<vmem>>, vector<2x128xf32>
    tpu.vector_store %arg15[%c0_36, %c0_37], %36 {strides = array<i32>} : memref<2x128xf32, #tpu.memory_space<vmem>>, vector<2x128xf32>,
    return
  }
}

</mosaic_0001>

<llo_original>
// kernel: custom_inception_v3_forward.2
$region0: #{custom_inception_v3_forward.2}
  #allocation0 [shape = 'u32[]', space=smem, size = 0x4, offset = 0x4, fixed_abs, tag = 'smem constant byte address 0x4 - core index']
  #allocation1 [shape = 'u32[144,128]{1,0:T(1,128)}', space=vmem, size = 0x12000, scoped, tag = 'internal scratch']
  %s0 = inlined_call_operand.vmem [shape: bf16[2,18,18,4], index: 0, kind: input, shape index: {}]
  %s1 = inlined_call_operand.hbm [shape: bf16[9,4,128], index: 1, kind: input, shape index: {}]
  %s2 = inlined_call_operand.hbm [shape: f32[1,128], index: 2, kind: input, shape index: {}]
  %s3 = inlined_call_operand.hbm [shape: f32[1,128], index: 3, kind: input, shape index: {}]
  %s4 = inlined_call_operand.vmem [shape: f32[2,1,128], index: 4, kind: output, shape index: {}]
  %s5 = sld [smem:[#allocation0]]
  $region61: #{custom_inception_v3_forward.2} parent=0
    _
  %s7 = ssub.s32 1, %s5
  %s8 = scalar_select 0, %s7, %s5
  $region1: #{custom_inception_v3_forward.2} parent=0
    #allocation2 [shape = 'u8[9216]{0}', space=vmem, size = 0x2400, scoped, tag = 'input window, operand 1, single buffered']
    #allocation3 [shape = 's32[2]{0}', space=sflag, size = 0x8, scoped, tag = 'scoped memory for custom_inception_v3_forward.2']
    #allocation4 [shape = 'u8[512]{0}', space=vmem, size = 0x400, scoped, tag = 'input window, operand 2, single buffered']
    #allocation5 [shape = 's32[1]{0}', space=sflag, size = 0x4, scoped, tag = 'scoped memory for custom_inception_v3_forward.2']
    #allocation6 [shape = 'u8[512]{0}', space=vmem, size = 0x400, scoped, tag = 'input window, operand 3, single buffered']
    %9 = vsyncpa [#allocation3], 0
    %10 = vsyncpa [#allocation5], 0
    loop: start=0, step=1, limit=4
    $region2: #{custom_inception_v3_forward.2} parent=1 // loop_pre_header
      _
    $region3: #{custom_inception_v3_forward.2} parent=1 // loop_header
      %s12 = sphi 0, %s16
      %p13 = scmp.ge.s32.totalorder %s12, 4
      %s22 = sphi 0, %s24
      %s25 = sphi 0, %s22
      %s26 = sphi 0, %s25
      %s42 = sphi 0, %s26
      %s46 = sphi 0, %s46
      %s48 = sphi 0, %s46
      %s49 = sphi 0, %s48
      %s63 = sphi 0, %s49
      %s67 = sphi 0, %s67
      %s69 = sphi 0, %s67
      %s70 = sphi 0, %s69
      %s84 = sphi 0, %s70
      %s88 = sphi 0, %s88
      %s90 = sphi 0, %s88
      %s91 = sphi 0, %s90
      %s105 = sphi 0, %s91
      %s111 = sphi 0, %s113
      %s114 = sphi 0, %s111
      %s115 = sphi 0, %s114
      %s131 = sphi 0, %s115
    $region4: #{custom_inception_v3_forward.2} parent=1 // loop_header_branch
      %15 = sbr.rel (%p13) target = $region8
    $region5: #{custom_inception_v3_forward.2} parent=1 // loop_body
      %s17 = ssub.s32 %s12, 1
      %s18 = ssub.s32 %s12, 2
      %s19 = sadd.s32 %s12, 1
      %s20 = ssub.s32 %s12, %s19
      %p21 = scmp.eq.s32.totalorder %s20, 0
      %s23 = sadd.s32 %s22, 1
      %s24 = scalar_select %p21, %s22, %s23
      %p27 = pneg %p21
      %p28 = scmp.eq.s32.totalorder %s12, 1
      %p29 = por %p27, %p28
      %p30 = scmp.ne.s32.totalorder %s22, %s25
      %p31 = scmp.eq.s32.totalorder %s12, 0
      %p32 = por %p30, %p31
      %p33 = scmp.ne.s32.totalorder %s22, %s25
      %p34 = scmp.eq.s32.totalorder %s17, 1
      %p35 = por %p33, %p34
      %p36 = scmp.ne.s32.totalorder %s25, %s26
      %p37 = scmp.eq.s32.totalorder %s17, 0
      %p38 = por %p36, %p37
      %p39 = scmp.ne.s32.totalorder %s25, %s26
      %p40 = scmp.eq.s32.totalorder %s18, 1
      %p41 = por %p39, %p40
      %p43 = scmp.ne.s32.totalorder %s26, %s42
      %p44 = scmp.eq.s32.totalorder %s18, 0
      %p45 = por %p43, %p44
      %s47 = sadd.s32 %s46, 1
      %p50 = scmp.eq.s32.totalorder %s12, 1
      %p51 = scmp.ne.s32.totalorder %s46, %s48
      %p52 = scmp.eq.s32.totalorder %s12, 0
      %p53 = por %p51, %p52
      %p54 = scmp.ne.s32.totalorder %s46, %s48
      %p55 = scmp.eq.s32.totalorder %s17, 1
      %p56 = por %p54, %p55
      %p57 = scmp.ne.s32.totalorder %s48, %s49
      %p58 = scmp.eq.s32.totalorder %s17, 0
      %p59 = por %p57, %p58
      %p60 = scmp.ne.s32.totalorder %s48, %s49
      %p61 = scmp.eq.s32.totalorder %s18, 1
      %p62 = por %p60, %p61
      %p64 = scmp.ne.s32.totalorder %s49, %s63
      %p65 = scmp.eq.s32.totalorder %s18, 0
      %p66 = por %p64, %p65
      %s68 = sadd.s32 %s67, 1
      %p71 = scmp.eq.s32.totalorder %s12, 1
      %p72 = scmp.ne.s32.totalorder %s67, %s69
      %p73 = scmp.eq.s32.totalorder %s12, 0
      %p74 = por %p72, %p73
      %p75 = scmp.ne.s32.totalorder %s67, %s69
      %p76 = scmp.eq.s32.totalorder %s17, 1
      %p77 = por %p75, %p76
      %p78 = scmp.ne.s32.totalorder %s69, %s70
      %p79 = scmp.eq.s32.totalorder %s17, 0
      %p80 = por %p78, %p79
      %p81 = scmp.ne.s32.totalorder %s69, %s70
      %p82 = scmp.eq.s32.totalorder %s18, 1
      %p83 = por %p81, %p82
      %p85 = scmp.ne.s32.totalorder %s70, %s84
      %p86 = scmp.eq.s32.totalorder %s18, 0
      %p87 = por %p85, %p86
      %s89 = sadd.s32 %s88, 1
      %p92 = scmp.eq.s32.totalorder %s12, 1
      %p93 = scmp.ne.s32.totalorder %s88, %s90
      %p94 = scmp.eq.s32.totalorder %s12, 0
      %p95 = por %p93, %p94
      %p96 = scmp.ne.s32.totalorder %s88, %s90
      %p97 = scmp.eq.s32.totalorder %s17, 1
      %p98 = por %p96, %p97
      %p99 = scmp.ne.s32.totalorder %s90, %s91
      %p100 = scmp.eq.s32.totalorder %s17, 0
      %p101 = por %p99, %p100
      %p102 = scmp.ne.s32.totalorder %s90, %s91
      %p103 = scmp.eq.s32.totalorder %s18, 1
      %p104 = por %p102, %p103
      %p106 = scmp.ne.s32.totalorder %s91, %s105
      %p107 = scmp.eq.s32.totalorder %s18, 0
      %p108 = por %p106, %p107
      %s109 = ssub.s32 %s12, %s19
      %p110 = scmp.eq.s32.totalorder %s109, 0
      %s112 = sadd.s32 %s111, 1
      %s113 = scalar_select %p110, %s111, %s112
      %p116 = pneg %p110
      %p117 = scmp.eq.s32.totalorder %s12, 1
      %p118 = por %p116, %p117
      %p119 = scmp.ne.s32.totalorder %s111, %s114
      %p120 = scmp.eq.s32.totalorder %s12, 0
      %p121 = por %p119, %p120
      %p122 = scmp.ne.s32.totalorder %s111, %s114
      %p123 = scmp.eq.s32.totalorder %s17, 1
      %p124 = por %p122, %p123
      %p125 = scmp.ne.s32.totalorder %s114, %s115
      %p126 = scmp.eq.s32.totalorder %s17, 0
      %p127 = por %p125, %p126
      %p128 = scmp.ne.s32.totalorder %s114, %s115
      %p129 = scmp.eq.s32.totalorder %s18, 1
      %p130 = por %p128, %p129
      %p132 = scmp.ne.s32.totalorder %s115, %s131
      %p133 = scmp.eq.s32.totalorder %s18, 0
      %p134 = por %p132, %p133
      %p135 = scmp.le.s32.totalorder 1, %s12
      %p136 = scmp.lt.s32.totalorder %s12, 3
      %p137 = pnand %p135, %p136
      %p138 = pneg %p137
      // Predicated region
      $region9: #{custom_inception_v3_forward.2} parent=5 // pred_check
        _
      $region10: #{custom_inception_v3_forward.2} parent=5 // pred_check_branch
        %140 = sbr.rel (%p137) target = $region12
      $region11: #{custom_inception_v3_forward.2} parent=5 // pred_region
        %s141 = ssub.s32 %s12, 1
        // Predicated region
        $region13: #{custom_inception_v3_forward.2} parent=11 // pred_check
          %p142 = pneg %p59
        $region14: #{custom_inception_v3_forward.2} parent=11 // pred_check_branch
          %144 = sbr.rel (%p142) target = $region16
        $region15: #{custom_inception_v3_forward.2} parent=11 // pred_region
          %s146 = ssub.s32 288, 288
          %147 = vsyncadd [#allocation3], %s146
          %s148 = sshll.u32 [#allocation2], 4
          %s149 = int_to_ptr.vmem [resolvable:$true] %s148
          %154 = dma.hbm_to_vmem [thread:$0]  %s1, 288, %s149, [#allocation3], 32, 32, 2
        $region16: #{custom_inception_v3_forward.2} parent=11 // pred_fallthru
          _
        // Predicated region
        $region17: #{custom_inception_v3_forward.2} parent=11 // pred_check
          %p155 = pneg %p80
        $region18: #{custom_inception_v3_forward.2} parent=11 // pred_check_branch
          %157 = sbr.rel (%p155) target = $region20
        $region19: #{custom_inception_v3_forward.2} parent=11 // pred_region
          %s159 = ssub.s32 16, 16
          %160 = vsyncadd [#allocation5], %s159
          %s162 = sshll.u32 [#allocation4], 4
          %s163 = int_to_ptr.vmem [resolvable:$true] %s162
          %165 = dma.hbm_to_vmem [thread:$0]  %s2, 16, %s163, [#allocation5]
        $region20: #{custom_inception_v3_forward.2} parent=11 // pred_fallthru
          _
        // Predicated region
        $region21: #{custom_inception_v3_forward.2} parent=11 // pred_check
          %p166 = pneg %p101
        $region22: #{custom_inception_v3_forward.2} parent=11 // pred_check_branch
          %168 = sbr.rel (%p166) target = $region24
        $region23: #{custom_inception_v3_forward.2} parent=11 // pred_region
          %s170 = ssub.s32 16, 16
          %171 = vsyncadd [#allocation5], %s170
          %s173 = sshll.u32 [#allocation6], 4
          %s174 = int_to_ptr.vmem [resolvable:$true] %s173
          %176 = dma.hbm_to_vmem [thread:$0]  %s3, 16, %s174, [#allocation5]
        $region24: #{custom_inception_v3_forward.2} parent=11 // pred_fallthru
          _
      $region12: #{custom_inception_v3_forward.2} parent=5 // pred_fallthru
        _
      %p177 = scmp.lt.s32.totalorder %s12, 2
      // Predicated region
      $region25: #{custom_inception_v3_forward.2} parent=5 // pred_check
        %p178 = pneg %p177
      $region26: #{custom_inception_v3_forward.2} parent=5 // pred_check_branch
        %180 = sbr.rel (%p178) target = $region28
      $region27: #{custom_inception_v3_forward.2} parent=5 // pred_region
        // Predicated region
        $region29: #{custom_inception_v3_forward.2} parent=27 // pred_check
          %p181 = pneg %p32
        $region30: #{custom_inception_v3_forward.2} parent=27 // pred_check_branch
          %183 = sbr.rel (%p181) target = $region32
        $region31: #{custom_inception_v3_forward.2} parent=27 // pred_region
          %p184 = scmp.lt.s32.totalorder %s12, 1
          %s185 = scalar_select %p184, %s12, 1
          %s186 = smul.addr %s185, 54
          %s187 = smul.addr %s186, 4
          %s188 = scalar_lea.vmem %s0, %s187
        $region32: #{custom_inception_v3_forward.2} parent=27 // pred_fallthru
          _
      $region28: #{custom_inception_v3_forward.2} parent=5 // pred_fallthru
        _
      %p189 = scmp.le.s32.totalorder 1, %s12
      %p190 = scmp.lt.s32.totalorder %s12, 3
      %p191 = pnand %p189, %p190
      %p192 = pneg %p191
      // Predicated region
      $region33: #{custom_inception_v3_forward.2} parent=5 // pred_check
        _
      $region34: #{custom_inception_v3_forward.2} parent=5 // pred_check_branch
        %194 = sbr.rel (%p191) target = $region36
      $region35: #{custom_inception_v3_forward.2} parent=5 // pred_region
        %s195 = ssub.s32 %s12, 1
        // Predicated region
        $region37: #{custom_inception_v3_forward.2} parent=35 // pred_check
          %p196 = pneg %p59
        $region38: #{custom_inception_v3_forward.2} parent=35 // pred_check_branch
          %198 = sbr.rel (%p196) target = $region40
        $region39: #{custom_inception_v3_forward.2} parent=35 // pred_region
          %199 = dma.done [#allocation3], 288
        $region40: #{custom_inception_v3_forward.2} parent=35 // pred_fallthru
          _
        // Predicated region
        $region41: #{custom_inception_v3_forward.2} parent=35 // pred_check
          %p200 = pneg %p80
        $region42: #{custom_inception_v3_forward.2} parent=35 // pred_check_branch
          %202 = sbr.rel (%p200) target = $region44
        $region43: #{custom_inception_v3_forward.2} parent=35 // pred_region
          %203 = dma.done [#allocation5], 16
        $region44: #{custom_inception_v3_forward.2} parent=35 // pred_fallthru
          _
        // Predicated region
        $region45: #{custom_inception_v3_forward.2} parent=35 // pred_check
          %p204 = pneg %p101
        $region46: #{custom_inception_v3_forward.2} parent=35 // pred_check_branch
          %206 = sbr.rel (%p204) target = $region48
        $region47: #{custom_inception_v3_forward.2} parent=35 // pred_region
          %207 = dma.done [#allocation5], 16
        $region48: #{custom_inception_v3_forward.2} parent=35 // pred_fallthru
          _
        %p208 = scmp.lt.s32.totalorder %s17, 1
        %s209 = scalar_select %p208, %s17, 1
        %s210 = smul.addr %s209, 54
        %s211 = smul.addr %s210, 4
        %s212 = scalar_lea.vmem %s0, %s211
        %p213 = pneg %p38
        %p214 = pneg %p35
        %p215 = pneg %p59
        %p216 = pneg %p56
        %p217 = pneg %p80
        %p218 = pneg %p77
        %p219 = pneg %p101
        %p220 = pneg %p98
        %p221 = pneg %p127
        %p222 = pneg %p124
        %p223 = scmp.lt.s32.totalorder %s17, 1
        %s224 = scalar_select %p223, %s17, 1
        %s225 = scalar_lea.vmem %s4, %s224
        %p226 = scmp.lt.s32.totalorder %s17, 1
        %s227 = scalar_select %p226, %s17, 1
        %s228 = smul.addr %s227, 54
        %s229 = smul.addr %s228, 4
        %s230 = scalar_lea.vmem %s0, %s229
        %p231 = scmp.lt.s32.totalorder %s17, 1
        %s232 = scalar_select %p231, %s17, 1
        %s233 = scalar_lea.vmem %s4, %s232
        %v235 = vld [vmem:[%s230] sm:$0xf]
        %v236 = vld [vmem:[%s230 + $0x4] sm:$0xf]
        %v237 = vld [vmem:[%s230 + $0xc] sm:$0xf]
        %v238 = vld [vmem:[%s230 + $0x10] sm:$0xf]
        %v239 = vld [vmem:[%s230 + $0x18] sm:$0xf]
        %v240 = vld [vmem:[%s230 + $0x1c] sm:$0xf]
        %v241 = vld [vmem:[%s230 + $0x24] sm:$0xf]
        %v242 = vld [vmem:[%s230 + $0x28] sm:$0xf]
        %v243 = vld [vmem:[%s230 + $0x30] sm:$0xf]
        %v244 = vld [vmem:[%s230 + $0x34] sm:$0xf]
        %v245 = vld [vmem:[%s230 + $0x3c] sm:$0xf]
        %v246 = vld [vmem:[%s230 + $0x40] sm:$0xf]
        %v247 = vld [vmem:[%s230 + $0x48] sm:$0xf]
        %v248 = vld [vmem:[%s230 + $0x4c] sm:$0xf]
        %v249 = vld [vmem:[%s230 + $0x54] sm:$0xf]
        %v250 = vld [vmem:[%s230 + $0x58] sm:$0xf]
        %v251 = vld [vmem:[%s230 + $0x60] sm:$0xf]
        %v252 = vld [vmem:[%s230 + $0x64] sm:$0xf]
        %v253 = vld [vmem:[%s230 + $0x6c] sm:$0xf]
        %v254 = vld [vmem:[%s230 + $0x70] sm:$0xf]
        %v255 = vld [vmem:[%s230 + $0x78] sm:$0xf]
        %v256 = vld [vmem:[%s230 + $0x7c] sm:$0xf]
        %v257 = vld [vmem:[%s230 + $0x84] sm:$0xf]
        %v258 = vld [vmem:[%s230 + $0x88] sm:$0xf]
        %v259 = vld [vmem:[%s230 + $0x90] sm:$0xf]
        %v260 = vld [vmem:[%s230 + $0x94] sm:$0xf]
        %v261 = vld [vmem:[%s230 + $0x9c] sm:$0xf]
        %v262 = vld [vmem:[%s230 + $0xa0] sm:$0xf]
        %v263 = vld [vmem:[%s230 + $0xa8] sm:$0xf]
        %v264 = vld [vmem:[%s230 + $0xac] sm:$0xf]
        %v265 = vld [vmem:[%s230 + $0xb4] sm:$0xf]
        %v266 = vld [vmem:[%s230 + $0xb8] sm:$0xf]
        %v267 = vld [vmem:[#allocation2] sm:$0x3]
        %v268 = vld [vmem:[%s230 + $0x8] sm:$0x1]
        %v269 = vld [vmem:[%s230 + $0x14] sm:$0x1]
        %v270 = vld [vmem:[%s230 + $0x20] sm:$0x1]
        %v271 = vld [vmem:[%s230 + $0x2c] sm:$0x1]
        %v272 = vld [vmem:[%s230 + $0x38] sm:$0x1]
        %v273 = vld [vmem:[%s230 + $0x44] sm:$0x1]
        %v274 = vld [vmem:[%s230 + $0x50] sm:$0x1]
        %v275 = vld [vmem:[%s230 + $0x5c] sm:$0x1]
        %v276 = vld [vmem:[%s230 + $0x68] sm:$0x1]
        %v277 = vld [vmem:[%s230 + $0x74] sm:$0x1]
        %v278 = vld [vmem:[%s230 + $0x80] sm:$0x1]
        %v279 = vld [vmem:[%s230 + $0x8c] sm:$0x1]
        %v280 = vld [vmem:[%s230 + $0x98] sm:$0x1]
        %v281 = vld [vmem:[%s230 + $0xa4] sm:$0x1]
        %v282 = vld [vmem:[%s230 + $0xb0] sm:$0x1]
        %v283 = vld [vmem:[%s230 + $0xbc] sm:$0x1]
        %vm284 = vsmask.f32 3328
        %vm285 = vsmask.f32 7440
        %vm286 = vmor %vm284, %vm285
        %v288 = vshrl.u32 %v235, 16
        %v290 = vrot.slane %v288, 4
        %v291 = vshll.u32 %v235, 16
        %v293 = vrot.slane %v291, 5
        %v294 = vor.u32 %v290, %v293
        %v295 = vrot.slane %v294, 4
        %v297 = vshll.u32 %v236, 16
        %v299 = vrot.slane %v297, 5
        %v300 = vsel %vm286, %v295, %v299
        %v301 = vshrl.u32 %v236, 16
        %v303 = vrot.slane %v301, 4
        %v304 = vor.u32 %v303, %v299
        %v305 = vrot.slane %v304, 4
        %v307 = vshll.u32 %v268, 16
        %v309 = vrot.slane %v307, 5
        %v310 = vsel %vm286, %v305, %v309
        %v312 = vshrl.u32 %v237, 16
        %v314 = vrot.slane %v312, 4
        %v315 = vshll.u32 %v237, 16
        %v317 = vrot.slane %v315, 5
        %v318 = vor.u32 %v314, %v317
        %v319 = vrot.slane %v318, 4
        %v321 = vshll.u32 %v238, 16
        %v323 = vrot.slane %v321, 5
        %v324 = vsel %vm286, %v319, %v323
        %v325 = vshrl.u32 %v238, 16
        %v327 = vrot.slane %v325, 4
        %v328 = vor.u32 %v327, %v323
        %v329 = vrot.slane %v328, 4
        %v331 = vshll.u32 %v269, 16
        %v333 = vrot.slane %v331, 5
        %v334 = vsel %vm286, %v329, %v333
        %v336 = vshrl.u32 %v239, 16
        %v338 = vrot.slane %v336, 4
        %v339 = vshll.u32 %v239, 16
        %v341 = vrot.slane %v339, 5
        %v342 = vor.u32 %v338, %v341
        %v343 = vrot.slane %v342, 4
        %v345 = vshll.u32 %v240, 16
        %v347 = vrot.slane %v345, 5
        %v348 = vsel %vm286, %v343, %v347
        %v349 = vshrl.u32 %v240, 16
        %v351 = vrot.slane %v349, 4
        %v352 = vor.u32 %v351, %v347
        %v353 = vrot.slane %v352, 4
        %v355 = vshll.u32 %v270, 16
        %v357 = vrot.slane %v355, 5
        %v358 = vsel %vm286, %v353, %v357
        %v360 = vshrl.u32 %v241, 16
        %v362 = vrot.slane %v360, 4
        %v363 = vshll.u32 %v241, 16
        %v365 = vrot.slane %v363, 5
        %v366 = vor.u32 %v362, %v365
        %v367 = vrot.slane %v366, 4
        %v369 = vshll.u32 %v242, 16
        %v371 = vrot.slane %v369, 5
        %v372 = vsel %vm286, %v367, %v371
        %v373 = vshrl.u32 %v242, 16
        %v375 = vrot.slane %v373, 4
        %v376 = vor.u32 %v375, %v371
        %v377 = vrot.slane %v376, 4
        %v379 = vshll.u32 %v271, 16
        %v381 = vrot.slane %v379, 5
        %v382 = vsel %vm286, %v377, %v381
        %v384 = vshrl.u32 %v243, 16
        %v386 = vrot.slane %v384, 4
        %v387 = vshll.u32 %v243, 16
        %v389 = vrot.slane %v387, 5
        %v390 = vor.u32 %v386, %v389
        %v391 = vrot.slane %v390, 4
        %v393 = vshll.u32 %v244, 16
        %v395 = vrot.slane %v393, 5
        %v396 = vsel %vm286, %v391, %v395
        %v397 = vshrl.u32 %v244, 16
        %v399 = vrot.slane %v397, 4
        %v400 = vor.u32 %v399, %v395
        %v401 = vrot.slane %v400, 4
        %v403 = vshll.u32 %v272, 16
        %v405 = vrot.slane %v403, 5
        %v406 = vsel %vm286, %v401, %v405
        %v408 = vshrl.u32 %v245, 16
        %v410 = vrot.slane %v408, 4
        %v411 = vshll.u32 %v245, 16
        %v413 = vrot.slane %v411, 5
        %v414 = vor.u32 %v410, %v413
        %v415 = vrot.slane %v414, 4
        %v417 = vshll.u32 %v246, 16
        %v419 = vrot.slane %v417, 5
        %v420 = vsel %vm286, %v415, %v419
        %v421 = vshrl.u32 %v246, 16
        %v423 = vrot.slane %v421, 4
        %v424 = vor.u32 %v423, %v419
        %v425 = vrot.slane %v424, 4
        %v427 = vshll.u32 %v273, 16
        %v429 = vrot.slane %v427, 5
        %v430 = vsel %vm286, %v425, %v429
        %v432 = vshrl.u32 %v247, 16
        %v434 = vrot.slane %v432, 4
        %v435 = vshll.u32 %v247, 16
        %v437 = vrot.slane %v435, 5
        %v438 = vor.u32 %v434, %v437
        %v439 = vrot.slane %v438, 4
        %v441 = vshll.u32 %v248, 16
        %v443 = vrot.slane %v441, 5
        %v444 = vsel %vm286, %v439, %v443
        %v445 = vshrl.u32 %v248, 16
        %v447 = vrot.slane %v445, 4
        %v448 = vor.u32 %v447, %v443
        %v449 = vrot.slane %v448, 4
        %v451 = vshll.u32 %v274, 16
        %v453 = vrot.slane %v451, 5
        %v454 = vsel %vm286, %v449, %v453
        %v456 = vshrl.u32 %v249, 16
        %v458 = vrot.slane %v456, 4
        %v459 = vshll.u32 %v249, 16
        %v461 = vrot.slane %v459, 5
        %v462 = vor.u32 %v458, %v461
        %v463 = vrot.slane %v462, 4
        %v465 = vshll.u32 %v250, 16
        %v467 = vrot.slane %v465, 5
        %v468 = vsel %vm286, %v463, %v467
        %v469 = vshrl.u32 %v250, 16
        %v471 = vrot.slane %v469, 4
        %v472 = vor.u32 %v471, %v467
        %v473 = vrot.slane %v472, 4
        %v475 = vshll.u32 %v275, 16
        %v477 = vrot.slane %v475, 5
        %v478 = vsel %vm286, %v473, %v477
        %v480 = vshrl.u32 %v251, 16
        %v482 = vrot.slane %v480, 4
        %v483 = vshll.u32 %v251, 16
        %v485 = vrot.slane %v483, 5
        %v486 = vor.u32 %v482, %v485
        %v487 = vrot.slane %v486, 4
        %v489 = vshll.u32 %v252, 16
        %v491 = vrot.slane %v489, 5
        %v492 = vsel %vm286, %v487, %v491
        %v493 = vshrl.u32 %v252, 16
        %v495 = vrot.slane %v493, 4
        %v496 = vor.u32 %v495, %v491
        %v497 = vrot.slane %v496, 4
        %v499 = vshll.u32 %v276, 16
        %v501 = vrot.slane %v499, 5
        %v502 = vsel %vm286, %v497, %v501
        %v504 = vshrl.u32 %v253, 16
        %v506 = vrot.slane %v504, 4
        %v507 = vshll.u32 %v253, 16
        %v509 = vrot.slane %v507, 5
        %v510 = vor.u32 %v506, %v509
        %v511 = vrot.slane %v510, 4
        %v513 = vshll.u32 %v254, 16
        %v515 = vrot.slane %v513, 5
        %v516 = vsel %vm286, %v511, %v515
        %v517 = vshrl.u32 %v254, 16
        %v519 = vrot.slane %v517, 4
        %v520 = vor.u32 %v519, %v515
        %v521 = vrot.slane %v520, 4
        %v523 = vshll.u32 %v277, 16
        %v525 = vrot.slane %v523, 5
        %v526 = vsel %vm286, %v521, %v525
        %v528 = vshrl.u32 %v255, 16
        %v530 = vrot.slane %v528, 4
        %v531 = vshll.u32 %v255, 16
        %v533 = vrot.slane %v531, 5
        %v534 = vor.u32 %v530, %v533
        %v535 = vrot.slane %v534, 4
        %v537 = vshll.u32 %v256, 16
        %v539 = vrot.slane %v537, 5
        %v540 = vsel %vm286, %v535, %v539
        %v541 = vshrl.u32 %v256, 16
        %v543 = vrot.slane %v541, 4
        %v544 = vor.u32 %v543, %v539
        %v545 = vrot.slane %v544, 4
        %v547 = vshll.u32 %v278, 16
        %v549 = vrot.slane %v547, 5
        %v550 = vsel %vm286, %v545, %v549
        %v552 = vshrl.u32 %v257, 16
        %v554 = vrot.slane %v552, 4
        %v555 = vshll.u32 %v257, 16
        %v557 = vrot.slane %v555, 5
        %v558 = vor.u32 %v554, %v557
        %v559 = vrot.slane %v558, 4
        %v561 = vshll.u32 %v258, 16
        %v563 = vrot.slane %v561, 5
        %v564 = vsel %vm286, %v559, %v563
        %v565 = vshrl.u32 %v258, 16
        %v567 = vrot.slane %v565, 4
        %v568 = vor.u32 %v567, %v563
        %v569 = vrot.slane %v568, 4
        %v571 = vshll.u32 %v279, 16
        %v573 = vrot.slane %v571, 5
        %v574 = vsel %vm286, %v569, %v573
        %v576 = vshrl.u32 %v259, 16
        %v578 = vrot.slane %v576, 4
        %v579 = vshll.u32 %v259, 16
        %v581 = vrot.slane %v579, 5
        %v582 = vor.u32 %v578, %v581
        %v583 = vrot.slane %v582, 4
        %v585 = vshll.u32 %v260, 16
        %v587 = vrot.slane %v585, 5
        %v588 = vsel %vm286, %v583, %v587
        %v589 = vshrl.u32 %v260, 16
        %v591 = vrot.slane %v589, 4
        %v592 = vor.u32 %v591, %v587
        %v593 = vrot.slane %v592, 4
        %v595 = vshll.u32 %v280, 16
        %v597 = vrot.slane %v595, 5
        %v598 = vsel %vm286, %v593, %v597
        %v600 = vshrl.u32 %v261, 16
        %v602 = vrot.slane %v600, 4
        %v603 = vshll.u32 %v261, 16
        %v605 = vrot.slane %v603, 5
        %v606 = vor.u32 %v602, %v605
        %v607 = vrot.slane %v606, 4
        %v609 = vshll.u32 %v262, 16
        %v611 = vrot.slane %v609, 5
        %v612 = vsel %vm286, %v607, %v611
        %v613 = vshrl.u32 %v262, 16
        %v615 = vrot.slane %v613, 4
        %v616 = vor.u32 %v615, %v611
        %v617 = vrot.slane %v616, 4
        %v619 = vshll.u32 %v281, 16
        %v621 = vrot.slane %v619, 5
        %v622 = vsel %vm286, %v617, %v621
        %v624 = vshrl.u32 %v263, 16
        %v626 = vrot.slane %v624, 4
        %v627 = vshll.u32 %v263, 16
        %v629 = vrot.slane %v627, 5
        %v630 = vor.u32 %v626, %v629
        %v631 = vrot.slane %v630, 4
        %v633 = vshll.u32 %v264, 16
        %v635 = vrot.slane %v633, 5
        %v636 = vsel %vm286, %v631, %v635
        %v637 = vshrl.u32 %v264, 16
        %v639 = vrot.slane %v637, 4
        %v640 = vor.u32 %v639, %v635
        %v641 = vrot.slane %v640, 4
        %v643 = vshll.u32 %v282, 16
        %v645 = vrot.slane %v643, 5
        %v646 = vsel %vm286, %v641, %v645
        %v648 = vshrl.u32 %v265, 16
        %v650 = vrot.slane %v648, 4
        %v651 = vshll.u32 %v265, 16
        %v653 = vrot.slane %v651, 5
        %v654 = vor.u32 %v650, %v653
        %v655 = vrot.slane %v654, 4
        %v657 = vshll.u32 %v266, 16
        %v659 = vrot.slane %v657, 5
        %v660 = vsel %vm286, %v655, %v659
        %v661 = vshrl.u32 %v266, 16
        %v663 = vrot.slane %v661, 4
        %v664 = vor.u32 %v663, %v659
        %v665 = vrot.slane %v664, 4
        %v667 = vshll.u32 %v283, 16
        %v669 = vrot.slane %v667, 5
        %v670 = vsel %vm286, %v665, %v669
        %s671 = scalar_lea.vmem [#allocation2], 2
        %v672 = vld [vmem:[%s671] sm:$0x3]
        %v673 = vunpack.c.l.b16 %v300
        %v674 = vunpack.c.l.b16 %v310
        %v675 = vunpack.c.l.b16 %v324
        %v676 = vunpack.c.l.b16 %v334
        %v677 = vunpack.c.l.b16 %v348
        %v678 = vunpack.c.l.b16 %v358
        %v679 = vunpack.c.l.b16 %v372
        %v680 = vunpack.c.l.b16 %v382
        %v681 = vunpack.c.l.b16 %v396
        %v682 = vunpack.c.l.b16 %v406
        %v683 = vunpack.c.l.b16 %v420
        %v684 = vunpack.c.l.b16 %v430
        %v685 = vunpack.c.l.b16 %v444
        %v686 = vunpack.c.l.b16 %v454
        %v687 = vunpack.c.l.b16 %v468
        %v688 = vunpack.c.l.b16 %v478
        %v689 = vunpack.c.l.b16 %v492
        %v690 = vunpack.c.l.b16 %v502
        %v691 = vunpack.c.l.b16 %v516
        %v692 = vunpack.c.l.b16 %v526
        %v693 = vunpack.c.l.b16 %v540
        %v694 = vunpack.c.l.b16 %v550
        %v695 = vunpack.c.l.b16 %v564
        %v696 = vunpack.c.l.b16 %v574
        %v697 = vunpack.c.l.b16 %v588
        %v698 = vunpack.c.l.b16 %v598
        %v699 = vunpack.c.l.b16 %v612
        %v700 = vunpack.c.l.b16 %v622
        %v701 = vunpack.c.l.b16 %v636
        %v702 = vunpack.c.l.b16 %v646
        %v703 = vunpack.c.l.b16 %v660
        %v704 = vunpack.c.l.b16 %v670
        %v705 = vpack.c.b16 %v674, %v673
        %v706 = vpack.c.b16 %v676, %v675
        %v707 = vpack.c.b16 %v678, %v677
        %v708 = vpack.c.b16 %v680, %v679
        %v709 = vpack.c.b16 %v682, %v681
        %v710 = vpack.c.b16 %v684, %v683
        %v711 = vpack.c.b16 %v686, %v685
        %v712 = vpack.c.b16 %v688, %v687
        %v713 = vpack.c.b16 %v690, %v689
        %v714 = vpack.c.b16 %v692, %v691
        %v715 = vpack.c.b16 %v694, %v693
        %v716 = vpack.c.b16 %v696, %v695
        %v717 = vpack.c.b16 %v698, %v697
        %v718 = vpack.c.b16 %v700, %v699
        %v719 = vpack.c.b16 %v702, %v701
        %v720 = vpack.c.b16 %v704, %v703
        %vm721 = vcmask 31744
        %v723 = vsel %vm721, %v705, 0
        %v726 = vsel %vm721, %v706, 0
        %v729 = vsel %vm721, %v707, 0
        %v732 = vsel %vm721, %v708, 0
        %v735 = vsel %vm721, %v709, 0
        %v738 = vsel %vm721, %v710, 0
        %v741 = vsel %vm721, %v711, 0
        %v744 = vsel %vm721, %v712, 0
        %v747 = vsel %vm721, %v713, 0
        %v750 = vsel %vm721, %v714, 0
        %v753 = vsel %vm721, %v715, 0
        %v756 = vsel %vm721, %v716, 0
        %v759 = vsel %vm721, %v717, 0
        %v762 = vsel %vm721, %v718, 0
        %v765 = vsel %vm721, %v719, 0
        %v768 = vsel %vm721, %v720, 0
        %vm770 = vcmask 1041408
        %v772 = vsel %vm770, %v672, 0
        %774 = vmatprep.subr.bf16.mxu0 0
        %775 = vmatpush1.bf16.msra.mxu0 %v772
        %776 = vmatprep.subr.bf16.mxu0 0
        %777 = vmatpush1.bf16.msra.mxu0 0
        %778 = vmatprep.subr.bf16.mxu0 0
        %779 = vmatpush1.bf16.msra.mxu0 0
        %780 = vmatprep.subr.bf16.mxu0 0
        %781 = vmatpush1.bf16.msra.mxu0 0
        %782 = vmatprep.subr.bf16.mxu0 0
        %783 = vmatpush1.bf16.msra.mxu0 0
        %784 = vmatprep.subr.bf16.mxu0 0
        %785 = vmatpush1.bf16.msra.mxu0 0
        %786 = vmatprep.subr.bf16.mxu0 0
        %787 = vmatpush1.bf16.msra.mxu0 0
        %788 = vmatprep.subr.bf16.mxu0 0
        %789 = vmatpush1.bf16.msra.mxu0 0
        %790 = vmatprep.subr.bf16.mxu0 0
        %791 = vmatpush1.bf16.msra.mxu0 0
        %792 = vmatprep.subr.bf16.mxu0 0
        %793 = vmatpush1.bf16.msra.mxu0 0
        %794 = vmatprep.subr.bf16.mxu0 0
        %795 = vmatpush1.bf16.msra.mxu0 0
        %796 = vmatprep.subr.bf16.mxu0 0
        %797 = vmatpush1.bf16.msra.mxu0 0
        %798 = vmatprep.subr.bf16.mxu0 0
        %799 = vmatpush1.bf16.msra.mxu0 0
        %800 = vmatprep.subr.bf16.mxu0 0
        %801 = vmatpush1.bf16.msra.mxu0 0
        %802 = vmatprep.subr.bf16.mxu0 0
        %803 = vmatpush1.bf16.msra.mxu0 0
        %804 = vmatprep.subr.bf16.mxu0 0
        %805 = vmatpush1.bf16.msra.mxu0 0
        %806 = vmatprep.mubr.bf16.mxu0 0
        %807 = vmatmul.mubr.bf16.gmra.mrb[0].mxu0 %v723
        %v808 = vpop.f32.mrb[0].mxu0
        %v809 = vadd.f32 0.0, %v808
        %v810 = vpop.f32.mrb[0].mxu0
        %v811 = vpop.f32.mrb[0].mxu0
        %v812 = vadd.f32 0.0, %v811
        %v813 = vpop.f32.mrb[0].mxu0
        %814 = vmatprep.mubr.bf16.mxu0 0
        %815 = vmatmul.mubr.bf16.gmra.mrb[0].mxu0 %v726
        %v816 = vpop.f32.mrb[0].mxu0
        %v817 = vadd.f32 0.0, %v816
        %v818 = vpop.f32.mrb[0].mxu0
        %v819 = vpop.f32.mrb[0].mxu0
        %v820 = vadd.f32 0.0, %v819
        %v821 = vpop.f32.mrb[0].mxu0
        %822 = vmatprep.mubr.bf16.mxu0 0
        %823 = vmatmul.mubr.bf16.gmra.mrb[0].mxu0 %v729
        %v824 = vpop.f32.mrb[0].mxu0
        %v825 = vadd.f32 0.0, %v824
        %v826 = vpop.f32.mrb[0].mxu0
        %v827 = vpop.f32.mrb[0].mxu0
        %v828 = vadd.f32 0.0, %v827
        %v829 = vpop.f32.mrb[0].mxu0
        %830 = vmatprep.mubr.bf16.mxu0 0
        %831 = vmatmul.mubr.bf16.gmra.mrb[0].mxu0 %v732
        %v832 = vpop.f32.mrb[0].mxu0
        %v833 = vadd.f32 0.0, %v832
        %v834 = vpop.f32.mrb[0].mxu0
        %v835 = vpop.f32.mrb[0].mxu0
        %v836 = vadd.f32 0.0, %v835
        %v837 = vpop.f32.mrb[0].mxu0
        %838 = vmatprep.mubr.bf16.mxu0 0
        %839 = vmatmul.mubr.bf16.gmra.mrb[0].mxu0 %v735
        %v840 = vpop.f32.mrb[0].mxu0
        %v841 = vadd.f32 0.0, %v840
        %v842 = vpop.f32.mrb[0].mxu0
        %v843 = vpop.f32.mrb[0].mxu0
        %v844 = vadd.f32 0.0, %v843
        %v845 = vpop.f32.mrb[0].mxu0
        %846 = vmatprep.mubr.bf16.mxu0 0
        %847 = vmatmul.mubr.bf16.gmra.mrb[0].mxu0 %v738
        %v848 = vpop.f32.mrb[0].mxu0
        %v849 = vadd.f32 0.0, %v848
        %v850 = vpop.f32.mrb[0].mxu0
        %v851 = vpop.f32.mrb[0].mxu0
        %v852 = vadd.f32 0.0, %v851
        %v853 = vpop.f32.mrb[0].mxu0
        %854 = vmatprep.mubr.bf16.mxu0 0
        %855 = vmatmul.mubr.bf16.gmra.mrb[0].mxu0 %v741
        %v856 = vpop.f32.mrb[0].mxu0
        %v857 = vadd.f32 0.0, %v856
        %v858 = vpop.f32.mrb[0].mxu0
        %v859 = vpop.f32.mrb[0].mxu0
        %v860 = vadd.f32 0.0, %v859
        %v861 = vpop.f32.mrb[0].mxu0
        %862 = vmatprep.mubr.bf16.mxu0 0
        %863 = vmatmul.mubr.bf16.gmra.mrb[0].mxu0 %v744
        %v864 = vpop.f32.mrb[0].mxu0
        %v865 = vadd.f32 0.0, %v864
        %v866 = vpop.f32.mrb[0].mxu0
        %v867 = vpop.f32.mrb[0].mxu0
        %v868 = vadd.f32 0.0, %v867
        %v869 = vpop.f32.mrb[0].mxu0
        %870 = vmatprep.mubr.bf16.mxu0 0
        %871 = vmatmul.mubr.bf16.gmra.mrb[0].mxu0 %v747
        %v872 = vpop.f32.mrb[0].mxu0
        %v873 = vadd.f32 0.0, %v872
        %v874 = vpop.f32.mrb[0].mxu0
        %v875 = vpop.f32.mrb[0].mxu0
        %v876 = vadd.f32 0.0, %v875
        %v877 = vpop.f32.mrb[0].mxu0
        %878 = vmatprep.mubr.bf16.mxu0 0
        %879 = vmatmul.mubr.bf16.gmra.mrb[0].mxu0 %v750
        %v880 = vpop.f32.mrb[0].mxu0
        %v881 = vadd.f32 0.0, %v880
        %v882 = vpop.f32.mrb[0].mxu0
        %v883 = vpop.f32.mrb[0].mxu0
        %v884 = vadd.f32 0.0, %v883
        %v885 = vpop.f32.mrb[0].mxu0
        %886 = vmatprep.mubr.bf16.mxu0 0
        %887 = vmatmul.mubr.bf16.gmra.mrb[0].mxu0 %v753
        %v888 = vpop.f32.mrb[0].mxu0
        %v889 = vadd.f32 0.0, %v888
        %v890 = vpop.f32.mrb[0].mxu0
        %v891 = vpop.f32.mrb[0].mxu0
        %v892 = vadd.f32 0.0, %v891
        %v893 = vpop.f32.mrb[0].mxu0
        %894 = vmatprep.mubr.bf16.mxu0 0
        %895 = vmatmul.mubr.bf16.gmra.mrb[0].mxu0 %v756
        %v896 = vpop.f32.mrb[0].mxu0
        %v897 = vadd.f32 0.0, %v896
        %v898 = vpop.f32.mrb[0].mxu0
        %v899 = vpop.f32.mrb[0].mxu0
        %v900 = vadd.f32 0.0, %v899
        %v901 = vpop.f32.mrb[0].mxu0
        %902 = vmatprep.mubr.bf16.mxu0 0
        %903 = vmatmul.mubr.bf16.gmra.mrb[0].mxu0 %v759
        %v904 = vpop.f32.mrb[0].mxu0
        %v905 = vadd.f32 0.0, %v904
        %v906 = vpop.f32.mrb[0].mxu0
        %v907 = vpop.f32.mrb[0].mxu0
        %v908 = vadd.f32 0.0, %v907
        %v909 = vpop.f32.mrb[0].mxu0
        %910 = vmatprep.mubr.bf16.mxu0 0
        %911 = vmatmul.mubr.bf16.gmra.mrb[0].mxu0 %v762
        %v912 = vpop.f32.mrb[0].mxu0
        %v913 = vadd.f32 0.0, %v912
        %v914 = vpop.f32.mrb[0].mxu0
        %v915 = vpop.f32.mrb[0].mxu0
        %v916 = vadd.f32 0.0, %v915
        %v917 = vpop.f32.mrb[0].mxu0
        %918 = vmatprep.mubr.bf16.mxu0 0
        %919 = vmatmul.mubr.bf16.gmra.mrb[0].mxu0 %v765
        %v920 = vpop.f32.mrb[0].mxu0
        %v921 = vadd.f32 0.0, %v920
        %v922 = vpop.f32.mrb[0].mxu0
        %v923 = vpop.f32.mrb[0].mxu0
        %v924 = vadd.f32 0.0, %v923
        %v925 = vpop.f32.mrb[0].mxu0
        %926 = vmatprep.mubr.bf16.mxu0 0
        %927 = vmatmul.mubr.bf16.gmra.mrb[0].mxu0 %v768
        %v928 = vpop.f32.mrb[0].mxu0
        %v929 = vadd.f32 0.0, %v928
        %v930 = vpop.f32.mrb[0].mxu0
        %v931 = vpop.f32.mrb[0].mxu0
        %v932 = vadd.f32 0.0, %v931
        %v933 = vpop.f32.mrb[0].mxu0
        %934 = vdwg.mxu0
        %v967 = vunpack.c.l.b16 %v235
        %v968 = vunpack.c.l.b16 %v236
        %v969 = vunpack.c.l.b16 %v237
        %v970 = vunpack.c.l.b16 %v238
        %v971 = vunpack.c.l.b16 %v239
        %v972 = vunpack.c.l.b16 %v240
        %v973 = vunpack.c.l.b16 %v241
        %v974 = vunpack.c.l.b16 %v242
        %v975 = vunpack.c.l.b16 %v243
        %v976 = vunpack.c.l.b16 %v244
        %v977 = vunpack.c.l.b16 %v245
        %v978 = vunpack.c.l.b16 %v246
        %v979 = vunpack.c.l.b16 %v247
        %v980 = vunpack.c.l.b16 %v248
        %v981 = vunpack.c.l.b16 %v249
        %v982 = vunpack.c.l.b16 %v250
        %v983 = vunpack.c.l.b16 %v251
        %v984 = vunpack.c.l.b16 %v252
        %v985 = vunpack.c.l.b16 %v253
        %v986 = vunpack.c.l.b16 %v254
        %v987 = vunpack.c.l.b16 %v255
        %v988 = vunpack.c.l.b16 %v256
        %v989 = vunpack.c.l.b16 %v257
        %v990 = vunpack.c.l.b16 %v258
        %v991 = vunpack.c.l.b16 %v259
        %v992 = vunpack.c.l.b16 %v260
        %v993 = vunpack.c.l.b16 %v261
        %v994 = vunpack.c.l.b16 %v262
        %v995 = vunpack.c.l.b16 %v263
        %v996 = vunpack.c.l.b16 %v264
        %v997 = vunpack.c.l.b16 %v265
        %v998 = vunpack.c.l.b16 %v266
        %v999 = vpack.c.b16 %v968, %v967
        %v1000 = vpack.c.b16 %v970, %v969
        %v1001 = vpack.c.b16 %v972, %v971
        %v1002 = vpack.c.b16 %v974, %v973
        %v1003 = vpack.c.b16 %v976, %v975
        %v1004 = vpack.c.b16 %v978, %v977
        %v1005 = vpack.c.b16 %v980, %v979
        %v1006 = vpack.c.b16 %v982, %v981
        %v1007 = vpack.c.b16 %v984, %v983
        %v1008 = vpack.c.b16 %v986, %v985
        %v1009 = vpack.c.b16 %v988, %v987
        %v1010 = vpack.c.b16 %v990, %v989
        %v1011 = vpack.c.b16 %v992, %v991
        %v1012 = vpack.c.b16 %v994, %v993
        %v1013 = vpack.c.b16 %v996, %v995
        %v1014 = vpack.c.b16 %v998, %v997
        %v1016 = vsel %vm721, %v999, 0
        %v1019 = vsel %vm721, %v1000, 0
        %v1022 = vsel %vm721, %v1001, 0
        %v1025 = vsel %vm721, %v1002, 0
        %v1028 = vsel %vm721, %v1003, 0
        %v1031 = vsel %vm721, %v1004, 0
        %v1034 = vsel %vm721, %v1005, 0
        %v1037 = vsel %vm721, %v1006, 0
        %v1040 = vsel %vm721, %v1007, 0
        %v1043 = vsel %vm721, %v1008, 0
        %v1046 = vsel %vm721, %v1009, 0
        %v1049 = vsel %vm721, %v1010, 0
        %v1052 = vsel %vm721, %v1011, 0
        %v1055 = vsel %vm721, %v1012, 0
        %v1058 = vsel %vm721, %v1013, 0
        %v1061 = vsel %vm721, %v1014, 0
        %v1064 = vsel %vm770, %v267, 0
        %1066 = vmatprep.subr.bf16.mxu0 0
        %1067 = vmatpush1.bf16.msra.mxu0 %v1064
        %1068 = vmatprep.subr.bf16.mxu0 0
        %1069 = vmatpush1.bf16.msra.mxu0 0
        %1070 = vmatprep.subr.bf16.mxu0 0
        %1071 = vmatpush1.bf16.msra.mxu0 0
        %1072 = vmatprep.subr.bf16.mxu0 0
        %1073 = vmatpush1.bf16.msra.mxu0 0
        %1074 = vmatprep.subr.bf16.mxu0 0
        %1075 = vmatpush1.bf16.msra.mxu0 0
        %1076 = vmatprep.subr.bf16.mxu0 0
        %1077 = vmatpush1.bf16.msra.mxu0 0
        %1078 = vmatprep.subr.bf16.mxu0 0
        %1079 = vmatpush1.bf16.msra.mxu0 0
        %1080 = vmatprep.subr.bf16.mxu0 0
        %1081 = vmatpush1.bf16.msra.mxu0 0
        %1082 = vmatprep.subr.bf16.mxu0 0
        %1083 = vmatpush1.bf16.msra.mxu0 0
        %1084 = vmatprep.subr.bf16.mxu0 0
        %1085 = vmatpush1.bf16.msra.mxu0 0
        %1086 = vmatprep.subr.bf16.mxu0 0
        %1087 = vmatpush1.bf16.msra.mxu0 0
        %1088 = vmatprep.subr.bf16.mxu0 0
        %1089 = vmatpush1.bf16.msra.mxu0 0
        %1090 = vmatprep.subr.bf16.mxu0 0
        %1091 = vmatpush1.bf16.msra.mxu0 0
        %1092 = vmatprep.subr.bf16.mxu0 0
        %1093 = vmatpush1.bf16.msra.mxu0 0
        %1094 = vmatprep.subr.bf16.mxu0 0
        %1095 = vmatpush1.bf16.msra.mxu0 0
        %1096 = vmatprep.subr.bf16.mxu0 0
        %1097 = vmatpush1.bf16.msra.mxu0 0
        %1098 = vmatprep.mubr.bf16.mxu0 0
        %1099 = vmatmul.mubr.bf16.gmra.mrb[0].mxu0 %v1016
        %v1100 = vpop.f32.mrb[0].mxu0
        %v1101 = vadd.f32 %v809, %v1100
        %v1102 = vpop.f32.mrb[0].mxu0
        %v1103 = vpop.f32.mrb[0].mxu0
        %v1104 = vadd.f32 %v812, %v1103
        %v1105 = vpop.f32.mrb[0].mxu0
        %1106 = vmatprep.mubr.bf16.mxu0 0
        %1107 = vmatmul.mubr.bf16.gmra.mrb[0].mxu0 %v1019
        %v1108 = vpop.f32.mrb[0].mxu0
        %v1109 = vadd.f32 %v817, %v1108
        %v1110 = vpop.f32.mrb[0].mxu0
        %v1111 = vpop.f32.mrb[0].mxu0
        %v1112 = vadd.f32 %v820, %v1111
        %v1113 = vpop.f32.mrb[0].mxu0
        %1114 = vmatprep.mubr.bf16.mxu0 0
        %1115 = vmatmul.mubr.bf16.gmra.mrb[0].mxu0 %v1022
        %v1116 = vpop.f32.mrb[0].mxu0
        %v1117 = vadd.f32 %v825, %v1116
        %v1118 = vpop.f32.mrb[0].mxu0
        %v1119 = vpop.f32.mrb[0].mxu0
        %v1120 = vadd.f32 %v828, %v1119
        %v1121 = vpop.f32.mrb[0].mxu0
        %1122 = vmatprep.mubr.bf16.mxu0 0
        %1123 = vmatmul.mubr.bf16.gmra.mrb[0].mxu0 %v1025
        %v1124 = vpop.f32.mrb[0].mxu0
        %v1125 = vadd.f32 %v833, %v1124
        %v1126 = vpop.f32.mrb[0].mxu0
        %v1127 = vpop.f32.mrb[0].mxu0
        %v1128 = vadd.f32 %v836, %v1127
        %v1129 = vpop.f32.mrb[0].mxu0
        %1130 = vmatprep.mubr.bf16.mxu0 0
        %1131 = vmatmul.mubr.bf16.gmra.mrb[0].mxu0 %v1028
        %v1132 = vpop.f32.mrb[0].mxu0
        %v1133 = vadd.f32 %v841, %v1132
        %v1134 = vpop.f32.mrb[0].mxu0
        %v1135 = vpop.f32.mrb[0].mxu0
        %v1136 = vadd.f32 %v844, %v1135
        %v1137 = vpop.f32.mrb[0].mxu0
        %1138 = vmatprep.mubr.bf16.mxu0 0
        %1139 = vmatmul.mubr.bf16.gmra.mrb[0].mxu0 %v1031
        %v1140 = vpop.f32.mrb[0].mxu0
        %v1141 = vadd.f32 %v849, %v1140
        %v1142 = vpop.f32.mrb[0].mxu0
        %v1143 = vpop.f32.mrb[0].mxu0
        %v1144 = vadd.f32 %v852, %v1143
        %v1145 = vpop.f32.mrb[0].mxu0
        %1146 = vmatprep.mubr.bf16.mxu0 0
        %1147 = vmatmul.mubr.bf16.gmra.mrb[0].mxu0 %v1034
        %v1148 = vpop.f32.mrb[0].mxu0
        %v1149 = vadd.f32 %v857, %v1148
        %v1150 = vpop.f32.mrb[0].mxu0
        %v1151 = vpop.f32.mrb[0].mxu0
        %v1152 = vadd.f32 %v860, %v1151
        %v1153 = vpop.f32.mrb[0].mxu0
        %1154 = vmatprep.mubr.bf16.mxu0 0
        %1155 = vmatmul.mubr.bf16.gmra.mrb[0].mxu0 %v1037
        %v1156 = vpop.f32.mrb[0].mxu0
        %v1157 = vadd.f32 %v865, %v1156
        %v1158 = vpop.f32.mrb[0].mxu0
        %v1159 = vpop.f32.mrb[0].mxu0
        %v1160 = vadd.f32 %v868, %v1159
        %v1161 = vpop.f32.mrb[0].mxu0
        %1162 = vmatprep.mubr.bf16.mxu0 0
        %1163 = vmatmul.mubr.bf16.gmra.mrb[0].mxu0 %v1040
        %v1164 = vpop.f32.mrb[0].mxu0
        %v1165 = vadd.f32 %v873, %v1164
        %v1166 = vpop.f32.mrb[0].mxu0
        %v1167 = vpop.f32.mrb[0].mxu0
        %v1168 = vadd.f32 %v876, %v1167
        %v1169 = vpop.f32.mrb[0].mxu0
        %1170 = vmatprep.mubr.bf16.mxu0 0
        %1171 = vmatmul.mubr.bf16.gmra.mrb[0].mxu0 %v1043
        %v1172 = vpop.f32.mrb[0].mxu0
        %v1173 = vadd.f32 %v881, %v1172
        %v1174 = vpop.f32.mrb[0].mxu0
        %v1175 = vpop.f32.mrb[0].mxu0
        %v1176 = vadd.f32 %v884, %v1175
        %v1177 = vpop.f32.mrb[0].mxu0
        %1178 = vmatprep.mubr.bf16.mxu0 0
        %1179 = vmatmul.mubr.bf16.gmra.mrb[0].mxu0 %v1046
        %v1180 = vpop.f32.mrb[0].mxu0
        %v1181 = vadd.f32 %v889, %v1180
        %v1182 = vpop.f32.mrb[0].mxu0
        %v1183 = vpop.f32.mrb[0].mxu0
        %v1184 = vadd.f32 %v892, %v1183
        %v1185 = vpop.f32.mrb[0].mxu0
        %1186 = vmatprep.mubr.bf16.mxu0 0
        %1187 = vmatmul.mubr.bf16.gmra.mrb[0].mxu0 %v1049
        %v1188 = vpop.f32.mrb[0].mxu0
        %v1189 = vadd.f32 %v897, %v1188
        %v1190 = vpop.f32.mrb[0].mxu0
        %v1191 = vpop.f32.mrb[0].mxu0
        %v1192 = vadd.f32 %v900, %v1191
        %v1193 = vpop.f32.mrb[0].mxu0
        %1194 = vmatprep.mubr.bf16.mxu0 0
        %1195 = vmatmul.mubr.bf16.gmra.mrb[0].mxu0 %v1052
        %v1196 = vpop.f32.mrb[0].mxu0
        %v1197 = vadd.f32 %v905, %v1196
        %v1198 = vpop.f32.mrb[0].mxu0
        %v1199 = vpop.f32.mrb[0].mxu0
        %v1200 = vadd.f32 %v908, %v1199
        %v1201 = vpop.f32.mrb[0].mxu0
        %1202 = vmatprep.mubr.bf16.mxu0 0
        %1203 = vmatmul.mubr.bf16.gmra.mrb[0].mxu0 %v1055
        %v1204 = vpop.f32.mrb[0].mxu0
        %v1205 = vadd.f32 %v913, %v1204
        %v1206 = vpop.f32.mrb[0].mxu0
        %v1207 = vpop.f32.mrb[0].mxu0
        %v1208 = vadd.f32 %v916, %v1207
        %v1209 = vpop.f32.mrb[0].mxu0
        %1210 = vmatprep.mubr.bf16.mxu0 0
        %1211 = vmatmul.mubr.bf16.gmra.mrb[0].mxu0 %v1058
        %v1212 = vpop.f32.mrb[0].mxu0
        %v1213 = vadd.f32 %v921, %v1212
        %v1214 = vpop.f32.mrb[0].mxu0
        %v1215 = vpop.f32.mrb[0].mxu0
        %v1216 = vadd.f32 %v924, %v1215
        %v1217 = vpop.f32.mrb[0].mxu0
        %1218 = vmatprep.mubr.bf16.mxu0 0
        %1219 = vmatmul.mubr.bf16.gmra.mrb[0].mxu0 %v1061
        %v1220 = vpop.f32.mrb[0].mxu0
        %v1221 = vadd.f32 %v929, %v1220
        %v1222 = vpop.f32.mrb[0].mxu0
        %v1223 = vpop.f32.mrb[0].mxu0
        %v1224 = vadd.f32 %v932, %v1223
        %v1225 = vpop.f32.mrb[0].mxu0
        %1226 = vdwg.mxu0
        %v1227 = vld [vmem:[%s230] sm:$0xe]
        %v1228 = vld [vmem:[%s230 + $0xc] sm:$0xe]
        %v1229 = vld [vmem:[%s230 + $0x18] sm:$0xe]
        %v1230 = vld [vmem:[%s230 + $0x24] sm:$0xe]
        %v1231 = vld [vmem:[%s230 + $0x30] sm:$0xe]
        %v1232 = vld [vmem:[%s230 + $0x3c] sm:$0xe]
        %v1233 = vld [vmem:[%s230 + $0x48] sm:$0xe]
        %v1234 = vld [vmem:[%s230 + $0x54] sm:$0xe]
        %v1235 = vld [vmem:[%s230 + $0x60] sm:$0xe]
        %v1236 = vld [vmem:[%s230 + $0x6c] sm:$0xe]
        %v1237 = vld [vmem:[%s230 + $0x78] sm:$0xe]
        %v1238 = vld [vmem:[%s230 + $0x84] sm:$0xe]
        %v1239 = vld [vmem:[%s230 + $0x90] sm:$0xe]
        %v1240 = vld [vmem:[%s230 + $0x9c] sm:$0xe]
        %v1241 = vld [vmem:[%s230 + $0xa8] sm:$0xe]
        %v1242 = vld [vmem:[%s230 + $0xb4] sm:$0xe]
        %vm1275 = vcmask 1042432
        %vm1276 = vcmask 1046532
        %vm1277 = vmor %vm1275, %vm1276
        %v1278 = vrot.slane %v1227, 5
        %v1279 = vrot.slane %v1278, 4
        %v1280 = vrot.slane %v236, 5
        %v1281 = vsel %vm1277, %v1279, %v1280
        %v1282 = vrot.slane %v1280, 4
        %v1283 = vrot.slane %v268, 5
        %v1284 = vsel %vm1277, %v1282, %v1283
        %v1285 = vrot.slane %v1228, 5
        %v1286 = vrot.slane %v1285, 4
        %v1287 = vrot.slane %v238, 5
        %v1288 = vsel %vm1277, %v1286, %v1287
        %v1289 = vrot.slane %v1287, 4
        %v1290 = vrot.slane %v269, 5
        %v1291 = vsel %vm1277, %v1289, %v1290
        %v1292 = vrot.slane %v1229, 5
        %v1293 = vrot.slane %v1292, 4
        %v1294 = vrot.slane %v240, 5
        %v1295 = vsel %vm1277, %v1293, %v1294
        %v1296 = vrot.slane %v1294, 4
        %v1297 = vrot.slane %v270, 5
        %v1298 = vsel %vm1277, %v1296, %v1297
        %v1299 = vrot.slane %v1230, 5
        %v1300 = vrot.slane %v1299, 4
        %v1301 = vrot.slane %v242, 5
        %v1302 = vsel %vm1277, %v1300, %v1301
        %v1303 = vrot.slane %v1301, 4
        %v1304 = vrot.slane %v271, 5
        %v1305 = vsel %vm1277, %v1303, %v1304
        %v1306 = vrot.slane %v1231, 5
        %v1307 = vrot.slane %v1306, 4
        %v1308 = vrot.slane %v244, 5
        %v1309 = vsel %vm1277, %v1307, %v1308
        %v1310 = vrot.slane %v1308, 4
        %v1311 = vrot.slane %v272, 5
        %v1312 = vsel %vm1277, %v1310, %v1311
        %v1313 = vrot.slane %v1232, 5
        %v1314 = vrot.slane %v1313, 4
        %v1315 = vrot.slane %v246, 5
        %v1316 = vsel %vm1277, %v1314, %v1315
        %v1317 = vrot.slane %v1315, 4
        %v1318 = vrot.slane %v273, 5
        %v1319 = vsel %vm1277, %v1317, %v1318
        %v1320 = vrot.slane %v1233, 5
        %v1321 = vrot.slane %v1320, 4
        %v1322 = vrot.slane %v248, 5
        %v1323 = vsel %vm1277, %v1321, %v1322
        %v1324 = vrot.slane %v1322, 4
        %v1325 = vrot.slane %v274, 5
        %v1326 = vsel %vm1277, %v1324, %v1325
        %v1327 = vrot.slane %v1234, 5
        %v1328 = vrot.slane %v1327, 4
        %v1329 = vrot.slane %v250, 5
        %v1330 = vsel %vm1277, %v1328, %v1329
        %v1331 = vrot.slane %v1329, 4
        %v1332 = vrot.slane %v275, 5
        %v1333 = vsel %vm1277, %v1331, %v1332
        %v1334 = vrot.slane %v1235, 5
        %v1335 = vrot.slane %v1334, 4
        %v1336 = vrot.slane %v252, 5
        %v1337 = vsel %vm1277, %v1335, %v1336
        %v1338 = vrot.slane %v1336, 4
        %v1339 = vrot.slane %v276, 5
        %v1340 = vsel %vm1277, %v1338, %v1339
        %v1341 = vrot.slane %v1236, 5
        %v1342 = vrot.slane %v1341, 4
        %v1343 = vrot.slane %v254, 5
        %v1344 = vsel %vm1277, %v1342, %v1343
        %v1345 = vrot.slane %v1343, 4
        %v1346 = vrot.slane %v277, 5
        %v1347 = vsel %vm1277, %v1345, %v1346
        %v1348 = vrot.slane %v1237, 5
        %v1349 = vrot.slane %v1348, 4
        %v1350 = vrot.slane %v256, 5
        %v1351 = vsel %vm1277, %v1349, %v1350
        %v1352 = vrot.slane %v1350, 4
        %v1353 = vrot.slane %v278, 5
        %v1354 = vsel %vm1277, %v1352, %v1353
        %v1355 = vrot.slane %v1238, 5
        %v1356 = vrot.slane %v1355, 4
        %v1357 = vrot.slane %v258, 5
        %v1358 = vsel %vm1277, %v1356, %v1357
        %v1359 = vrot.slane %v1357, 4
        %v1360 = vrot.slane %v279, 5
        %v1361 = vsel %vm1277, %v1359, %v1360
        %v1362 = vrot.slane %v1239, 5
        %v1363 = vrot.slane %v1362, 4
        %v1364 = vrot.slane %v260, 5
        %v1365 = vsel %vm1277, %v1363, %v1364
        %v1366 = vrot.slane %v1364, 4
        %v1367 = vrot.slane %v280, 5
        %v1368 = vsel %vm1277, %v1366, %v1367
        %v1369 = vrot.slane %v1240, 5
        %v1370 = vrot.slane %v1369, 4
        %v1371 = vrot.slane %v262, 5
        %v1372 = vsel %vm1277, %v1370, %v1371
        %v1373 = vrot.slane %v1371, 4
        %v1374 = vrot.slane %v281, 5
        %v1375 = vsel %vm1277, %v1373, %v1374
        %v1376 = vrot.slane %v1241, 5
        %v1377 = vrot.slane %v1376, 4
        %v1378 = vrot.slane %v264, 5
        %v1379 = vsel %vm1277, %v1377, %v1378
        %v1380 = vrot.slane %v1378, 4
        %v1381 = vrot.slane %v282, 5
        %v1382 = vsel %vm1277, %v1380, %v1381
        %v1383 = vrot.slane %v1242, 5
        %v1384 = vrot.slane %v1383, 4
        %v1385 = vrot.slane %v266, 5
        %v1386 = vsel %vm1277, %v1384, %v1385
        %v1387 = vrot.slane %v1385, 4
        %v1388 = vrot.slane %v283, 5
        %v1389 = vsel %vm1277, %v1387, %v1388
        %s1390 = scalar_lea.vmem [#allocation2], 4
        %v1391 = vld [vmem:[%s1390] sm:$0x3]
        %v1392 = vunpack.c.l.b16 %v1281
        %v1393 = vunpack.c.l.b16 %v1284
        %v1394 = vunpack.c.l.b16 %v1288
        %v1395 = vunpack.c.l.b16 %v1291
        %v1396 = vunpack.c.l.b16 %v1295
        %v1397 = vunpack.c.l.b16 %v1298
        %v1398 = vunpack.c.l.b16 %v1302
        %v1399 = vunpack.c.l.b16 %v1305
        %v1400 = vunpack.c.l.b16 %v1309
        %v1401 = vunpack.c.l.b16 %v1312
        %v1402 = vunpack.c.l.b16 %v1316
        %v1403 = vunpack.c.l.b16 %v1319
        %v1404 = vunpack.c.l.b16 %v1323
        %v1405 = vunpack.c.l.b16 %v1326
        %v1406 = vunpack.c.l.b16 %v1330
        %v1407 = vunpack.c.l.b16 %v1333
        %v1408 = vunpack.c.l.b16 %v1337
        %v1409 = vunpack.c.l.b16 %v1340
        %v1410 = vunpack.c.l.b16 %v1344
        %v1411 = vunpack.c.l.b16 %v1347
        %v1412 = vunpack.c.l.b16 %v1351
        %v1413 = vunpack.c.l.b16 %v1354
        %v1414 = vunpack.c.l.b16 %v1358
        %v1415 = vunpack.c.l.b16 %v1361
        %v1416 = vunpack.c.l.b16 %v1365
        %v1417 = vunpack.c.l.b16 %v1368
        %v1418 = vunpack.c.l.b16 %v1372
        %v1419 = vunpack.c.l.b16 %v1375
        %v1420 = vunpack.c.l.b16 %v1379
        %v1421 = vunpack.c.l.b16 %v1382
        %v1422 = vunpack.c.l.b16 %v1386
        %v1423 = vunpack.c.l.b16 %v1389
        %v1424 = vpack.c.b16 %v1393, %v1392
        %v1425 = vpack.c.b16 %v1395, %v1394
        %v1426 = vpack.c.b16 %v1397, %v1396
        %v1427 = vpack.c.b16 %v1399, %v1398
        %v1428 = vpack.c.b16 %v1401, %v1400
        %v1429 = vpack.c.b16 %v1403, %v1402
        %v1430 = vpack.c.b16 %v1405, %v1404
        %v1431 = vpack.c.b16 %v1407, %v1406
        %v1432 = vpack.c.b16 %v1409, %v1408
        %v1433 = vpack.c.b16 %v1411, %v1410
        %v1434 = vpack.c.b16 %v1413, %v1412
        %v1435 = vpack.c.b16 %v1415, %v1414
        %v1436 = vpack.c.b16 %v1417, %v1416
        %v1437 = vpack.c.b16 %v1419, %v1418
        %v1438 = vpack.c.b16 %v1421, %v1420
        %v1439 = vpack.c.b16 %v1423, %v1422
        %v1441 = vsel %vm721, %v1424, 0
        %v1444 = vsel %vm721, %v1425, 0
        %v1447 = vsel %vm721, %v1426, 0
        %v1450 = vsel %vm721, %v1427, 0
        %v1453 = vsel %vm721, %v1428, 0
        %v1456 = vsel %vm721, %v1429, 0
        %v1459 = vsel %vm721, %v1430, 0
        %v1462 = vsel %vm721, %v1431, 0
        %v1465 = vsel %vm721, %v1432, 0
        %v1468 = vsel %vm721, %v1433, 0
        %v1471 = vsel %vm721, %v1434, 0
        %v1474 = vsel %vm721, %v1435, 0
        %v1477 = vsel %vm721, %v1436, 0
        %v1480 = vsel %vm721, %v1437, 0
        %v1483 = vsel %vm721, %v1438, 0
        %v1486 = vsel %vm721, %v1439, 0
        %v1489 = vsel %vm770, %v1391, 0
        %1491 = vmatprep.subr.bf16.mxu0 0
        %1492 = vmatpush1.bf16.msra.mxu0 %v1489
        %1493 = vmatprep.subr.bf16.mxu0 0
        %1494 = vmatpush1.bf16.msra.mxu0 0
        %1495 = vmatprep.subr.bf16.mxu0 0
        %1496 = vmatpush1.bf16.msra.mxu0 0
        %1497 = vmatprep.subr.bf16.mxu0 0
        %1498 = vmatpush1.bf16.msra.mxu0 0
        %1499 = vmatprep.subr.bf16.mxu0 0
        %1500 = vmatpush1.bf16.msra.mxu0 0
        %1501 = vmatprep.subr.bf16.mxu0 0
        %1502 = vmatpush1.bf16.msra.mxu0 0
        %1503 = vmatprep.subr.bf16.mxu0 0
        %1504 = vmatpush1.bf16.msra.mxu0 0
        %1505 = vmatprep.subr.bf16.mxu0 0
        %1506 = vmatpush1.bf16.msra.mxu0 0
        %1507 = vmatprep.subr.bf16.mxu0 0
        %1508 = vmatpush1.bf16.msra.mxu0 0
        %1509 = vmatprep.subr.bf16.mxu0 0
        %1510 = vmatpush1.bf16.msra.mxu0 0
        %1511 = vmatprep.subr.bf16.mxu0 0
        %1512 = vmatpush1.bf16.msra.mxu0 0
        %1513 = vmatprep.subr.bf16.mxu0 0
        %1514 = vmatpush1.bf16.msra.mxu0 0
        %1515 = vmatprep.subr.bf16.mxu0 0
        %1516 = vmatpush1.bf16.msra.mxu0 0
        %1517 = vmatprep.subr.bf16.mxu0 0
        %1518 = vmatpush1.bf16.msra.mxu0 0
        %1519 = vmatprep.subr.bf16.mxu0 0
        %1520 = vmatpush1.bf16.msra.mxu0 0
        %1521 = vmatprep.subr.bf16.mxu0 0
        %1522 = vmatpush1.bf16.msra.mxu0 0
        %1523 = vmatprep.mubr.bf16.mxu0 0
        %1524 = vmatmul.mubr.bf16.gmra.mrb[0].mxu0 %v1441
        %v1525 = vpop.f32.mrb[0].mxu0
        %v1526 = vadd.f32 0.0, %v1525
        %v1527 = vpop.f32.mrb[0].mxu0
        %v1528 = vpop.f32.mrb[0].mxu0
        %v1529 = vadd.f32 0.0, %v1528
        %v1530 = vpop.f32.mrb[0].mxu0
        %1531 = vmatprep.mubr.bf16.mxu0 0
        %1532 = vmatmul.mubr.bf16.gmra.mrb[0].mxu0 %v1444
        %v1533 = vpop.f32.mrb[0].mxu0
        %v1534 = vadd.f32 0.0, %v1533
        %v1535 = vpop.f32.mrb[0].mxu0
        %v1536 = vpop.f32.mrb[0].mxu0
        %v1537 = vadd.f32 0.0, %v1536
        %v1538 = vpop.f32.mrb[0].mxu0
        %1539 = vmatprep.mubr.bf16.mxu0 0
        %1540 = vmatmul.mubr.bf16.gmra.mrb[0].mxu0 %v1447
        %v1541 = vpop.f32.mrb[0].mxu0
        %v1542 = vadd.f32 0.0, %v1541
        %v1543 = vpop.f32.mrb[0].mxu0
        %v1544 = vpop.f32.mrb[0].mxu0
        %v1545 = vadd.f32 0.0, %v1544
        %v1546 = vpop.f32.mrb[0].mxu0
        %1547 = vmatprep.mubr.bf16.mxu0 0
        %1548 = vmatmul.mubr.bf16.gmra.mrb[0].mxu0 %v1450
        %v1549 = vpop.f32.mrb[0].mxu0
        %v1550 = vadd.f32 0.0, %v1549
        %v1551 = vpop.f32.mrb[0].mxu0
        %v1552 = vpop.f32.mrb[0].mxu0
        %v1553 = vadd.f32 0.0, %v1552
        %v1554 = vpop.f32.mrb[0].mxu0
        %1555 = vmatprep.mubr.bf16.mxu0 0
        %1556 = vmatmul.mubr.bf16.gmra.mrb[0].mxu0 %v1453
        %v1557 = vpop.f32.mrb[0].mxu0
        %v1558 = vadd.f32 0.0, %v1557
        %v1559 = vpop.f32.mrb[0].mxu0
        %v1560 = vpop.f32.mrb[0].mxu0
        %v1561 = vadd.f32 0.0, %v1560
        %v1562 = vpop.f32.mrb[0].mxu0
        %1563 = vmatprep.mubr.bf16.mxu0 0
        %1564 = vmatmul.mubr.bf16.gmra.mrb[0].mxu0 %v1456
        %v1565 = vpop.f32.mrb[0].mxu0
        %v1566 = vadd.f32 0.0, %v1565
        %v1567 = vpop.f32.mrb[0].mxu0
        %v1568 = vpop.f32.mrb[0].mxu0
        %v1569 = vadd.f32 0.0, %v1568
        %v1570 = vpop.f32.mrb[0].mxu0
        %1571 = vmatprep.mubr.bf16.mxu0 0
        %1572 = vmatmul.mubr.bf16.gmra.mrb[0].mxu0 %v1459
        %v1573 = vpop.f32.mrb[0].mxu0
        %v1574 = vadd.f32 0.0, %v1573
        %v1575 = vpop.f32.mrb[0].mxu0
        %v1576 = vpop.f32.mrb[0].mxu0
        %v1577 = vadd.f32 0.0, %v1576
        %v1578 = vpop.f32.mrb[0].mxu0
        %1579 = vmatprep.mubr.bf16.mxu0 0
        %1580 = vmatmul.mubr.bf16.gmra.mrb[0].mxu0 %v1462
        %v1581 = vpop.f32.mrb[0].mxu0
        %v1582 = vadd.f32 0.0, %v1581
        %v1583 = vpop.f32.mrb[0].mxu0
        %v1584 = vpop.f32.mrb[0].mxu0
        %v1585 = vadd.f32 0.0, %v1584
        %v1586 = vpop.f32.mrb[0].mxu0
        %1587 = vmatprep.mubr.bf16.mxu0 0
        %1588 = vmatmul.mubr.bf16.gmra.mrb[0].mxu0 %v1465
        %v1589 = vpop.f32.mrb[0].mxu0
        %v1590 = vadd.f32 0.0, %v1589
        %v1591 = vpop.f32.mrb[0].mxu0
        %v1592 = vpop.f32.mrb[0].mxu0
        %v1593 = vadd.f32 0.0, %v1592
        %v1594 = vpop.f32.mrb[0].mxu0
        %1595 = vmatprep.mubr.bf16.mxu0 0
        %1596 = vmatmul.mubr.bf16.gmra.mrb[0].mxu0 %v1468
        %v1597 = vpop.f32.mrb[0].mxu0
        %v1598 = vadd.f32 0.0, %v1597
        %v1599 = vpop.f32.mrb[0].mxu0
        %v1600 = vpop.f32.mrb[0].mxu0
        %v1601 = vadd.f32 0.0, %v1600
        %v1602 = vpop.f32.mrb[0].mxu0
        %1603 = vmatprep.mubr.bf16.mxu0 0
        %1604 = vmatmul.mubr.bf16.gmra.mrb[0].mxu0 %v1471
        %v1605 = vpop.f32.mrb[0].mxu0
        %v1606 = vadd.f32 0.0, %v1605
        %v1607 = vpop.f32.mrb[0].mxu0
        %v1608 = vpop.f32.mrb[0].mxu0
        %v1609 = vadd.f32 0.0, %v1608
        %v1610 = vpop.f32.mrb[0].mxu0
        %1611 = vmatprep.mubr.bf16.mxu0 0
        %1612 = vmatmul.mubr.bf16.gmra.mrb[0].mxu0 %v1474
        %v1613 = vpop.f32.mrb[0].mxu0
        %v1614 = vadd.f32 0.0, %v1613
        %v1615 = vpop.f32.mrb[0].mxu0
        %v1616 = vpop.f32.mrb[0].mxu0
        %v1617 = vadd.f32 0.0, %v1616
        %v1618 = vpop.f32.mrb[0].mxu0
        %1619 = vmatprep.mubr.bf16.mxu0 0
        %1620 = vmatmul.mubr.bf16.gmra.mrb[0].mxu0 %v1477
        %v1621 = vpop.f32.mrb[0].mxu0
        %v1622 = vadd.f32 0.0, %v1621
        %v1623 = vpop.f32.mrb[0].mxu0
        %v1624 = vpop.f32.mrb[0].mxu0
        %v1625 = vadd.f32 0.0, %v1624
        %v1626 = vpop.f32.mrb[0].mxu0
        %1627 = vmatprep.mubr.bf16.mxu0 0
        %1628 = vmatmul.mubr.bf16.gmra.mrb[0].mxu0 %v1480
        %v1629 = vpop.f32.mrb[0].mxu0
        %v1630 = vadd.f32 0.0, %v1629
        %v1631 = vpop.f32.mrb[0].mxu0
        %v1632 = vpop.f32.mrb[0].mxu0
        %v1633 = vadd.f32 0.0, %v1632
        %v1634 = vpop.f32.mrb[0].mxu0
        %1635 = vmatprep.mubr.bf16.mxu0 0
        %1636 = vmatmul.mubr.bf16.gmra.mrb[0].mxu0 %v1483
        %v1637 = vpop.f32.mrb[0].mxu0
        %v1638 = vadd.f32 0.0, %v1637
        %v1639 = vpop.f32.mrb[0].mxu0
        %v1640 = vpop.f32.mrb[0].mxu0
        %v1641 = vadd.f32 0.0, %v1640
        %v1642 = vpop.f32.mrb[0].mxu0
        %1643 = vmatprep.mubr.bf16.mxu0 0
        %1644 = vmatmul.mubr.bf16.gmra.mrb[0].mxu0 %v1486
        %v1645 = vpop.f32.mrb[0].mxu0
        %v1646 = vadd.f32 0.0, %v1645
        %v1647 = vpop.f32.mrb[0].mxu0
        %v1648 = vpop.f32.mrb[0].mxu0
        %v1649 = vadd.f32 0.0, %v1648
        %v1650 = vpop.f32.mrb[0].mxu0
        %1651 = vdwg.mxu0
        %v1652 = vadd.f32 %v1101, %v1526
        %v1653 = vadd.f32 %v1104, %v1529
        %v1654 = vadd.f32 %v1109, %v1534
        %v1655 = vadd.f32 %v1112, %v1537
        %v1656 = vadd.f32 %v1117, %v1542
        %v1657 = vadd.f32 %v1120, %v1545
        %v1658 = vadd.f32 %v1125, %v1550
        %v1659 = vadd.f32 %v1128, %v1553
        %v1660 = vadd.f32 %v1133, %v1558
        %v1661 = vadd.f32 %v1136, %v1561
        %v1662 = vadd.f32 %v1141, %v1566
        %v1663 = vadd.f32 %v1144, %v1569
        %v1664 = vadd.f32 %v1149, %v1574
        %v1665 = vadd.f32 %v1152, %v1577
        %v1666 = vadd.f32 %v1157, %v1582
        %v1667 = vadd.f32 %v1160, %v1585
        %v1668 = vadd.f32 %v1165, %v1590
        %v1669 = vadd.f32 %v1168, %v1593
        %v1670 = vadd.f32 %v1173, %v1598
        %v1671 = vadd.f32 %v1176, %v1601
        %v1672 = vadd.f32 %v1181, %v1606
        %v1673 = vadd.f32 %v1184, %v1609
        %v1674 = vadd.f32 %v1189, %v1614
        %v1675 = vadd.f32 %v1192, %v1617
        %v1676 = vadd.f32 %v1197, %v1622
        %v1677 = vadd.f32 %v1200, %v1625
        %v1678 = vadd.f32 %v1205, %v1630
        %v1679 = vadd.f32 %v1208, %v1633
        %v1680 = vadd.f32 %v1213, %v1638
        %v1681 = vadd.f32 %v1216, %v1641
        %v1682 = vadd.f32 %v1221, %v1646
        %v1683 = vadd.f32 %v1224, %v1649
        %s1684 = scalar_lea.vmem %s230, 12
        %v1685 = vld [vmem:[%s1684] sm:$0xf]
        %v1686 = vld [vmem:[%s1684 + $0x4] sm:$0xf]
        %v1687 = vld [vmem:[%s1684 + $0xc] sm:$0xf]
        %v1688 = vld [vmem:[%s1684 + $0x10] sm:$0xf]
        %v1689 = vld [vmem:[%s1684 + $0x18] sm:$0xf]
        %v1690 = vld [vmem:[%s1684 + $0x1c] sm:$0xf]
        %v1691 = vld [vmem:[%s1684 + $0x24] sm:$0xf]
        %v1692 = vld [vmem:[%s1684 + $0x28] sm:$0xf]
        %v1693 = vld [vmem:[%s1684 + $0x30] sm:$0xf]
        %v1694 = vld [vmem:[%s1684 + $0x34] sm:$0xf]
        %v1695 = vld [vmem:[%s1684 + $0x3c] sm:$0xf]
        %v1696 = vld [vmem:[%s1684 + $0x40] sm:$0xf]
        %v1697 = vld [vmem:[%s1684 + $0x48] sm:$0xf]
        %v1698 = vld [vmem:[%s1684 + $0x4c] sm:$0xf]
        %v1699 = vld [vmem:[%s1684 + $0x54] sm:$0xf]
        %v1700 = vld [vmem:[%s1684 + $0x58] sm:$0xf]
        %v1701 = vld [vmem:[%s1684 + $0x60] sm:$0xf]
        %v1702 = vld [vmem:[%s1684 + $0x64] sm:$0xf]
        %v1703 = vld [vmem:[%s1684 + $0x6c] sm:$0xf]
        %v1704 = vld [vmem:[%s1684 + $0x70] sm:$0xf]
        %v1705 = vld [vmem:[%s1684 + $0x78] sm:$0xf]
        %v1706 = vld [vmem:[%s1684 + $0x7c] sm:$0xf]
        %v1707 = vld [vmem:[%s1684 + $0x84] sm:$0xf]
        %v1708 = vld [vmem:[%s1684 + $0x88] sm:$0xf]
        %v1709 = vld [vmem:[%s1684 + $0x90] sm:$0xf]
        %v1710 = vld [vmem:[%s1684 + $0x94] sm:$0xf]
        %v1711 = vld [vmem:[%s1684 + $0x9c] sm:$0xf]
        %v1712 = vld [vmem:[%s1684 + $0xa0] sm:$0xf]
        %v1713 = vld [vmem:[%s1684 + $0xa8] sm:$0xf]
        %v1714 = vld [vmem:[%s1684 + $0xac] sm:$0xf]
        %v1715 = vld [vmem:[%s1684 + $0xb4] sm:$0xf]
        %v1716 = vld [vmem:[%s1684 + $0xb8] sm:$0xf]
        %s1717 = scalar_lea.vmem [#allocation2], 6
        %v1718 = vld [vmem:[%s1717] sm:$0x3]
        %v1751 = vunpack.c.l.b16 %v1685
        %v1752 = vunpack.c.l.b16 %v1686
        %v1753 = vunpack.c.l.b16 %v1687
        %v1754 = vunpack.c.l.b16 %v1688
        %v1755 = vunpack.c.l.b16 %v1689
        %v1756 = vunpack.c.l.b16 %v1690
        %v1757 = vunpack.c.l.b16 %v1691
        %v1758 = vunpack.c.l.b16 %v1692
        %v1759 = vunpack.c.l.b16 %v1693
        %v1760 = vunpack.c.l.b16 %v1694
        %v1761 = vunpack.c.l.b16 %v1695
        %v1762 = vunpack.c.l.b16 %v1696
        %v1763 = vunpack.c.l.b16 %v1697
        %v1764 = vunpack.c.l.b16 %v1698
        %v1765 = vunpack.c.l.b16 %v1699
        %v1766 = vunpack.c.l.b16 %v1700
        %v1767 = vunpack.c.l.b16 %v1701
        %v1768 = vunpack.c.l.b16 %v1702
        %v1769 = vunpack.c.l.b16 %v1703
        %v1770 = vunpack.c.l.b16 %v1704
        %v1771 = vunpack.c.l.b16 %v1705
        %v1772 = vunpack.c.l.b16 %v1706
        %v1773 = vunpack.c.l.b16 %v1707
        %v1774 = vunpack.c.l.b16 %v1708
        %v1775 = vunpack.c.l.b16 %v1709
        %v1776 = vunpack.c.l.b16 %v1710
        %v1777 = vunpack.c.l.b16 %v1711
        %v1778 = vunpack.c.l.b16 %v1712
        %v1779 = vunpack.c.l.b16 %v1713
        %v1780 = vunpack.c.l.b16 %v1714
        %v1781 = vunpack.c.l.b16 %v1715
        %v1782 = vunpack.c.l.b16 %v1716
        %v1783 = vpack.c.b16 %v1752, %v1751
        %v1784 = vpack.c.b16 %v1754, %v1753
        %v1785 = vpack.c.b16 %v1756, %v1755
        %v1786 = vpack.c.b16 %v1758, %v1757
        %v1787 = vpack.c.b16 %v1760, %v1759
        %v1788 = vpack.c.b16 %v1762, %v1761
        %v1789 = vpack.c.b16 %v1764, %v1763
        %v1790 = vpack.c.b16 %v1766, %v1765
        %v1791 = vpack.c.b16 %v1768, %v1767
        %v1792 = vpack.c.b16 %v1770, %v1769
        %v1793 = vpack.c.b16 %v1772, %v1771
        %v1794 = vpack.c.b16 %v1774, %v1773
        %v1795 = vpack.c.b16 %v1776, %v1775
        %v1796 = vpack.c.b16 %v1778, %v1777
        %v1797 = vpack.c.b16 %v1780, %v1779
        %v1798 = vpack.c.b16 %v1782, %v1781
        %v1800 = vsel %vm721, %v1783, 0
        %v1803 = vsel %vm721, %v1784, 0
        %v1806 = vsel %vm721, %v1785, 0
        %v1809 = vsel %vm721, %v1786, 0
        %v1812 = vsel %vm721, %v1787, 0
        %v1815 = vsel %vm721, %v1788, 0
        %v1818 = vsel %vm721, %v1789, 0
        %v1821 = vsel %vm721, %v1790, 0
        %v1824 = vsel %vm721, %v1791, 0
        %v1827 = vsel %vm721, %v1792, 0
        %v1830 = vsel %vm721, %v1793, 0
        %v1833 = vsel %vm721, %v1794, 0
        %v1836 = vsel %vm721, %v1795, 0
        %v1839 = vsel %vm721, %v1796, 0
        %v1842 = vsel %vm721, %v1797, 0
        %v1845 = vsel %vm721, %v1798, 0
        %v1848 = vsel %vm770, %v1718, 0
        %1850 = vmatprep.subr.bf16.mxu0 0
        %1851 = vmatpush1.bf16.msra.mxu0 %v1848
        %1852 = vmatprep.subr.bf16.mxu0 0
        %1853 = vmatpush1.bf16.msra.mxu0 0
        %1854 = vmatprep.subr.bf16.mxu0 0
        %1855 = vmatpush1.bf16.msra.mxu0 0
        %1856 = vmatprep.subr.bf16.mxu0 0
        %1857 = vmatpush1.bf16.msra.mxu0 0
        %1858 = vmatprep.subr.bf16.mxu0 0
        %1859 = vmatpush1.bf16.msra.mxu0 0
        %1860 = vmatprep.subr.bf16.mxu0 0
        %1861 = vmatpush1.bf16.msra.mxu0 0
        %1862 = vmatprep.subr.bf16.mxu0 0
        %1863 = vmatpush1.bf16.msra.mxu0 0
        %1864 = vmatprep.subr.bf16.mxu0 0
        %1865 = vmatpush1.bf16.msra.mxu0 0
        %1866 = vmatprep.subr.bf16.mxu0 0
        %1867 = vmatpush1.bf16.msra.mxu0 0
        %1868 = vmatprep.subr.bf16.mxu0 0
        %1869 = vmatpush1.bf16.msra.mxu0 0
        %1870 = vmatprep.subr.bf16.mxu0 0
        %1871 = vmatpush1.bf16.msra.mxu0 0
        %1872 = vmatprep.subr.bf16.mxu0 0
        %1873 = vmatpush1.bf16.msra.mxu0 0
        %1874 = vmatprep.subr.bf16.mxu0 0
        %1875 = vmatpush1.bf16.msra.mxu0 0
        %1876 = vmatprep.subr.bf16.mxu0 0
        %1877 = vmatpush1.bf16.msra.mxu0 0
        %1878 = vmatprep.subr.bf16.mxu0 0
        %1879 = vmatpush1.bf16.msra.mxu0 0
        %1880 = vmatprep.subr.bf16.mxu0 0
        %1881 = vmatpush1.bf16.msra.mxu0 0
        %1882 = vmatprep.mubr.bf16.mxu0 0
        %1883 = vmatmul.mubr.bf16.gmra.mrb[0].mxu0 %v1800
        %v1884 = vpop.f32.mrb[0].mxu0
        %v1885 = vadd.f32 0.0, %v1884
        %v1886 = vpop.f32.mrb[0].mxu0
        %v1887 = vpop.f32.mrb[0].mxu0
        %v1888 = vadd.f32 0.0, %v1887
        %v1889 = vpop.f32.mrb[0].mxu0
        %1890 = vmatprep.mubr.bf16.mxu0 0
        %1891 = vmatmul.mubr.bf16.gmra.mrb[0].mxu0 %v1803
        %v1892 = vpop.f32.mrb[0].mxu0
        %v1893 = vadd.f32 0.0, %v1892
        %v1894 = vpop.f32.mrb[0].mxu0
        %v1895 = vpop.f32.mrb[0].mxu0
        %v1896 = vadd.f32 0.0, %v1895
        %v1897 = vpop.f32.mrb[0].mxu0
        %1898 = vmatprep.mubr.bf16.mxu0 0
        %1899 = vmatmul.mubr.bf16.gmra.mrb[0].mxu0 %v1806
        %v1900 = vpop.f32.mrb[0].mxu0
        %v1901 = vadd.f32 0.0, %v1900
        %v1902 = vpop.f32.mrb[0].mxu0
        %v1903 = vpop.f32.mrb[0].mxu0
        %v1904 = vadd.f32 0.0, %v1903
        %v1905 = vpop.f32.mrb[0].mxu0
        %1906 = vmatprep.mubr.bf16.mxu0 0
        %1907 = vmatmul.mubr.bf16.gmra.mrb[0].mxu0 %v1809
        %v1908 = vpop.f32.mrb[0].mxu0
        %v1909 = vadd.f32 0.0, %v1908
        %v1910 = vpop.f32.mrb[0].mxu0
        %v1911 = vpop.f32.mrb[0].mxu0
        %v1912 = vadd.f32 0.0, %v1911
        %v1913 = vpop.f32.mrb[0].mxu0
        %1914 = vmatprep.mubr.bf16.mxu0 0
        %1915 = vmatmul.mubr.bf16.gmra.mrb[0].mxu0 %v1812
        %v1916 = vpop.f32.mrb[0].mxu0
        %v1917 = vadd.f32 0.0, %v1916
        %v1918 = vpop.f32.mrb[0].mxu0
        %v1919 = vpop.f32.mrb[0].mxu0
        %v1920 = vadd.f32 0.0, %v1919
        %v1921 = vpop.f32.mrb[0].mxu0
        %1922 = vmatprep.mubr.bf16.mxu0 0
        %1923 = vmatmul.mubr.bf16.gmra.mrb[0].mxu0 %v1815
        %v1924 = vpop.f32.mrb[0].mxu0
        %v1925 = vadd.f32 0.0, %v1924
        %v1926 = vpop.f32.mrb[0].mxu0
        %v1927 = vpop.f32.mrb[0].mxu0
        %v1928 = vadd.f32 0.0, %v1927
        %v1929 = vpop.f32.mrb[0].mxu0
        %1930 = vmatprep.mubr.bf16.mxu0 0
        %1931 = vmatmul.mubr.bf16.gmra.mrb[0].mxu0 %v1818
        %v1932 = vpop.f32.mrb[0].mxu0
        %v1933 = vadd.f32 0.0, %v1932
        %v1934 = vpop.f32.mrb[0].mxu0
        %v1935 = vpop.f32.mrb[0].mxu0
        %v1936 = vadd.f32 0.0, %v1935
        %v1937 = vpop.f32.mrb[0].mxu0
        %1938 = vmatprep.mubr.bf16.mxu0 0
        %1939 = vmatmul.mubr.bf16.gmra.mrb[0].mxu0 %v1821
        %v1940 = vpop.f32.mrb[0].mxu0
        %v1941 = vadd.f32 0.0, %v1940
        %v1942 = vpop.f32.mrb[0].mxu0
        %v1943 = vpop.f32.mrb[0].mxu0
        %v1944 = vadd.f32 0.0, %v1943
        %v1945 = vpop.f32.mrb[0].mxu0
        %1946 = vmatprep.mubr.bf16.mxu0 0
        %1947 = vmatmul.mubr.bf16.gmra.mrb[0].mxu0 %v1824
        %v1948 = vpop.f32.mrb[0].mxu0
        %v1949 = vadd.f32 0.0, %v1948
        %v1950 = vpop.f32.mrb[0].mxu0
        %v1951 = vpop.f32.mrb[0].mxu0
        %v1952 = vadd.f32 0.0, %v1951
        %v1953 = vpop.f32.mrb[0].mxu0
        %1954 = vmatprep.mubr.bf16.mxu0 0
        %1955 = vmatmul.mubr.bf16.gmra.mrb[0].mxu0 %v1827
        %v1956 = vpop.f32.mrb[0].mxu0
        %v1957 = vadd.f32 0.0, %v1956
        %v1958 = vpop.f32.mrb[0].mxu0
        %v1959 = vpop.f32.mrb[0].mxu0
        %v1960 = vadd.f32 0.0, %v1959
        %v1961 = vpop.f32.mrb[0].mxu0
        %1962 = vmatprep.mubr.bf16.mxu0 0
        %1963 = vmatmul.mubr.bf16.gmra.mrb[0].mxu0 %v1830
        %v1964 = vpop.f32.mrb[0].mxu0
        %v1965 = vadd.f32 0.0, %v1964
        %v1966 = vpop.f32.mrb[0].mxu0
        %v1967 = vpop.f32.mrb[0].mxu0
        %v1968 = vadd.f32 0.0, %v1967
        %v1969 = vpop.f32.mrb[0].mxu0
        %1970 = vmatprep.mubr.bf16.mxu0 0
        %1971 = vmatmul.mubr.bf16.gmra.mrb[0].mxu0 %v1833
        %v1972 = vpop.f32.mrb[0].mxu0
        %v1973 = vadd.f32 0.0, %v1972
        %v1974 = vpop.f32.mrb[0].mxu0
        %v1975 = vpop.f32.mrb[0].mxu0
        %v1976 = vadd.f32 0.0, %v1975
        %v1977 = vpop.f32.mrb[0].mxu0
        %1978 = vmatprep.mubr.bf16.mxu0 0
        %1979 = vmatmul.mubr.bf16.gmra.mrb[0].mxu0 %v1836
        %v1980 = vpop.f32.mrb[0].mxu0
        %v1981 = vadd.f32 0.0, %v1980
        %v1982 = vpop.f32.mrb[0].mxu0
        %v1983 = vpop.f32.mrb[0].mxu0
        %v1984 = vadd.f32 0.0, %v1983
        %v1985 = vpop.f32.mrb[0].mxu0
        %1986 = vmatprep.mubr.bf16.mxu0 0
        %1987 = vmatmul.mubr.bf16.gmra.mrb[0].mxu0 %v1839
        %v1988 = vpop.f32.mrb[0].mxu0
        %v1989 = vadd.f32 0.0, %v1988
        %v1990 = vpop.f32.mrb[0].mxu0
        %v1991 = vpop.f32.mrb[0].mxu0
        %v1992 = vadd.f32 0.0, %v1991
        %v1993 = vpop.f32.mrb[0].mxu0
        %1994 = vmatprep.mubr.bf16.mxu0 0
        %1995 = vmatmul.mubr.bf16.gmra.mrb[0].mxu0 %v1842
        %v1996 = vpop.f32.mrb[0].mxu0
        %v1997 = vadd.f32 0.0, %v1996
        %v1998 = vpop.f32.mrb[0].mxu0
        %v1999 = vpop.f32.mrb[0].mxu0
        %v2000 = vadd.f32 0.0, %v1999
        %v2001 = vpop.f32.mrb[0].mxu0
        %2002 = vmatprep.mubr.bf16.mxu0 0
        %2003 = vmatmul.mubr.bf16.gmra.mrb[0].mxu0 %v1845
        %v2004 = vpop.f32.mrb[0].mxu0
        %v2005 = vadd.f32 0.0, %v2004
        %v2006 = vpop.f32.mrb[0].mxu0
        %v2007 = vpop.f32.mrb[0].mxu0
        %v2008 = vadd.f32 0.0, %v2007
        %v2009 = vpop.f32.mrb[0].mxu0
        %2010 = vdwg.mxu0
        %v2011 = vadd.f32 %v1652, %v1885
        %v2012 = vadd.f32 %v1653, %v1888
        %v2013 = vadd.f32 %v1654, %v1893
        %v2014 = vadd.f32 %v1655, %v1896
        %v2015 = vadd.f32 %v1656, %v1901
        %v2016 = vadd.f32 %v1657, %v1904
        %v2017 = vadd.f32 %v1658, %v1909
        %v2018 = vadd.f32 %v1659, %v1912
        %v2019 = vadd.f32 %v1660, %v1917
        %v2020 = vadd.f32 %v1661, %v1920
        %v2021 = vadd.f32 %v1662, %v1925
        %v2022 = vadd.f32 %v1663, %v1928
        %v2023 = vadd.f32 %v1664, %v1933
        %v2024 = vadd.f32 %v1665, %v1936
        %v2025 = vadd.f32 %v1666, %v1941
        %v2026 = vadd.f32 %v1667, %v1944
        %v2027 = vadd.f32 %v1668, %v1949
        %v2028 = vadd.f32 %v1669, %v1952
        %v2029 = vadd.f32 %v1670, %v1957
        %v2030 = vadd.f32 %v1671, %v1960
        %v2031 = vadd.f32 %v1672, %v1965
        %v2032 = vadd.f32 %v1673, %v1968
        %v2033 = vadd.f32 %v1674, %v1973
        %v2034 = vadd.f32 %v1675, %v1976
        %v2035 = vadd.f32 %v1676, %v1981
        %v2036 = vadd.f32 %v1677, %v1984
        %v2037 = vadd.f32 %v1678, %v1989
        %v2038 = vadd.f32 %v1679, %v1992
        %v2039 = vadd.f32 %v1680, %v1997
        %v2040 = vadd.f32 %v1681, %v2000
        %v2041 = vadd.f32 %v1682, %v2005
        %v2042 = vadd.f32 %v1683, %v2008
        %v2043 = vld [vmem:[%s1684] sm:$0xf]
        %v2044 = vld [vmem:[%s1684 + $0x4] sm:$0xf]
        %v2045 = vld [vmem:[%s1684 + $0x8] sm:$0x1]
        %v2046 = vld [vmem:[%s1684 + $0xc] sm:$0xf]
        %v2047 = vld [vmem:[%s1684 + $0x10] sm:$0xf]
        %v2048 = vld [vmem:[%s1684 + $0x14] sm:$0x1]
        %v2049 = vld [vmem:[%s1684 + $0x18] sm:$0xf]
        %v2050 = vld [vmem:[%s1684 + $0x1c] sm:$0xf]
        %v2051 = vld [vmem:[%s1684 + $0x20] sm:$0x1]
        %v2052 = vld [vmem:[%s1684 + $0x24] sm:$0xf]
        %v2053 = vld [vmem:[%s1684 + $0x28] sm:$0xf]
        %v2054 = vld [vmem:[%s1684 + $0x2c] sm:$0x1]
        %v2055 = vld [vmem:[%s1684 + $0x30] sm:$0xf]
        %v2056 = vld [vmem:[%s1684 + $0x34] sm:$0xf]
        %v2057 = vld [vmem:[%s1684 + $0x38] sm:$0x1]
        %v2058 = vld [vmem:[%s1684 + $0x3c] sm:$0xf]
        %v2059 = vld [vmem:[%s1684 + $0x40] sm:$0xf]
        %v2060 = vld [vmem:[%s1684 + $0x44] sm:$0x1]
        %v2061 = vld [vmem:[%s1684 + $0x48] sm:$0xf]
        %v2062 = vld [vmem:[%s1684 + $0x4c] sm:$0xf]
        %v2063 = vld [vmem:[%s1684 + $0x50] sm:$0x1]
        %v2064 = vld [vmem:[%s1684 + $0x54] sm:$0xf]
        %v2065 = vld [vmem:[%s1684 + $0x58] sm:$0xf]
        %v2066 = vld [vmem:[%s1684 + $0x5c] sm:$0x1]
        %v2067 = vld [vmem:[%s1684 + $0x60] sm:$0xf]
        %v2068 = vld [vmem:[%s1684 + $0x64] sm:$0xf]
        %v2069 = vld [vmem:[%s1684 + $0x68] sm:$0x1]
        %v2070 = vld [vmem:[%s1684 + $0x6c] sm:$0xf]
        %v2071 = vld [vmem:[%s1684 + $0x70] sm:$0xf]
        %v2072 = vld [vmem:[%s1684 + $0x74] sm:$0x1]
        %v2073 = vld [vmem:[%s1684 + $0x78] sm:$0xf]
        %v2074 = vld [vmem:[%s1684 + $0x7c] sm:$0xf]
        %v2075 = vld [vmem:[%s1684 + $0x80] sm:$0x1]
        %v2076 = vld [vmem:[%s1684 + $0x84] sm:$0xf]
        %v2077 = vld [vmem:[%s1684 + $0x88] sm:$0xf]
        %v2078 = vld [vmem:[%s1684 + $0x8c] sm:$0x1]
        %v2079 = vld [vmem:[%s1684 + $0x90] sm:$0xf]
        %v2080 = vld [vmem:[%s1684 + $0x94] sm:$0xf]
        %v2081 = vld [vmem:[%s1684 + $0x98] sm:$0x1]
        %v2082 = vld [vmem:[%s1684 + $0x9c] sm:$0xf]
        %v2083 = vld [vmem:[%s1684 + $0xa0] sm:$0xf]
        %v2084 = vld [vmem:[%s1684 + $0xa4] sm:$0x1]
        %v2085 = vld [vmem:[%s1684 + $0xa8] sm:$0xf]
        %v2086 = vld [vmem:[%s1684 + $0xac] sm:$0xf]
        %v2087 = vld [vmem:[%s1684 + $0xb0] sm:$0x1]
        %v2088 = vld [vmem:[%s1684 + $0xb4] sm:$0xf]
        %v2089 = vld [vmem:[%s1684 + $0xb8] sm:$0xf]
        %v2090 = vld [vmem:[%s1684 + $0xbc] sm:$0x1]
        %v2092 = vshrl.u32 %v2043, 16
        %v2094 = vrot.slane %v2092, 4
        %v2095 = vshll.u32 %v2043, 16
        %v2097 = vrot.slane %v2095, 5
        %v2098 = vor.u32 %v2094, %v2097
        %v2099 = vrot.slane %v2098, 4
        %v2101 = vshll.u32 %v2044, 16
        %v2103 = vrot.slane %v2101, 5
        %v2104 = vsel %vm286, %v2099, %v2103
        %v2105 = vshrl.u32 %v2044, 16
        %v2107 = vrot.slane %v2105, 4
        %v2108 = vor.u32 %v2107, %v2103
        %v2109 = vrot.slane %v2108, 4
        %v2111 = vshll.u32 %v2045, 16
        %v2113 = vrot.slane %v2111, 5
        %v2114 = vsel %vm286, %v2109, %v2113
        %v2116 = vshrl.u32 %v2046, 16
        %v2118 = vrot.slane %v2116, 4
        %v2119 = vshll.u32 %v2046, 16
        %v2121 = vrot.slane %v2119, 5
        %v2122 = vor.u32 %v2118, %v2121
        %v2123 = vrot.slane %v2122, 4
        %v2125 = vshll.u32 %v2047, 16
        %v2127 = vrot.slane %v2125, 5
        %v2128 = vsel %vm286, %v2123, %v2127
        %v2129 = vshrl.u32 %v2047, 16
        %v2131 = vrot.slane %v2129, 4
        %v2132 = vor.u32 %v2131, %v2127
        %v2133 = vrot.slane %v2132, 4
        %v2135 = vshll.u32 %v2048, 16
        %v2137 = vrot.slane %v2135, 5
        %v2138 = vsel %vm286, %v2133, %v2137
        %v2140 = vshrl.u32 %v2049, 16
        %v2142 = vrot.slane %v2140, 4
        %v2143 = vshll.u32 %v2049, 16
        %v2145 = vrot.slane %v2143, 5
        %v2146 = vor.u32 %v2142, %v2145
        %v2147 = vrot.slane %v2146, 4
        %v2149 = vshll.u32 %v2050, 16
        %v2151 = vrot.slane %v2149, 5
        %v2152 = vsel %vm286, %v2147, %v2151
        %v2153 = vshrl.u32 %v2050, 16
        %v2155 = vrot.slane %v2153, 4
        %v2156 = vor.u32 %v2155, %v2151
        %v2157 = vrot.slane %v2156, 4
        %v2159 = vshll.u32 %v2051, 16
        %v2161 = vrot.slane %v2159, 5
        %v2162 = vsel %vm286, %v2157, %v2161
        %v2164 = vshrl.u32 %v2052, 16
        %v2166 = vrot.slane %v2164, 4
        %v2167 = vshll.u32 %v2052, 16
        %v2169 = vrot.slane %v2167, 5
        %v2170 = vor.u32 %v2166, %v2169
        %v2171 = vrot.slane %v2170, 4
        %v2173 = vshll.u32 %v2053, 16
        %v2175 = vrot.slane %v2173, 5
        %v2176 = vsel %vm286, %v2171, %v2175
        %v2177 = vshrl.u32 %v2053, 16
        %v2179 = vrot.slane %v2177, 4
        %v2180 = vor.u32 %v2179, %v2175
        %v2181 = vrot.slane %v2180, 4
        %v2183 = vshll.u32 %v2054, 16
        %v2185 = vrot.slane %v2183, 5
        %v2186 = vsel %vm286, %v2181, %v2185
        %v2188 = vshrl.u32 %v2055, 16
        %v2190 = vrot.slane %v2188, 4
        %v2191 = vshll.u32 %v2055, 16
        %v2193 = vrot.slane %v2191, 5
        %v2194 = vor.u32 %v2190, %v2193
        %v2195 = vrot.slane %v2194, 4
        %v2197 = vshll.u32 %v2056, 16
        %v2199 = vrot.slane %v2197, 5
        %v2200 = vsel %vm286, %v2195, %v2199
        %v2201 = vshrl.u32 %v2056, 16
        %v2203 = vrot.slane %v2201, 4
        %v2204 = vor.u32 %v2203, %v2199
        %v2205 = vrot.slane %v2204, 4
        %v2207 = vshll.u32 %v2057, 16
        %v2209 = vrot.slane %v2207, 5
        %v2210 = vsel %vm286, %v2205, %v2209
        %v2212 = vshrl.u32 %v2058, 16
        %v2214 = vrot.slane %v2212, 4
        %v2215 = vshll.u32 %v2058, 16
        %v2217 = vrot.slane %v2215, 5
        %v2218 = vor.u32 %v2214, %v2217
        %v2219 = vrot.slane %v2218, 4
        %v2221 = vshll.u32 %v2059, 16
        %v2223 = vrot.slane %v2221, 5
        %v2224 = vsel %vm286, %v2219, %v2223
        %v2225 = vshrl.u32 %v2059, 16
        %v2227 = vrot.slane %v2225, 4
        %v2228 = vor.u32 %v2227, %v2223
        %v2229 = vrot.slane %v2228, 4
        %v2231 = vshll.u32 %v2060, 16
        %v2233 = vrot.slane %v2231, 5
        %v2234 = vsel %vm286, %v2229, %v2233
        %v2236 = vshrl.u32 %v2061, 16
        %v2238 = vrot.slane %v2236, 4
        %v2239 = vshll.u32 %v2061, 16
        %v2241 = vrot.slane %v2239, 5
        %v2242 = vor.u32 %v2238, %v2241
        %v2243 = vrot.slane %v2242, 4
        %v2245 = vshll.u32 %v2062, 16
        %v2247 = vrot.slane %v2245, 5
        %v2248 = vsel %vm286, %v2243, %v2247
        %v2249 = vshrl.u32 %v2062, 16
        %v2251 = vrot.slane %v2249, 4
        %v2252 = vor.u32 %v2251, %v2247
        %v2253 = vrot.slane %v2252, 4
        %v2255 = vshll.u32 %v2063, 16
        %v2257 = vrot.slane %v2255, 5
        %v2258 = vsel %vm286, %v2253, %v2257
        %v2260 = vshrl.u32 %v2064, 16
        %v2262 = vrot.slane %v2260, 4
        %v2263 = vshll.u32 %v2064, 16
        %v2265 = vrot.slane %v2263, 5
        %v2266 = vor.u32 %v2262, %v2265
        %v2267 = vrot.slane %v2266, 4
        %v2269 = vshll.u32 %v2065, 16
        %v2271 = vrot.slane %v2269, 5
        %v2272 = vsel %vm286, %v2267, %v2271
        %v2273 = vshrl.u32 %v2065, 16
        %v2275 = vrot.slane %v2273, 4
        %v2276 = vor.u32 %v2275, %v2271
        %v2277 = vrot.slane %v2276, 4
        %v2279 = vshll.u32 %v2066, 16
        %v2281 = vrot.slane %v2279, 5
        %v2282 = vsel %vm286, %v2277, %v2281
        %v2284 = vshrl.u32 %v2067, 16
        %v2286 = vrot.slane %v2284, 4
        %v2287 = vshll.u32 %v2067, 16
        %v2289 = vrot.slane %v2287, 5
        %v2290 = vor.u32 %v2286, %v2289
        %v2291 = vrot.slane %v2290, 4
        %v2293 = vshll.u32 %v2068, 16
        %v2295 = vrot.slane %v2293, 5
        %v2296 = vsel %vm286, %v2291, %v2295
        %v2297 = vshrl.u32 %v2068, 16
        %v2299 = vrot.slane %v2297, 4
        %v2300 = vor.u32 %v2299, %v2295
        %v2301 = vrot.slane %v2300, 4
        %v2303 = vshll.u32 %v2069, 16
        %v2305 = vrot.slane %v2303, 5
        %v2306 = vsel %vm286, %v2301, %v2305
        %v2308 = vshrl.u32 %v2070, 16
        %v2310 = vrot.slane %v2308, 4
        %v2311 = vshll.u32 %v2070, 16
        %v2313 = vrot.slane %v2311, 5
        %v2314 = vor.u32 %v2310, %v2313
        %v2315 = vrot.slane %v2314, 4
        %v2317 = vshll.u32 %v2071, 16
        %v2319 = vrot.slane %v2317, 5
        %v2320 = vsel %vm286, %v2315, %v2319
        %v2321 = vshrl.u32 %v2071, 16
        %v2323 = vrot.slane %v2321, 4
        %v2324 = vor.u32 %v2323, %v2319
        %v2325 = vrot.slane %v2324, 4
        %v2327 = vshll.u32 %v2072, 16
        %v2329 = vrot.slane %v2327, 5
        %v2330 = vsel %vm286, %v2325, %v2329
        %v2332 = vshrl.u32 %v2073, 16
        %v2334 = vrot.slane %v2332, 4
        %v2335 = vshll.u32 %v2073, 16
        %v2337 = vrot.slane %v2335, 5
        %v2338 = vor.u32 %v2334, %v2337
        %v2339 = vrot.slane %v2338, 4
        %v2341 = vshll.u32 %v2074, 16
        %v2343 = vrot.slane %v2341, 5
        %v2344 = vsel %vm286, %v2339, %v2343
        %v2345 = vshrl.u32 %v2074, 16
        %v2347 = vrot.slane %v2345, 4
        %v2348 = vor.u32 %v2347, %v2343
        %v2349 = vrot.slane %v2348, 4
        %v2351 = vshll.u32 %v2075, 16
        %v2353 = vrot.slane %v2351, 5
        %v2354 = vsel %vm286, %v2349, %v2353
        %v2356 = vshrl.u32 %v2076, 16
        %v2358 = vrot.slane %v2356, 4
        %v2359 = vshll.u32 %v2076, 16
        %v2361 = vrot.slane %v2359, 5
        %v2362 = vor.u32 %v2358, %v2361
        %v2363 = vrot.slane %v2362, 4
        %v2365 = vshll.u32 %v2077, 16
        %v2367 = vrot.slane %v2365, 5
        %v2368 = vsel %vm286, %v2363, %v2367
        %v2369 = vshrl.u32 %v2077, 16
        %v2371 = vrot.slane %v2369, 4
        %v2372 = vor.u32 %v2371, %v2367
        %v2373 = vrot.slane %v2372, 4
        %v2375 = vshll.u32 %v2078, 16
        %v2377 = vrot.slane %v2375, 5
        %v2378 = vsel %vm286, %v2373, %v2377
        %v2380 = vshrl.u32 %v2079, 16
        %v2382 = vrot.slane %v2380, 4
        %v2383 = vshll.u32 %v2079, 16
        %v2385 = vrot.slane %v2383, 5
        %v2386 = vor.u32 %v2382, %v2385
        %v2387 = vrot.slane %v2386, 4
        %v2389 = vshll.u32 %v2080, 16
        %v2391 = vrot.slane %v2389, 5
        %v2392 = vsel %vm286, %v2387, %v2391
        %v2393 = vshrl.u32 %v2080, 16
        %v2395 = vrot.slane %v2393, 4
        %v2396 = vor.u32 %v2395, %v2391
        %v2397 = vrot.slane %v2396, 4
        %v2399 = vshll.u32 %v2081, 16
        %v2401 = vrot.slane %v2399, 5
        %v2402 = vsel %vm286, %v2397, %v2401
        %v2404 = vshrl.u32 %v2082, 16
        %v2406 = vrot.slane %v2404, 4
        %v2407 = vshll.u32 %v2082, 16
        %v2409 = vrot.slane %v2407, 5
        %v2410 = vor.u32 %v2406, %v2409
        %v2411 = vrot.slane %v2410, 4
        %v2413 = vshll.u32 %v2083, 16
        %v2415 = vrot.slane %v2413, 5
        %v2416 = vsel %vm286, %v2411, %v2415
        %v2417 = vshrl.u32 %v2083, 16
        %v2419 = vrot.slane %v2417, 4
        %v2420 = vor.u32 %v2419, %v2415
        %v2421 = vrot.slane %v2420, 4
        %v2423 = vshll.u32 %v2084, 16
        %v2425 = vrot.slane %v2423, 5
        %v2426 = vsel %vm286, %v2421, %v2425
        %v2428 = vshrl.u32 %v2085, 16
        %v2430 = vrot.slane %v2428, 4
        %v2431 = vshll.u32 %v2085, 16
        %v2433 = vrot.slane %v2431, 5
        %v2434 = vor.u32 %v2430, %v2433
        %v2435 = vrot.slane %v2434, 4
        %v2437 = vshll.u32 %v2086, 16
        %v2439 = vrot.slane %v2437, 5
        %v2440 = vsel %vm286, %v2435, %v2439
        %v2441 = vshrl.u32 %v2086, 16
        %v2443 = vrot.slane %v2441, 4
        %v2444 = vor.u32 %v2443, %v2439
        %v2445 = vrot.slane %v2444, 4
        %v2447 = vshll.u32 %v2087, 16
        %v2449 = vrot.slane %v2447, 5
        %v2450 = vsel %vm286, %v2445, %v2449
        %v2452 = vshrl.u32 %v2088, 16
        %v2454 = vrot.slane %v2452, 4
        %v2455 = vshll.u32 %v2088, 16
        %v2457 = vrot.slane %v2455, 5
        %v2458 = vor.u32 %v2454, %v2457
        %v2459 = vrot.slane %v2458, 4
        %v2461 = vshll.u32 %v2089, 16
        %v2463 = vrot.slane %v2461, 5
        %v2464 = vsel %vm286, %v2459, %v2463
        %v2465 = vshrl.u32 %v2089, 16
        %v2467 = vrot.slane %v2465, 4
        %v2468 = vor.u32 %v2467, %v2463
        %v2469 = vrot.slane %v2468, 4
        %v2471 = vshll.u32 %v2090, 16
        %v2473 = vrot.slane %v2471, 5
        %v2474 = vsel %vm286, %v2469, %v2473
        %s2475 = scalar_lea.vmem [#allocation2], 8
        %v2476 = vld [vmem:[%s2475] sm:$0x3]
        %v2477 = vunpack.c.l.b16 %v2104
        %v2478 = vunpack.c.l.b16 %v2114
        %v2479 = vunpack.c.l.b16 %v2128
        %v2480 = vunpack.c.l.b16 %v2138
        %v2481 = vunpack.c.l.b16 %v2152
        %v2482 = vunpack.c.l.b16 %v2162
        %v2483 = vunpack.c.l.b16 %v2176
        %v2484 = vunpack.c.l.b16 %v2186
        %v2485 = vunpack.c.l.b16 %v2200
        %v2486 = vunpack.c.l.b16 %v2210
        %v2487 = vunpack.c.l.b16 %v2224
        %v2488 = vunpack.c.l.b16 %v2234
        %v2489 = vunpack.c.l.b16 %v2248
        %v2490 = vunpack.c.l.b16 %v2258
        %v2491 = vunpack.c.l.b16 %v2272
        %v2492 = vunpack.c.l.b16 %v2282
        %v2493 = vunpack.c.l.b16 %v2296
        %v2494 = vunpack.c.l.b16 %v2306
        %v2495 = vunpack.c.l.b16 %v2320
        %v2496 = vunpack.c.l.b16 %v2330
        %v2497 = vunpack.c.l.b16 %v2344
        %v2498 = vunpack.c.l.b16 %v2354
        %v2499 = vunpack.c.l.b16 %v2368
        %v2500 = vunpack.c.l.b16 %v2378
        %v2501 = vunpack.c.l.b16 %v2392
        %v2502 = vunpack.c.l.b16 %v2402
        %v2503 = vunpack.c.l.b16 %v2416
        %v2504 = vunpack.c.l.b16 %v2426
        %v2505 = vunpack.c.l.b16 %v2440
        %v2506 = vunpack.c.l.b16 %v2450
        %v2507 = vunpack.c.l.b16 %v2464
        %v2508 = vunpack.c.l.b16 %v2474
        %v2509 = vpack.c.b16 %v2478, %v2477
        %v2510 = vpack.c.b16 %v2480, %v2479
        %v2511 = vpack.c.b16 %v2482, %v2481
        %v2512 = vpack.c.b16 %v2484, %v2483
        %v2513 = vpack.c.b16 %v2486, %v2485
        %v2514 = vpack.c.b16 %v2488, %v2487
        %v2515 = vpack.c.b16 %v2490, %v2489
        %v2516 = vpack.c.b16 %v2492, %v2491
        %v2517 = vpack.c.b16 %v2494, %v2493
        %v2518 = vpack.c.b16 %v2496, %v2495
        %v2519 = vpack.c.b16 %v2498, %v2497
        %v2520 = vpack.c.b16 %v2500, %v2499
        %v2521 = vpack.c.b16 %v2502, %v2501
        %v2522 = vpack.c.b16 %v2504, %v2503
        %v2523 = vpack.c.b16 %v2506, %v2505
        %v2524 = vpack.c.b16 %v2508, %v2507
        %v2526 = vsel %vm721, %v2509, 0
        %v2529 = vsel %vm721, %v2510, 0
        %v2532 = vsel %vm721, %v2511, 0
        %v2535 = vsel %vm721, %v2512, 0
        %v2538 = vsel %vm721, %v2513, 0
        %v2541 = vsel %vm721, %v2514, 0
        %v2544 = vsel %vm721, %v2515, 0
        %v2547 = vsel %vm721, %v2516, 0
        %v2550 = vsel %vm721, %v2517, 0
        %v2553 = vsel %vm721, %v2518, 0
        %v2556 = vsel %vm721, %v2519, 0
        %v2559 = vsel %vm721, %v2520, 0
        %v2562 = vsel %vm721, %v2521, 0
        %v2565 = vsel %vm721, %v2522, 0
        %v2568 = vsel %vm721, %v2523, 0
        %v2571 = vsel %vm721, %v2524, 0
        %v2574 = vsel %vm770, %v2476, 0
        %2576 = vmatprep.subr.bf16.mxu0 0
        %2577 = vmatpush1.bf16.msra.mxu0 %v2574
        %2578 = vmatprep.subr.bf16.mxu0 0
        %2579 = vmatpush1.bf16.msra.mxu0 0
        %2580 = vmatprep.subr.bf16.mxu0 0
        %2581 = vmatpush1.bf16.msra.mxu0 0
        %2582 = vmatprep.subr.bf16.mxu0 0
        %2583 = vmatpush1.bf16.msra.mxu0 0
        %2584 = vmatprep.subr.bf16.mxu0 0
        %2585 = vmatpush1.bf16.msra.mxu0 0
        %2586 = vmatprep.subr.bf16.mxu0 0
        %2587 = vmatpush1.bf16.msra.mxu0 0
        %2588 = vmatprep.subr.bf16.mxu0 0
        %2589 = vmatpush1.bf16.msra.mxu0 0
        %2590 = vmatprep.subr.bf16.mxu0 0
        %2591 = vmatpush1.bf16.msra.mxu0 0
        %2592 = vmatprep.subr.bf16.mxu0 0
        %2593 = vmatpush1.bf16.msra.mxu0 0
        %2594 = vmatprep.subr.bf16.mxu0 0
        %2595 = vmatpush1.bf16.msra.mxu0 0
        %2596 = vmatprep.subr.bf16.mxu0 0
        %2597 = vmatpush1.bf16.msra.mxu0 0
        %2598 = vmatprep.subr.bf16.mxu0 0
        %2599 = vmatpush1.bf16.msra.mxu0 0
        %2600 = vmatprep.subr.bf16.mxu0 0
        %2601 = vmatpush1.bf16.msra.mxu0 0
        %2602 = vmatprep.subr.bf16.mxu0 0
        %2603 = vmatpush1.bf16.msra.mxu0 0
        %2604 = vmatprep.subr.bf16.mxu0 0
        %2605 = vmatpush1.bf16.msra.mxu0 0
        %2606 = vmatprep.subr.bf16.mxu0 0
        %2607 = vmatpush1.bf16.msra.mxu0 0
        %2608 = vmatprep.mubr.bf16.mxu0 0
        %2609 = vmatmul.mubr.bf16.gmra.mrb[0].mxu0 %v2526
        %v2610 = vpop.f32.mrb[0].mxu0
        %v2611 = vadd.f32 0.0, %v2610
        %v2612 = vpop.f32.mrb[0].mxu0
        %v2613 = vpop.f32.mrb[0].mxu0
        %v2614 = vadd.f32 0.0, %v2613
        %v2615 = vpop.f32.mrb[0].mxu0
        %2616 = vmatprep.mubr.bf16.mxu0 0
        %2617 = vmatmul.mubr.bf16.gmra.mrb[0].mxu0 %v2529
        %v2618 = vpop.f32.mrb[0].mxu0
        %v2619 = vadd.f32 0.0, %v2618
        %v2620 = vpop.f32.mrb[0].mxu0
        %v2621 = vpop.f32.mrb[0].mxu0
        %v2622 = vadd.f32 0.0, %v2621
        %v2623 = vpop.f32.mrb[0].mxu0
        %2624 = vmatprep.mubr.bf16.mxu0 0
        %2625 = vmatmul.mubr.bf16.gmra.mrb[0].mxu0 %v2532
        %v2626 = vpop.f32.mrb[0].mxu0
        %v2627 = vadd.f32 0.0, %v2626
        %v2628 = vpop.f32.mrb[0].mxu0
        %v2629 = vpop.f32.mrb[0].mxu0
        %v2630 = vadd.f32 0.0, %v2629
        %v2631 = vpop.f32.mrb[0].mxu0
        %2632 = vmatprep.mubr.bf16.mxu0 0
        %2633 = vmatmul.mubr.bf16.gmra.mrb[0].mxu0 %v2535
        %v2634 = vpop.f32.mrb[0].mxu0
        %v2635 = vadd.f32 0.0, %v2634
        %v2636 = vpop.f32.mrb[0].mxu0
        %v2637 = vpop.f32.mrb[0].mxu0
        %v2638 = vadd.f32 0.0, %v2637
        %v2639 = vpop.f32.mrb[0].mxu0
        %2640 = vmatprep.mubr.bf16.mxu0 0
        %2641 = vmatmul.mubr.bf16.gmra.mrb[0].mxu0 %v2538
        %v2642 = vpop.f32.mrb[0].mxu0
        %v2643 = vadd.f32 0.0, %v2642
        %v2644 = vpop.f32.mrb[0].mxu0
        %v2645 = vpop.f32.mrb[0].mxu0
        %v2646 = vadd.f32 0.0, %v2645
        %v2647 = vpop.f32.mrb[0].mxu0
        %2648 = vmatprep.mubr.bf16.mxu0 0
        %2649 = vmatmul.mubr.bf16.gmra.mrb[0].mxu0 %v2541
        %v2650 = vpop.f32.mrb[0].mxu0
        %v2651 = vadd.f32 0.0, %v2650
        %v2652 = vpop.f32.mrb[0].mxu0
        %v2653 = vpop.f32.mrb[0].mxu0
        %v2654 = vadd.f32 0.0, %v2653
        %v2655 = vpop.f32.mrb[0].mxu0
        %2656 = vmatprep.mubr.bf16.mxu0 0
        %2657 = vmatmul.mubr.bf16.gmra.mrb[0].mxu0 %v2544
        %v2658 = vpop.f32.mrb[0].mxu0
        %v2659 = vadd.f32 0.0, %v2658
        %v2660 = vpop.f32.mrb[0].mxu0
        %v2661 = vpop.f32.mrb[0].mxu0
        %v2662 = vadd.f32 0.0, %v2661
        %v2663 = vpop.f32.mrb[0].mxu0
        %2664 = vmatprep.mubr.bf16.mxu0 0
        %2665 = vmatmul.mubr.bf16.gmra.mrb[0].mxu0 %v2547
        %v2666 = vpop.f32.mrb[0].mxu0
        %v2667 = vadd.f32 0.0, %v2666
        %v2668 = vpop.f32.mrb[0].mxu0
        %v2669 = vpop.f32.mrb[0].mxu0
        %v2670 = vadd.f32 0.0, %v2669
        %v2671 = vpop.f32.mrb[0].mxu0
        %2672 = vmatprep.mubr.bf16.mxu0 0
        %2673 = vmatmul.mubr.bf16.gmra.mrb[0].mxu0 %v2550
        %v2674 = vpop.f32.mrb[0].mxu0
        %v2675 = vadd.f32 0.0, %v2674
        %v2676 = vpop.f32.mrb[0].mxu0
        %v2677 = vpop.f32.mrb[0].mxu0
        %v2678 = vadd.f32 0.0, %v2677
        %v2679 = vpop.f32.mrb[0].mxu0
        %2680 = vmatprep.mubr.bf16.mxu0 0
        %2681 = vmatmul.mubr.bf16.gmra.mrb[0].mxu0 %v2553
        %v2682 = vpop.f32.mrb[0].mxu0
        %v2683 = vadd.f32 0.0, %v2682
        %v2684 = vpop.f32.mrb[0].mxu0
        %v2685 = vpop.f32.mrb[0].mxu0
        %v2686 = vadd.f32 0.0, %v2685
        %v2687 = vpop.f32.mrb[0].mxu0
        %2688 = vmatprep.mubr.bf16.mxu0 0
        %2689 = vmatmul.mubr.bf16.gmra.mrb[0].mxu0 %v2556
        %v2690 = vpop.f32.mrb[0].mxu0
        %v2691 = vadd.f32 0.0, %v2690
        %v2692 = vpop.f32.mrb[0].mxu0
        %v2693 = vpop.f32.mrb[0].mxu0
        %v2694 = vadd.f32 0.0, %v2693
        %v2695 = vpop.f32.mrb[0].mxu0
        %2696 = vmatprep.mubr.bf16.mxu0 0
        %2697 = vmatmul.mubr.bf16.gmra.mrb[0].mxu0 %v2559
        %v2698 = vpop.f32.mrb[0].mxu0
        %v2699 = vadd.f32 0.0, %v2698
        %v2700 = vpop.f32.mrb[0].mxu0
        %v2701 = vpop.f32.mrb[0].mxu0
        %v2702 = vadd.f32 0.0, %v2701
        %v2703 = vpop.f32.mrb[0].mxu0
        %2704 = vmatprep.mubr.bf16.mxu0 0
        %2705 = vmatmul.mubr.bf16.gmra.mrb[0].mxu0 %v2562
        %v2706 = vpop.f32.mrb[0].mxu0
        %v2707 = vadd.f32 0.0, %v2706
        %v2708 = vpop.f32.mrb[0].mxu0
        %v2709 = vpop.f32.mrb[0].mxu0
        %v2710 = vadd.f32 0.0, %v2709
        %v2711 = vpop.f32.mrb[0].mxu0
        %2712 = vmatprep.mubr.bf16.mxu0 0
        %2713 = vmatmul.mubr.bf16.gmra.mrb[0].mxu0 %v2565
        %v2714 = vpop.f32.mrb[0].mxu0
        %v2715 = vadd.f32 0.0, %v2714
        %v2716 = vpop.f32.mrb[0].mxu0
        %v2717 = vpop.f32.mrb[0].mxu0
        %v2718 = vadd.f32 0.0, %v2717
        %v2719 = vpop.f32.mrb[0].mxu0
        %2720 = vmatprep.mubr.bf16.mxu0 0
        %2721 = vmatmul.mubr.bf16.gmra.mrb[0].mxu0 %v2568
        %v2722 = vpop.f32.mrb[0].mxu0
        %v2723 = vadd.f32 0.0, %v2722
        %v2724 = vpop.f32.mrb[0].mxu0
        %v2725 = vpop.f32.mrb[0].mxu0
        %v2726 = vadd.f32 0.0, %v2725
        %v2727 = vpop.f32.mrb[0].mxu0
        %2728 = vmatprep.mubr.bf16.mxu0 0
        %2729 = vmatmul.mubr.bf16.gmra.mrb[0].mxu0 %v2571
        %v2730 = vpop.f32.mrb[0].mxu0
        %v2731 = vadd.f32 0.0, %v2730
        %v2732 = vpop.f32.mrb[0].mxu0
        %v2733 = vpop.f32.mrb[0].mxu0
        %v2734 = vadd.f32 0.0, %v2733
        %v2735 = vpop.f32.mrb[0].mxu0
        %2736 = vdwg.mxu0
        %v2737 = vadd.f32 %v2011, %v2611
        %v2738 = vadd.f32 %v2012, %v2614
        %v2739 = vadd.f32 %v2013, %v2619
        %v2740 = vadd.f32 %v2014, %v2622
        %v2741 = vadd.f32 %v2015, %v2627
        %v2742 = vadd.f32 %v2016, %v2630
        %v2743 = vadd.f32 %v2017, %v2635
        %v2744 = vadd.f32 %v2018, %v2638
        %v2745 = vadd.f32 %v2019, %v2643
        %v2746 = vadd.f32 %v2020, %v2646
        %v2747 = vadd.f32 %v2021, %v2651
        %v2748 = vadd.f32 %v2022, %v2654
        %v2749 = vadd.f32 %v2023, %v2659
        %v2750 = vadd.f32 %v2024, %v2662
        %v2751 = vadd.f32 %v2025, %v2667
        %v2752 = vadd.f32 %v2026, %v2670
        %v2753 = vadd.f32 %v2027, %v2675
        %v2754 = vadd.f32 %v2028, %v2678
        %v2755 = vadd.f32 %v2029, %v2683
        %v2756 = vadd.f32 %v2030, %v2686
        %v2757 = vadd.f32 %v2031, %v2691
        %v2758 = vadd.f32 %v2032, %v2694
        %v2759 = vadd.f32 %v2033, %v2699
        %v2760 = vadd.f32 %v2034, %v2702
        %v2761 = vadd.f32 %v2035, %v2707
        %v2762 = vadd.f32 %v2036, %v2710
        %v2763 = vadd.f32 %v2037, %v2715
        %v2764 = vadd.f32 %v2038, %v2718
        %v2765 = vadd.f32 %v2039, %v2723
        %v2766 = vadd.f32 %v2040, %v2726
        %v2767 = vadd.f32 %v2041, %v2731
        %v2768 = vadd.f32 %v2042, %v2734
        %v2769 = vld [vmem:[%s1684] sm:$0xe]
        %v2770 = vld [vmem:[%s1684 + $0xc] sm:$0xe]
        %v2771 = vld [vmem:[%s1684 + $0x18] sm:$0xe]
        %v2772 = vld [vmem:[%s1684 + $0x24] sm:$0xe]
        %v2773 = vld [vmem:[%s1684 + $0x30] sm:$0xe]
        %v2774 = vld [vmem:[%s1684 + $0x3c] sm:$0xe]
        %v2775 = vld [vmem:[%s1684 + $0x48] sm:$0xe]
        %v2776 = vld [vmem:[%s1684 + $0x54] sm:$0xe]
        %v2777 = vld [vmem:[%s1684 + $0x60] sm:$0xe]
        %v2778 = vld [vmem:[%s1684 + $0x6c] sm:$0xe]
        %v2779 = vld [vmem:[%s1684 + $0x78] sm:$0xe]
        %v2780 = vld [vmem:[%s1684 + $0x84] sm:$0xe]
        %v2781 = vld [vmem:[%s1684 + $0x90] sm:$0xe]
        %v2782 = vld [vmem:[%s1684 + $0x9c] sm:$0xe]
        %v2783 = vld [vmem:[%s1684 + $0xa8] sm:$0xe]
        %v2784 = vld [vmem:[%s1684 + $0xb4] sm:$0xe]
        %v2833 = vrot.slane %v2769, 5
        %v2834 = vrot.slane %v2833, 4
        %v2835 = vrot.slane %v2044, 5
        %v2836 = vsel %vm1277, %v2834, %v2835
        %v2837 = vrot.slane %v2835, 4
        %v2838 = vrot.slane %v2045, 5
        %v2839 = vsel %vm1277, %v2837, %v2838
        %v2840 = vrot.slane %v2770, 5
        %v2841 = vrot.slane %v2840, 4
        %v2842 = vrot.slane %v2047, 5
        %v2843 = vsel %vm1277, %v2841, %v2842
        %v2844 = vrot.slane %v2842, 4
        %v2845 = vrot.slane %v2048, 5
        %v2846 = vsel %vm1277, %v2844, %v2845
        %v2847 = vrot.slane %v2771, 5
        %v2848 = vrot.slane %v2847, 4
        %v2849 = vrot.slane %v2050, 5
        %v2850 = vsel %vm1277, %v2848, %v2849
        %v2851 = vrot.slane %v2849, 4
        %v2852 = vrot.slane %v2051, 5
        %v2853 = vsel %vm1277, %v2851, %v2852
        %v2854 = vrot.slane %v2772, 5
        %v2855 = vrot.slane %v2854, 4
        %v2856 = vrot.slane %v2053, 5
        %v2857 = vsel %vm1277, %v2855, %v2856
        %v2858 = vrot.slane %v2856, 4
        %v2859 = vrot.slane %v2054, 5
        %v2860 = vsel %vm1277, %v2858, %v2859
        %v2861 = vrot.slane %v2773, 5
        %v2862 = vrot.slane %v2861, 4
        %v2863 = vrot.slane %v2056, 5
        %v2864 = vsel %vm1277, %v2862, %v2863
        %v2865 = vrot.slane %v2863, 4
        %v2866 = vrot.slane %v2057, 5
        %v2867 = vsel %vm1277, %v2865, %v2866
        %v2868 = vrot.slane %v2774, 5
        %v2869 = vrot.slane %v2868, 4
        %v2870 = vrot.slane %v2059, 5
        %v2871 = vsel %vm1277, %v2869, %v2870
        %v2872 = vrot.slane %v2870, 4
        %v2873 = vrot.slane %v2060, 5
        %v2874 = vsel %vm1277, %v2872, %v2873
        %v2875 = vrot.slane %v2775, 5
        %v2876 = vrot.slane %v2875, 4
        %v2877 = vrot.slane %v2062, 5
        %v2878 = vsel %vm1277, %v2876, %v2877
        %v2879 = vrot.slane %v2877, 4
        %v2880 = vrot.slane %v2063, 5
        %v2881 = vsel %vm1277, %v2879, %v2880
        %v2882 = vrot.slane %v2776, 5
        %v2883 = vrot.slane %v2882, 4
        %v2884 = vrot.slane %v2065, 5
        %v2885 = vsel %vm1277, %v2883, %v2884
        %v2886 = vrot.slane %v2884, 4
        %v2887 = vrot.slane %v2066, 5
        %v2888 = vsel %vm1277, %v2886, %v2887
        %v2889 = vrot.slane %v2777, 5
        %v2890 = vrot.slane %v2889, 4
        %v2891 = vrot.slane %v2068, 5
        %v2892 = vsel %vm1277, %v2890, %v2891
        %v2893 = vrot.slane %v2891, 4
        %v2894 = vrot.slane %v2069, 5
        %v2895 = vsel %vm1277, %v2893, %v2894
        %v2896 = vrot.slane %v2778, 5
        %v2897 = vrot.slane %v2896, 4
        %v2898 = vrot.slane %v2071, 5
        %v2899 = vsel %vm1277, %v2897, %v2898
        %v2900 = vrot.slane %v2898, 4
        %v2901 = vrot.slane %v2072, 5
        %v2902 = vsel %vm1277, %v2900, %v2901
        %v2903 = vrot.slane %v2779, 5
        %v2904 = vrot.slane %v2903, 4
        %v2905 = vrot.slane %v2074, 5
        %v2906 = vsel %vm1277, %v2904, %v2905
        %v2907 = vrot.slane %v2905, 4
        %v2908 = vrot.slane %v2075, 5
        %v2909 = vsel %vm1277, %v2907, %v2908
        %v2910 = vrot.slane %v2780, 5
        %v2911 = vrot.slane %v2910, 4
        %v2912 = vrot.slane %v2077, 5
        %v2913 = vsel %vm1277, %v2911, %v2912
        %v2914 = vrot.slane %v2912, 4
        %v2915 = vrot.slane %v2078, 5
        %v2916 = vsel %vm1277, %v2914, %v2915
        %v2917 = vrot.slane %v2781, 5
        %v2918 = vrot.slane %v2917, 4
        %v2919 = vrot.slane %v2080, 5
        %v2920 = vsel %vm1277, %v2918, %v2919
        %v2921 = vrot.slane %v2919, 4
        %v2922 = vrot.slane %v2081, 5
        %v2923 = vsel %vm1277, %v2921, %v2922
        %v2924 = vrot.slane %v2782, 5
        %v2925 = vrot.slane %v2924, 4
        %v2926 = vrot.slane %v2083, 5
        %v2927 = vsel %vm1277, %v2925, %v2926
        %v2928 = vrot.slane %v2926, 4
        %v2929 = vrot.slane %v2084, 5
        %v2930 = vsel %vm1277, %v2928, %v2929
        %v2931 = vrot.slane %v2783, 5
        %v2932 = vrot.slane %v2931, 4
        %v2933 = vrot.slane %v2086, 5
        %v2934 = vsel %vm1277, %v2932, %v2933
        %v2935 = vrot.slane %v2933, 4
        %v2936 = vrot.slane %v2087, 5
        %v2937 = vsel %vm1277, %v2935, %v2936
        %v2938 = vrot.slane %v2784, 5
        %v2939 = vrot.slane %v2938, 4
        %v2940 = vrot.slane %v2089, 5
        %v2941 = vsel %vm1277, %v2939, %v2940
        %v2942 = vrot.slane %v2940, 4
        %v2943 = vrot.slane %v2090, 5
        %v2944 = vsel %vm1277, %v2942, %v2943
        %s2945 = scalar_lea.vmem [#allocation2], 10
        %v2946 = vld [vmem:[%s2945] sm:$0x3]
        %v2947 = vunpack.c.l.b16 %v2836
        %v2948 = vunpack.c.l.b16 %v2839
        %v2949 = vunpack.c.l.b16 %v2843
        %v2950 = vunpack.c.l.b16 %v2846
        %v2951 = vunpack.c.l.b16 %v2850
        %v2952 = vunpack.c.l.b16 %v2853
        %v2953 = vunpack.c.l.b16 %v2857
        %v2954 = vunpack.c.l.b16 %v2860
        %v2955 = vunpack.c.l.b16 %v2864
        %v2956 = vunpack.c.l.b16 %v2867
        %v2957 = vunpack.c.l.b16 %v2871
        %v2958 = vunpack.c.l.b16 %v2874
        %v2959 = vunpack.c.l.b16 %v2878
        %v2960 = vunpack.c.l.b16 %v2881
        %v2961 = vunpack.c.l.b16 %v2885
        %v2962 = vunpack.c.l.b16 %v2888
        %v2963 = vunpack.c.l.b16 %v2892
        %v2964 = vunpack.c.l.b16 %v2895
        %v2965 = vunpack.c.l.b16 %v2899
        %v2966 = vunpack.c.l.b16 %v2902
        %v2967 = vunpack.c.l.b16 %v2906
        %v2968 = vunpack.c.l.b16 %v2909
        %v2969 = vunpack.c.l.b16 %v2913
        %v2970 = vunpack.c.l.b16 %v2916
        %v2971 = vunpack.c.l.b16 %v2920
        %v2972 = vunpack.c.l.b16 %v2923
        %v2973 = vunpack.c.l.b16 %v2927
        %v2974 = vunpack.c.l.b16 %v2930
        %v2975 = vunpack.c.l.b16 %v2934
        %v2976 = vunpack.c.l.b16 %v2937
        %v2977 = vunpack.c.l.b16 %v2941
        %v2978 = vunpack.c.l.b16 %v2944
        %v2979 = vpack.c.b16 %v2948, %v2947
        %v2980 = vpack.c.b16 %v2950, %v2949
        %v2981 = vpack.c.b16 %v2952, %v2951
        %v2982 = vpack.c.b16 %v2954, %v2953
        %v2983 = vpack.c.b16 %v2956, %v2955
        %v2984 = vpack.c.b16 %v2958, %v2957
        %v2985 = vpack.c.b16 %v2960, %v2959
        %v2986 = vpack.c.b16 %v2962, %v2961
        %v2987 = vpack.c.b16 %v2964, %v2963
        %v2988 = vpack.c.b16 %v2966, %v2965
        %v2989 = vpack.c.b16 %v2968, %v2967
        %v2990 = vpack.c.b16 %v2970, %v2969
        %v2991 = vpack.c.b16 %v2972, %v2971
        %v2992 = vpack.c.b16 %v2974, %v2973
        %v2993 = vpack.c.b16 %v2976, %v2975
        %v2994 = vpack.c.b16 %v2978, %v2977
        %v2996 = vsel %vm721, %v2979, 0
        %v2999 = vsel %vm721, %v2980, 0
        %v3002 = vsel %vm721, %v2981, 0
        %v3005 = vsel %vm721, %v2982, 0
        %v3008 = vsel %vm721, %v2983, 0
        %v3011 = vsel %vm721, %v2984, 0
        %v3014 = vsel %vm721, %v2985, 0
        %v3017 = vsel %vm721, %v2986, 0
        %v3020 = vsel %vm721, %v2987, 0
        %v3023 = vsel %vm721, %v2988, 0
        %v3026 = vsel %vm721, %v2989, 0
        %v3029 = vsel %vm721, %v2990, 0
        %v3032 = vsel %vm721, %v2991, 0
        %v3035 = vsel %vm721, %v2992, 0
        %v3038 = vsel %vm721, %v2993, 0
        %v3041 = vsel %vm721, %v2994, 0
        %v3044 = vsel %vm770, %v2946, 0
        %3046 = vmatprep.subr.bf16.mxu0 0
        %3047 = vmatpush1.bf16.msra.mxu0 %v3044
        %3048 = vmatprep.subr.bf16.mxu0 0
        %3049 = vmatpush1.bf16.msra.mxu0 0
        %3050 = vmatprep.subr.bf16.mxu0 0
        %3051 = vmatpush1.bf16.msra.mxu0 0
        %3052 = vmatprep.subr.bf16.mxu0 0
        %3053 = vmatpush1.bf16.msra.mxu0 0
        %3054 = vmatprep.subr.bf16.mxu0 0
        %3055 = vmatpush1.bf16.msra.mxu0 0
        %3056 = vmatprep.subr.bf16.mxu0 0
        %3057 = vmatpush1.bf16.msra.mxu0 0
        %3058 = vmatprep.subr.bf16.mxu0 0
        %3059 = vmatpush1.bf16.msra.mxu0 0
        %3060 = vmatprep.subr.bf16.mxu0 0
        %3061 = vmatpush1.bf16.msra.mxu0 0
        %3062 = vmatprep.subr.bf16.mxu0 0
        %3063 = vmatpush1.bf16.msra.mxu0 0
        %3064 = vmatprep.subr.bf16.mxu0 0
        %3065 = vmatpush1.bf16.msra.mxu0 0
        %3066 = vmatprep.subr.bf16.mxu0 0
        %3067 = vmatpush1.bf16.msra.mxu0 0
        %3068 = vmatprep.subr.bf16.mxu0 0
        %3069 = vmatpush1.bf16.msra.mxu0 0
        %3070 = vmatprep.subr.bf16.mxu0 0
        %3071 = vmatpush1.bf16.msra.mxu0 0
        %3072 = vmatprep.subr.bf16.mxu0 0
        %3073 = vmatpush1.bf16.msra.mxu0 0
        %3074 = vmatprep.subr.bf16.mxu0 0
        %3075 = vmatpush1.bf16.msra.mxu0 0
        %3076 = vmatprep.subr.bf16.mxu0 0
        %3077 = vmatpush1.bf16.msra.mxu0 0
        %3078 = vmatprep.mubr.bf16.mxu0 0
        %3079 = vmatmul.mubr.bf16.gmra.mrb[0].mxu0 %v2996
        %v3080 = vpop.f32.mrb[0].mxu0
        %v3081 = vadd.f32 0.0, %v3080
        %v3082 = vpop.f32.mrb[0].mxu0
        %v3083 = vpop.f32.mrb[0].mxu0
        %v3084 = vadd.f32 0.0, %v3083
        %v3085 = vpop.f32.mrb[0].mxu0
        %3086 = vmatprep.mubr.bf16.mxu0 0
        %3087 = vmatmul.mubr.bf16.gmra.mrb[0].mxu0 %v2999
        %v3088 = vpop.f32.mrb[0].mxu0
        %v3089 = vadd.f32 0.0, %v3088
        %v3090 = vpop.f32.mrb[0].mxu0
        %v3091 = vpop.f32.mrb[0].mxu0
        %v3092 = vadd.f32 0.0, %v3091
        %v3093 = vpop.f32.mrb[0].mxu0
        %3094 = vmatprep.mubr.bf16.mxu0 0
        %3095 = vmatmul.mubr.bf16.gmra.mrb[0].mxu0 %v3002
        %v3096 = vpop.f32.mrb[0].mxu0
        %v3097 = vadd.f32 0.0, %v3096
        %v3098 = vpop.f32.mrb[0].mxu0
        %v3099 = vpop.f32.mrb[0].mxu0
        %v3100 = vadd.f32 0.0, %v3099
        %v3101 = vpop.f32.mrb[0].mxu0
        %3102 = vmatprep.mubr.bf16.mxu0 0
        %3103 = vmatmul.mubr.bf16.gmra.mrb[0].mxu0 %v3005
        %v3104 = vpop.f32.mrb[0].mxu0
        %v3105 = vadd.f32 0.0, %v3104
        %v3106 = vpop.f32.mrb[0].mxu0
        %v3107 = vpop.f32.mrb[0].mxu0
        %v3108 = vadd.f32 0.0, %v3107
        %v3109 = vpop.f32.mrb[0].mxu0
        %3110 = vmatprep.mubr.bf16.mxu0 0
        %3111 = vmatmul.mubr.bf16.gmra.mrb[0].mxu0 %v3008
        %v3112 = vpop.f32.mrb[0].mxu0
        %v3113 = vadd.f32 0.0, %v3112
        %v3114 = vpop.f32.mrb[0].mxu0
        %v3115 = vpop.f32.mrb[0].mxu0
        %v3116 = vadd.f32 0.0, %v3115
        %v3117 = vpop.f32.mrb[0].mxu0
        %3118 = vmatprep.mubr.bf16.mxu0 0
        %3119 = vmatmul.mubr.bf16.gmra.mrb[0].mxu0 %v3011
        %v3120 = vpop.f32.mrb[0].mxu0
        %v3121 = vadd.f32 0.0, %v3120
        %v3122 = vpop.f32.mrb[0].mxu0
        %v3123 = vpop.f32.mrb[0].mxu0
        %v3124 = vadd.f32 0.0, %v3123
        %v3125 = vpop.f32.mrb[0].mxu0
        %3126 = vmatprep.mubr.bf16.mxu0 0
        %3127 = vmatmul.mubr.bf16.gmra.mrb[0].mxu0 %v3014
        %v3128 = vpop.f32.mrb[0].mxu0
        %v3129 = vadd.f32 0.0, %v3128
        %v3130 = vpop.f32.mrb[0].mxu0
        %v3131 = vpop.f32.mrb[0].mxu0
        %v3132 = vadd.f32 0.0, %v3131
        %v3133 = vpop.f32.mrb[0].mxu0
        %3134 = vmatprep.mubr.bf16.mxu0 0
        %3135 = vmatmul.mubr.bf16.gmra.mrb[0].mxu0 %v3017
        %v3136 = vpop.f32.mrb[0].mxu0
        %v3137 = vadd.f32 0.0, %v3136
        %v3138 = vpop.f32.mrb[0].mxu0
        %v3139 = vpop.f32.mrb[0].mxu0
        %v3140 = vadd.f32 0.0, %v3139
        %v3141 = vpop.f32.mrb[0].mxu0
        %3142 = vmatprep.mubr.bf16.mxu0 0
        %3143 = vmatmul.mubr.bf16.gmra.mrb[0].mxu0 %v3020
        %v3144 = vpop.f32.mrb[0].mxu0
        %v3145 = vadd.f32 0.0, %v3144
        %v3146 = vpop.f32.mrb[0].mxu0
        %v3147 = vpop.f32.mrb[0].mxu0
        %v3148 = vadd.f32 0.0, %v3147
        %v3149 = vpop.f32.mrb[0].mxu0
        %3150 = vmatprep.mubr.bf16.mxu0 0
        %3151 = vmatmul.mubr.bf16.gmra.mrb[0].mxu0 %v3023
        %v3152 = vpop.f32.mrb[0].mxu0
        %v3153 = vadd.f32 0.0, %v3152
        %v3154 = vpop.f32.mrb[0].mxu0
        %v3155 = vpop.f32.mrb[0].mxu0
        %v3156 = vadd.f32 0.0, %v3155
        %v3157 = vpop.f32.mrb[0].mxu0
        %3158 = vmatprep.mubr.bf16.mxu0 0
        %3159 = vmatmul.mubr.bf16.gmra.mrb[0].mxu0 %v3026
        %v3160 = vpop.f32.mrb[0].mxu0
        %v3161 = vadd.f32 0.0, %v3160
        %v3162 = vpop.f32.mrb[0].mxu0
        %v3163 = vpop.f32.mrb[0].mxu0
        %v3164 = vadd.f32 0.0, %v3163
        %v3165 = vpop.f32.mrb[0].mxu0
        %3166 = vmatprep.mubr.bf16.mxu0 0
        %3167 = vmatmul.mubr.bf16.gmra.mrb[0].mxu0 %v3029
        %v3168 = vpop.f32.mrb[0].mxu0
        %v3169 = vadd.f32 0.0, %v3168
        %v3170 = vpop.f32.mrb[0].mxu0
        %v3171 = vpop.f32.mrb[0].mxu0
        %v3172 = vadd.f32 0.0, %v3171
        %v3173 = vpop.f32.mrb[0].mxu0
        %3174 = vmatprep.mubr.bf16.mxu0 0
        %3175 = vmatmul.mubr.bf16.gmra.mrb[0].mxu0 %v3032
        %v3176 = vpop.f32.mrb[0].mxu0
        %v3177 = vadd.f32 0.0, %v3176
        %v3178 = vpop.f32.mrb[0].mxu0
        %v3179 = vpop.f32.mrb[0].mxu0
        %v3180 = vadd.f32 0.0, %v3179
        %v3181 = vpop.f32.mrb[0].mxu0
        %3182 = vmatprep.mubr.bf16.mxu0 0
        %3183 = vmatmul.mubr.bf16.gmra.mrb[0].mxu0 %v3035
        %v3184 = vpop.f32.mrb[0].mxu0
        %v3185 = vadd.f32 0.0, %v3184
        %v3186 = vpop.f32.mrb[0].mxu0
        %v3187 = vpop.f32.mrb[0].mxu0
        %v3188 = vadd.f32 0.0, %v3187
        %v3189 = vpop.f32.mrb[0].mxu0
        %3190 = vmatprep.mubr.bf16.mxu0 0
        %3191 = vmatmul.mubr.bf16.gmra.mrb[0].mxu0 %v3038
        %v3192 = vpop.f32.mrb[0].mxu0
        %v3193 = vadd.f32 0.0, %v3192
        %v3194 = vpop.f32.mrb[0].mxu0
        %v3195 = vpop.f32.mrb[0].mxu0
        %v3196 = vadd.f32 0.0, %v3195
        %v3197 = vpop.f32.mrb[0].mxu0
        %3198 = vmatprep.mubr.bf16.mxu0 0
        %3199 = vmatmul.mubr.bf16.gmra.mrb[0].mxu0 %v3041
        %v3200 = vpop.f32.mrb[0].mxu0
        %v3201 = vadd.f32 0.0, %v3200
        %v3202 = vpop.f32.mrb[0].mxu0
        %v3203 = vpop.f32.mrb[0].mxu0
        %v3204 = vadd.f32 0.0, %v3203
        %v3205 = vpop.f32.mrb[0].mxu0
        %3206 = vdwg.mxu0
        %v3207 = vadd.f32 %v2737, %v3081
        %v3208 = vadd.f32 %v2738, %v3084
        %v3209 = vadd.f32 %v2739, %v3089
        %v3210 = vadd.f32 %v2740, %v3092
        %v3211 = vadd.f32 %v2741, %v3097
        %v3212 = vadd.f32 %v2742, %v3100
        %v3213 = vadd.f32 %v2743, %v3105
        %v3214 = vadd.f32 %v2744, %v3108
        %v3215 = vadd.f32 %v2745, %v3113
        %v3216 = vadd.f32 %v2746, %v3116
        %v3217 = vadd.f32 %v2747, %v3121
        %v3218 = vadd.f32 %v2748, %v3124
        %v3219 = vadd.f32 %v2749, %v3129
        %v3220 = vadd.f32 %v2750, %v3132
        %v3221 = vadd.f32 %v2751, %v3137
        %v3222 = vadd.f32 %v2752, %v3140
        %v3223 = vadd.f32 %v2753, %v3145
        %v3224 = vadd.f32 %v2754, %v3148
        %v3225 = vadd.f32 %v2755, %v3153
        %v3226 = vadd.f32 %v2756, %v3156
        %v3227 = vadd.f32 %v2757, %v3161
        %v3228 = vadd.f32 %v2758, %v3164
        %v3229 = vadd.f32 %v2759, %v3169
        %v3230 = vadd.f32 %v2760, %v3172
        %v3231 = vadd.f32 %v2761, %v3177
        %v3232 = vadd.f32 %v2762, %v3180
        %v3233 = vadd.f32 %v2763, %v3185
        %v3234 = vadd.f32 %v2764, %v3188
        %v3235 = vadd.f32 %v2765, %v3193
        %v3236 = vadd.f32 %v2766, %v3196
        %v3237 = vadd.f32 %v2767, %v3201
        %v3238 = vadd.f32 %v2768, %v3204
        %s3239 = scalar_lea.vmem %s230, 24
        %v3240 = vld [vmem:[%s3239] sm:$0xf]
        %v3241 = vld [vmem:[%s3239 + $0x4] sm:$0xf]
        %v3242 = vld [vmem:[%s3239 + $0xc] sm:$0xf]
        %v3243 = vld [vmem:[%s3239 + $0x10] sm:$0xf]
        %v3244 = vld [vmem:[%s3239 + $0x18] sm:$0xf]
        %v3245 = vld [vmem:[%s3239 + $0x1c] sm:$0xf]
        %v3246 = vld [vmem:[%s3239 + $0x24] sm:$0xf]
        %v3247 = vld [vmem:[%s3239 + $0x28] sm:$0xf]
        %v3248 = vld [vmem:[%s3239 + $0x30] sm:$0xf]
        %v3249 = vld [vmem:[%s3239 + $0x34] sm:$0xf]
        %v3250 = vld [vmem:[%s3239 + $0x3c] sm:$0xf]
        %v3251 = vld [vmem:[%s3239 + $0x40] sm:$0xf]
        %v3252 = vld [vmem:[%s3239 + $0x48] sm:$0xf]
        %v3253 = vld [vmem:[%s3239 + $0x4c] sm:$0xf]
        %v3254 = vld [vmem:[%s3239 + $0x54] sm:$0xf]
        %v3255 = vld [vmem:[%s3239 + $0x58] sm:$0xf]
        %v3256 = vld [vmem:[%s3239 + $0x60] sm:$0xf]
        %v3257 = vld [vmem:[%s3239 + $0x64] sm:$0xf]
        %v3258 = vld [vmem:[%s3239 + $0x6c] sm:$0xf]
        %v3259 = vld [vmem:[%s3239 + $0x70] sm:$0xf]
        %v3260 = vld [vmem:[%s3239 + $0x78] sm:$0xf]
        %v3261 = vld [vmem:[%s3239 + $0x7c] sm:$0xf]
        %v3262 = vld [vmem:[%s3239 + $0x84] sm:$0xf]
        %v3263 = vld [vmem:[%s3239 + $0x88] sm:$0xf]
        %v3264 = vld [vmem:[%s3239 + $0x90] sm:$0xf]
        %v3265 = vld [vmem:[%s3239 + $0x94] sm:$0xf]
        %v3266 = vld [vmem:[%s3239 + $0x9c] sm:$0xf]
        %v3267 = vld [vmem:[%s3239 + $0xa0] sm:$0xf]
        %v3268 = vld [vmem:[%s3239 + $0xa8] sm:$0xf]
        %v3269 = vld [vmem:[%s3239 + $0xac] sm:$0xf]
        %v3270 = vld [vmem:[%s3239 + $0xb4] sm:$0xf]
        %v3271 = vld [vmem:[%s3239 + $0xb8] sm:$0xf]
        %s3272 = scalar_lea.vmem [#allocation2], 12
        %v3273 = vld [vmem:[%s3272] sm:$0x3]
        %v3306 = vunpack.c.l.b16 %v3240
        %v3307 = vunpack.c.l.b16 %v3241
        %v3308 = vunpack.c.l.b16 %v3242
        %v3309 = vunpack.c.l.b16 %v3243
        %v3310 = vunpack.c.l.b16 %v3244
        %v3311 = vunpack.c.l.b16 %v3245
        %v3312 = vunpack.c.l.b16 %v3246
        %v3313 = vunpack.c.l.b16 %v3247
        %v3314 = vunpack.c.l.b16 %v3248
        %v3315 = vunpack.c.l.b16 %v3249
        %v3316 = vunpack.c.l.b16 %v3250
        %v3317 = vunpack.c.l.b16 %v3251
        %v3318 = vunpack.c.l.b16 %v3252
        %v3319 = vunpack.c.l.b16 %v3253
        %v3320 = vunpack.c.l.b16 %v3254
        %v3321 = vunpack.c.l.b16 %v3255
        %v3322 = vunpack.c.l.b16 %v3256
        %v3323 = vunpack.c.l.b16 %v3257
        %v3324 = vunpack.c.l.b16 %v3258
        %v3325 = vunpack.c.l.b16 %v3259
        %v3326 = vunpack.c.l.b16 %v3260
        %v3327 = vunpack.c.l.b16 %v3261
        %v3328 = vunpack.c.l.b16 %v3262
        %v3329 = vunpack.c.l.b16 %v3263
        %v3330 = vunpack.c.l.b16 %v3264
        %v3331 = vunpack.c.l.b16 %v3265
        %v3332 = vunpack.c.l.b16 %v3266
        %v3333 = vunpack.c.l.b16 %v3267
        %v3334 = vunpack.c.l.b16 %v3268
        %v3335 = vunpack.c.l.b16 %v3269
        %v3336 = vunpack.c.l.b16 %v3270
        %v3337 = vunpack.c.l.b16 %v3271
        %v3338 = vpack.c.b16 %v3307, %v3306
        %v3339 = vpack.c.b16 %v3309, %v3308
        %v3340 = vpack.c.b16 %v3311, %v3310
        %v3341 = vpack.c.b16 %v3313, %v3312
        %v3342 = vpack.c.b16 %v3315, %v3314
        %v3343 = vpack.c.b16 %v3317, %v3316
        %v3344 = vpack.c.b16 %v3319, %v3318
        %v3345 = vpack.c.b16 %v3321, %v3320
        %v3346 = vpack.c.b16 %v3323, %v3322
        %v3347 = vpack.c.b16 %v3325, %v3324
        %v3348 = vpack.c.b16 %v3327, %v3326
        %v3349 = vpack.c.b16 %v3329, %v3328
        %v3350 = vpack.c.b16 %v3331, %v3330
        %v3351 = vpack.c.b16 %v3333, %v3332
        %v3352 = vpack.c.b16 %v3335, %v3334
        %v3353 = vpack.c.b16 %v3337, %v3336
        %v3355 = vsel %vm721, %v3338, 0
        %v3358 = vsel %vm721, %v3339, 0
        %v3361 = vsel %vm721, %v3340, 0
        %v3364 = vsel %vm721, %v3341, 0
        %v3367 = vsel %vm721, %v3342, 0
        %v3370 = vsel %vm721, %v3343, 0
        %v3373 = vsel %vm721, %v3344, 0
        %v3376 = vsel %vm721, %v3345, 0
        %v3379 = vsel %vm721, %v3346, 0
        %v3382 = vsel %vm721, %v3347, 0
        %v3385 = vsel %vm721, %v3348, 0
        %v3388 = vsel %vm721, %v3349, 0
        %v3391 = vsel %vm721, %v3350, 0
        %v3394 = vsel %vm721, %v3351, 0
        %v3397 = vsel %vm721, %v3352, 0
        %v3400 = vsel %vm721, %v3353, 0
        %v3403 = vsel %vm770, %v3273, 0
        %3405 = vmatprep.subr.bf16.mxu0 0
        %3406 = vmatpush1.bf16.msra.mxu0 %v3403
        %3407 = vmatprep.subr.bf16.mxu0 0
        %3408 = vmatpush1.bf16.msra.mxu0 0
        %3409 = vmatprep.subr.bf16.mxu0 0
        %3410 = vmatpush1.bf16.msra.mxu0 0
        %3411 = vmatprep.subr.bf16.mxu0 0
        %3412 = vmatpush1.bf16.msra.mxu0 0
        %3413 = vmatprep.subr.bf16.mxu0 0
        %3414 = vmatpush1.bf16.msra.mxu0 0
        %3415 = vmatprep.subr.bf16.mxu0 0
        %3416 = vmatpush1.bf16.msra.mxu0 0
        %3417 = vmatprep.subr.bf16.mxu0 0
        %3418 = vmatpush1.bf16.msra.mxu0 0
        %3419 = vmatprep.subr.bf16.mxu0 0
        %3420 = vmatpush1.bf16.msra.mxu0 0
        %3421 = vmatprep.subr.bf16.mxu0 0
        %3422 = vmatpush1.bf16.msra.mxu0 0
        %3423 = vmatprep.subr.bf16.mxu0 0
        %3424 = vmatpush1.bf16.msra.mxu0 0
        %3425 = vmatprep.subr.bf16.mxu0 0
        %3426 = vmatpush1.bf16.msra.mxu0 0
        %3427 = vmatprep.subr.bf16.mxu0 0
        %3428 = vmatpush1.bf16.msra.mxu0 0
        %3429 = vmatprep.subr.bf16.mxu0 0
        %3430 = vmatpush1.bf16.msra.mxu0 0
        %3431 = vmatprep.subr.bf16.mxu0 0
        %3432 = vmatpush1.bf16.msra.mxu0 0
        %3433 = vmatprep.subr.bf16.mxu0 0
        %3434 = vmatpush1.bf16.msra.mxu0 0
        %3435 = vmatprep.subr.bf16.mxu0 0
        %3436 = vmatpush1.bf16.msra.mxu0 0
        %3437 = vmatprep.mubr.bf16.mxu0 0
        %3438 = vmatmul.mubr.bf16.gmra.mrb[0].mxu0 %v3355
        %v3439 = vpop.f32.mrb[0].mxu0
        %v3440 = vadd.f32 0.0, %v3439
        %v3441 = vpop.f32.mrb[0].mxu0
        %v3442 = vpop.f32.mrb[0].mxu0
        %v3443 = vadd.f32 0.0, %v3442
        %v3444 = vpop.f32.mrb[0].mxu0
        %3445 = vmatprep.mubr.bf16.mxu0 0
        %3446 = vmatmul.mubr.bf16.gmra.mrb[0].mxu0 %v3358
        %v3447 = vpop.f32.mrb[0].mxu0
        %v3448 = vadd.f32 0.0, %v3447
        %v3449 = vpop.f32.mrb[0].mxu0
        %v3450 = vpop.f32.mrb[0].mxu0
        %v3451 = vadd.f32 0.0, %v3450
        %v3452 = vpop.f32.mrb[0].mxu0
        %3453 = vmatprep.mubr.bf16.mxu0 0
        %3454 = vmatmul.mubr.bf16.gmra.mrb[0].mxu0 %v3361
        %v3455 = vpop.f32.mrb[0].mxu0
        %v3456 = vadd.f32 0.0, %v3455
        %v3457 = vpop.f32.mrb[0].mxu0
        %v3458 = vpop.f32.mrb[0].mxu0
        %v3459 = vadd.f32 0.0, %v3458
        %v3460 = vpop.f32.mrb[0].mxu0
        %3461 = vmatprep.mubr.bf16.mxu0 0
        %3462 = vmatmul.mubr.bf16.gmra.mrb[0].mxu0 %v3364
        %v3463 = vpop.f32.mrb[0].mxu0
        %v3464 = vadd.f32 0.0, %v3463
        %v3465 = vpop.f32.mrb[0].mxu0
        %v3466 = vpop.f32.mrb[0].mxu0
        %v3467 = vadd.f32 0.0, %v3466
        %v3468 = vpop.f32.mrb[0].mxu0
        %3469 = vmatprep.mubr.bf16.mxu0 0
        %3470 = vmatmul.mubr.bf16.gmra.mrb[0].mxu0 %v3367
        %v3471 = vpop.f32.mrb[0].mxu0
        %v3472 = vadd.f32 0.0, %v3471
        %v3473 = vpop.f32.mrb[0].mxu0
        %v3474 = vpop.f32.mrb[0].mxu0
        %v3475 = vadd.f32 0.0, %v3474
        %v3476 = vpop.f32.mrb[0].mxu0
        %3477 = vmatprep.mubr.bf16.mxu0 0
        %3478 = vmatmul.mubr.bf16.gmra.mrb[0].mxu0 %v3370
        %v3479 = vpop.f32.mrb[0].mxu0
        %v3480 = vadd.f32 0.0, %v3479
        %v3481 = vpop.f32.mrb[0].mxu0
        %v3482 = vpop.f32.mrb[0].mxu0
        %v3483 = vadd.f32 0.0, %v3482
        %v3484 = vpop.f32.mrb[0].mxu0
        %3485 = vmatprep.mubr.bf16.mxu0 0
        %3486 = vmatmul.mubr.bf16.gmra.mrb[0].mxu0 %v3373
        %v3487 = vpop.f32.mrb[0].mxu0
        %v3488 = vadd.f32 0.0, %v3487
        %v3489 = vpop.f32.mrb[0].mxu0
        %v3490 = vpop.f32.mrb[0].mxu0
        %v3491 = vadd.f32 0.0, %v3490
        %v3492 = vpop.f32.mrb[0].mxu0
        %3493 = vmatprep.mubr.bf16.mxu0 0
        %3494 = vmatmul.mubr.bf16.gmra.mrb[0].mxu0 %v3376
        %v3495 = vpop.f32.mrb[0].mxu0
        %v3496 = vadd.f32 0.0, %v3495
        %v3497 = vpop.f32.mrb[0].mxu0
        %v3498 = vpop.f32.mrb[0].mxu0
        %v3499 = vadd.f32 0.0, %v3498
        %v3500 = vpop.f32.mrb[0].mxu0
        %3501 = vmatprep.mubr.bf16.mxu0 0
        %3502 = vmatmul.mubr.bf16.gmra.mrb[0].mxu0 %v3379
        %v3503 = vpop.f32.mrb[0].mxu0
        %v3504 = vadd.f32 0.0, %v3503
        %v3505 = vpop.f32.mrb[0].mxu0
        %v3506 = vpop.f32.mrb[0].mxu0
        %v3507 = vadd.f32 0.0, %v3506
        %v3508 = vpop.f32.mrb[0].mxu0
        %3509 = vmatprep.mubr.bf16.mxu0 0
        %3510 = vmatmul.mubr.bf16.gmra.mrb[0].mxu0 %v3382
        %v3511 = vpop.f32.mrb[0].mxu0
        %v3512 = vadd.f32 0.0, %v3511
        %v3513 = vpop.f32.mrb[0].mxu0
        %v3514 = vpop.f32.mrb[0].mxu0
        %v3515 = vadd.f32 0.0, %v3514
        %v3516 = vpop.f32.mrb[0].mxu0
        %3517 = vmatprep.mubr.bf16.mxu0 0
        %3518 = vmatmul.mubr.bf16.gmra.mrb[0].mxu0 %v3385
        %v3519 = vpop.f32.mrb[0].mxu0
        %v3520 = vadd.f32 0.0, %v3519
        %v3521 = vpop.f32.mrb[0].mxu0
        %v3522 = vpop.f32.mrb[0].mxu0
        %v3523 = vadd.f32 0.0, %v3522
        %v3524 = vpop.f32.mrb[0].mxu0
        %3525 = vmatprep.mubr.bf16.mxu0 0
        %3526 = vmatmul.mubr.bf16.gmra.mrb[0].mxu0 %v3388
        %v3527 = vpop.f32.mrb[0].mxu0
        %v3528 = vadd.f32 0.0, %v3527
        %v3529 = vpop.f32.mrb[0].mxu0
        %v3530 = vpop.f32.mrb[0].mxu0
        %v3531 = vadd.f32 0.0, %v3530
        %v3532 = vpop.f32.mrb[0].mxu0
        %3533 = vmatprep.mubr.bf16.mxu0 0
        %3534 = vmatmul.mubr.bf16.gmra.mrb[0].mxu0 %v3391
        %v3535 = vpop.f32.mrb[0].mxu0
        %v3536 = vadd.f32 0.0, %v3535
        %v3537 = vpop.f32.mrb[0].mxu0
        %v3538 = vpop.f32.mrb[0].mxu0
        %v3539 = vadd.f32 0.0, %v3538
        %v3540 = vpop.f32.mrb[0].mxu0
        %3541 = vmatprep.mubr.bf16.mxu0 0
        %3542 = vmatmul.mubr.bf16.gmra.mrb[0].mxu0 %v3394
        %v3543 = vpop.f32.mrb[0].mxu0
        %v3544 = vadd.f32 0.0, %v3543
        %v3545 = vpop.f32.mrb[0].mxu0
        %v3546 = vpop.f32.mrb[0].mxu0
        %v3547 = vadd.f32 0.0, %v3546
        %v3548 = vpop.f32.mrb[0].mxu0
        %3549 = vmatprep.mubr.bf16.mxu0 0
        %3550 = vmatmul.mubr.bf16.gmra.mrb[0].mxu0 %v3397
        %v3551 = vpop.f32.mrb[0].mxu0
        %v3552 = vadd.f32 0.0, %v3551
        %v3553 = vpop.f32.mrb[0].mxu0
        %v3554 = vpop.f32.mrb[0].mxu0
        %v3555 = vadd.f32 0.0, %v3554
        %v3556 = vpop.f32.mrb[0].mxu0
        %3557 = vmatprep.mubr.bf16.mxu0 0
        %3558 = vmatmul.mubr.bf16.gmra.mrb[0].mxu0 %v3400
        %v3559 = vpop.f32.mrb[0].mxu0
        %v3560 = vadd.f32 0.0, %v3559
        %v3561 = vpop.f32.mrb[0].mxu0
        %v3562 = vpop.f32.mrb[0].mxu0
        %v3563 = vadd.f32 0.0, %v3562
        %v3564 = vpop.f32.mrb[0].mxu0
        %3565 = vdwg.mxu0
        %v3566 = vadd.f32 %v3207, %v3440
        %v3567 = vadd.f32 %v3208, %v3443
        %v3568 = vadd.f32 %v3209, %v3448
        %v3569 = vadd.f32 %v3210, %v3451
        %v3570 = vadd.f32 %v3211, %v3456
        %v3571 = vadd.f32 %v3212, %v3459
        %v3572 = vadd.f32 %v3213, %v3464
        %v3573 = vadd.f32 %v3214, %v3467
        %v3574 = vadd.f32 %v3215, %v3472
        %v3575 = vadd.f32 %v3216, %v3475
        %v3576 = vadd.f32 %v3217, %v3480
        %v3577 = vadd.f32 %v3218, %v3483
        %v3578 = vadd.f32 %v3219, %v3488
        %v3579 = vadd.f32 %v3220, %v3491
        %v3580 = vadd.f32 %v3221, %v3496
        %v3581 = vadd.f32 %v3222, %v3499
        %v3582 = vadd.f32 %v3223, %v3504
        %v3583 = vadd.f32 %v3224, %v3507
        %v3584 = vadd.f32 %v3225, %v3512
        %v3585 = vadd.f32 %v3226, %v3515
        %v3586 = vadd.f32 %v3227, %v3520
        %v3587 = vadd.f32 %v3228, %v3523
        %v3588 = vadd.f32 %v3229, %v3528
        %v3589 = vadd.f32 %v3230, %v3531
        %v3590 = vadd.f32 %v3231, %v3536
        %v3591 = vadd.f32 %v3232, %v3539
        %v3592 = vadd.f32 %v3233, %v3544
        %v3593 = vadd.f32 %v3234, %v3547
        %v3594 = vadd.f32 %v3235, %v3552
        %v3595 = vadd.f32 %v3236, %v3555
        %v3596 = vadd.f32 %v3237, %v3560
        %v3597 = vadd.f32 %v3238, %v3563
        %v3598 = vld [vmem:[%s3239] sm:$0xf]
        %v3599 = vld [vmem:[%s3239 + $0x4] sm:$0xf]
        %v3600 = vld [vmem:[%s3239 + $0x8] sm:$0x1]
        %v3601 = vld [vmem:[%s3239 + $0xc] sm:$0xf]
        %v3602 = vld [vmem:[%s3239 + $0x10] sm:$0xf]
        %v3603 = vld [vmem:[%s3239 + $0x14] sm:$0x1]
        %v3604 = vld [vmem:[%s3239 + $0x18] sm:$0xf]
        %v3605 = vld [vmem:[%s3239 + $0x1c] sm:$0xf]
        %v3606 = vld [vmem:[%s3239 + $0x20] sm:$0x1]
        %v3607 = vld [vmem:[%s3239 + $0x24] sm:$0xf]
        %v3608 = vld [vmem:[%s3239 + $0x28] sm:$0xf]
        %v3609 = vld [vmem:[%s3239 + $0x2c] sm:$0x1]
        %v3610 = vld [vmem:[%s3239 + $0x30] sm:$0xf]
        %v3611 = vld [vmem:[%s3239 + $0x34] sm:$0xf]
        %v3612 = vld [vmem:[%s3239 + $0x38] sm:$0x1]
        %v3613 = vld [vmem:[%s3239 + $0x3c] sm:$0xf]
        %v3614 = vld [vmem:[%s3239 + $0x40] sm:$0xf]
        %v3615 = vld [vmem:[%s3239 + $0x44] sm:$0x1]
        %v3616 = vld [vmem:[%s3239 + $0x48] sm:$0xf]
        %v3617 = vld [vmem:[%s3239 + $0x4c] sm:$0xf]
        %v3618 = vld [vmem:[%s3239 + $0x50] sm:$0x1]
        %v3619 = vld [vmem:[%s3239 + $0x54] sm:$0xf]
        %v3620 = vld [vmem:[%s3239 + $0x58] sm:$0xf]
        %v3621 = vld [vmem:[%s3239 + $0x5c] sm:$0x1]
        %v3622 = vld [vmem:[%s3239 + $0x60] sm:$0xf]
        %v3623 = vld [vmem:[%s3239 + $0x64] sm:$0xf]
        %v3624 = vld [vmem:[%s3239 + $0x68] sm:$0x1]
        %v3625 = vld [vmem:[%s3239 + $0x6c] sm:$0xf]
        %v3626 = vld [vmem:[%s3239 + $0x70] sm:$0xf]
        %v3627 = vld [vmem:[%s3239 + $0x74] sm:$0x1]
        %v3628 = vld [vmem:[%s3239 + $0x78] sm:$0xf]
        %v3629 = vld [vmem:[%s3239 + $0x7c] sm:$0xf]
        %v3630 = vld [vmem:[%s3239 + $0x80] sm:$0x1]
        %v3631 = vld [vmem:[%s3239 + $0x84] sm:$0xf]
        %v3632 = vld [vmem:[%s3239 + $0x88] sm:$0xf]
        %v3633 = vld [vmem:[%s3239 + $0x8c] sm:$0x1]
        %v3634 = vld [vmem:[%s3239 + $0x90] sm:$0xf]
        %v3635 = vld [vmem:[%s3239 + $0x94] sm:$0xf]
        %v3636 = vld [vmem:[%s3239 + $0x98] sm:$0x1]
        %v3637 = vld [vmem:[%s3239 + $0x9c] sm:$0xf]
        %v3638 = vld [vmem:[%s3239 + $0xa0] sm:$0xf]
        %v3639 = vld [vmem:[%s3239 + $0xa4] sm:$0x1]
        %v3640 = vld [vmem:[%s3239 + $0xa8] sm:$0xf]
        %v3641 = vld [vmem:[%s3239 + $0xac] sm:$0xf]
        %v3642 = vld [vmem:[%s3239 + $0xb0] sm:$0x1]
        %v3643 = vld [vmem:[%s3239 + $0xb4] sm:$0xf]
        %v3644 = vld [vmem:[%s3239 + $0xb8] sm:$0xf]
        %v3645 = vld [vmem:[%s3239 + $0xbc] sm:$0x1]
        %v3647 = vshrl.u32 %v3598, 16
        %v3649 = vrot.slane %v3647, 4
        %v3650 = vshll.u32 %v3598, 16
        %v3652 = vrot.slane %v3650, 5
        %v3653 = vor.u32 %v3649, %v3652
        %v3654 = vrot.slane %v3653, 4
        %v3656 = vshll.u32 %v3599, 16
        %v3658 = vrot.slane %v3656, 5
        %v3659 = vsel %vm286, %v3654, %v3658
        %v3660 = vshrl.u32 %v3599, 16
        %v3662 = vrot.slane %v3660, 4
        %v3663 = vor.u32 %v3662, %v3658
        %v3664 = vrot.slane %v3663, 4
        %v3666 = vshll.u32 %v3600, 16
        %v3668 = vrot.slane %v3666, 5
        %v3669 = vsel %vm286, %v3664, %v3668
        %v3671 = vshrl.u32 %v3601, 16
        %v3673 = vrot.slane %v3671, 4
        %v3674 = vshll.u32 %v3601, 16
        %v3676 = vrot.slane %v3674, 5
        %v3677 = vor.u32 %v3673, %v3676
        %v3678 = vrot.slane %v3677, 4
        %v3680 = vshll.u32 %v3602, 16
        %v3682 = vrot.slane %v3680, 5
        %v3683 = vsel %vm286, %v3678, %v3682
        %v3684 = vshrl.u32 %v3602, 16
        %v3686 = vrot.slane %v3684, 4
        %v3687 = vor.u32 %v3686, %v3682
        %v3688 = vrot.slane %v3687, 4
        %v3690 = vshll.u32 %v3603, 16
        %v3692 = vrot.slane %v3690, 5
        %v3693 = vsel %vm286, %v3688, %v3692
        %v3695 = vshrl.u32 %v3604, 16
        %v3697 = vrot.slane %v3695, 4
        %v3698 = vshll.u32 %v3604, 16
        %v3700 = vrot.slane %v3698, 5
        %v3701 = vor.u32 %v3697, %v3700
        %v3702 = vrot.slane %v3701, 4
        %v3704 = vshll.u32 %v3605, 16
        %v3706 = vrot.slane %v3704, 5
        %v3707 = vsel %vm286, %v3702, %v3706
        %v3708 = vshrl.u32 %v3605, 16
        %v3710 = vrot.slane %v3708, 4
        %v3711 = vor.u32 %v3710, %v3706
        %v3712 = vrot.slane %v3711, 4
        %v3714 = vshll.u32 %v3606, 16
        %v3716 = vrot.slane %v3714, 5
        %v3717 = vsel %vm286, %v3712, %v3716
        %v3719 = vshrl.u32 %v3607, 16
        %v3721 = vrot.slane %v3719, 4
        %v3722 = vshll.u32 %v3607, 16
        %v3724 = vrot.slane %v3722, 5
        %v3725 = vor.u32 %v3721, %v3724
        %v3726 = vrot.slane %v3725, 4
        %v3728 = vshll.u32 %v3608, 16
        %v3730 = vrot.slane %v3728, 5
        %v3731 = vsel %vm286, %v3726, %v3730
        %v3732 = vshrl.u32 %v3608, 16
        %v3734 = vrot.slane %v3732, 4
        %v3735 = vor.u32 %v3734, %v3730
        %v3736 = vrot.slane %v3735, 4
        %v3738 = vshll.u32 %v3609, 16
        %v3740 = vrot.slane %v3738, 5
        %v3741 = vsel %vm286, %v3736, %v3740
        %v3743 = vshrl.u32 %v3610, 16
        %v3745 = vrot.slane %v3743, 4
        %v3746 = vshll.u32 %v3610, 16
        %v3748 = vrot.slane %v3746, 5
        %v3749 = vor.u32 %v3745, %v3748
        %v3750 = vrot.slane %v3749, 4
        %v3752 = vshll.u32 %v3611, 16
        %v3754 = vrot.slane %v3752, 5
        %v3755 = vsel %vm286, %v3750, %v3754
        %v3756 = vshrl.u32 %v3611, 16
        %v3758 = vrot.slane %v3756, 4
        %v3759 = vor.u32 %v3758, %v3754
        %v3760 = vrot.slane %v3759, 4
        %v3762 = vshll.u32 %v3612, 16
        %v3764 = vrot.slane %v3762, 5
        %v3765 = vsel %vm286, %v3760, %v3764
        %v3767 = vshrl.u32 %v3613, 16
        %v3769 = vrot.slane %v3767, 4
        %v3770 = vshll.u32 %v3613, 16
        %v3772 = vrot.slane %v3770, 5
        %v3773 = vor.u32 %v3769, %v3772
        %v3774 = vrot.slane %v3773, 4
        %v3776 = vshll.u32 %v3614, 16
        %v3778 = vrot.slane %v3776, 5
        %v3779 = vsel %vm286, %v3774, %v3778
        %v3780 = vshrl.u32 %v3614, 16
        %v3782 = vrot.slane %v3780, 4
        %v3783 = vor.u32 %v3782, %v3778
        %v3784 = vrot.slane %v3783, 4
        %v3786 = vshll.u32 %v3615, 16
        %v3788 = vrot.slane %v3786, 5
        %v3789 = vsel %vm286, %v3784, %v3788
        %v3791 = vshrl.u32 %v3616, 16
        %v3793 = vrot.slane %v3791, 4
        %v3794 = vshll.u32 %v3616, 16
        %v3796 = vrot.slane %v3794, 5
        %v3797 = vor.u32 %v3793, %v3796
        %v3798 = vrot.slane %v3797, 4
        %v3800 = vshll.u32 %v3617, 16
        %v3802 = vrot.slane %v3800, 5
        %v3803 = vsel %vm286, %v3798, %v3802
        %v3804 = vshrl.u32 %v3617, 16
        %v3806 = vrot.slane %v3804, 4
        %v3807 = vor.u32 %v3806, %v3802
        %v3808 = vrot.slane %v3807, 4
        %v3810 = vshll.u32 %v3618, 16
        %v3812 = vrot.slane %v3810, 5
        %v3813 = vsel %vm286, %v3808, %v3812
        %v3815 = vshrl.u32 %v3619, 16
        %v3817 = vrot.slane %v3815, 4
        %v3818 = vshll.u32 %v3619, 16
        %v3820 = vrot.slane %v3818, 5
        %v3821 = vor.u32 %v3817, %v3820
        %v3822 = vrot.slane %v3821, 4
        %v3824 = vshll.u32 %v3620, 16
        %v3826 = vrot.slane %v3824, 5
        %v3827 = vsel %vm286, %v3822, %v3826
        %v3828 = vshrl.u32 %v3620, 16
        %v3830 = vrot.slane %v3828, 4
        %v3831 = vor.u32 %v3830, %v3826
        %v3832 = vrot.slane %v3831, 4
        %v3834 = vshll.u32 %v3621, 16
        %v3836 = vrot.slane %v3834, 5
        %v3837 = vsel %vm286, %v3832, %v3836
        %v3839 = vshrl.u32 %v3622, 16
        %v3841 = vrot.slane %v3839, 4
        %v3842 = vshll.u32 %v3622, 16
        %v3844 = vrot.slane %v3842, 5
        %v3845 = vor.u32 %v3841, %v3844
        %v3846 = vrot.slane %v3845, 4
        %v3848 = vshll.u32 %v3623, 16
        %v3850 = vrot.slane %v3848, 5
        %v3851 = vsel %vm286, %v3846, %v3850
        %v3852 = vshrl.u32 %v3623, 16
        %v3854 = vrot.slane %v3852, 4
        %v3855 = vor.u32 %v3854, %v3850
        %v3856 = vrot.slane %v3855, 4
        %v3858 = vshll.u32 %v3624, 16
        %v3860 = vrot.slane %v3858, 5
        %v3861 = vsel %vm286, %v3856, %v3860
        %v3863 = vshrl.u32 %v3625, 16
        %v3865 = vrot.slane %v3863, 4
        %v3866 = vshll.u32 %v3625, 16
        %v3868 = vrot.slane %v3866, 5
        %v3869 = vor.u32 %v3865, %v3868
        %v3870 = vrot.slane %v3869, 4
        %v3872 = vshll.u32 %v3626, 16
        %v3874 = vrot.slane %v3872, 5
        %v3875 = vsel %vm286, %v3870, %v3874
        %v3876 = vshrl.u32 %v3626, 16
        %v3878 = vrot.slane %v3876, 4
        %v3879 = vor.u32 %v3878, %v3874
        %v3880 = vrot.slane %v3879, 4
        %v3882 = vshll.u32 %v3627, 16
        %v3884 = vrot.slane %v3882, 5
        %v3885 = vsel %vm286, %v3880, %v3884
        %v3887 = vshrl.u32 %v3628, 16
        %v3889 = vrot.slane %v3887, 4
        %v3890 = vshll.u32 %v3628, 16
        %v3892 = vrot.slane %v3890, 5
        %v3893 = vor.u32 %v3889, %v3892
        %v3894 = vrot.slane %v3893, 4
        %v3896 = vshll.u32 %v3629, 16
        %v3898 = vrot.slane %v3896, 5
        %v3899 = vsel %vm286, %v3894, %v3898
        %v3900 = vshrl.u32 %v3629, 16
        %v3902 = vrot.slane %v3900, 4
        %v3903 = vor.u32 %v3902, %v3898
        %v3904 = vrot.slane %v3903, 4
        %v3906 = vshll.u32 %v3630, 16
        %v3908 = vrot.slane %v3906, 5
        %v3909 = vsel %vm286, %v3904, %v3908
        %v3911 = vshrl.u32 %v3631, 16
        %v3913 = vrot.slane %v3911, 4
        %v3914 = vshll.u32 %v3631, 16
        %v3916 = vrot.slane %v3914, 5
        %v3917 = vor.u32 %v3913, %v3916
        %v3918 = vrot.slane %v3917, 4
        %v3920 = vshll.u32 %v3632, 16
        %v3922 = vrot.slane %v3920, 5
        %v3923 = vsel %vm286, %v3918, %v3922
        %v3924 = vshrl.u32 %v3632, 16
        %v3926 = vrot.slane %v3924, 4
        %v3927 = vor.u32 %v3926, %v3922
        %v3928 = vrot.slane %v3927, 4
        %v3930 = vshll.u32 %v3633, 16
        %v3932 = vrot.slane %v3930, 5
        %v3933 = vsel %vm286, %v3928, %v3932
        %v3935 = vshrl.u32 %v3634, 16
        %v3937 = vrot.slane %v3935, 4
        %v3938 = vshll.u32 %v3634, 16
        %v3940 = vrot.slane %v3938, 5
        %v3941 = vor.u32 %v3937, %v3940
        %v3942 = vrot.slane %v3941, 4
        %v3944 = vshll.u32 %v3635, 16
        %v3946 = vrot.slane %v3944, 5
        %v3947 = vsel %vm286, %v3942, %v3946
        %v3948 = vshrl.u32 %v3635, 16
        %v3950 = vrot.slane %v3948, 4
        %v3951 = vor.u32 %v3950, %v3946
        %v3952 = vrot.slane %v3951, 4
        %v3954 = vshll.u32 %v3636, 16
        %v3956 = vrot.slane %v3954, 5
        %v3957 = vsel %vm286, %v3952, %v3956
        %v3959 = vshrl.u32 %v3637, 16
        %v3961 = vrot.slane %v3959, 4
        %v3962 = vshll.u32 %v3637, 16
        %v3964 = vrot.slane %v3962, 5
        %v3965 = vor.u32 %v3961, %v3964
        %v3966 = vrot.slane %v3965, 4
        %v3968 = vshll.u32 %v3638, 16
        %v3970 = vrot.slane %v3968, 5
        %v3971 = vsel %vm286, %v3966, %v3970
        %v3972 = vshrl.u32 %v3638, 16
        %v3974 = vrot.slane %v3972, 4
        %v3975 = vor.u32 %v3974, %v3970
        %v3976 = vrot.slane %v3975, 4
        %v3978 = vshll.u32 %v3639, 16
        %v3980 = vrot.slane %v3978, 5
        %v3981 = vsel %vm286, %v3976, %v3980
        %v3983 = vshrl.u32 %v3640, 16
        %v3985 = vrot.slane %v3983, 4
        %v3986 = vshll.u32 %v3640, 16
        %v3988 = vrot.slane %v3986, 5
        %v3989 = vor.u32 %v3985, %v3988
        %v3990 = vrot.slane %v3989, 4
        %v3992 = vshll.u32 %v3641, 16
        %v3994 = vrot.slane %v3992, 5
        %v3995 = vsel %vm286, %v3990, %v3994
        %v3996 = vshrl.u32 %v3641, 16
        %v3998 = vrot.slane %v3996, 4
        %v3999 = vor.u32 %v3998, %v3994
        %v4000 = vrot.slane %v3999, 4
        %v4002 = vshll.u32 %v3642, 16
        %v4004 = vrot.slane %v4002, 5
        %v4005 = vsel %vm286, %v4000, %v4004
        %v4007 = vshrl.u32 %v3643, 16
        %v4009 = vrot.slane %v4007, 4
        %v4010 = vshll.u32 %v3643, 16
        %v4012 = vrot.slane %v4010, 5
        %v4013 = vor.u32 %v4009, %v4012
        %v4014 = vrot.slane %v4013, 4
        %v4016 = vshll.u32 %v3644, 16
        %v4018 = vrot.slane %v4016, 5
        %v4019 = vsel %vm286, %v4014, %v4018
        %v4020 = vshrl.u32 %v3644, 16
        %v4022 = vrot.slane %v4020, 4
        %v4023 = vor.u32 %v4022, %v4018
        %v4024 = vrot.slane %v4023, 4
        %v4026 = vshll.u32 %v3645, 16
        %v4028 = vrot.slane %v4026, 5
        %v4029 = vsel %vm286, %v4024, %v4028
        %s4030 = scalar_lea.vmem [#allocation2], 14
        %v4031 = vld [vmem:[%s4030] sm:$0x3]
        %v4032 = vunpack.c.l.b16 %v3659
        %v4033 = vunpack.c.l.b16 %v3669
        %v4034 = vunpack.c.l.b16 %v3683
        %v4035 = vunpack.c.l.b16 %v3693
        %v4036 = vunpack.c.l.b16 %v3707
        %v4037 = vunpack.c.l.b16 %v3717
        %v4038 = vunpack.c.l.b16 %v3731
        %v4039 = vunpack.c.l.b16 %v3741
        %v4040 = vunpack.c.l.b16 %v3755
        %v4041 = vunpack.c.l.b16 %v3765
        %v4042 = vunpack.c.l.b16 %v3779
        %v4043 = vunpack.c.l.b16 %v3789
        %v4044 = vunpack.c.l.b16 %v3803
        %v4045 = vunpack.c.l.b16 %v3813
        %v4046 = vunpack.c.l.b16 %v3827
        %v4047 = vunpack.c.l.b16 %v3837
        %v4048 = vunpack.c.l.b16 %v3851
        %v4049 = vunpack.c.l.b16 %v3861
        %v4050 = vunpack.c.l.b16 %v3875
        %v4051 = vunpack.c.l.b16 %v3885
        %v4052 = vunpack.c.l.b16 %v3899
        %v4053 = vunpack.c.l.b16 %v3909
        %v4054 = vunpack.c.l.b16 %v3923
        %v4055 = vunpack.c.l.b16 %v3933
        %v4056 = vunpack.c.l.b16 %v3947
        %v4057 = vunpack.c.l.b16 %v3957
        %v4058 = vunpack.c.l.b16 %v3971
        %v4059 = vunpack.c.l.b16 %v3981
        %v4060 = vunpack.c.l.b16 %v3995
        %v4061 = vunpack.c.l.b16 %v4005
        %v4062 = vunpack.c.l.b16 %v4019
        %v4063 = vunpack.c.l.b16 %v4029
        %v4064 = vpack.c.b16 %v4033, %v4032
        %v4065 = vpack.c.b16 %v4035, %v4034
        %v4066 = vpack.c.b16 %v4037, %v4036
        %v4067 = vpack.c.b16 %v4039, %v4038
        %v4068 = vpack.c.b16 %v4041, %v4040
        %v4069 = vpack.c.b16 %v4043, %v4042
        %v4070 = vpack.c.b16 %v4045, %v4044
        %v4071 = vpack.c.b16 %v4047, %v4046
        %v4072 = vpack.c.b16 %v4049, %v4048
        %v4073 = vpack.c.b16 %v4051, %v4050
        %v4074 = vpack.c.b16 %v4053, %v4052
        %v4075 = vpack.c.b16 %v4055, %v4054
        %v4076 = vpack.c.b16 %v4057, %v4056
        %v4077 = vpack.c.b16 %v4059, %v4058
        %v4078 = vpack.c.b16 %v4061, %v4060
        %v4079 = vpack.c.b16 %v4063, %v4062
        %v4081 = vsel %vm721, %v4064, 0
        %v4084 = vsel %vm721, %v4065, 0
        %v4087 = vsel %vm721, %v4066, 0
        %v4090 = vsel %vm721, %v4067, 0
        %v4093 = vsel %vm721, %v4068, 0
        %v4096 = vsel %vm721, %v4069, 0
        %v4099 = vsel %vm721, %v4070, 0
        %v4102 = vsel %vm721, %v4071, 0
        %v4105 = vsel %vm721, %v4072, 0
        %v4108 = vsel %vm721, %v4073, 0
        %v4111 = vsel %vm721, %v4074, 0
        %v4114 = vsel %vm721, %v4075, 0
        %v4117 = vsel %vm721, %v4076, 0
        %v4120 = vsel %vm721, %v4077, 0
        %v4123 = vsel %vm721, %v4078, 0
        %v4126 = vsel %vm721, %v4079, 0
        %v4129 = vsel %vm770, %v4031, 0
        %4131 = vmatprep.subr.bf16.mxu0 0
        %4132 = vmatpush1.bf16.msra.mxu0 %v4129
        %4133 = vmatprep.subr.bf16.mxu0 0
        %4134 = vmatpush1.bf16.msra.mxu0 0
        %4135 = vmatprep.subr.bf16.mxu0 0
        %4136 = vmatpush1.bf16.msra.mxu0 0
        %4137 = vmatprep.subr.bf16.mxu0 0
        %4138 = vmatpush1.bf16.msra.mxu0 0
        %4139 = vmatprep.subr.bf16.mxu0 0
        %4140 = vmatpush1.bf16.msra.mxu0 0
        %4141 = vmatprep.subr.bf16.mxu0 0
        %4142 = vmatpush1.bf16.msra.mxu0 0
        %4143 = vmatprep.subr.bf16.mxu0 0
        %4144 = vmatpush1.bf16.msra.mxu0 0
        %4145 = vmatprep.subr.bf16.mxu0 0
        %4146 = vmatpush1.bf16.msra.mxu0 0
        %4147 = vmatprep.subr.bf16.mxu0 0
        %4148 = vmatpush1.bf16.msra.mxu0 0
        %4149 = vmatprep.subr.bf16.mxu0 0
        %4150 = vmatpush1.bf16.msra.mxu0 0
        %4151 = vmatprep.subr.bf16.mxu0 0
        %4152 = vmatpush1.bf16.msra.mxu0 0
        %4153 = vmatprep.subr.bf16.mxu0 0
        %4154 = vmatpush1.bf16.msra.mxu0 0
        %4155 = vmatprep.subr.bf16.mxu0 0
        %4156 = vmatpush1.bf16.msra.mxu0 0
        %4157 = vmatprep.subr.bf16.mxu0 0
        %4158 = vmatpush1.bf16.msra.mxu0 0
        %4159 = vmatprep.subr.bf16.mxu0 0
        %4160 = vmatpush1.bf16.msra.mxu0 0
        %4161 = vmatprep.subr.bf16.mxu0 0
        %4162 = vmatpush1.bf16.msra.mxu0 0
        %4163 = vmatprep.mubr.bf16.mxu0 0
        %4164 = vmatmul.mubr.bf16.gmra.mrb[0].mxu0 %v4081
        %v4165 = vpop.f32.mrb[0].mxu0
        %v4166 = vadd.f32 0.0, %v4165
        %v4167 = vpop.f32.mrb[0].mxu0
        %v4168 = vpop.f32.mrb[0].mxu0
        %v4169 = vadd.f32 0.0, %v4168
        %v4170 = vpop.f32.mrb[0].mxu0
        %4171 = vmatprep.mubr.bf16.mxu0 0
        %4172 = vmatmul.mubr.bf16.gmra.mrb[0].mxu0 %v4084
        %v4173 = vpop.f32.mrb[0].mxu0
        %v4174 = vadd.f32 0.0, %v4173
        %v4175 = vpop.f32.mrb[0].mxu0
        %v4176 = vpop.f32.mrb[0].mxu0
        %v4177 = vadd.f32 0.0, %v4176
        %v4178 = vpop.f32.mrb[0].mxu0
        %4179 = vmatprep.mubr.bf16.mxu0 0
        %4180 = vmatmul.mubr.bf16.gmra.mrb[0].mxu0 %v4087
        %v4181 = vpop.f32.mrb[0].mxu0
        %v4182 = vadd.f32 0.0, %v4181
        %v4183 = vpop.f32.mrb[0].mxu0
        %v4184 = vpop.f32.mrb[0].mxu0
        %v4185 = vadd.f32 0.0, %v4184
        %v4186 = vpop.f32.mrb[0].mxu0
        %4187 = vmatprep.mubr.bf16.mxu0 0
        %4188 = vmatmul.mubr.bf16.gmra.mrb[0].mxu0 %v4090
        %v4189 = vpop.f32.mrb[0].mxu0
        %v4190 = vadd.f32 0.0, %v4189
        %v4191 = vpop.f32.mrb[0].mxu0
        %v4192 = vpop.f32.mrb[0].mxu0
        %v4193 = vadd.f32 0.0, %v4192
        %v4194 = vpop.f32.mrb[0].mxu0
        %4195 = vmatprep.mubr.bf16.mxu0 0
        %4196 = vmatmul.mubr.bf16.gmra.mrb[0].mxu0 %v4093
        %v4197 = vpop.f32.mrb[0].mxu0
        %v4198 = vadd.f32 0.0, %v4197
        %v4199 = vpop.f32.mrb[0].mxu0
        %v4200 = vpop.f32.mrb[0].mxu0
        %v4201 = vadd.f32 0.0, %v4200
        %v4202 = vpop.f32.mrb[0].mxu0
        %4203 = vmatprep.mubr.bf16.mxu0 0
        %4204 = vmatmul.mubr.bf16.gmra.mrb[0].mxu0 %v4096
        %v4205 = vpop.f32.mrb[0].mxu0
        %v4206 = vadd.f32 0.0, %v4205
        %v4207 = vpop.f32.mrb[0].mxu0
        %v4208 = vpop.f32.mrb[0].mxu0
        %v4209 = vadd.f32 0.0, %v4208
        %v4210 = vpop.f32.mrb[0].mxu0
        %4211 = vmatprep.mubr.bf16.mxu0 0
        %4212 = vmatmul.mubr.bf16.gmra.mrb[0].mxu0 %v4099
        %v4213 = vpop.f32.mrb[0].mxu0
        %v4214 = vadd.f32 0.0, %v4213
        %v4215 = vpop.f32.mrb[0].mxu0
        %v4216 = vpop.f32.mrb[0].mxu0
        %v4217 = vadd.f32 0.0, %v4216
        %v4218 = vpop.f32.mrb[0].mxu0
        %4219 = vmatprep.mubr.bf16.mxu0 0
        %4220 = vmatmul.mubr.bf16.gmra.mrb[0].mxu0 %v4102
        %v4221 = vpop.f32.mrb[0].mxu0
        %v4222 = vadd.f32 0.0, %v4221
        %v4223 = vpop.f32.mrb[0].mxu0
        %v4224 = vpop.f32.mrb[0].mxu0
        %v4225 = vadd.f32 0.0, %v4224
        %v4226 = vpop.f32.mrb[0].mxu0
        %4227 = vmatprep.mubr.bf16.mxu0 0
        %4228 = vmatmul.mubr.bf16.gmra.mrb[0].mxu0 %v4105
        %v4229 = vpop.f32.mrb[0].mxu0
        %v4230 = vadd.f32 0.0, %v4229
        %v4231 = vpop.f32.mrb[0].mxu0
        %v4232 = vpop.f32.mrb[0].mxu0
        %v4233 = vadd.f32 0.0, %v4232
        %v4234 = vpop.f32.mrb[0].mxu0
        %4235 = vmatprep.mubr.bf16.mxu0 0
        %4236 = vmatmul.mubr.bf16.gmra.mrb[0].mxu0 %v4108
        %v4237 = vpop.f32.mrb[0].mxu0
        %v4238 = vadd.f32 0.0, %v4237
        %v4239 = vpop.f32.mrb[0].mxu0
        %v4240 = vpop.f32.mrb[0].mxu0
        %v4241 = vadd.f32 0.0, %v4240
        %v4242 = vpop.f32.mrb[0].mxu0
        %4243 = vmatprep.mubr.bf16.mxu0 0
        %4244 = vmatmul.mubr.bf16.gmra.mrb[0].mxu0 %v4111
        %v4245 = vpop.f32.mrb[0].mxu0
        %v4246 = vadd.f32 0.0, %v4245
        %v4247 = vpop.f32.mrb[0].mxu0
        %v4248 = vpop.f32.mrb[0].mxu0
        %v4249 = vadd.f32 0.0, %v4248
        %v4250 = vpop.f32.mrb[0].mxu0
        %4251 = vmatprep.mubr.bf16.mxu0 0
        %4252 = vmatmul.mubr.bf16.gmra.mrb[0].mxu0 %v4114
        %v4253 = vpop.f32.mrb[0].mxu0
        %v4254 = vadd.f32 0.0, %v4253
        %v4255 = vpop.f32.mrb[0].mxu0
        %v4256 = vpop.f32.mrb[0].mxu0
        %v4257 = vadd.f32 0.0, %v4256
        %v4258 = vpop.f32.mrb[0].mxu0
        %4259 = vmatprep.mubr.bf16.mxu0 0
        %4260 = vmatmul.mubr.bf16.gmra.mrb[0].mxu0 %v4117
        %v4261 = vpop.f32.mrb[0].mxu0
        %v4262 = vadd.f32 0.0, %v4261
        %v4263 = vpop.f32.mrb[0].mxu0
        %v4264 = vpop.f32.mrb[0].mxu0
        %v4265 = vadd.f32 0.0, %v4264
        %v4266 = vpop.f32.mrb[0].mxu0
        %4267 = vmatprep.mubr.bf16.mxu0 0
        %4268 = vmatmul.mubr.bf16.gmra.mrb[0].mxu0 %v4120
        %v4269 = vpop.f32.mrb[0].mxu0
        %v4270 = vadd.f32 0.0, %v4269
        %v4271 = vpop.f32.mrb[0].mxu0
        %v4272 = vpop.f32.mrb[0].mxu0
        %v4273 = vadd.f32 0.0, %v4272
        %v4274 = vpop.f32.mrb[0].mxu0
        %4275 = vmatprep.mubr.bf16.mxu0 0
        %4276 = vmatmul.mubr.bf16.gmra.mrb[0].mxu0 %v4123
        %v4277 = vpop.f32.mrb[0].mxu0
        %v4278 = vadd.f32 0.0, %v4277
        %v4279 = vpop.f32.mrb[0].mxu0
        %v4280 = vpop.f32.mrb[0].mxu0
        %v4281 = vadd.f32 0.0, %v4280
        %v4282 = vpop.f32.mrb[0].mxu0
        %4283 = vmatprep.mubr.bf16.mxu0 0
        %4284 = vmatmul.mubr.bf16.gmra.mrb[0].mxu0 %v4126
        %v4285 = vpop.f32.mrb[0].mxu0
        %v4286 = vadd.f32 0.0, %v4285
        %v4287 = vpop.f32.mrb[0].mxu0
        %v4288 = vpop.f32.mrb[0].mxu0
        %v4289 = vadd.f32 0.0, %v4288
        %v4290 = vpop.f32.mrb[0].mxu0
        %4291 = vdwg.mxu0
        %v4292 = vadd.f32 %v3566, %v4166
        %v4293 = vadd.f32 %v3567, %v4169
        %v4294 = vadd.f32 %v3568, %v4174
        %v4295 = vadd.f32 %v3569, %v4177
        %v4296 = vadd.f32 %v3570, %v4182
        %v4297 = vadd.f32 %v3571, %v4185
        %v4298 = vadd.f32 %v3572, %v4190
        %v4299 = vadd.f32 %v3573, %v4193
        %v4300 = vadd.f32 %v3574, %v4198
        %v4301 = vadd.f32 %v3575, %v4201
        %v4302 = vadd.f32 %v3576, %v4206
        %v4303 = vadd.f32 %v3577, %v4209
        %v4304 = vadd.f32 %v3578, %v4214
        %v4305 = vadd.f32 %v3579, %v4217
        %v4306 = vadd.f32 %v3580, %v4222
        %v4307 = vadd.f32 %v3581, %v4225
        %v4308 = vadd.f32 %v3582, %v4230
        %v4309 = vadd.f32 %v3583, %v4233
        %v4310 = vadd.f32 %v3584, %v4238
        %v4311 = vadd.f32 %v3585, %v4241
        %v4312 = vadd.f32 %v3586, %v4246
        %v4313 = vadd.f32 %v3587, %v4249
        %v4314 = vadd.f32 %v3588, %v4254
        %v4315 = vadd.f32 %v3589, %v4257
        %v4316 = vadd.f32 %v3590, %v4262
        %v4317 = vadd.f32 %v3591, %v4265
        %v4318 = vadd.f32 %v3592, %v4270
        %v4319 = vadd.f32 %v3593, %v4273
        %v4320 = vadd.f32 %v3594, %v4278
        %v4321 = vadd.f32 %v3595, %v4281
        %v4322 = vadd.f32 %v3596, %v4286
        %v4323 = vadd.f32 %v3597, %v4289
        %v4324 = vld [vmem:[%s3239] sm:$0xe]
        %v4325 = vld [vmem:[%s3239 + $0xc] sm:$0xe]
        %v4326 = vld [vmem:[%s3239 + $0x18] sm:$0xe]
        %v4327 = vld [vmem:[%s3239 + $0x24] sm:$0xe]
        %v4328 = vld [vmem:[%s3239 + $0x30] sm:$0xe]
        %v4329 = vld [vmem:[%s3239 + $0x3c] sm:$0xe]
        %v4330 = vld [vmem:[%s3239 + $0x48] sm:$0xe]
        %v4331 = vld [vmem:[%s3239 + $0x54] sm:$0xe]
        %v4332 = vld [vmem:[%s3239 + $0x60] sm:$0xe]
        %v4333 = vld [vmem:[%s3239 + $0x6c] sm:$0xe]
        %v4334 = vld [vmem:[%s3239 + $0x78] sm:$0xe]
        %v4335 = vld [vmem:[%s3239 + $0x84] sm:$0xe]
        %v4336 = vld [vmem:[%s3239 + $0x90] sm:$0xe]
        %v4337 = vld [vmem:[%s3239 + $0x9c] sm:$0xe]
        %v4338 = vld [vmem:[%s3239 + $0xa8] sm:$0xe]
        %v4339 = vld [vmem:[%s3239 + $0xb4] sm:$0xe]
        %v4388 = vrot.slane %v4324, 5
        %v4389 = vrot.slane %v4388, 4
        %v4390 = vrot.slane %v3599, 5
        %v4391 = vsel %vm1277, %v4389, %v4390
        %v4392 = vrot.slane %v4390, 4
        %v4393 = vrot.slane %v3600, 5
        %v4394 = vsel %vm1277, %v4392, %v4393
        %v4395 = vrot.slane %v4325, 5
        %v4396 = vrot.slane %v4395, 4
        %v4397 = vrot.slane %v3602, 5
        %v4398 = vsel %vm1277, %v4396, %v4397
        %v4399 = vrot.slane %v4397, 4
        %v4400 = vrot.slane %v3603, 5
        %v4401 = vsel %vm1277, %v4399, %v4400
        %v4402 = vrot.slane %v4326, 5
        %v4403 = vrot.slane %v4402, 4
        %v4404 = vrot.slane %v3605, 5
        %v4405 = vsel %vm1277, %v4403, %v4404
        %v4406 = vrot.slane %v4404, 4
        %v4407 = vrot.slane %v3606, 5
        %v4408 = vsel %vm1277, %v4406, %v4407
        %v4409 = vrot.slane %v4327, 5
        %v4410 = vrot.slane %v4409, 4
        %v4411 = vrot.slane %v3608, 5
        %v4412 = vsel %vm1277, %v4410, %v4411
        %v4413 = vrot.slane %v4411, 4
        %v4414 = vrot.slane %v3609, 5
        %v4415 = vsel %vm1277, %v4413, %v4414
        %v4416 = vrot.slane %v4328, 5
        %v4417 = vrot.slane %v4416, 4
        %v4418 = vrot.slane %v3611, 5
        %v4419 = vsel %vm1277, %v4417, %v4418
        %v4420 = vrot.slane %v4418, 4
        %v4421 = vrot.slane %v3612, 5
        %v4422 = vsel %vm1277, %v4420, %v4421
        %v4423 = vrot.slane %v4329, 5
        %v4424 = vrot.slane %v4423, 4
        %v4425 = vrot.slane %v3614, 5
        %v4426 = vsel %vm1277, %v4424, %v4425
        %v4427 = vrot.slane %v4425, 4
        %v4428 = vrot.slane %v3615, 5
        %v4429 = vsel %vm1277, %v4427, %v4428
        %v4430 = vrot.slane %v4330, 5
        %v4431 = vrot.slane %v4430, 4
        %v4432 = vrot.slane %v3617, 5
        %v4433 = vsel %vm1277, %v4431, %v4432
        %v4434 = vrot.slane %v4432, 4
        %v4435 = vrot.slane %v3618, 5
        %v4436 = vsel %vm1277, %v4434, %v4435
        %v4437 = vrot.slane %v4331, 5
        %v4438 = vrot.slane %v4437, 4
        %v4439 = vrot.slane %v3620, 5
        %v4440 = vsel %vm1277, %v4438, %v4439
        %v4441 = vrot.slane %v4439, 4
        %v4442 = vrot.slane %v3621, 5
        %v4443 = vsel %vm1277, %v4441, %v4442
        %v4444 = vrot.slane %v4332, 5
        %v4445 = vrot.slane %v4444, 4
        %v4446 = vrot.slane %v3623, 5
        %v4447 = vsel %vm1277, %v4445, %v4446
        %v4448 = vrot.slane %v4446, 4
        %v4449 = vrot.slane %v3624, 5
        %v4450 = vsel %vm1277, %v4448, %v4449
        %v4451 = vrot.slane %v4333, 5
        %v4452 = vrot.slane %v4451, 4
        %v4453 = vrot.slane %v3626, 5
        %v4454 = vsel %vm1277, %v4452, %v4453
        %v4455 = vrot.slane %v4453, 4
        %v4456 = vrot.slane %v3627, 5
        %v4457 = vsel %vm1277, %v4455, %v4456
        %v4458 = vrot.slane %v4334, 5
        %v4459 = vrot.slane %v4458, 4
        %v4460 = vrot.slane %v3629, 5
        %v4461 = vsel %vm1277, %v4459, %v4460
        %v4462 = vrot.slane %v4460, 4
        %v4463 = vrot.slane %v3630, 5
        %v4464 = vsel %vm1277, %v4462, %v4463
        %v4465 = vrot.slane %v4335, 5
        %v4466 = vrot.slane %v4465, 4
        %v4467 = vrot.slane %v3632, 5
        %v4468 = vsel %vm1277, %v4466, %v4467
        %v4469 = vrot.slane %v4467, 4
        %v4470 = vrot.slane %v3633, 5
        %v4471 = vsel %vm1277, %v4469, %v4470
        %v4472 = vrot.slane %v4336, 5
        %v4473 = vrot.slane %v4472, 4
        %v4474 = vrot.slane %v3635, 5
        %v4475 = vsel %vm1277, %v4473, %v4474
        %v4476 = vrot.slane %v4474, 4
        %v4477 = vrot.slane %v3636, 5
        %v4478 = vsel %vm1277, %v4476, %v4477
        %v4479 = vrot.slane %v4337, 5
        %v4480 = vrot.slane %v4479, 4
        %v4481 = vrot.slane %v3638, 5
        %v4482 = vsel %vm1277, %v4480, %v4481
        %v4483 = vrot.slane %v4481, 4
        %v4484 = vrot.slane %v3639, 5
        %v4485 = vsel %vm1277, %v4483, %v4484
        %v4486 = vrot.slane %v4338, 5
        %v4487 = vrot.slane %v4486, 4
        %v4488 = vrot.slane %v3641, 5
        %v4489 = vsel %vm1277, %v4487, %v4488
        %v4490 = vrot.slane %v4488, 4
        %v4491 = vrot.slane %v3642, 5
        %v4492 = vsel %vm1277, %v4490, %v4491
        %v4493 = vrot.slane %v4339, 5
        %v4494 = vrot.slane %v4493, 4
        %v4495 = vrot.slane %v3644, 5
        %v4496 = vsel %vm1277, %v4494, %v4495
        %v4497 = vrot.slane %v4495, 4
        %v4498 = vrot.slane %v3645, 5
        %v4499 = vsel %vm1277, %v4497, %v4498
        %s4500 = scalar_lea.vmem [#allocation2], 16
        %v4501 = vld [vmem:[%s4500] sm:$0x3]
        %v4502 = vunpack.c.l.b16 %v4391
        %v4503 = vunpack.c.l.b16 %v4394
        %v4504 = vunpack.c.l.b16 %v4398
        %v4505 = vunpack.c.l.b16 %v4401
        %v4506 = vunpack.c.l.b16 %v4405
        %v4507 = vunpack.c.l.b16 %v4408
        %v4508 = vunpack.c.l.b16 %v4412
        %v4509 = vunpack.c.l.b16 %v4415
        %v4510 = vunpack.c.l.b16 %v4419
        %v4511 = vunpack.c.l.b16 %v4422
        %v4512 = vunpack.c.l.b16 %v4426
        %v4513 = vunpack.c.l.b16 %v4429
        %v4514 = vunpack.c.l.b16 %v4433
        %v4515 = vunpack.c.l.b16 %v4436
        %v4516 = vunpack.c.l.b16 %v4440
        %v4517 = vunpack.c.l.b16 %v4443
        %v4518 = vunpack.c.l.b16 %v4447
        %v4519 = vunpack.c.l.b16 %v4450
        %v4520 = vunpack.c.l.b16 %v4454
        %v4521 = vunpack.c.l.b16 %v4457
        %v4522 = vunpack.c.l.b16 %v4461
        %v4523 = vunpack.c.l.b16 %v4464
        %v4524 = vunpack.c.l.b16 %v4468
        %v4525 = vunpack.c.l.b16 %v4471
        %v4526 = vunpack.c.l.b16 %v4475
        %v4527 = vunpack.c.l.b16 %v4478
        %v4528 = vunpack.c.l.b16 %v4482
        %v4529 = vunpack.c.l.b16 %v4485
        %v4530 = vunpack.c.l.b16 %v4489
        %v4531 = vunpack.c.l.b16 %v4492
        %v4532 = vunpack.c.l.b16 %v4496
        %v4533 = vunpack.c.l.b16 %v4499
        %v4534 = vpack.c.b16 %v4503, %v4502
        %v4535 = vpack.c.b16 %v4505, %v4504
        %v4536 = vpack.c.b16 %v4507, %v4506
        %v4537 = vpack.c.b16 %v4509, %v4508
        %v4538 = vpack.c.b16 %v4511, %v4510
        %v4539 = vpack.c.b16 %v4513, %v4512
        %v4540 = vpack.c.b16 %v4515, %v4514
        %v4541 = vpack.c.b16 %v4517, %v4516
        %v4542 = vpack.c.b16 %v4519, %v4518
        %v4543 = vpack.c.b16 %v4521, %v4520
        %v4544 = vpack.c.b16 %v4523, %v4522
        %v4545 = vpack.c.b16 %v4525, %v4524
        %v4546 = vpack.c.b16 %v4527, %v4526
        %v4547 = vpack.c.b16 %v4529, %v4528
        %v4548 = vpack.c.b16 %v4531, %v4530
        %v4549 = vpack.c.b16 %v4533, %v4532
        %v4551 = vsel %vm721, %v4534, 0
        %v4554 = vsel %vm721, %v4535, 0
        %v4557 = vsel %vm721, %v4536, 0
        %v4560 = vsel %vm721, %v4537, 0
        %v4563 = vsel %vm721, %v4538, 0
        %v4566 = vsel %vm721, %v4539, 0
        %v4569 = vsel %vm721, %v4540, 0
        %v4572 = vsel %vm721, %v4541, 0
        %v4575 = vsel %vm721, %v4542, 0
        %v4578 = vsel %vm721, %v4543, 0
        %v4581 = vsel %vm721, %v4544, 0
        %v4584 = vsel %vm721, %v4545, 0
        %v4587 = vsel %vm721, %v4546, 0
        %v4590 = vsel %vm721, %v4547, 0
        %v4593 = vsel %vm721, %v4548, 0
        %v4596 = vsel %vm721, %v4549, 0
        %v4599 = vsel %vm770, %v4501, 0
        %4601 = vmatprep.subr.bf16.mxu0 0
        %4602 = vmatpush1.bf16.msra.mxu0 %v4599
        %4603 = vmatprep.subr.bf16.mxu0 0
        %4604 = vmatpush1.bf16.msra.mxu0 0
        %4605 = vmatprep.subr.bf16.mxu0 0
        %4606 = vmatpush1.bf16.msra.mxu0 0
        %4607 = vmatprep.subr.bf16.mxu0 0
        %4608 = vmatpush1.bf16.msra.mxu0 0
        %4609 = vmatprep.subr.bf16.mxu0 0
        %4610 = vmatpush1.bf16.msra.mxu0 0
        %4611 = vmatprep.subr.bf16.mxu0 0
        %4612 = vmatpush1.bf16.msra.mxu0 0
        %4613 = vmatprep.subr.bf16.mxu0 0
        %4614 = vmatpush1.bf16.msra.mxu0 0
        %4615 = vmatprep.subr.bf16.mxu0 0
        %4616 = vmatpush1.bf16.msra.mxu0 0
        %4617 = vmatprep.subr.bf16.mxu0 0
        %4618 = vmatpush1.bf16.msra.mxu0 0
        %4619 = vmatprep.subr.bf16.mxu0 0
        %4620 = vmatpush1.bf16.msra.mxu0 0
        %4621 = vmatprep.subr.bf16.mxu0 0
        %4622 = vmatpush1.bf16.msra.mxu0 0
        %4623 = vmatprep.subr.bf16.mxu0 0
        %4624 = vmatpush1.bf16.msra.mxu0 0
        %4625 = vmatprep.subr.bf16.mxu0 0
        %4626 = vmatpush1.bf16.msra.mxu0 0
        %4627 = vmatprep.subr.bf16.mxu0 0
        %4628 = vmatpush1.bf16.msra.mxu0 0
        %4629 = vmatprep.subr.bf16.mxu0 0
        %4630 = vmatpush1.bf16.msra.mxu0 0
        %4631 = vmatprep.subr.bf16.mxu0 0
        %4632 = vmatpush1.bf16.msra.mxu0 0
        %4633 = vmatprep.mubr.bf16.mxu0 0
        %4634 = vmatmul.mubr.bf16.gmra.mrb[0].mxu0 %v4551
        %v4635 = vpop.f32.mrb[0].mxu0
        %v4636 = vadd.f32 0.0, %v4635
        %v4637 = vpop.f32.mrb[0].mxu0
        %v4638 = vpop.f32.mrb[0].mxu0
        %v4639 = vadd.f32 0.0, %v4638
        %v4640 = vpop.f32.mrb[0].mxu0
        %4641 = vmatprep.mubr.bf16.mxu0 0
        %4642 = vmatmul.mubr.bf16.gmra.mrb[0].mxu0 %v4554
        %v4643 = vpop.f32.mrb[0].mxu0
        %v4644 = vadd.f32 0.0, %v4643
        %v4645 = vpop.f32.mrb[0].mxu0
        %v4646 = vpop.f32.mrb[0].mxu0
        %v4647 = vadd.f32 0.0, %v4646
        %v4648 = vpop.f32.mrb[0].mxu0
        %4649 = vmatprep.mubr.bf16.mxu0 0
        %4650 = vmatmul.mubr.bf16.gmra.mrb[0].mxu0 %v4557
        %v4651 = vpop.f32.mrb[0].mxu0
        %v4652 = vadd.f32 0.0, %v4651
        %v4653 = vpop.f32.mrb[0].mxu0
        %v4654 = vpop.f32.mrb[0].mxu0
        %v4655 = vadd.f32 0.0, %v4654
        %v4656 = vpop.f32.mrb[0].mxu0
        %4657 = vmatprep.mubr.bf16.mxu0 0
        %4658 = vmatmul.mubr.bf16.gmra.mrb[0].mxu0 %v4560
        %v4659 = vpop.f32.mrb[0].mxu0
        %v4660 = vadd.f32 0.0, %v4659
        %v4661 = vpop.f32.mrb[0].mxu0
        %v4662 = vpop.f32.mrb[0].mxu0
        %v4663 = vadd.f32 0.0, %v4662
        %v4664 = vpop.f32.mrb[0].mxu0
        %4665 = vmatprep.mubr.bf16.mxu0 0
        %4666 = vmatmul.mubr.bf16.gmra.mrb[0].mxu0 %v4563
        %v4667 = vpop.f32.mrb[0].mxu0
        %v4668 = vadd.f32 0.0, %v4667
        %v4669 = vpop.f32.mrb[0].mxu0
        %v4670 = vpop.f32.mrb[0].mxu0
        %v4671 = vadd.f32 0.0, %v4670
        %v4672 = vpop.f32.mrb[0].mxu0
        %4673 = vmatprep.mubr.bf16.mxu0 0
        %4674 = vmatmul.mubr.bf16.gmra.mrb[0].mxu0 %v4566
        %v4675 = vpop.f32.mrb[0].mxu0
        %v4676 = vadd.f32 0.0, %v4675
        %v4677 = vpop.f32.mrb[0].mxu0
        %v4678 = vpop.f32.mrb[0].mxu0
        %v4679 = vadd.f32 0.0, %v4678
        %v4680 = vpop.f32.mrb[0].mxu0
        %4681 = vmatprep.mubr.bf16.mxu0 0
        %4682 = vmatmul.mubr.bf16.gmra.mrb[0].mxu0 %v4569
        %v4683 = vpop.f32.mrb[0].mxu0
        %v4684 = vadd.f32 0.0, %v4683
        %v4685 = vpop.f32.mrb[0].mxu0
        %v4686 = vpop.f32.mrb[0].mxu0
        %v4687 = vadd.f32 0.0, %v4686
        %v4688 = vpop.f32.mrb[0].mxu0
        %4689 = vmatprep.mubr.bf16.mxu0 0
        %4690 = vmatmul.mubr.bf16.gmra.mrb[0].mxu0 %v4572
        %v4691 = vpop.f32.mrb[0].mxu0
        %v4692 = vadd.f32 0.0, %v4691
        %v4693 = vpop.f32.mrb[0].mxu0
        %v4694 = vpop.f32.mrb[0].mxu0
        %v4695 = vadd.f32 0.0, %v4694
        %v4696 = vpop.f32.mrb[0].mxu0
        %4697 = vmatprep.mubr.bf16.mxu0 0
        %4698 = vmatmul.mubr.bf16.gmra.mrb[0].mxu0 %v4575
        %v4699 = vpop.f32.mrb[0].mxu0
        %v4700 = vadd.f32 0.0, %v4699
        %v4701 = vpop.f32.mrb[0].mxu0
        %v4702 = vpop.f32.mrb[0].mxu0
        %v4703 = vadd.f32 0.0, %v4702
        %v4704 = vpop.f32.mrb[0].mxu0
        %4705 = vmatprep.mubr.bf16.mxu0 0
        %4706 = vmatmul.mubr.bf16.gmra.mrb[0].mxu0 %v4578
        %v4707 = vpop.f32.mrb[0].mxu0
        %v4708 = vadd.f32 0.0, %v4707
        %v4709 = vpop.f32.mrb[0].mxu0
        %v4710 = vpop.f32.mrb[0].mxu0
        %v4711 = vadd.f32 0.0, %v4710
        %v4712 = vpop.f32.mrb[0].mxu0
        %4713 = vmatprep.mubr.bf16.mxu0 0
        %4714 = vmatmul.mubr.bf16.gmra.mrb[0].mxu0 %v4581
        %v4715 = vpop.f32.mrb[0].mxu0
        %v4716 = vadd.f32 0.0, %v4715
        %v4717 = vpop.f32.mrb[0].mxu0
        %v4718 = vpop.f32.mrb[0].mxu0
        %v4719 = vadd.f32 0.0, %v4718
        %v4720 = vpop.f32.mrb[0].mxu0
        %4721 = vmatprep.mubr.bf16.mxu0 0
        %4722 = vmatmul.mubr.bf16.gmra.mrb[0].mxu0 %v4584
        %v4723 = vpop.f32.mrb[0].mxu0
        %v4724 = vadd.f32 0.0, %v4723
        %v4725 = vpop.f32.mrb[0].mxu0
        %v4726 = vpop.f32.mrb[0].mxu0
        %v4727 = vadd.f32 0.0, %v4726
        %v4728 = vpop.f32.mrb[0].mxu0
        %4729 = vmatprep.mubr.bf16.mxu0 0
        %4730 = vmatmul.mubr.bf16.gmra.mrb[0].mxu0 %v4587
        %v4731 = vpop.f32.mrb[0].mxu0
        %v4732 = vadd.f32 0.0, %v4731
        %v4733 = vpop.f32.mrb[0].mxu0
        %v4734 = vpop.f32.mrb[0].mxu0
        %v4735 = vadd.f32 0.0, %v4734
        %v4736 = vpop.f32.mrb[0].mxu0
        %4737 = vmatprep.mubr.bf16.mxu0 0
        %4738 = vmatmul.mubr.bf16.gmra.mrb[0].mxu0 %v4590
        %v4739 = vpop.f32.mrb[0].mxu0
        %v4740 = vadd.f32 0.0, %v4739
        %v4741 = vpop.f32.mrb[0].mxu0
        %v4742 = vpop.f32.mrb[0].mxu0
        %v4743 = vadd.f32 0.0, %v4742
        %v4744 = vpop.f32.mrb[0].mxu0
        %4745 = vmatprep.mubr.bf16.mxu0 0
        %4746 = vmatmul.mubr.bf16.gmra.mrb[0].mxu0 %v4593
        %v4747 = vpop.f32.mrb[0].mxu0
        %v4748 = vadd.f32 0.0, %v4747
        %v4749 = vpop.f32.mrb[0].mxu0
        %v4750 = vpop.f32.mrb[0].mxu0
        %v4751 = vadd.f32 0.0, %v4750
        %v4752 = vpop.f32.mrb[0].mxu0
        %4753 = vmatprep.mubr.bf16.mxu0 0
        %4754 = vmatmul.mubr.bf16.gmra.mrb[0].mxu0 %v4596
        %v4755 = vpop.f32.mrb[0].mxu0
        %v4756 = vadd.f32 0.0, %v4755
        %v4757 = vpop.f32.mrb[0].mxu0
        %v4758 = vpop.f32.mrb[0].mxu0
        %v4759 = vadd.f32 0.0, %v4758
        %v4760 = vpop.f32.mrb[0].mxu0
        %4761 = vdwg.mxu0
        %v4762 = vadd.f32 %v4292, %v4636
        %v4763 = vadd.f32 %v4293, %v4639
        %v4764 = vadd.f32 %v4294, %v4644
        %v4765 = vadd.f32 %v4295, %v4647
        %v4766 = vadd.f32 %v4296, %v4652
        %v4767 = vadd.f32 %v4297, %v4655
        %v4768 = vadd.f32 %v4298, %v4660
        %v4769 = vadd.f32 %v4299, %v4663
        %v4770 = vadd.f32 %v4300, %v4668
        %v4771 = vadd.f32 %v4301, %v4671
        %v4772 = vadd.f32 %v4302, %v4676
        %v4773 = vadd.f32 %v4303, %v4679
        %v4774 = vadd.f32 %v4304, %v4684
        %v4775 = vadd.f32 %v4305, %v4687
        %v4776 = vadd.f32 %v4306, %v4692
        %v4777 = vadd.f32 %v4307, %v4695
        %v4778 = vadd.f32 %v4308, %v4700
        %v4779 = vadd.f32 %v4309, %v4703
        %v4780 = vadd.f32 %v4310, %v4708
        %v4781 = vadd.f32 %v4311, %v4711
        %v4782 = vadd.f32 %v4312, %v4716
        %v4783 = vadd.f32 %v4313, %v4719
        %v4784 = vadd.f32 %v4314, %v4724
        %v4785 = vadd.f32 %v4315, %v4727
        %v4786 = vadd.f32 %v4316, %v4732
        %v4787 = vadd.f32 %v4317, %v4735
        %v4788 = vadd.f32 %v4318, %v4740
        %v4789 = vadd.f32 %v4319, %v4743
        %v4790 = vadd.f32 %v4320, %v4748
        %v4791 = vadd.f32 %v4321, %v4751
        %v4792 = vadd.f32 %v4322, %v4756
        %v4793 = vadd.f32 %v4323, %v4759
        %v4794 = vld [vmem:[#allocation4] sm:$0x1]
        %v4796 = vlaneseq
        %v4797 = vshrl.u32 %v4796, 7
        %v4798 = vsub.s32 0, %v4797
        %v4799 = vrot.slane %v4794, %v4798
        %v4801 = vmul.f32 %v4762, %v4799
        %v4802 = vmul.f32 %v4763, %v4799
        %v4803 = vmul.f32 %v4764, %v4799
        %v4804 = vmul.f32 %v4765, %v4799
        %v4805 = vmul.f32 %v4766, %v4799
        %v4806 = vmul.f32 %v4767, %v4799
        %v4807 = vmul.f32 %v4768, %v4799
        %v4808 = vmul.f32 %v4769, %v4799
        %v4809 = vmul.f32 %v4770, %v4799
        %v4810 = vmul.f32 %v4771, %v4799
        %v4811 = vmul.f32 %v4772, %v4799
        %v4812 = vmul.f32 %v4773, %v4799
        %v4813 = vmul.f32 %v4774, %v4799
        %v4814 = vmul.f32 %v4775, %v4799
        %v4815 = vmul.f32 %v4776, %v4799
        %v4816 = vmul.f32 %v4777, %v4799
        %v4817 = vmul.f32 %v4778, %v4799
        %v4818 = vmul.f32 %v4779, %v4799
        %v4819 = vmul.f32 %v4780, %v4799
        %v4820 = vmul.f32 %v4781, %v4799
        %v4821 = vmul.f32 %v4782, %v4799
        %v4822 = vmul.f32 %v4783, %v4799
        %v4823 = vmul.f32 %v4784, %v4799
        %v4824 = vmul.f32 %v4785, %v4799
        %v4825 = vmul.f32 %v4786, %v4799
        %v4826 = vmul.f32 %v4787, %v4799
        %v4827 = vmul.f32 %v4788, %v4799
        %v4828 = vmul.f32 %v4789, %v4799
        %v4829 = vmul.f32 %v4790, %v4799
        %v4830 = vmul.f32 %v4791, %v4799
        %v4831 = vmul.f32 %v4792, %v4799
        %v4832 = vmul.f32 %v4793, %v4799
        %v4833 = vld [vmem:[#allocation6] sm:$0x1]
        %v4835 = vlaneseq
        %v4836 = vshrl.u32 %v4835, 7
        %v4837 = vsub.s32 0, %v4836
        %v4838 = vrot.slane %v4833, %v4837
        %v4840 = vadd.f32 %v4801, %v4838
        %v4841 = vadd.f32 %v4802, %v4838
        %v4842 = vadd.f32 %v4803, %v4838
        %v4843 = vadd.f32 %v4804, %v4838
        %v4844 = vadd.f32 %v4805, %v4838
        %v4845 = vadd.f32 %v4806, %v4838
        %v4846 = vadd.f32 %v4807, %v4838
        %v4847 = vadd.f32 %v4808, %v4838
        %v4848 = vadd.f32 %v4809, %v4838
        %v4849 = vadd.f32 %v4810, %v4838
        %v4850 = vadd.f32 %v4811, %v4838
        %v4851 = vadd.f32 %v4812, %v4838
        %v4852 = vadd.f32 %v4813, %v4838
        %v4853 = vadd.f32 %v4814, %v4838
        %v4854 = vadd.f32 %v4815, %v4838
        %v4855 = vadd.f32 %v4816, %v4838
        %v4856 = vadd.f32 %v4817, %v4838
        %v4857 = vadd.f32 %v4818, %v4838
        %v4858 = vadd.f32 %v4819, %v4838
        %v4859 = vadd.f32 %v4820, %v4838
        %v4860 = vadd.f32 %v4821, %v4838
        %v4861 = vadd.f32 %v4822, %v4838
        %v4862 = vadd.f32 %v4823, %v4838
        %v4863 = vadd.f32 %v4824, %v4838
        %v4864 = vadd.f32 %v4825, %v4838
        %v4865 = vadd.f32 %v4826, %v4838
        %v4866 = vadd.f32 %v4827, %v4838
        %v4867 = vadd.f32 %v4828, %v4838
        %v4868 = vadd.f32 %v4829, %v4838
        %v4869 = vadd.f32 %v4830, %v4838
        %v4870 = vadd.f32 %v4831, %v4838
        %v4871 = vadd.f32 %v4832, %v4838
        %v4872 = vmax.f32 %v4840, 0.0
        %v4873 = vmax.f32 %v4841, 0.0
        %v4874 = vmax.f32 %v4842, 0.0
        %v4875 = vmax.f32 %v4843, 0.0
        %v4876 = vmax.f32 %v4844, 0.0
        %v4877 = vmax.f32 %v4845, 0.0
        %v4878 = vmax.f32 %v4846, 0.0
        %v4879 = vmax.f32 %v4847, 0.0
        %v4880 = vmax.f32 %v4848, 0.0
        %v4881 = vmax.f32 %v4849, 0.0
        %v4882 = vmax.f32 %v4850, 0.0
        %v4883 = vmax.f32 %v4851, 0.0
        %v4884 = vmax.f32 %v4852, 0.0
        %v4885 = vmax.f32 %v4853, 0.0
        %v4886 = vmax.f32 %v4854, 0.0
        %v4887 = vmax.f32 %v4855, 0.0
        %v4888 = vmax.f32 %v4856, 0.0
        %v4889 = vmax.f32 %v4857, 0.0
        %v4890 = vmax.f32 %v4858, 0.0
        %v4891 = vmax.f32 %v4859, 0.0
        %v4892 = vmax.f32 %v4860, 0.0
        %v4893 = vmax.f32 %v4861, 0.0
        %v4894 = vmax.f32 %v4862, 0.0
        %v4895 = vmax.f32 %v4863, 0.0
        %v4896 = vmax.f32 %v4864, 0.0
        %v4897 = vmax.f32 %v4865, 0.0
        %v4898 = vmax.f32 %v4866, 0.0
        %v4899 = vmax.f32 %v4867, 0.0
        %v4900 = vmax.f32 %v4868, 0.0
        %v4901 = vmax.f32 %v4869, 0.0
        %v4902 = vmax.f32 %v4870, 0.0
        %v4903 = vmax.f32 %v4871, 0.0
        %4904 = vmatprep.subr.mxu0 0.0
        %4905 = vmatpush1.msra.mxu0 %v4872
        %4906 = vmatprep.subr.mxu0 0.0
        %4907 = vmatpush1.msra.mxu0 %v4873
        %4908 = vmatprep.subr.mxu0 0.0
        %4909 = vmatpush1.msra.mxu0 %v4874
        %4910 = vmatprep.subr.mxu0 0.0
        %4911 = vmatpush1.msra.mxu0 %v4875
        %4912 = vmatprep.subr.mxu0 0.0
        %4913 = vmatpush1.msra.mxu0 %v4876
        %4914 = vmatprep.subr.mxu0 0.0
        %4915 = vmatpush1.msra.mxu0 %v4877
        %4916 = vmatprep.subr.mxu0 0.0
        %4917 = vmatpush1.msra.mxu0 %v4878
        %4918 = vmatprep.subr.mxu0 0.0
        %4919 = vmatpush1.msra.mxu0 %v4879
        %4920 = vmatprep.subr.mxu0 0.0
        %4921 = vmatpush1.msra.mxu0 %v4880
        %4922 = vmatprep.subr.mxu0 0.0
        %4923 = vmatpush1.msra.mxu0 %v4881
        %4924 = vmatprep.subr.mxu0 0.0
        %4925 = vmatpush1.msra.mxu0 %v4882
        %4926 = vmatprep.subr.mxu0 0.0
        %4927 = vmatpush1.msra.mxu0 %v4883
        %4928 = vmatprep.subr.mxu0 0.0
        %4929 = vmatpush1.msra.mxu0 %v4884
        %4930 = vmatprep.subr.mxu0 0.0
        %4931 = vmatpush1.msra.mxu0 %v4885
        %4932 = vmatprep.subr.mxu0 0.0
        %4933 = vmatpush1.msra.mxu0 %v4886
        %4934 = vmatprep.subr.mxu0 0.0
        %4935 = vmatpush1.msra.mxu0 %v4887
        %4936 = vmatprep.subr.mxu0 0.0
        %4937 = vmatpush1.msra.mxu0 %v4888
        %4938 = vmatprep.subr.mxu0 0.0
        %4939 = vmatpush1.msra.mxu0 %v4889
        %4940 = vmatprep.subr.mxu0 0.0
        %4941 = vmatpush1.msra.mxu0 %v4890
        %4942 = vmatprep.subr.mxu0 0.0
        %4943 = vmatpush1.msra.mxu0 %v4891
        %4944 = vmatprep.subr.mxu0 0.0
        %4945 = vmatpush1.msra.mxu0 %v4892
        %4946 = vmatprep.subr.mxu0 0.0
        %4947 = vmatpush1.msra.mxu0 %v4893
        %4948 = vmatprep.subr.mxu0 0.0
        %4949 = vmatpush1.msra.mxu0 %v4894
        %4950 = vmatprep.subr.mxu0 0.0
        %4951 = vmatpush1.msra.mxu0 %v4895
        %4952 = vmatprep.subr.mxu0 0.0
        %4953 = vmatpush1.msra.mxu0 %v4896
        %4954 = vmatprep.subr.mxu0 0.0
        %4955 = vmatpush1.msra.mxu0 %v4897
        %4956 = vmatprep.subr.mxu0 0.0
        %4957 = vmatpush1.msra.mxu0 %v4898
        %4958 = vmatprep.subr.mxu0 0.0
        %4959 = vmatpush1.msra.mxu0 %v4899
        %4960 = vmatprep.subr.mxu0 0.0
        %4961 = vmatpush1.msra.mxu0 %v4900
        %4962 = vmatprep.subr.mxu0 0.0
        %4963 = vmatpush1.msra.mxu0 %v4901
        %4964 = vmatprep.subr.mxu0 0.0
        %4965 = vmatpush1.msra.mxu0 %v4902
        %4966 = vmatprep.subr.mxu0 0.0
        %4967 = vmatpush1.msra.mxu0 %v4903
        %4968 = vmatprep.mubr.f32.mxu0 0.00390625
        %4969 = vmatmul.mubr.f32.gmra.mrb[0].mxu0 0.00390625
        %v4970 = vpop.f32.mrb[0].mxu0
        %v4971 = vadd.f32 0.0, %v4970
        %v4972 = vpop.f32.mrb[0].mxu0
        %4973 = vdwg.mxu0
        %4974 = vst [vmem:[%s233] sm:$0x1] %v4971
        %p4975 = scmp.lt.s32.totalorder %s17, 1
        %s4976 = scalar_select %p4975, %s17, 1
        %s4977 = scalar_lea.vmem %s4, %s4976
        // Predicated region
        $region49: #{custom_inception_v3_forward.2} parent=35 // pred_check
          %p4978 = pneg %p124
        $region50: #{custom_inception_v3_forward.2} parent=35 // pred_check_branch
          %4980 = sbr.rel (%p4978) target = $region52
        $region51: #{custom_inception_v3_forward.2} parent=35 // pred_region
          _
        $region52: #{custom_inception_v3_forward.2} parent=35 // pred_fallthru
          _
      $region36: #{custom_inception_v3_forward.2} parent=5 // pred_fallthru
        _
      %p4981 = scmp.le.s32.totalorder 2, %s12
      // Predicated region
      $region53: #{custom_inception_v3_forward.2} parent=5 // pred_check
        %p4982 = pneg %p4981
      $region54: #{custom_inception_v3_forward.2} parent=5 // pred_check_branch
        %4984 = sbr.rel (%p4982) target = $region56
      $region55: #{custom_inception_v3_forward.2} parent=5 // pred_region
        %s4985 = ssub.s32 %s12, 2
        // Predicated region
        $region57: #{custom_inception_v3_forward.2} parent=55 // pred_check
          %p4986 = pneg %p130
        $region58: #{custom_inception_v3_forward.2} parent=55 // pred_check_branch
          %4988 = sbr.rel (%p4986) target = $region60
        $region59: #{custom_inception_v3_forward.2} parent=55 // pred_region
          %p4989 = scmp.lt.s32.totalorder %s18, 1
          %s4990 = scalar_select %p4989, %s18, 1
          %s4991 = scalar_lea.vmem %s4, %s4990
        $region60: #{custom_inception_v3_forward.2} parent=55 // pred_fallthru
          _
      $region56: #{custom_inception_v3_forward.2} parent=5 // pred_fallthru
        _
    $region6: #{custom_inception_v3_forward.2} parent=1 // loop_footer
      %s16 = sadd.s32 1, %s12
    $region7: #{custom_inception_v3_forward.2} parent=1 // loop_footer_branch
      %11 = sbr.rel target = $region3
    $region8: #{custom_inception_v3_forward.2} parent=1 // loop_exit
      _
    %4992 = vsyncpa [#allocation3], 1
    %s4993 = scalar_lea.sflag [#allocation3], 1
    %4994 = vsyncpa %s4993, 1
    %4995 = vsyncpa [#allocation5], 1

// kernel: custom_inception_v3_forward.3
$region0: #{custom_inception_v3_forward.3}
  #allocation0 [shape = 'u32[]', space=smem, size = 0x4, offset = 0x4, fixed_abs, tag = 'smem constant byte address 0x4 - core index']
  #allocation1 [shape = 'u32[144,128]{1,0:T(1,128)}', space=vmem, size = 0x12000, scoped, tag = 'internal scratch']
  %s0 = inlined_call_operand.vmem [shape: f32[2,128], index: 0, kind: input, shape index: {}]
  %s1 = inlined_call_operand.vmem [shape: bf16[128,1024], index: 1, kind: input, shape index: {}]
  %s2 = inlined_call_operand.vmem [shape: f32[1,1024], index: 2, kind: input, shape index: {}, may-alias: {2,4}]
  %s3 = inlined_call_operand.vmem [shape: bf16[1024,1024], index: 3, kind: input, shape index: {}]
  %s4 = inlined_call_operand.vmem [shape: f32[1,1024], index: 4, kind: input, shape index: {}, may-alias: {2,4}]
  %s5 = inlined_call_operand.vmem [shape: bf16[1024,512], index: 5, kind: input, shape index: {}]
  %s6 = inlined_call_operand.vmem [shape: f32[1,512], index: 6, kind: input, shape index: {}]
  %s7 = inlined_call_operand.vmem [shape: bf16[512,256], index: 7, kind: input, shape index: {}]
  %s8 = inlined_call_operand.vmem [shape: f32[1,256], index: 8, kind: input, shape index: {}]
  %s9 = inlined_call_operand.vmem [shape: bf16[256,128], index: 9, kind: input, shape index: {}]
  %s10 = inlined_call_operand.vmem [shape: f32[1,128], index: 10, kind: input, shape index: {}]
  %s11 = inlined_call_operand.hbm [shape: f32[2,1024], index: 11, kind: output, shape index: {0}]
  %s12 = inlined_call_operand.hbm [shape: f32[2,1024], index: 12, kind: output, shape index: {1}]
  %s13 = inlined_call_operand.hbm [shape: f32[2,512], index: 13, kind: output, shape index: {2}]
  %s14 = inlined_call_operand.hbm [shape: f32[2,256], index: 14, kind: output, shape index: {3}]
  %s15 = inlined_call_operand.hbm [shape: f32[2,128], index: 15, kind: output, shape index: {4}]
  %16 = xla_tuple %s11, %s12, %s13, %s14, %s15
  %s17 = sld [smem:[#allocation0]]
  $region86: #{custom_inception_v3_forward.3} parent=0
    _
  %s19 = ssub.s32 1, %s17
  %s20 = scalar_select 0, %s19, %s17
  $region1: #{custom_inception_v3_forward.3} parent=0
    #allocation2 [shape = 'u8[8192]{0}', space=vmem, size = 0x2000, scoped, tag = 'output window, operand 0, single buffered']
    #allocation3 [shape = 's32[1]{0}', space=sflag, size = 0x4, scoped, tag = 'scoped memory for custom_inception_v3_forward.3']
    #allocation4 [shape = 'u8[8192]{0}', space=vmem, size = 0x2000, scoped, tag = 'output window, operand 1, single buffered']
    #allocation5 [shape = 's32[1]{0}', space=sflag, size = 0x4, scoped, tag = 'scoped memory for custom_inception_v3_forward.3']
    #allocation6 [shape = 'u8[4096]{0}', space=vmem, size = 0x1000, scoped, tag = 'output window, operand 2, single buffered']
    #allocation7 [shape = 'u8[2048]{0}', space=vmem, size = 0x800, scoped, tag = 'output window, operand 3, single buffered']
    #allocation8 [shape = 's32[1]{0}', space=sflag, size = 0x4, scoped, tag = 'scoped memory for custom_inception_v3_forward.3']
    #allocation9 [shape = 'u8[1024]{0}', space=vmem, size = 0x400, scoped, tag = 'output window, operand 4, single buffered']
    %21 = vsyncpa [#allocation3], 0
    %22 = vsyncpa [#allocation5], 0
    %23 = vsyncpa [#allocation8], 0
    // Predicated region
    $region2: #{custom_inception_v3_forward.3} parent=1 // pred_check
      _
    $region3: #{custom_inception_v3_forward.3} parent=1 // pred_check_branch
      %25 = sbr.rel (0) target = $region5
    $region4: #{custom_inception_v3_forward.3} parent=1 // pred_region
      _
    $region5: #{custom_inception_v3_forward.3} parent=1 // pred_fallthru
      _
    // Predicated region
    $region6: #{custom_inception_v3_forward.3} parent=1 // pred_check
      _
    $region7: #{custom_inception_v3_forward.3} parent=1 // pred_check_branch
      %27 = sbr.rel (0) target = $region9
    $region8: #{custom_inception_v3_forward.3} parent=1 // pred_region
      _
    $region9: #{custom_inception_v3_forward.3} parent=1 // pred_fallthru
      _
    // Predicated region
    $region10: #{custom_inception_v3_forward.3} parent=1 // pred_check
      _
    $region11: #{custom_inception_v3_forward.3} parent=1 // pred_check_branch
      %29 = sbr.rel (0) target = $region13
    $region12: #{custom_inception_v3_forward.3} parent=1 // pred_region
      _
    $region13: #{custom_inception_v3_forward.3} parent=1 // pred_fallthru
      _
    // Predicated region
    $region14: #{custom_inception_v3_forward.3} parent=1 // pred_check
      _
    $region15: #{custom_inception_v3_forward.3} parent=1 // pred_check_branch
      %31 = sbr.rel (0) target = $region17
    $region16: #{custom_inception_v3_forward.3} parent=1 // pred_region
      _
    $region17: #{custom_inception_v3_forward.3} parent=1 // pred_fallthru
      _
    // Predicated region
    $region18: #{custom_inception_v3_forward.3} parent=1 // pred_check
      _
    $region19: #{custom_inception_v3_forward.3} parent=1 // pred_check_branch
      %33 = sbr.rel (0) target = $region21
    $region20: #{custom_inception_v3_forward.3} parent=1 // pred_region
      _
    $region21: #{custom_inception_v3_forward.3} parent=1 // pred_fallthru
      _
    // Predicated region
    $region22: #{custom_inception_v3_forward.3} parent=1 // pred_check
      _
    $region23: #{custom_inception_v3_forward.3} parent=1 // pred_check_branch
      %35 = sbr.rel (0) target = $region25
    $region24: #{custom_inception_v3_forward.3} parent=1 // pred_region
      _
    $region25: #{custom_inception_v3_forward.3} parent=1 // pred_fallthru
      _
    // Predicated region
    $region26: #{custom_inception_v3_forward.3} parent=1 // pred_check
      _
    $region27: #{custom_inception_v3_forward.3} parent=1 // pred_check_branch
      %37 = sbr.rel (0) target = $region29
    $region28: #{custom_inception_v3_forward.3} parent=1 // pred_region
      _
    $region29: #{custom_inception_v3_forward.3} parent=1 // pred_fallthru
      _
    // Predicated region
    $region30: #{custom_inception_v3_forward.3} parent=1 // pred_check
      _
    $region31: #{custom_inception_v3_forward.3} parent=1 // pred_check_branch
      %39 = sbr.rel (0) target = $region33
    $region32: #{custom_inception_v3_forward.3} parent=1 // pred_region
      _
    $region33: #{custom_inception_v3_forward.3} parent=1 // pred_fallthru
      _
    // Predicated region
    $region34: #{custom_inception_v3_forward.3} parent=1 // pred_check
      _
    $region35: #{custom_inception_v3_forward.3} parent=1 // pred_check_branch
      %41 = sbr.rel (0) target = $region37
    $region36: #{custom_inception_v3_forward.3} parent=1 // pred_region
      _
    $region37: #{custom_inception_v3_forward.3} parent=1 // pred_fallthru
      _
    // Predicated region
    $region38: #{custom_inception_v3_forward.3} parent=1 // pred_check
      _
    $region39: #{custom_inception_v3_forward.3} parent=1 // pred_check_branch
      %43 = sbr.rel (0) target = $region41
    $region40: #{custom_inception_v3_forward.3} parent=1 // pred_region
      _
    $region41: #{custom_inception_v3_forward.3} parent=1 // pred_fallthru
      _
    // Predicated region
    $region42: #{custom_inception_v3_forward.3} parent=1 // pred_check
      _
    $region43: #{custom_inception_v3_forward.3} parent=1 // pred_check_branch
      %45 = sbr.rel (0) target = $region45
    $region44: #{custom_inception_v3_forward.3} parent=1 // pred_region
      _
    $region45: #{custom_inception_v3_forward.3} parent=1 // pred_fallthru
      _
    %v47 = vld [vmem:[%s0] sm:$0x3]
    %v48 = vpack.c.bf16 %v47, %v47
    %v49 = vld [vmem:[%s1] sm:$0xff]
    %v50 = vld [vmem:[%s1 + $0x8] sm:$0xff]
    %v51 = vld [vmem:[%s1 + $0x10] sm:$0xff]
    %v52 = vld [vmem:[%s1 + $0x18] sm:$0xff]
    %v53 = vld [vmem:[%s1 + $0x20] sm:$0xff]
    %v54 = vld [vmem:[%s1 + $0x28] sm:$0xff]
    %v55 = vld [vmem:[%s1 + $0x30] sm:$0xff]
    %v56 = vld [vmem:[%s1 + $0x38] sm:$0xff]
    %v57 = vld [vmem:[%s1 + $0x40] sm:$0xff]
    %v58 = vld [vmem:[%s1 + $0x48] sm:$0xff]
    %v59 = vld [vmem:[%s1 + $0x50] sm:$0xff]
    %v60 = vld [vmem:[%s1 + $0x58] sm:$0xff]
    %v61 = vld [vmem:[%s1 + $0x60] sm:$0xff]
    %v62 = vld [vmem:[%s1 + $0x68] sm:$0xff]
    %v63 = vld [vmem:[%s1 + $0x70] sm:$0xff]
    %v64 = vld [vmem:[%s1 + $0x78] sm:$0xff]
    %v65 = vld [vmem:[%s1 + $0x80] sm:$0xff]
    %v66 = vld [vmem:[%s1 + $0x88] sm:$0xff]
    %v67 = vld [vmem:[%s1 + $0x90] sm:$0xff]
    %v68 = vld [vmem:[%s1 + $0x98] sm:$0xff]
    %v69 = vld [vmem:[%s1 + $0xa0] sm:$0xff]
    %v70 = vld [vmem:[%s1 + $0xa8] sm:$0xff]
    %v71 = vld [vmem:[%s1 + $0xb0] sm:$0xff]
    %v72 = vld [vmem:[%s1 + $0xb8] sm:$0xff]
    %v73 = vld [vmem:[%s1 + $0xc0] sm:$0xff]
    %v74 = vld [vmem:[%s1 + $0xc8] sm:$0xff]
    %v75 = vld [vmem:[%s1 + $0xd0] sm:$0xff]
    %v76 = vld [vmem:[%s1 + $0xd8] sm:$0xff]
    %v77 = vld [vmem:[%s1 + $0xe0] sm:$0xff]
    %v78 = vld [vmem:[%s1 + $0xe8] sm:$0xff]
    %v79 = vld [vmem:[%s1 + $0xf0] sm:$0xff]
    %v80 = vld [vmem:[%s1 + $0xf8] sm:$0xff]
    %v81 = vld [vmem:[%s1 + $0x100] sm:$0xff]
    %v82 = vld [vmem:[%s1 + $0x108] sm:$0xff]
    %v83 = vld [vmem:[%s1 + $0x110] sm:$0xff]
    %v84 = vld [vmem:[%s1 + $0x118] sm:$0xff]
    %v85 = vld [vmem:[%s1 + $0x120] sm:$0xff]
    %v86 = vld [vmem:[%s1 + $0x128] sm:$0xff]
    %v87 = vld [vmem:[%s1 + $0x130] sm:$0xff]
    %v88 = vld [vmem:[%s1 + $0x138] sm:$0xff]
    %v89 = vld [vmem:[%s1 + $0x140] sm:$0xff]
    %v90 = vld [vmem:[%s1 + $0x148] sm:$0xff]
    %v91 = vld [vmem:[%s1 + $0x150] sm:$0xff]
    %v92 = vld [vmem:[%s1 + $0x158] sm:$0xff]
    %v93 = vld [vmem:[%s1 + $0x160] sm:$0xff]
    %v94 = vld [vmem:[%s1 + $0x168] sm:$0xff]
    %v95 = vld [vmem:[%s1 + $0x170] sm:$0xff]
    %v96 = vld [vmem:[%s1 + $0x178] sm:$0xff]
    %v97 = vld [vmem:[%s1 + $0x180] sm:$0xff]
    %v98 = vld [vmem:[%s1 + $0x188] sm:$0xff]
    %v99 = vld [vmem:[%s1 + $0x190] sm:$0xff]
    %v100 = vld [vmem:[%s1 + $0x198] sm:$0xff]
    %v101 = vld [vmem:[%s1 + $0x1a0] sm:$0xff]
    %v102 = vld [vmem:[%s1 + $0x1a8] sm:$0xff]
    %v103 = vld [vmem:[%s1 + $0x1b0] sm:$0xff]
    %v104 = vld [vmem:[%s1 + $0x1b8] sm:$0xff]
    %v105 = vld [vmem:[%s1 + $0x1c0] sm:$0xff]
    %v106 = vld [vmem:[%s1 + $0x1c8] sm:$0xff]
    %v107 = vld [vmem:[%s1 + $0x1d0] sm:$0xff]
    %v108 = vld [vmem:[%s1 + $0x1d8] sm:$0xff]
    %v109 = vld [vmem:[%s1 + $0x1e0] sm:$0xff]
    %v110 = vld [vmem:[%s1 + $0x1e8] sm:$0xff]
    %v111 = vld [vmem:[%s1 + $0x1f0] sm:$0xff]
    %v112 = vld [vmem:[%s1 + $0x1f8] sm:$0xff]
    %v113 = vld [vmem:[%s2] sm:$0xff]
    %v115 = vlaneseq
    %v116 = vshrl.u32 %v115, 7
    %v117 = vsub.s32 0, %v116
    %v118 = vrot.slane %v113, %v117
    %v119 = vlaneseq
    %v120 = vshrl.u32 %v119, 7
    %v121 = vsub.s32 1, %v120
    %v122 = vrot.slane %v113, %v121
    %v123 = vlaneseq
    %v124 = vshrl.u32 %v123, 7
    %v125 = vsub.s32 2, %v124
    %v126 = vrot.slane %v113, %v125
    %v127 = vlaneseq
    %v128 = vshrl.u32 %v127, 7
    %v129 = vsub.s32 3, %v128
    %v130 = vrot.slane %v113, %v129
    %v131 = vlaneseq
    %v132 = vshrl.u32 %v131, 7
    %v133 = vsub.s32 4, %v132
    %v134 = vrot.slane %v113, %v133
    %v135 = vlaneseq
    %v136 = vshrl.u32 %v135, 7
    %v137 = vsub.s32 5, %v136
    %v138 = vrot.slane %v113, %v137
    %v139 = vlaneseq
    %v140 = vshrl.u32 %v139, 7
    %v141 = vsub.s32 6, %v140
    %v142 = vrot.slane %v113, %v141
    %v143 = vlaneseq
    %v144 = vshrl.u32 %v143, 7
    %v145 = vsub.s32 7, %v144
    %v146 = vrot.slane %v113, %v145
    %v219 = vunpack.c.l.b16 %v49
    %v220 = vunpack.c.h.b16 %v49
    %v221 = vunpack.c.l.b16 %v50
    %v222 = vunpack.c.h.b16 %v50
    %v223 = vunpack.c.l.b16 %v51
    %v224 = vunpack.c.h.b16 %v51
    %v225 = vunpack.c.l.b16 %v52
    %v226 = vunpack.c.h.b16 %v52
    %v227 = vunpack.c.l.b16 %v53
    %v228 = vunpack.c.h.b16 %v53
    %v229 = vunpack.c.l.b16 %v54
    %v230 = vunpack.c.h.b16 %v54
    %v231 = vunpack.c.l.b16 %v55
    %v232 = vunpack.c.h.b16 %v55
    %v233 = vunpack.c.l.b16 %v56
    %v234 = vunpack.c.h.b16 %v56
    %v235 = vunpack.c.l.b16 %v57
    %v236 = vunpack.c.h.b16 %v57
    %v237 = vunpack.c.l.b16 %v58
    %v238 = vunpack.c.h.b16 %v58
    %v239 = vunpack.c.l.b16 %v59
    %v240 = vunpack.c.h.b16 %v59
    %v241 = vunpack.c.l.b16 %v60
    %v242 = vunpack.c.h.b16 %v60
    %v243 = vunpack.c.l.b16 %v61
    %v244 = vunpack.c.h.b16 %v61
    %v245 = vunpack.c.l.b16 %v62
    %v246 = vunpack.c.h.b16 %v62
    %v247 = vunpack.c.l.b16 %v63
    %v248 = vunpack.c.h.b16 %v63
    %v249 = vunpack.c.l.b16 %v64
    %v250 = vunpack.c.h.b16 %v64
    %v251 = vunpack.c.l.b16 %v65
    %v252 = vunpack.c.h.b16 %v65
    %v253 = vunpack.c.l.b16 %v66
    %v254 = vunpack.c.h.b16 %v66
    %v255 = vunpack.c.l.b16 %v67
    %v256 = vunpack.c.h.b16 %v67
    %v257 = vunpack.c.l.b16 %v68
    %v258 = vunpack.c.h.b16 %v68
    %v259 = vunpack.c.l.b16 %v69
    %v260 = vunpack.c.h.b16 %v69
    %v261 = vunpack.c.l.b16 %v70
    %v262 = vunpack.c.h.b16 %v70
    %v263 = vunpack.c.l.b16 %v71
    %v264 = vunpack.c.h.b16 %v71
    %v265 = vunpack.c.l.b16 %v72
    %v266 = vunpack.c.h.b16 %v72
    %v267 = vunpack.c.l.b16 %v73
    %v268 = vunpack.c.h.b16 %v73
    %v269 = vunpack.c.l.b16 %v74
    %v270 = vunpack.c.h.b16 %v74
    %v271 = vunpack.c.l.b16 %v75
    %v272 = vunpack.c.h.b16 %v75
    %v273 = vunpack.c.l.b16 %v76
    %v274 = vunpack.c.h.b16 %v76
    %v275 = vunpack.c.l.b16 %v77
    %v276 = vunpack.c.h.b16 %v77
    %v277 = vunpack.c.l.b16 %v78
    %v278 = vunpack.c.h.b16 %v78
    %v279 = vunpack.c.l.b16 %v79
    %v280 = vunpack.c.h.b16 %v79
    %v281 = vunpack.c.l.b16 %v80
    %v282 = vunpack.c.h.b16 %v80
    %v283 = vunpack.c.l.b16 %v81
    %v284 = vunpack.c.h.b16 %v81
    %v285 = vunpack.c.l.b16 %v82
    %v286 = vunpack.c.h.b16 %v82
    %v287 = vunpack.c.l.b16 %v83
    %v288 = vunpack.c.h.b16 %v83
    %v289 = vunpack.c.l.b16 %v84
    %v290 = vunpack.c.h.b16 %v84
    %v291 = vunpack.c.l.b16 %v85
    %v292 = vunpack.c.h.b16 %v85
    %v293 = vunpack.c.l.b16 %v86
    %v294 = vunpack.c.h.b16 %v86
    %v295 = vunpack.c.l.b16 %v87
    %v296 = vunpack.c.h.b16 %v87
    %v297 = vunpack.c.l.b16 %v88
    %v298 = vunpack.c.h.b16 %v88
    %v299 = vunpack.c.l.b16 %v89
    %v300 = vunpack.c.h.b16 %v89
    %v301 = vunpack.c.l.b16 %v90
    %v302 = vunpack.c.h.b16 %v90
    %v303 = vunpack.c.l.b16 %v91
    %v304 = vunpack.c.h.b16 %v91
    %v305 = vunpack.c.l.b16 %v92
    %v306 = vunpack.c.h.b16 %v92
    %v307 = vunpack.c.l.b16 %v93
    %v308 = vunpack.c.h.b16 %v93
    %v309 = vunpack.c.l.b16 %v94
    %v310 = vunpack.c.h.b16 %v94
    %v311 = vunpack.c.l.b16 %v95
    %v312 = vunpack.c.h.b16 %v95
    %v313 = vunpack.c.l.b16 %v96
    %v314 = vunpack.c.h.b16 %v96
    %v315 = vunpack.c.l.b16 %v97
    %v316 = vunpack.c.h.b16 %v97
    %v317 = vunpack.c.l.b16 %v98
    %v318 = vunpack.c.h.b16 %v98
    %v319 = vunpack.c.l.b16 %v99
    %v320 = vunpack.c.h.b16 %v99
    %v321 = vunpack.c.l.b16 %v100
    %v322 = vunpack.c.h.b16 %v100
    %v323 = vunpack.c.l.b16 %v101
    %v324 = vunpack.c.h.b16 %v101
    %v325 = vunpack.c.l.b16 %v102
    %v326 = vunpack.c.h.b16 %v102
    %v327 = vunpack.c.l.b16 %v103
    %v328 = vunpack.c.h.b16 %v103
    %v329 = vunpack.c.l.b16 %v104
    %v330 = vunpack.c.h.b16 %v104
    %v331 = vunpack.c.l.b16 %v105
    %v332 = vunpack.c.h.b16 %v105
    %v333 = vunpack.c.l.b16 %v106
    %v334 = vunpack.c.h.b16 %v106
    %v335 = vunpack.c.l.b16 %v107
    %v336 = vunpack.c.h.b16 %v107
    %v337 = vunpack.c.l.b16 %v108
    %v338 = vunpack.c.h.b16 %v108
    %v339 = vunpack.c.l.b16 %v109
    %v340 = vunpack.c.h.b16 %v109
    %v341 = vunpack.c.l.b16 %v110
    %v342 = vunpack.c.h.b16 %v110
    %v343 = vunpack.c.l.b16 %v111
    %v344 = vunpack.c.h.b16 %v111
    %v345 = vunpack.c.l.b16 %v112
    %v346 = vunpack.c.h.b16 %v112
    %v347 = vpack.c.b16 %v227, %v219
    %v348 = vpack.c.b16 %v228, %v220
    %v349 = vpack.c.b16 %v229, %v221
    %v350 = vpack.c.b16 %v230, %v222
    %v351 = vpack.c.b16 %v231, %v223
    %v352 = vpack.c.b16 %v232, %v224
    %v353 = vpack.c.b16 %v233, %v225
    %v354 = vpack.c.b16 %v234, %v226
    %v355 = vpack.c.b16 %v243, %v235
    %v356 = vpack.c.b16 %v244, %v236
    %v357 = vpack.c.b16 %v245, %v237
    %v358 = vpack.c.b16 %v246, %v238
    %v359 = vpack.c.b16 %v247, %v239
    %v360 = vpack.c.b16 %v248, %v240
    %v361 = vpack.c.b16 %v249, %v241
    %v362 = vpack.c.b16 %v250, %v242
    %v363 = vpack.c.b16 %v259, %v251
    %v364 = vpack.c.b16 %v260, %v252
    %v365 = vpack.c.b16 %v261, %v253
    %v366 = vpack.c.b16 %v262, %v254
    %v367 = vpack.c.b16 %v263, %v255
    %v368 = vpack.c.b16 %v264, %v256
    %v369 = vpack.c.b16 %v265, %v257
    %v370 = vpack.c.b16 %v266, %v258
    %v371 = vpack.c.b16 %v275, %v267
    %v372 = vpack.c.b16 %v276, %v268
    %v373 = vpack.c.b16 %v277, %v269
    %v374 = vpack.c.b16 %v278, %v270
    %v375 = vpack.c.b16 %v279, %v271
    %v376 = vpack.c.b16 %v280, %v272
    %v377 = vpack.c.b16 %v281, %v273
    %v378 = vpack.c.b16 %v282, %v274
    %v379 = vpack.c.b16 %v291, %v283
    %v380 = vpack.c.b16 %v292, %v284
    %v381 = vpack.c.b16 %v293, %v285
    %v382 = vpack.c.b16 %v294, %v286
    %v383 = vpack.c.b16 %v295, %v287
    %v384 = vpack.c.b16 %v296, %v288
    %v385 = vpack.c.b16 %v297, %v289
    %v386 = vpack.c.b16 %v298, %v290
    %v387 = vpack.c.b16 %v307, %v299
    %v388 = vpack.c.b16 %v308, %v300
    %v389 = vpack.c.b16 %v309, %v301
    %v390 = vpack.c.b16 %v310, %v302
    %v391 = vpack.c.b16 %v311, %v303
    %v392 = vpack.c.b16 %v312, %v304
    %v393 = vpack.c.b16 %v313, %v305
    %v394 = vpack.c.b16 %v314, %v306
    %v395 = vpack.c.b16 %v323, %v315
    %v396 = vpack.c.b16 %v324, %v316
    %v397 = vpack.c.b16 %v325, %v317
    %v398 = vpack.c.b16 %v326, %v318
    %v399 = vpack.c.b16 %v327, %v319
    %v400 = vpack.c.b16 %v328, %v320
    %v401 = vpack.c.b16 %v329, %v321
    %v402 = vpack.c.b16 %v330, %v322
    %v403 = vpack.c.b16 %v339, %v331
    %v404 = vpack.c.b16 %v340, %v332
    %v405 = vpack.c.b16 %v341, %v333
    %v406 = vpack.c.b16 %v342, %v334
    %v407 = vpack.c.b16 %v343, %v335
    %v408 = vpack.c.b16 %v344, %v336
    %v409 = vpack.c.b16 %v345, %v337
    %v410 = vpack.c.b16 %v346, %v338
    %475 = vmatprep.subr.bf16.mxu0 %v348
    %476 = vmatpush1.bf16.msra.mxu0 %v347
    %477 = vmatprep.subr.bf16.mxu0 %v356
    %478 = vmatpush1.bf16.msra.mxu0 %v355
    %479 = vmatprep.subr.bf16.mxu0 %v364
    %480 = vmatpush1.bf16.msra.mxu0 %v363
    %481 = vmatprep.subr.bf16.mxu0 %v372
    %482 = vmatpush1.bf16.msra.mxu0 %v371
    %483 = vmatprep.subr.bf16.mxu0 %v380
    %484 = vmatpush1.bf16.msra.mxu0 %v379
    %485 = vmatprep.subr.bf16.mxu0 %v388
    %486 = vmatpush1.bf16.msra.mxu0 %v387
    %487 = vmatprep.subr.bf16.mxu0 %v396
    %488 = vmatpush1.bf16.msra.mxu0 %v395
    %489 = vmatprep.subr.bf16.mxu0 %v404
    %490 = vmatpush1.bf16.msra.mxu0 %v403
    %491 = vmatprep.subr.bf16.mxu0 0
    %492 = vmatpush1.bf16.msra.mxu0 0
    %493 = vmatprep.subr.bf16.mxu0 0
    %494 = vmatpush1.bf16.msra.mxu0 0
    %495 = vmatprep.subr.bf16.mxu0 0
    %496 = vmatpush1.bf16.msra.mxu0 0
    %497 = vmatprep.subr.bf16.mxu0 0
    %498 = vmatpush1.bf16.msra.mxu0 0
    %499 = vmatprep.subr.bf16.mxu0 0
    %500 = vmatpush1.bf16.msra.mxu0 0
    %501 = vmatprep.subr.bf16.mxu0 0
    %502 = vmatpush1.bf16.msra.mxu0 0
    %503 = vmatprep.subr.bf16.mxu0 0
    %504 = vmatpush1.bf16.msra.mxu0 0
    %505 = vmatprep.subr.bf16.mxu0 0
    %506 = vmatpush1.bf16.msra.mxu0 0
    %507 = vmatprep.mubr.bf16.mxu0 0
    %508 = vmatmul.mubr.bf16.gmra.mrb[0].mxu0 %v48
    %v509 = vpop.f32.mrb[0].mxu0
    %v510 = vadd.f32 %v118, %v509
    %v511 = vpop.f32.mrb[0].mxu0
    %v512 = vadd.f32 %v122, %v511
    %v513 = vpop.f32.mrb[0].mxu0
    %v514 = vpop.f32.mrb[0].mxu0
    %515 = vdwg.mxu0
    %516 = vmatprep.subr.bf16.mxu0 %v350
    %517 = vmatpush1.bf16.msra.mxu0 %v349
    %518 = vmatprep.subr.bf16.mxu0 %v358
    %519 = vmatpush1.bf16.msra.mxu0 %v357
    %520 = vmatprep.subr.bf16.mxu0 %v366
    %521 = vmatpush1.bf16.msra.mxu0 %v365
    %522 = vmatprep.subr.bf16.mxu0 %v374
    %523 = vmatpush1.bf16.msra.mxu0 %v373
    %524 = vmatprep.subr.bf16.mxu0 %v382
    %525 = vmatpush1.bf16.msra.mxu0 %v381
    %526 = vmatprep.subr.bf16.mxu0 %v390
    %527 = vmatpush1.bf16.msra.mxu0 %v389
    %528 = vmatprep.subr.bf16.mxu0 %v398
    %529 = vmatpush1.bf16.msra.mxu0 %v397
    %530 = vmatprep.subr.bf16.mxu0 %v406
    %531 = vmatpush1.bf16.msra.mxu0 %v405
    %532 = vmatprep.subr.bf16.mxu0 0
    %533 = vmatpush1.bf16.msra.mxu0 0
    %534 = vmatprep.subr.bf16.mxu0 0
    %535 = vmatpush1.bf16.msra.mxu0 0
    %536 = vmatprep.subr.bf16.mxu0 0
    %537 = vmatpush1.bf16.msra.mxu0 0
    %538 = vmatprep.subr.bf16.mxu0 0
    %539 = vmatpush1.bf16.msra.mxu0 0
    %540 = vmatprep.subr.bf16.mxu0 0
    %541 = vmatpush1.bf16.msra.mxu0 0
    %542 = vmatprep.subr.bf16.mxu0 0
    %543 = vmatpush1.bf16.msra.mxu0 0
    %544 = vmatprep.subr.bf16.mxu0 0
    %545 = vmatpush1.bf16.msra.mxu0 0
    %546 = vmatprep.subr.bf16.mxu0 0
    %547 = vmatpush1.bf16.msra.mxu0 0
    %548 = vmatprep.mubr.bf16.mxu0 0
    %549 = vmatmul.mubr.bf16.gmra.mrb[0].mxu0 %v48
    %v550 = vpop.f32.mrb[0].mxu0
    %v551 = vadd.f32 %v126, %v550
    %v552 = vpop.f32.mrb[0].mxu0
    %v553 = vadd.f32 %v130, %v552
    %v554 = vpop.f32.mrb[0].mxu0
    %v555 = vpop.f32.mrb[0].mxu0
    %556 = vdwg.mxu0
    %557 = vmatprep.subr.bf16.mxu0 %v352
    %558 = vmatpush1.bf16.msra.mxu0 %v351
    %559 = vmatprep.subr.bf16.mxu0 %v360
    %560 = vmatpush1.bf16.msra.mxu0 %v359
    %561 = vmatprep.subr.bf16.mxu0 %v368
    %562 = vmatpush1.bf16.msra.mxu0 %v367
    %563 = vmatprep.subr.bf16.mxu0 %v376
    %564 = vmatpush1.bf16.msra.mxu0 %v375
    %565 = vmatprep.subr.bf16.mxu0 %v384
    %566 = vmatpush1.bf16.msra.mxu0 %v383
    %567 = vmatprep.subr.bf16.mxu0 %v392
    %568 = vmatpush1.bf16.msra.mxu0 %v391
    %569 = vmatprep.subr.bf16.mxu0 %v400
    %570 = vmatpush1.bf16.msra.mxu0 %v399
    %571 = vmatprep.subr.bf16.mxu0 %v408
    %572 = vmatpush1.bf16.msra.mxu0 %v407
    %573 = vmatprep.subr.bf16.mxu0 0
    %574 = vmatpush1.bf16.msra.mxu0 0
    %575 = vmatprep.subr.bf16.mxu0 0
    %576 = vmatpush1.bf16.msra.mxu0 0
    %577 = vmatprep.subr.bf16.mxu0 0
    %578 = vmatpush1.bf16.msra.mxu0 0
    %579 = vmatprep.subr.bf16.mxu0 0
    %580 = vmatpush1.bf16.msra.mxu0 0
    %581 = vmatprep.subr.bf16.mxu0 0
    %582 = vmatpush1.bf16.msra.mxu0 0
    %583 = vmatprep.subr.bf16.mxu0 0
    %584 = vmatpush1.bf16.msra.mxu0 0
    %585 = vmatprep.subr.bf16.mxu0 0
    %586 = vmatpush1.bf16.msra.mxu0 0
    %587 = vmatprep.subr.bf16.mxu0 0
    %588 = vmatpush1.bf16.msra.mxu0 0
    %589 = vmatprep.mubr.bf16.mxu0 0
    %590 = vmatmul.mubr.bf16.gmra.mrb[0].mxu0 %v48
    %v591 = vpop.f32.mrb[0].mxu0
    %v592 = vadd.f32 %v134, %v591
    %v593 = vpop.f32.mrb[0].mxu0
    %v594 = vadd.f32 %v138, %v593
    %v595 = vpop.f32.mrb[0].mxu0
    %v596 = vpop.f32.mrb[0].mxu0
    %597 = vdwg.mxu0
    %598 = vmatprep.subr.bf16.mxu0 %v354
    %599 = vmatpush1.bf16.msra.mxu0 %v353
    %600 = vmatprep.subr.bf16.mxu0 %v362
    %601 = vmatpush1.bf16.msra.mxu0 %v361
    %602 = vmatprep.subr.bf16.mxu0 %v370
    %603 = vmatpush1.bf16.msra.mxu0 %v369
    %604 = vmatprep.subr.bf16.mxu0 %v378
    %605 = vmatpush1.bf16.msra.mxu0 %v377
    %606 = vmatprep.subr.bf16.mxu0 %v386
    %607 = vmatpush1.bf16.msra.mxu0 %v385
    %608 = vmatprep.subr.bf16.mxu0 %v394
    %609 = vmatpush1.bf16.msra.mxu0 %v393
    %610 = vmatprep.subr.bf16.mxu0 %v402
    %611 = vmatpush1.bf16.msra.mxu0 %v401
    %612 = vmatprep.subr.bf16.mxu0 %v410
    %613 = vmatpush1.bf16.msra.mxu0 %v409
    %614 = vmatprep.subr.bf16.mxu0 0
    %615 = vmatpush1.bf16.msra.mxu0 0
    %616 = vmatprep.subr.bf16.mxu0 0
    %617 = vmatpush1.bf16.msra.mxu0 0
    %618 = vmatprep.subr.bf16.mxu0 0
    %619 = vmatpush1.bf16.msra.mxu0 0
    %620 = vmatprep.subr.bf16.mxu0 0
    %621 = vmatpush1.bf16.msra.mxu0 0
    %622 = vmatprep.subr.bf16.mxu0 0
    %623 = vmatpush1.bf16.msra.mxu0 0
    %624 = vmatprep.subr.bf16.mxu0 0
    %625 = vmatpush1.bf16.msra.mxu0 0
    %626 = vmatprep.subr.bf16.mxu0 0
    %627 = vmatpush1.bf16.msra.mxu0 0
    %628 = vmatprep.subr.bf16.mxu0 0
    %629 = vmatpush1.bf16.msra.mxu0 0
    %630 = vmatprep.mubr.bf16.mxu0 0
    %631 = vmatmul.mubr.bf16.gmra.mrb[0].mxu0 %v48
    %v632 = vpop.f32.mrb[0].mxu0
    %v633 = vadd.f32 %v142, %v632
    %v634 = vpop.f32.mrb[0].mxu0
    %v635 = vadd.f32 %v146, %v634
    %v636 = vpop.f32.mrb[0].mxu0
    %v637 = vpop.f32.mrb[0].mxu0
    %638 = vdwg.mxu0
    %v639 = vpack.c.bf16 %v510, %v510
    %v640 = vpack.c.bf16 %v512, %v512
    %v641 = vpack.c.bf16 %v551, %v551
    %v642 = vpack.c.bf16 %v553, %v553
    %v643 = vpack.c.bf16 %v592, %v592
    %v644 = vpack.c.bf16 %v594, %v594
    %v645 = vpack.c.bf16 %v633, %v633
    %v646 = vpack.c.bf16 %v635, %v635
    %v647 = vld [vmem:[%s3] sm:$0xff]
    %v648 = vld [vmem:[%s3 + $0x8] sm:$0xff]
    %v649 = vld [vmem:[%s3 + $0x10] sm:$0xff]
    %v650 = vld [vmem:[%s3 + $0x18] sm:$0xff]
    %v651 = vld [vmem:[%s3 + $0x20] sm:$0xff]
    %v652 = vld [vmem:[%s3 + $0x28] sm:$0xff]
    %v653 = vld [vmem:[%s3 + $0x30] sm:$0xff]
    %v654 = vld [vmem:[%s3 + $0x38] sm:$0xff]
    %v655 = vld [vmem:[%s3 + $0x40] sm:$0xff]
    %v656 = vld [vmem:[%s3 + $0x48] sm:$0xff]
    %v657 = vld [vmem:[%s3 + $0x50] sm:$0xff]
    %v658 = vld [vmem:[%s3 + $0x58] sm:$0xff]
    %v659 = vld [vmem:[%s3 + $0x60] sm:$0xff]
    %v660 = vld [vmem:[%s3 + $0x68] sm:$0xff]
    %v661 = vld [vmem:[%s3 + $0x70] sm:$0xff]
    %v662 = vld [vmem:[%s3 + $0x78] sm:$0xff]
    %v663 = vld [vmem:[%s3 + $0x80] sm:$0xff]
    %v664 = vld [vmem:[%s3 + $0x88] sm:$0xff]
    %v665 = vld [vmem:[%s3 + $0x90] sm:$0xff]
    %v666 = vld [vmem:[%s3 + $0x98] sm:$0xff]
    %v667 = vld [vmem:[%s3 + $0xa0] sm:$0xff]
    %v668 = vld [vmem:[%s3 + $0xa8] sm:$0xff]
    %v669 = vld [vmem:[%s3 + $0xb0] sm:$0xff]
    %v670 = vld [vmem:[%s3 + $0xb8] sm:$0xff]
    %v671 = vld [vmem:[%s3 + $0xc0] sm:$0xff]
    %v672 = vld [vmem:[%s3 + $0xc8] sm:$0xff]
    %v673 = vld [vmem:[%s3 + $0xd0] sm:$0xff]
    %v674 = vld [vmem:[%s3 + $0xd8] sm:$0xff]
    %v675 = vld [vmem:[%s3 + $0xe0] sm:$0xff]
    %v676 = vld [vmem:[%s3 + $0xe8] sm:$0xff]
    %v677 = vld [vmem:[%s3 + $0xf0] sm:$0xff]
    %v678 = vld [vmem:[%s3 + $0xf8] sm:$0xff]
    %v679 = vld [vmem:[%s3 + $0x100] sm:$0xff]
    %v680 = vld [vmem:[%s3 + $0x108] sm:$0xff]
    %v681 = vld [vmem:[%s3 + $0x110] sm:$0xff]
    %v682 = vld [vmem:[%s3 + $0x118] sm:$0xff]
    %v683 = vld [vmem:[%s3 + $0x120] sm:$0xff]
    %v684 = vld [vmem:[%s3 + $0x128] sm:$0xff]
    %v685 = vld [vmem:[%s3 + $0x130] sm:$0xff]
    %v686 = vld [vmem:[%s3 + $0x138] sm:$0xff]
    %v687 = vld [vmem:[%s3 + $0x140] sm:$0xff]
    %v688 = vld [vmem:[%s3 + $0x148] sm:$0xff]
    %v689 = vld [vmem:[%s3 + $0x150] sm:$0xff]
    %v690 = vld [vmem:[%s3 + $0x158] sm:$0xff]
    %v691 = vld [vmem:[%s3 + $0x160] sm:$0xff]
    %v692 = vld [vmem:[%s3 + $0x168] sm:$0xff]
    %v693 = vld [vmem:[%s3 + $0x170] sm:$0xff]
    %v694 = vld [vmem:[%s3 + $0x178] sm:$0xff]
    %v695 = vld [vmem:[%s3 + $0x180] sm:$0xff]
    %v696 = vld [vmem:[%s3 + $0x188] sm:$0xff]
    %v697 = vld [vmem:[%s3 + $0x190] sm:$0xff]
    %v698 = vld [vmem:[%s3 + $0x198] sm:$0xff]
    %v699 = vld [vmem:[%s3 + $0x1a0] sm:$0xff]
    %v700 = vld [vmem:[%s3 + $0x1a8] sm:$0xff]
    %v701 = vld [vmem:[%s3 + $0x1b0] sm:$0xff]
    %v702 = vld [vmem:[%s3 + $0x1b8] sm:$0xff]
    %v703 = vld [vmem:[%s3 + $0x1c0] sm:$0xff]
    %v704 = vld [vmem:[%s3 + $0x1c8] sm:$0xff]
    %v705 = vld [vmem:[%s3 + $0x1d0] sm:$0xff]
    %v706 = vld [vmem:[%s3 + $0x1d8] sm:$0xff]
    %v707 = vld [vmem:[%s3 + $0x1e0] sm:$0xff]
    %v708 = vld [vmem:[%s3 + $0x1e8] sm:$0xff]
    %v709 = vld [vmem:[%s3 + $0x1f0] sm:$0xff]
    %v710 = vld [vmem:[%s3 + $0x1f8] sm:$0xff]
    %v711 = vld [vmem:[%s3 + $0x200] sm:$0xff]
    %v712 = vld [vmem:[%s3 + $0x208] sm:$0xff]
    %v713 = vld [vmem:[%s3 + $0x210] sm:$0xff]
    %v714 = vld [vmem:[%s3 + $0x218] sm:$0xff]
    %v715 = vld [vmem:[%s3 + $0x220] sm:$0xff]
    %v716 = vld [vmem:[%s3 + $0x228] sm:$0xff]
    %v717 = vld [vmem:[%s3 + $0x230] sm:$0xff]
    %v718 = vld [vmem:[%s3 + $0x238] sm:$0xff]
    %v719 = vld [vmem:[%s3 + $0x240] sm:$0xff]
    %v720 = vld [vmem:[%s3 + $0x248] sm:$0xff]
    %v721 = vld [vmem:[%s3 + $0x250] sm:$0xff]
    %v722 = vld [vmem:[%s3 + $0x258] sm:$0xff]
    %v723 = vld [vmem:[%s3 + $0x260] sm:$0xff]
    %v724 = vld [vmem:[%s3 + $0x268] sm:$0xff]
    %v725 = vld [vmem:[%s3 + $0x270] sm:$0xff]
    %v726 = vld [vmem:[%s3 + $0x278] sm:$0xff]
    %v727 = vld [vmem:[%s3 + $0x280] sm:$0xff]
    %v728 = vld [vmem:[%s3 + $0x288] sm:$0xff]
    %v729 = vld [vmem:[%s3 + $0x290] sm:$0xff]
    %v730 = vld [vmem:[%s3 + $0x298] sm:$0xff]
    %v731 = vld [vmem:[%s3 + $0x2a0] sm:$0xff]
    %v732 = vld [vmem:[%s3 + $0x2a8] sm:$0xff]
    %v733 = vld [vmem:[%s3 + $0x2b0] sm:$0xff]
    %v734 = vld [vmem:[%s3 + $0x2b8] sm:$0xff]
    %v735 = vld [vmem:[%s3 + $0x2c0] sm:$0xff]
    %v736 = vld [vmem:[%s3 + $0x2c8] sm:$0xff]
    %v737 = vld [vmem:[%s3 + $0x2d0] sm:$0xff]
    %v738 = vld [vmem:[%s3 + $0x2d8] sm:$0xff]
    %v739 = vld [vmem:[%s3 + $0x2e0] sm:$0xff]
    %v740 = vld [vmem:[%s3 + $0x2e8] sm:$0xff]
    %v741 = vld [vmem:[%s3 + $0x2f0] sm:$0xff]
    %v742 = vld [vmem:[%s3 + $0x2f8] sm:$0xff]
    %v743 = vld [vmem:[%s3 + $0x300] sm:$0xff]
    %v744 = vld [vmem:[%s3 + $0x308] sm:$0xff]
    %v745 = vld [vmem:[%s3 + $0x310] sm:$0xff]
    %v746 = vld [vmem:[%s3 + $0x318] sm:$0xff]
    %v747 = vld [vmem:[%s3 + $0x320] sm:$0xff]
    %v748 = vld [vmem:[%s3 + $0x328] sm:$0xff]
    %v749 = vld [vmem:[%s3 + $0x330] sm:$0xff]
    %v750 = vld [vmem:[%s3 + $0x338] sm:$0xff]
    %v751 = vld [vmem:[%s3 + $0x340] sm:$0xff]
    %v752 = vld [vmem:[%s3 + $0x348] sm:$0xff]
    %v753 = vld [vmem:[%s3 + $0x350] sm:$0xff]
    %v754 = vld [vmem:[%s3 + $0x358] sm:$0xff]
    %v755 = vld [vmem:[%s3 + $0x360] sm:$0xff]
    %v756 = vld [vmem:[%s3 + $0x368] sm:$0xff]
    %v757 = vld [vmem:[%s3 + $0x370] sm:$0xff]
    %v758 = vld [vmem:[%s3 + $0x378] sm:$0xff]
    %v759 = vld [vmem:[%s3 + $0x380] sm:$0xff]
    %v760 = vld [vmem:[%s3 + $0x388] sm:$0xff]
    %v761 = vld [vmem:[%s3 + $0x390] sm:$0xff]
    %v762 = vld [vmem:[%s3 + $0x398] sm:$0xff]
    %v763 = vld [vmem:[%s3 + $0x3a0] sm:$0xff]
    %v764 = vld [vmem:[%s3 + $0x3a8] sm:$0xff]
    %v765 = vld [vmem:[%s3 + $0x3b0] sm:$0xff]
    %v766 = vld [vmem:[%s3 + $0x3b8] sm:$0xff]
    %v767 = vld [vmem:[%s3 + $0x3c0] sm:$0xff]
    %v768 = vld [vmem:[%s3 + $0x3c8] sm:$0xff]
    %v769 = vld [vmem:[%s3 + $0x3d0] sm:$0xff]
    %v770 = vld [vmem:[%s3 + $0x3d8] sm:$0xff]
    %v771 = vld [vmem:[%s3 + $0x3e0] sm:$0xff]
    %v772 = vld [vmem:[%s3 + $0x3e8] sm:$0xff]
    %v773 = vld [vmem:[%s3 + $0x3f0] sm:$0xff]
    %v774 = vld [vmem:[%s3 + $0x3f8] sm:$0xff]
    %v775 = vld [vmem:[%s3 + $0x400] sm:$0xff]
    %v776 = vld [vmem:[%s3 + $0x408] sm:$0xff]
    %v777 = vld [vmem:[%s3 + $0x410] sm:$0xff]
    %v778 = vld [vmem:[%s3 + $0x418] sm:$0xff]
    %v779 = vld [vmem:[%s3 + $0x420] sm:$0xff]
    %v780 = vld [vmem:[%s3 + $0x428] sm:$0xff]
    %v781 = vld [vmem:[%s3 + $0x430] sm:$0xff]
    %v782 = vld [vmem:[%s3 + $0x438] sm:$0xff]
    %v783 = vld [vmem:[%s3 + $0x440] sm:$0xff]
    %v784 = vld [vmem:[%s3 + $0x448] sm:$0xff]
    %v785 = vld [vmem:[%s3 + $0x450] sm:$0xff]
    %v786 = vld [vmem:[%s3 + $0x458] sm:$0xff]
    %v787 = vld [vmem:[%s3 + $0x460] sm:$0xff]
    %v788 = vld [vmem:[%s3 + $0x468] sm:$0xff]
    %v789 = vld [vmem:[%s3 + $0x470] sm:$0xff]
    %v790 = vld [vmem:[%s3 + $0x478] sm:$0xff]
    %v791 = vld [vmem:[%s3 + $0x480] sm:$0xff]
    %v792 = vld [vmem:[%s3 + $0x488] sm:$0xff]
    %v793 = vld [vmem:[%s3 + $0x490] sm:$0xff]
    %v794 = vld [vmem:[%s3 + $0x498] sm:$0xff]
    %v795 = vld [vmem:[%s3 + $0x4a0] sm:$0xff]
    %v796 = vld [vmem:[%s3 + $0x4a8] sm:$0xff]
    %v797 = vld [vmem:[%s3 + $0x4b0] sm:$0xff]
    %v798 = vld [vmem:[%s3 + $0x4b8] sm:$0xff]
    %v799 = vld [vmem:[%s3 + $0x4c0] sm:$0xff]
    %v800 = vld [vmem:[%s3 + $0x4c8] sm:$0xff]
    %v801 = vld [vmem:[%s3 + $0x4d0] sm:$0xff]
    %v802 = vld [vmem:[%s3 + $0x4d8] sm:$0xff]
    %v803 = vld [vmem:[%s3 + $0x4e0] sm:$0xff]
    %v804 = vld [vmem:[%s3 + $0x4e8] sm:$0xff]
    %v805 = vld [vmem:[%s3 + $0x4f0] sm:$0xff]
    %v806 = vld [vmem:[%s3 + $0x4f8] sm:$0xff]
    %v807 = vld [vmem:[%s3 + $0x500] sm:$0xff]
    %v808 = vld [vmem:[%s3 + $0x508] sm:$0xff]
    %v809 = vld [vmem:[%s3 + $0x510] sm:$0xff]
    %v810 = vld [vmem:[%s3 + $0x518] sm:$0xff]
    %v811 = vld [vmem:[%s3 + $0x520] sm:$0xff]
    %v812 = vld [vmem:[%s3 + $0x528] sm:$0xff]
    %v813 = vld [vmem:[%s3 + $0x530] sm:$0xff]
    %v814 = vld [vmem:[%s3 + $0x538] sm:$0xff]
    %v815 = vld [vmem:[%s3 + $0x540] sm:$0xff]
    %v816 = vld [vmem:[%s3 + $0x548] sm:$0xff]
    %v817 = vld [vmem:[%s3 + $0x550] sm:$0xff]
    %v818 = vld [vmem:[%s3 + $0x558] sm:$0xff]
    %v819 = vld [vmem:[%s3 + $0x560] sm:$0xff]
    %v820 = vld [vmem:[%s3 + $0x568] sm:$0xff]
    %v821 = vld [vmem:[%s3 + $0x570] sm:$0xff]
    %v822 = vld [vmem:[%s3 + $0x578] sm:$0xff]
    %v823 = vld [vmem:[%s3 + $0x580] sm:$0xff]
    %v824 = vld [vmem:[%s3 + $0x588] sm:$0xff]
    %v825 = vld [vmem:[%s3 + $0x590] sm:$0xff]
    %v826 = vld [vmem:[%s3 + $0x598] sm:$0xff]
    %v827 = vld [vmem:[%s3 + $0x5a0] sm:$0xff]
    %v828 = vld [vmem:[%s3 + $0x5a8] sm:$0xff]
    %v829 = vld [vmem:[%s3 + $0x5b0] sm:$0xff]
    %v830 = vld [vmem:[%s3 + $0x5b8] sm:$0xff]
    %v831 = vld [vmem:[%s3 + $0x5c0] sm:$0xff]
    %v832 = vld [vmem:[%s3 + $0x5c8] sm:$0xff]
    %v833 = vld [vmem:[%s3 + $0x5d0] sm:$0xff]
    %v834 = vld [vmem:[%s3 + $0x5d8] sm:$0xff]
    %v835 = vld [vmem:[%s3 + $0x5e0] sm:$0xff]
    %v836 = vld [vmem:[%s3 + $0x5e8] sm:$0xff]
    %v837 = vld [vmem:[%s3 + $0x5f0] sm:$0xff]
    %v838 = vld [vmem:[%s3 + $0x5f8] sm:$0xff]
    %v839 = vld [vmem:[%s3 + $0x600] sm:$0xff]
    %v840 = vld [vmem:[%s3 + $0x608] sm:$0xff]
    %v841 = vld [vmem:[%s3 + $0x610] sm:$0xff]
    %v842 = vld [vmem:[%s3 + $0x618] sm:$0xff]
    %v843 = vld [vmem:[%s3 + $0x620] sm:$0xff]
    %v844 = vld [vmem:[%s3 + $0x628] sm:$0xff]
    %v845 = vld [vmem:[%s3 + $0x630] sm:$0xff]
    %v846 = vld [vmem:[%s3 + $0x638] sm:$0xff]
    %v847 = vld [vmem:[%s3 + $0x640] sm:$0xff]
    %v848 = vld [vmem:[%s3 + $0x648] sm:$0xff]
    %v849 = vld [vmem:[%s3 + $0x650] sm:$0xff]
    %v850 = vld [vmem:[%s3 + $0x658] sm:$0xff]
    %v851 = vld [vmem:[%s3 + $0x660] sm:$0xff]
    %v852 = vld [vmem:[%s3 + $0x668] sm:$0xff]
    %v853 = vld [vmem:[%s3 + $0x670] sm:$0xff]
    %v854 = vld [vmem:[%s3 + $0x678] sm:$0xff]
    %v855 = vld [vmem:[%s3 + $0x680] sm:$0xff]
    %v856 = vld [vmem:[%s3 + $0x688] sm:$0xff]
    %v857 = vld [vmem:[%s3 + $0x690] sm:$0xff]
    %v858 = vld [vmem:[%s3 + $0x698] sm:$0xff]
    %v859 = vld [vmem:[%s3 + $0x6a0] sm:$0xff]
    %v860 = vld [vmem:[%s3 + $0x6a8] sm:$0xff]
    %v861 = vld [vmem:[%s3 + $0x6b0] sm:$0xff]
    %v862 = vld [vmem:[%s3 + $0x6b8] sm:$0xff]
    %v863 = vld [vmem:[%s3 + $0x6c0] sm:$0xff]
    %v864 = vld [vmem:[%s3 + $0x6c8] sm:$0xff]
    %v865 = vld [vmem:[%s3 + $0x6d0] sm:$0xff]
    %v866 = vld [vmem:[%s3 + $0x6d8] sm:$0xff]
    %v867 = vld [vmem:[%s3 + $0x6e0] sm:$0xff]
    %v868 = vld [vmem:[%s3 + $0x6e8] sm:$0xff]
    %v869 = vld [vmem:[%s3 + $0x6f0] sm:$0xff]
    %v870 = vld [vmem:[%s3 + $0x6f8] sm:$0xff]
    %v871 = vld [vmem:[%s3 + $0x700] sm:$0xff]
    %v872 = vld [vmem:[%s3 + $0x708] sm:$0xff]
    %v873 = vld [vmem:[%s3 + $0x710] sm:$0xff]
    %v874 = vld [vmem:[%s3 + $0x718] sm:$0xff]
    %v875 = vld [vmem:[%s3 + $0x720] sm:$0xff]
    %v876 = vld [vmem:[%s3 + $0x728] sm:$0xff]
    %v877 = vld [vmem:[%s3 + $0x730] sm:$0xff]
    %v878 = vld [vmem:[%s3 + $0x738] sm:$0xff]
    %v879 = vld [vmem:[%s3 + $0x740] sm:$0xff]
    %v880 = vld [vmem:[%s3 + $0x748] sm:$0xff]
    %v881 = vld [vmem:[%s3 + $0x750] sm:$0xff]
    %v882 = vld [vmem:[%s3 + $0x758] sm:$0xff]
    %v883 = vld [vmem:[%s3 + $0x760] sm:$0xff]
    %v884 = vld [vmem:[%s3 + $0x768] sm:$0xff]
    %v885 = vld [vmem:[%s3 + $0x770] sm:$0xff]
    %v886 = vld [vmem:[%s3 + $0x778] sm:$0xff]
    %v887 = vld [vmem:[%s3 + $0x780] sm:$0xff]
    %v888 = vld [vmem:[%s3 + $0x788] sm:$0xff]
    %v889 = vld [vmem:[%s3 + $0x790] sm:$0xff]
    %v890 = vld [vmem:[%s3 + $0x798] sm:$0xff]
    %v891 = vld [vmem:[%s3 + $0x7a0] sm:$0xff]
    %v892 = vld [vmem:[%s3 + $0x7a8] sm:$0xff]
    %v893 = vld [vmem:[%s3 + $0x7b0] sm:$0xff]
    %v894 = vld [vmem:[%s3 + $0x7b8] sm:$0xff]
    %v895 = vld [vmem:[%s3 + $0x7c0] sm:$0xff]
    %v896 = vld [vmem:[%s3 + $0x7c8] sm:$0xff]
    %v897 = vld [vmem:[%s3 + $0x7d0] sm:$0xff]
    %v898 = vld [vmem:[%s3 + $0x7d8] sm:$0xff]
    %v899 = vld [vmem:[%s3 + $0x7e0] sm:$0xff]
    %v900 = vld [vmem:[%s3 + $0x7e8] sm:$0xff]
    %v901 = vld [vmem:[%s3 + $0x7f0] sm:$0xff]
    %v902 = vld [vmem:[%s3 + $0x7f8] sm:$0xff]
    %v903 = vld [vmem:[%s3 + $0x800] sm:$0xff]
    %v904 = vld [vmem:[%s3 + $0x808] sm:$0xff]
    %v905 = vld [vmem:[%s3 + $0x810] sm:$0xff]
    %v906 = vld [vmem:[%s3 + $0x818] sm:$0xff]
    %v907 = vld [vmem:[%s3 + $0x820] sm:$0xff]
    %v908 = vld [vmem:[%s3 + $0x828] sm:$0xff]
    %v909 = vld [vmem:[%s3 + $0x830] sm:$0xff]
    %v910 = vld [vmem:[%s3 + $0x838] sm:$0xff]
    %v911 = vld [vmem:[%s3 + $0x840] sm:$0xff]
    %v912 = vld [vmem:[%s3 + $0x848] sm:$0xff]
    %v913 = vld [vmem:[%s3 + $0x850] sm:$0xff]
    %v914 = vld [vmem:[%s3 + $0x858] sm:$0xff]
    %v915 = vld [vmem:[%s3 + $0x860] sm:$0xff]
    %v916 = vld [vmem:[%s3 + $0x868] sm:$0xff]
    %v917 = vld [vmem:[%s3 + $0x870] sm:$0xff]
    %v918 = vld [vmem:[%s3 + $0x878] sm:$0xff]
    %v919 = vld [vmem:[%s3 + $0x880] sm:$0xff]
    %v920 = vld [vmem:[%s3 + $0x888] sm:$0xff]
    %v921 = vld [vmem:[%s3 + $0x890] sm:$0xff]
    %v922 = vld [vmem:[%s3 + $0x898] sm:$0xff]
    %v923 = vld [vmem:[%s3 + $0x8a0] sm:$0xff]
    %v924 = vld [vmem:[%s3 + $0x8a8] sm:$0xff]
    %v925 = vld [vmem:[%s3 + $0x8b0] sm:$0xff]
    %v926 = vld [vmem:[%s3 + $0x8b8] sm:$0xff]
    %v927 = vld [vmem:[%s3 + $0x8c0] sm:$0xff]
    %v928 = vld [vmem:[%s3 + $0x8c8] sm:$0xff]
    %v929 = vld [vmem:[%s3 + $0x8d0] sm:$0xff]
    %v930 = vld [vmem:[%s3 + $0x8d8] sm:$0xff]
    %v931 = vld [vmem:[%s3 + $0x8e0] sm:$0xff]
    %v932 = vld [vmem:[%s3 + $0x8e8] sm:$0xff]
    %v933 = vld [vmem:[%s3 + $0x8f0] sm:$0xff]
    %v934 = vld [vmem:[%s3 + $0x8f8] sm:$0xff]
    %v935 = vld [vmem:[%s3 + $0x900] sm:$0xff]
    %v936 = vld [vmem:[%s3 + $0x908] sm:$0xff]
    %v937 = vld [vmem:[%s3 + $0x910] sm:$0xff]
    %v938 = vld [vmem:[%s3 + $0x918] sm:$0xff]
    %v939 = vld [vmem:[%s3 + $0x920] sm:$0xff]
    %v940 = vld [vmem:[%s3 + $0x928] sm:$0xff]
    %v941 = vld [vmem:[%s3 + $0x930] sm:$0xff]
    %v942 = vld [vmem:[%s3 + $0x938] sm:$0xff]
    %v943 = vld [vmem:[%s3 + $0x940] sm:$0xff]
    %v944 = vld [vmem:[%s3 + $0x948] sm:$0xff]
    %v945 = vld [vmem:[%s3 + $0x950] sm:$0xff]
    %v946 = vld [vmem:[%s3 + $0x958] sm:$0xff]
    %v947 = vld [vmem:[%s3 + $0x960] sm:$0xff]
    %v948 = vld [vmem:[%s3 + $0x968] sm:$0xff]
    %v949 = vld [vmem:[%s3 + $0x970] sm:$0xff]
    %v950 = vld [vmem:[%s3 + $0x978] sm:$0xff]
    %v951 = vld [vmem:[%s3 + $0x980] sm:$0xff]
    %v952 = vld [vmem:[%s3 + $0x988] sm:$0xff]
    %v953 = vld [vmem:[%s3 + $0x990] sm:$0xff]
    %v954 = vld [vmem:[%s3 + $0x998] sm:$0xff]
    %v955 = vld [vmem:[%s3 + $0x9a0] sm:$0xff]
    %v956 = vld [vmem:[%s3 + $0x9a8] sm:$0xff]
    %v957 = vld [vmem:[%s3 + $0x9b0] sm:$0xff]
    %v958 = vld [vmem:[%s3 + $0x9b8] sm:$0xff]
    %v959 = vld [vmem:[%s3 + $0x9c0] sm:$0xff]
    %v960 = vld [vmem:[%s3 + $0x9c8] sm:$0xff]
    %v961 = vld [vmem:[%s3 + $0x9d0] sm:$0xff]
    %v962 = vld [vmem:[%s3 + $0x9d8] sm:$0xff]
    %v963 = vld [vmem:[%s3 + $0x9e0] sm:$0xff]
    %v964 = vld [vmem:[%s3 + $0x9e8] sm:$0xff]
    %v965 = vld [vmem:[%s3 + $0x9f0] sm:$0xff]
    %v966 = vld [vmem:[%s3 + $0x9f8] sm:$0xff]
    %v967 = vld [vmem:[%s3 + $0xa00] sm:$0xff]
    %v968 = vld [vmem:[%s3 + $0xa08] sm:$0xff]
    %v969 = vld [vmem:[%s3 + $0xa10] sm:$0xff]
    %v970 = vld [vmem:[%s3 + $0xa18] sm:$0xff]
    %v971 = vld [vmem:[%s3 + $0xa20] sm:$0xff]
    %v972 = vld [vmem:[%s3 + $0xa28] sm:$0xff]
    %v973 = vld [vmem:[%s3 + $0xa30] sm:$0xff]
    %v974 = vld [vmem:[%s3 + $0xa38] sm:$0xff]
    %v975 = vld [vmem:[%s3 + $0xa40] sm:$0xff]
    %v976 = vld [vmem:[%s3 + $0xa48] sm:$0xff]
    %v977 = vld [vmem:[%s3 + $0xa50] sm:$0xff]
    %v978 = vld [vmem:[%s3 + $0xa58] sm:$0xff]
    %v979 = vld [vmem:[%s3 + $0xa60] sm:$0xff]
    %v980 = vld [vmem:[%s3 + $0xa68] sm:$0xff]
    %v981 = vld [vmem:[%s3 + $0xa70] sm:$0xff]
    %v982 = vld [vmem:[%s3 + $0xa78] sm:$0xff]
    %v983 = vld [vmem:[%s3 + $0xa80] sm:$0xff]
    %v984 = vld [vmem:[%s3 + $0xa88] sm:$0xff]
    %v985 = vld [vmem:[%s3 + $0xa90] sm:$0xff]
    %v986 = vld [vmem:[%s3 + $0xa98] sm:$0xff]
    %v987 = vld [vmem:[%s3 + $0xaa0] sm:$0xff]
    %v988 = vld [vmem:[%s3 + $0xaa8] sm:$0xff]
    %v989 = vld [vmem:[%s3 + $0xab0] sm:$0xff]
    %v990 = vld [vmem:[%s3 + $0xab8] sm:$0xff]
    %v991 = vld [vmem:[%s3 + $0xac0] sm:$0xff]
    %v992 = vld [vmem:[%s3 + $0xac8] sm:$0xff]
    %v993 = vld [vmem:[%s3 + $0xad0] sm:$0xff]
    %v994 = vld [vmem:[%s3 + $0xad8] sm:$0xff]
    %v995 = vld [vmem:[%s3 + $0xae0] sm:$0xff]
    %v996 = vld [vmem:[%s3 + $0xae8] sm:$0xff]
    %v997 = vld [vmem:[%s3 + $0xaf0] sm:$0xff]
    %v998 = vld [vmem:[%s3 + $0xaf8] sm:$0xff]
    %v999 = vld [vmem:[%s3 + $0xb00] sm:$0xff]
    %v1000 = vld [vmem:[%s3 + $0xb08] sm:$0xff]
    %v1001 = vld [vmem:[%s3 + $0xb10] sm:$0xff]
    %v1002 = vld [vmem:[%s3 + $0xb18] sm:$0xff]
    %v1003 = vld [vmem:[%s3 + $0xb20] sm:$0xff]
    %v1004 = vld [vmem:[%s3 + $0xb28] sm:$0xff]
    %v1005 = vld [vmem:[%s3 + $0xb30] sm:$0xff]
    %v1006 = vld [vmem:[%s3 + $0xb38] sm:$0xff]
    %v1007 = vld [vmem:[%s3 + $0xb40] sm:$0xff]
    %v1008 = vld [vmem:[%s3 + $0xb48] sm:$0xff]
    %v1009 = vld [vmem:[%s3 + $0xb50] sm:$0xff]
    %v1010 = vld [vmem:[%s3 + $0xb58] sm:$0xff]
    %v1011 = vld [vmem:[%s3 + $0xb60] sm:$0xff]
    %v1012 = vld [vmem:[%s3 + $0xb68] sm:$0xff]
    %v1013 = vld [vmem:[%s3 + $0xb70] sm:$0xff]
    %v1014 = vld [vmem:[%s3 + $0xb78] sm:$0xff]
    %v1015 = vld [vmem:[%s3 + $0xb80] sm:$0xff]
    %v1016 = vld [vmem:[%s3 + $0xb88] sm:$0xff]
    %v1017 = vld [vmem:[%s3 + $0xb90] sm:$0xff]
    %v1018 = vld [vmem:[%s3 + $0xb98] sm:$0xff]
    %v1019 = vld [vmem:[%s3 + $0xba0] sm:$0xff]
    %v1020 = vld [vmem:[%s3 + $0xba8] sm:$0xff]
    %v1021 = vld [vmem:[%s3 + $0xbb0] sm:$0xff]
    %v1022 = vld [vmem:[%s3 + $0xbb8] sm:$0xff]
    %v1023 = vld [vmem:[%s3 + $0xbc0] sm:$0xff]
    %v1024 = vld [vmem:[%s3 + $0xbc8] sm:$0xff]
    %v1025 = vld [vmem:[%s3 + $0xbd0] sm:$0xff]
    %v1026 = vld [vmem:[%s3 + $0xbd8] sm:$0xff]
    %v1027 = vld [vmem:[%s3 + $0xbe0] sm:$0xff]
    %v1028 = vld [vmem:[%s3 + $0xbe8] sm:$0xff]
    %v1029 = vld [vmem:[%s3 + $0xbf0] sm:$0xff]
    %v1030 = vld [vmem:[%s3 + $0xbf8] sm:$0xff]
    %v1031 = vld [vmem:[%s3 + $0xc00] sm:$0xff]
    %v1032 = vld [vmem:[%s3 + $0xc08] sm:$0xff]
    %v1033 = vld [vmem:[%s3 + $0xc10] sm:$0xff]
    %v1034 = vld [vmem:[%s3 + $0xc18] sm:$0xff]
    %v1035 = vld [vmem:[%s3 + $0xc20] sm:$0xff]
    %v1036 = vld [vmem:[%s3 + $0xc28] sm:$0xff]
    %v1037 = vld [vmem:[%s3 + $0xc30] sm:$0xff]
    %v1038 = vld [vmem:[%s3 + $0xc38] sm:$0xff]
    %v1039 = vld [vmem:[%s3 + $0xc40] sm:$0xff]
    %v1040 = vld [vmem:[%s3 + $0xc48] sm:$0xff]
    %v1041 = vld [vmem:[%s3 + $0xc50] sm:$0xff]
    %v1042 = vld [vmem:[%s3 + $0xc58] sm:$0xff]
    %v1043 = vld [vmem:[%s3 + $0xc60] sm:$0xff]
    %v1044 = vld [vmem:[%s3 + $0xc68] sm:$0xff]
    %v1045 = vld [vmem:[%s3 + $0xc70] sm:$0xff]
    %v1046 = vld [vmem:[%s3 + $0xc78] sm:$0xff]
    %v1047 = vld [vmem:[%s3 + $0xc80] sm:$0xff]
    %v1048 = vld [vmem:[%s3 + $0xc88] sm:$0xff]
    %v1049 = vld [vmem:[%s3 + $0xc90] sm:$0xff]
    %v1050 = vld [vmem:[%s3 + $0xc98] sm:$0xff]
    %v1051 = vld [vmem:[%s3 + $0xca0] sm:$0xff]
    %v1052 = vld [vmem:[%s3 + $0xca8] sm:$0xff]
    %v1053 = vld [vmem:[%s3 + $0xcb0] sm:$0xff]
    %v1054 = vld [vmem:[%s3 + $0xcb8] sm:$0xff]
    %v1055 = vld [vmem:[%s3 + $0xcc0] sm:$0xff]
    %v1056 = vld [vmem:[%s3 + $0xcc8] sm:$0xff]
    %v1057 = vld [vmem:[%s3 + $0xcd0] sm:$0xff]
    %v1058 = vld [vmem:[%s3 + $0xcd8] sm:$0xff]
    %v1059 = vld [vmem:[%s3 + $0xce0] sm:$0xff]
    %v1060 = vld [vmem:[%s3 + $0xce8] sm:$0xff]
    %v1061 = vld [vmem:[%s3 + $0xcf0] sm:$0xff]
    %v1062 = vld [vmem:[%s3 + $0xcf8] sm:$0xff]
    %v1063 = vld [vmem:[%s3 + $0xd00] sm:$0xff]
    %v1064 = vld [vmem:[%s3 + $0xd08] sm:$0xff]
    %v1065 = vld [vmem:[%s3 + $0xd10] sm:$0xff]
    %v1066 = vld [vmem:[%s3 + $0xd18] sm:$0xff]
    %v1067 = vld [vmem:[%s3 + $0xd20] sm:$0xff]
    %v1068 = vld [vmem:[%s3 + $0xd28] sm:$0xff]
    %v1069 = vld [vmem:[%s3 + $0xd30] sm:$0xff]
    %v1070 = vld [vmem:[%s3 + $0xd38] sm:$0xff]
    %v1071 = vld [vmem:[%s3 + $0xd40] sm:$0xff]
    %v1072 = vld [vmem:[%s3 + $0xd48] sm:$0xff]
    %v1073 = vld [vmem:[%s3 + $0xd50] sm:$0xff]
    %v1074 = vld [vmem:[%s3 + $0xd58] sm:$0xff]
    %v1075 = vld [vmem:[%s3 + $0xd60] sm:$0xff]
    %v1076 = vld [vmem:[%s3 + $0xd68] sm:$0xff]
    %v1077 = vld [vmem:[%s3 + $0xd70] sm:$0xff]
    %v1078 = vld [vmem:[%s3 + $0xd78] sm:$0xff]
    %v1079 = vld [vmem:[%s3 + $0xd80] sm:$0xff]
    %v1080 = vld [vmem:[%s3 + $0xd88] sm:$0xff]
    %v1081 = vld [vmem:[%s3 + $0xd90] sm:$0xff]
    %v1082 = vld [vmem:[%s3 + $0xd98] sm:$0xff]
    %v1083 = vld [vmem:[%s3 + $0xda0] sm:$0xff]
    %v1084 = vld [vmem:[%s3 + $0xda8] sm:$0xff]
    %v1085 = vld [vmem:[%s3 + $0xdb0] sm:$0xff]
    %v1086 = vld [vmem:[%s3 + $0xdb8] sm:$0xff]
    %v1087 = vld [vmem:[%s3 + $0xdc0] sm:$0xff]
    %v1088 = vld [vmem:[%s3 + $0xdc8] sm:$0xff]
    %v1089 = vld [vmem:[%s3 + $0xdd0] sm:$0xff]
    %v1090 = vld [vmem:[%s3 + $0xdd8] sm:$0xff]
    %v1091 = vld [vmem:[%s3 + $0xde0] sm:$0xff]
    %v1092 = vld [vmem:[%s3 + $0xde8] sm:$0xff]
    %v1093 = vld [vmem:[%s3 + $0xdf0] sm:$0xff]
    %v1094 = vld [vmem:[%s3 + $0xdf8] sm:$0xff]
    %v1095 = vld [vmem:[%s3 + $0xe00] sm:$0xff]
    %v1096 = vld [vmem:[%s3 + $0xe08] sm:$0xff]
    %v1097 = vld [vmem:[%s3 + $0xe10] sm:$0xff]
    %v1098 = vld [vmem:[%s3 + $0xe18] sm:$0xff]
    %v1099 = vld [vmem:[%s3 + $0xe20] sm:$0xff]
    %v1100 = vld [vmem:[%s3 + $0xe28] sm:$0xff]
    %v1101 = vld [vmem:[%s3 + $0xe30] sm:$0xff]
    %v1102 = vld [vmem:[%s3 + $0xe38] sm:$0xff]
    %v1103 = vld [vmem:[%s3 + $0xe40] sm:$0xff]
    %v1104 = vld [vmem:[%s3 + $0xe48] sm:$0xff]
    %v1105 = vld [vmem:[%s3 + $0xe50] sm:$0xff]
    %v1106 = vld [vmem:[%s3 + $0xe58] sm:$0xff]
    %v1107 = vld [vmem:[%s3 + $0xe60] sm:$0xff]
    %v1108 = vld [vmem:[%s3 + $0xe68] sm:$0xff]
    %v1109 = vld [vmem:[%s3 + $0xe70] sm:$0xff]
    %v1110 = vld [vmem:[%s3 + $0xe78] sm:$0xff]
    %v1111 = vld [vmem:[%s3 + $0xe80] sm:$0xff]
    %v1112 = vld [vmem:[%s3 + $0xe88] sm:$0xff]
    %v1113 = vld [vmem:[%s3 + $0xe90] sm:$0xff]
    %v1114 = vld [vmem:[%s3 + $0xe98] sm:$0xff]
    %v1115 = vld [vmem:[%s3 + $0xea0] sm:$0xff]
    %v1116 = vld [vmem:[%s3 + $0xea8] sm:$0xff]
    %v1117 = vld [vmem:[%s3 + $0xeb0] sm:$0xff]
    %v1118 = vld [vmem:[%s3 + $0xeb8] sm:$0xff]
    %v1119 = vld [vmem:[%s3 + $0xec0] sm:$0xff]
    %v1120 = vld [vmem:[%s3 + $0xec8] sm:$0xff]
    %v1121 = vld [vmem:[%s3 + $0xed0] sm:$0xff]
    %v1122 = vld [vmem:[%s3 + $0xed8] sm:$0xff]
    %v1123 = vld [vmem:[%s3 + $0xee0] sm:$0xff]
    %v1124 = vld [vmem:[%s3 + $0xee8] sm:$0xff]
    %v1125 = vld [vmem:[%s3 + $0xef0] sm:$0xff]
    %v1126 = vld [vmem:[%s3 + $0xef8] sm:$0xff]
    %v1127 = vld [vmem:[%s3 + $0xf00] sm:$0xff]
    %v1128 = vld [vmem:[%s3 + $0xf08] sm:$0xff]
    %v1129 = vld [vmem:[%s3 + $0xf10] sm:$0xff]
    %v1130 = vld [vmem:[%s3 + $0xf18] sm:$0xff]
    %v1131 = vld [vmem:[%s3 + $0xf20] sm:$0xff]
    %v1132 = vld [vmem:[%s3 + $0xf28] sm:$0xff]
    %v1133 = vld [vmem:[%s3 + $0xf30] sm:$0xff]
    %v1134 = vld [vmem:[%s3 + $0xf38] sm:$0xff]
    %v1135 = vld [vmem:[%s3 + $0xf40] sm:$0xff]
    %v1136 = vld [vmem:[%s3 + $0xf48] sm:$0xff]
    %v1137 = vld [vmem:[%s3 + $0xf50] sm:$0xff]
    %v1138 = vld [vmem:[%s3 + $0xf58] sm:$0xff]
    %v1139 = vld [vmem:[%s3 + $0xf60] sm:$0xff]
    %v1140 = vld [vmem:[%s3 + $0xf68] sm:$0xff]
    %v1141 = vld [vmem:[%s3 + $0xf70] sm:$0xff]
    %v1142 = vld [vmem:[%s3 + $0xf78] sm:$0xff]
    %v1143 = vld [vmem:[%s3 + $0xf80] sm:$0xff]
    %v1144 = vld [vmem:[%s3 + $0xf88] sm:$0xff]
    %v1145 = vld [vmem:[%s3 + $0xf90] sm:$0xff]
    %v1146 = vld [vmem:[%s3 + $0xf98] sm:$0xff]
    %v1147 = vld [vmem:[%s3 + $0xfa0] sm:$0xff]
    %v1148 = vld [vmem:[%s3 + $0xfa8] sm:$0xff]
    %v1149 = vld [vmem:[%s3 + $0xfb0] sm:$0xff]
    %v1150 = vld [vmem:[%s3 + $0xfb8] sm:$0xff]
    %v1151 = vld [vmem:[%s3 + $0xfc0] sm:$0xff]
    %v1152 = vld [vmem:[%s3 + $0xfc8] sm:$0xff]
    %v1153 = vld [vmem:[%s3 + $0xfd0] sm:$0xff]
    %v1154 = vld [vmem:[%s3 + $0xfd8] sm:$0xff]
    %v1155 = vld [vmem:[%s3 + $0xfe0] sm:$0xff]
    %v1156 = vld [vmem:[%s3 + $0xfe8] sm:$0xff]
    %v1157 = vld [vmem:[%s3 + $0xff0] sm:$0xff]
    %v1158 = vld [vmem:[%s3 + $0xff8] sm:$0xff]
    %v1159 = vld [vmem:[%s4] sm:$0xff]
    %v1161 = vlaneseq
    %v1162 = vshrl.u32 %v1161, 7
    %v1163 = vsub.s32 0, %v1162
    %v1164 = vrot.slane %v1159, %v1163
    %v1165 = vlaneseq
    %v1166 = vshrl.u32 %v1165, 7
    %v1167 = vsub.s32 1, %v1166
    %v1168 = vrot.slane %v1159, %v1167
    %v1169 = vlaneseq
    %v1170 = vshrl.u32 %v1169, 7
    %v1171 = vsub.s32 2, %v1170
    %v1172 = vrot.slane %v1159, %v1171
    %v1173 = vlaneseq
    %v1174 = vshrl.u32 %v1173, 7
    %v1175 = vsub.s32 3, %v1174
    %v1176 = vrot.slane %v1159, %v1175
    %v1177 = vlaneseq
    %v1178 = vshrl.u32 %v1177, 7
    %v1179 = vsub.s32 4, %v1178
    %v1180 = vrot.slane %v1159, %v1179
    %v1181 = vlaneseq
    %v1182 = vshrl.u32 %v1181, 7
    %v1183 = vsub.s32 5, %v1182
    %v1184 = vrot.slane %v1159, %v1183
    %v1185 = vlaneseq
    %v1186 = vshrl.u32 %v1185, 7
    %v1187 = vsub.s32 6, %v1186
    %v1188 = vrot.slane %v1159, %v1187
    %v1189 = vlaneseq
    %v1190 = vshrl.u32 %v1189, 7
    %v1191 = vsub.s32 7, %v1190
    %v1192 = vrot.slane %v1159, %v1191
    %v1713 = vunpack.c.l.b16 %v647
    %v1714 = vunpack.c.h.b16 %v647
    %v1715 = vunpack.c.l.b16 %v648
    %v1716 = vunpack.c.h.b16 %v648
    %v1717 = vunpack.c.l.b16 %v649
    %v1718 = vunpack.c.h.b16 %v649
    %v1719 = vunpack.c.l.b16 %v650
    %v1720 = vunpack.c.h.b16 %v650
    %v1721 = vunpack.c.l.b16 %v651
    %v1722 = vunpack.c.h.b16 %v651
    %v1723 = vunpack.c.l.b16 %v652
    %v1724 = vunpack.c.h.b16 %v652
    %v1725 = vunpack.c.l.b16 %v653
    %v1726 = vunpack.c.h.b16 %v653
    %v1727 = vunpack.c.l.b16 %v654
    %v1728 = vunpack.c.h.b16 %v654
    %v1729 = vunpack.c.l.b16 %v655
    %v1730 = vunpack.c.h.b16 %v655
    %v1731 = vunpack.c.l.b16 %v656
    %v1732 = vunpack.c.h.b16 %v656
    %v1733 = vunpack.c.l.b16 %v657
    %v1734 = vunpack.c.h.b16 %v657
    %v1735 = vunpack.c.l.b16 %v658
    %v1736 = vunpack.c.h.b16 %v658
    %v1737 = vunpack.c.l.b16 %v659
    %v1738 = vunpack.c.h.b16 %v659
    %v1739 = vunpack.c.l.b16 %v660
    %v1740 = vunpack.c.h.b16 %v660
    %v1741 = vunpack.c.l.b16 %v661
    %v1742 = vunpack.c.h.b16 %v661
    %v1743 = vunpack.c.l.b16 %v662
    %v1744 = vunpack.c.h.b16 %v662
    %v1745 = vunpack.c.l.b16 %v663
    %v1746 = vunpack.c.h.b16 %v663
    %v1747 = vunpack.c.l.b16 %v664
    %v1748 = vunpack.c.h.b16 %v664
    %v1749 = vunpack.c.l.b16 %v665
    %v1750 = vunpack.c.h.b16 %v665
    %v1751 = vunpack.c.l.b16 %v666
    %v1752 = vunpack.c.h.b16 %v666
    %v1753 = vunpack.c.l.b16 %v667
    %v1754 = vunpack.c.h.b16 %v667
    %v1755 = vunpack.c.l.b16 %v668
    %v1756 = vunpack.c.h.b16 %v668
    %v1757 = vunpack.c.l.b16 %v669
    %v1758 = vunpack.c.h.b16 %v669
    %v1759 = vunpack.c.l.b16 %v670
    %v1760 = vunpack.c.h.b16 %v670
    %v1761 = vunpack.c.l.b16 %v671
    %v1762 = vunpack.c.h.b16 %v671
    %v1763 = vunpack.c.l.b16 %v672
    %v1764 = vunpack.c.h.b16 %v672
    %v1765 = vunpack.c.l.b16 %v673
    %v1766 = vunpack.c.h.b16 %v673
    %v1767 = vunpack.c.l.b16 %v674
    %v1768 = vunpack.c.h.b16 %v674
    %v1769 = vunpack.c.l.b16 %v675
    %v1770 = vunpack.c.h.b16 %v675
    %v1771 = vunpack.c.l.b16 %v676
    %v1772 = vunpack.c.h.b16 %v676
    %v1773 = vunpack.c.l.b16 %v677
    %v1774 = vunpack.c.h.b16 %v677
    %v1775 = vunpack.c.l.b16 %v678
    %v1776 = vunpack.c.h.b16 %v678
    %v1777 = vunpack.c.l.b16 %v679
    %v1778 = vunpack.c.h.b16 %v679
    %v1779 = vunpack.c.l.b16 %v680
    %v1780 = vunpack.c.h.b16 %v680
    %v1781 = vunpack.c.l.b16 %v681
    %v1782 = vunpack.c.h.b16 %v681
    %v1783 = vunpack.c.l.b16 %v682
    %v1784 = vunpack.c.h.b16 %v682
    %v1785 = vunpack.c.l.b16 %v683
    %v1786 = vunpack.c.h.b16 %v683
    %v1787 = vunpack.c.l.b16 %v684
    %v1788 = vunpack.c.h.b16 %v684
    %v1789 = vunpack.c.l.b16 %v685
    %v1790 = vunpack.c.h.b16 %v685
    %v1791 = vunpack.c.l.b16 %v686
    %v1792 = vunpack.c.h.b16 %v686
    %v1793 = vunpack.c.l.b16 %v687
    %v1794 = vunpack.c.h.b16 %v687
    %v1795 = vunpack.c.l.b16 %v688
    %v1796 = vunpack.c.h.b16 %v688
    %v1797 = vunpack.c.l.b16 %v689
    %v1798 = vunpack.c.h.b16 %v689
    %v1799 = vunpack.c.l.b16 %v690
    %v1800 = vunpack.c.h.b16 %v690
    %v1801 = vunpack.c.l.b16 %v691
    %v1802 = vunpack.c.h.b16 %v691
    %v1803 = vunpack.c.l.b16 %v692
    %v1804 = vunpack.c.h.b16 %v692
    %v1805 = vunpack.c.l.b16 %v693
    %v1806 = vunpack.c.h.b16 %v693
    %v1807 = vunpack.c.l.b16 %v694
    %v1808 = vunpack.c.h.b16 %v694
    %v1809 = vunpack.c.l.b16 %v695
    %v1810 = vunpack.c.h.b16 %v695
    %v1811 = vunpack.c.l.b16 %v696
    %v1812 = vunpack.c.h.b16 %v696
    %v1813 = vunpack.c.l.b16 %v697
    %v1814 = vunpack.c.h.b16 %v697
    %v1815 = vunpack.c.l.b16 %v698
    %v1816 = vunpack.c.h.b16 %v698
    %v1817 = vunpack.c.l.b16 %v699
    %v1818 = vunpack.c.h.b16 %v699
    %v1819 = vunpack.c.l.b16 %v700
    %v1820 = vunpack.c.h.b16 %v700
    %v1821 = vunpack.c.l.b16 %v701
    %v1822 = vunpack.c.h.b16 %v701
    %v1823 = vunpack.c.l.b16 %v702
    %v1824 = vunpack.c.h.b16 %v702
    %v1825 = vunpack.c.l.b16 %v703
    %v1826 = vunpack.c.h.b16 %v703
    %v1827 = vunpack.c.l.b16 %v704
    %v1828 = vunpack.c.h.b16 %v704
    %v1829 = vunpack.c.l.b16 %v705
    %v1830 = vunpack.c.h.b16 %v705
    %v1831 = vunpack.c.l.b16 %v706
    %v1832 = vunpack.c.h.b16 %v706
    %v1833 = vunpack.c.l.b16 %v707
    %v1834 = vunpack.c.h.b16 %v707
    %v1835 = vunpack.c.l.b16 %v708
    %v1836 = vunpack.c.h.b16 %v708
    %v1837 = vunpack.c.l.b16 %v709
    %v1838 = vunpack.c.h.b16 %v709
    %v1839 = vunpack.c.l.b16 %v710
    %v1840 = vunpack.c.h.b16 %v710
    %v1841 = vunpack.c.l.b16 %v711
    %v1842 = vunpack.c.h.b16 %v711
    %v1843 = vunpack.c.l.b16 %v712
    %v1844 = vunpack.c.h.b16 %v712
    %v1845 = vunpack.c.l.b16 %v713
    %v1846 = vunpack.c.h.b16 %v713
    %v1847 = vunpack.c.l.b16 %v714
    %v1848 = vunpack.c.h.b16 %v714
    %v1849 = vunpack.c.l.b16 %v715
    %v1850 = vunpack.c.h.b16 %v715
    %v1851 = vunpack.c.l.b16 %v716
    %v1852 = vunpack.c.h.b16 %v716
    %v1853 = vunpack.c.l.b16 %v717
    %v1854 = vunpack.c.h.b16 %v717
    %v1855 = vunpack.c.l.b16 %v718
    %v1856 = vunpack.c.h.b16 %v718
    %v1857 = vunpack.c.l.b16 %v719
    %v1858 = vunpack.c.h.b16 %v719
    %v1859 = vunpack.c.l.b16 %v720
    %v1860 = vunpack.c.h.b16 %v720
    %v1861 = vunpack.c.l.b16 %v721
    %v1862 = vunpack.c.h.b16 %v721
    %v1863 = vunpack.c.l.b16 %v722
    %v1864 = vunpack.c.h.b16 %v722
    %v1865 = vunpack.c.l.b16 %v723
    %v1866 = vunpack.c.h.b16 %v723
    %v1867 = vunpack.c.l.b16 %v724
    %v1868 = vunpack.c.h.b16 %v724
    %v1869 = vunpack.c.l.b16 %v725
    %v1870 = vunpack.c.h.b16 %v725
    %v1871 = vunpack.c.l.b16 %v726
    %v1872 = vunpack.c.h.b16 %v726
    %v1873 = vunpack.c.l.b16 %v727
    %v1874 = vunpack.c.h.b16 %v727
    %v1875 = vunpack.c.l.b16 %v728
    %v1876 = vunpack.c.h.b16 %v728
    %v1877 = vunpack.c.l.b16 %v729
    %v1878 = vunpack.c.h.b16 %v729
    %v1879 = vunpack.c.l.b16 %v730
    %v1880 = vunpack.c.h.b16 %v730
    %v1881 = vunpack.c.l.b16 %v731
    %v1882 = vunpack.c.h.b16 %v731
    %v1883 = vunpack.c.l.b16 %v732
    %v1884 = vunpack.c.h.b16 %v732
    %v1885 = vunpack.c.l.b16 %v733
    %v1886 = vunpack.c.h.b16 %v733
    %v1887 = vunpack.c.l.b16 %v734
    %v1888 = vunpack.c.h.b16 %v734
    %v1889 = vunpack.c.l.b16 %v735
    %v1890 = vunpack.c.h.b16 %v735
    %v1891 = vunpack.c.l.b16 %v736
    %v1892 = vunpack.c.h.b16 %v736
    %v1893 = vunpack.c.l.b16 %v737
    %v1894 = vunpack.c.h.b16 %v737
    %v1895 = vunpack.c.l.b16 %v738
    %v1896 = vunpack.c.h.b16 %v738
    %v1897 = vunpack.c.l.b16 %v739
    %v1898 = vunpack.c.h.b16 %v739
    %v1899 = vunpack.c.l.b16 %v740
    %v1900 = vunpack.c.h.b16 %v740
    %v1901 = vunpack.c.l.b16 %v741
    %v1902 = vunpack.c.h.b16 %v741
    %v1903 = vunpack.c.l.b16 %v742
    %v1904 = vunpack.c.h.b16 %v742
    %v1905 = vunpack.c.l.b16 %v743
    %v1906 = vunpack.c.h.b16 %v743
    %v1907 = vunpack.c.l.b16 %v744
    %v1908 = vunpack.c.h.b16 %v744
    %v1909 = vunpack.c.l.b16 %v745
    %v1910 = vunpack.c.h.b16 %v745
    %v1911 = vunpack.c.l.b16 %v746
    %v1912 = vunpack.c.h.b16 %v746
    %v1913 = vunpack.c.l.b16 %v747
    %v1914 = vunpack.c.h.b16 %v747
    %v1915 = vunpack.c.l.b16 %v748
    %v1916 = vunpack.c.h.b16 %v748
    %v1917 = vunpack.c.l.b16 %v749
    %v1918 = vunpack.c.h.b16 %v749
    %v1919 = vunpack.c.l.b16 %v750
    %v1920 = vunpack.c.h.b16 %v750
    %v1921 = vunpack.c.l.b16 %v751
    %v1922 = vunpack.c.h.b16 %v751
    %v1923 = vunpack.c.l.b16 %v752
    %v1924 = vunpack.c.h.b16 %v752
    %v1925 = vunpack.c.l.b16 %v753
    %v1926 = vunpack.c.h.b16 %v753
    %v1927 = vunpack.c.l.b16 %v754
    %v1928 = vunpack.c.h.b16 %v754
    %v1929 = vunpack.c.l.b16 %v755
    %v1930 = vunpack.c.h.b16 %v755
    %v1931 = vunpack.c.l.b16 %v756
    %v1932 = vunpack.c.h.b16 %v756
    %v1933 = vunpack.c.l.b16 %v757
    %v1934 = vunpack.c.h.b16 %v757
    %v1935 = vunpack.c.l.b16 %v758
    %v1936 = vunpack.c.h.b16 %v758
    %v1937 = vunpack.c.l.b16 %v759
    %v1938 = vunpack.c.h.b16 %v759
    %v1939 = vunpack.c.l.b16 %v760
    %v1940 = vunpack.c.h.b16 %v760
    %v1941 = vunpack.c.l.b16 %v761
    %v1942 = vunpack.c.h.b16 %v761
    %v1943 = vunpack.c.l.b16 %v762
    %v1944 = vunpack.c.h.b16 %v762
    %v1945 = vunpack.c.l.b16 %v763
    %v1946 = vunpack.c.h.b16 %v763
    %v1947 = vunpack.c.l.b16 %v764
    %v1948 = vunpack.c.h.b16 %v764
    %v1949 = vunpack.c.l.b16 %v765
    %v1950 = vunpack.c.h.b16 %v765
    %v1951 = vunpack.c.l.b16 %v766
    %v1952 = vunpack.c.h.b16 %v766
    %v1953 = vunpack.c.l.b16 %v767
    %v1954 = vunpack.c.h.b16 %v767
    %v1955 = vunpack.c.l.b16 %v768
    %v1956 = vunpack.c.h.b16 %v768
    %v1957 = vunpack.c.l.b16 %v769
    %v1958 = vunpack.c.h.b16 %v769
    %v1959 = vunpack.c.l.b16 %v770
    %v1960 = vunpack.c.h.b16 %v770
    %v1961 = vunpack.c.l.b16 %v771
    %v1962 = vunpack.c.h.b16 %v771
    %v1963 = vunpack.c.l.b16 %v772
    %v1964 = vunpack.c.h.b16 %v772
    %v1965 = vunpack.c.l.b16 %v773
    %v1966 = vunpack.c.h.b16 %v773
    %v1967 = vunpack.c.l.b16 %v774
    %v1968 = vunpack.c.h.b16 %v774
    %v1969 = vunpack.c.l.b16 %v775
    %v1970 = vunpack.c.h.b16 %v775
    %v1971 = vunpack.c.l.b16 %v776
    %v1972 = vunpack.c.h.b16 %v776
    %v1973 = vunpack.c.l.b16 %v777
    %v1974 = vunpack.c.h.b16 %v777
    %v1975 = vunpack.c.l.b16 %v778
    %v1976 = vunpack.c.h.b16 %v778
    %v1977 = vunpack.c.l.b16 %v779
    %v1978 = vunpack.c.h.b16 %v779
    %v1979 = vunpack.c.l.b16 %v780
    %v1980 = vunpack.c.h.b16 %v780
    %v1981 = vunpack.c.l.b16 %v781
    %v1982 = vunpack.c.h.b16 %v781
    %v1983 = vunpack.c.l.b16 %v782
    %v1984 = vunpack.c.h.b16 %v782
    %v1985 = vunpack.c.l.b16 %v783
    %v1986 = vunpack.c.h.b16 %v783
    %v1987 = vunpack.c.l.b16 %v784
    %v1988 = vunpack.c.h.b16 %v784
    %v1989 = vunpack.c.l.b16 %v785
    %v1990 = vunpack.c.h.b16 %v785
    %v1991 = vunpack.c.l.b16 %v786
    %v1992 = vunpack.c.h.b16 %v786
    %v1993 = vunpack.c.l.b16 %v787
    %v1994 = vunpack.c.h.b16 %v787
    %v1995 = vunpack.c.l.b16 %v788
    %v1996 = vunpack.c.h.b16 %v788
    %v1997 = vunpack.c.l.b16 %v789
    %v1998 = vunpack.c.h.b16 %v789
    %v1999 = vunpack.c.l.b16 %v790
    %v2000 = vunpack.c.h.b16 %v790
    %v2001 = vunpack.c.l.b16 %v791
    %v2002 = vunpack.c.h.b16 %v791
    %v2003 = vunpack.c.l.b16 %v792
    %v2004 = vunpack.c.h.b16 %v792
    %v2005 = vunpack.c.l.b16 %v793
    %v2006 = vunpack.c.h.b16 %v793
    %v2007 = vunpack.c.l.b16 %v794
    %v2008 = vunpack.c.h.b16 %v794
    %v2009 = vunpack.c.l.b16 %v795
    %v2010 = vunpack.c.h.b16 %v795
    %v2011 = vunpack.c.l.b16 %v796
    %v2012 = vunpack.c.h.b16 %v796
    %v2013 = vunpack.c.l.b16 %v797
    %v2014 = vunpack.c.h.b16 %v797
    %v2015 = vunpack.c.l.b16 %v798
    %v2016 = vunpack.c.h.b16 %v798
    %v2017 = vunpack.c.l.b16 %v799
    %v2018 = vunpack.c.h.b16 %v799
    %v2019 = vunpack.c.l.b16 %v800
    %v2020 = vunpack.c.h.b16 %v800
    %v2021 = vunpack.c.l.b16 %v801
    %v2022 = vunpack.c.h.b16 %v801
    %v2023 = vunpack.c.l.b16 %v802
    %v2024 = vunpack.c.h.b16 %v802
    %v2025 = vunpack.c.l.b16 %v803
    %v2026 = vunpack.c.h.b16 %v803
    %v2027 = vunpack.c.l.b16 %v804
    %v2028 = vunpack.c.h.b16 %v804
    %v2029 = vunpack.c.l.b16 %v805
    %v2030 = vunpack.c.h.b16 %v805
    %v2031 = vunpack.c.l.b16 %v806
    %v2032 = vunpack.c.h.b16 %v806
    %v2033 = vunpack.c.l.b16 %v807
    %v2034 = vunpack.c.h.b16 %v807
    %v2035 = vunpack.c.l.b16 %v808
    %v2036 = vunpack.c.h.b16 %v808
    %v2037 = vunpack.c.l.b16 %v809
    %v2038 = vunpack.c.h.b16 %v809
    %v2039 = vunpack.c.l.b16 %v810
    %v2040 = vunpack.c.h.b16 %v810
    %v2041 = vunpack.c.l.b16 %v811
    %v2042 = vunpack.c.h.b16 %v811
    %v2043 = vunpack.c.l.b16 %v812
    %v2044 = vunpack.c.h.b16 %v812
    %v2045 = vunpack.c.l.b16 %v813
    %v2046 = vunpack.c.h.b16 %v813
    %v2047 = vunpack.c.l.b16 %v814
    %v2048 = vunpack.c.h.b16 %v814
    %v2049 = vunpack.c.l.b16 %v815
    %v2050 = vunpack.c.h.b16 %v815
    %v2051 = vunpack.c.l.b16 %v816
    %v2052 = vunpack.c.h.b16 %v816
    %v2053 = vunpack.c.l.b16 %v817
    %v2054 = vunpack.c.h.b16 %v817
    %v2055 = vunpack.c.l.b16 %v818
    %v2056 = vunpack.c.h.b16 %v818
    %v2057 = vunpack.c.l.b16 %v819
    %v2058 = vunpack.c.h.b16 %v819
    %v2059 = vunpack.c.l.b16 %v820
    %v2060 = vunpack.c.h.b16 %v820
    %v2061 = vunpack.c.l.b16 %v821
    %v2062 = vunpack.c.h.b16 %v821
    %v2063 = vunpack.c.l.b16 %v822
    %v2064 = vunpack.c.h.b16 %v822
    %v2065 = vunpack.c.l.b16 %v823
    %v2066 = vunpack.c.h.b16 %v823
    %v2067 = vunpack.c.l.b16 %v824
    %v2068 = vunpack.c.h.b16 %v824
    %v2069 = vunpack.c.l.b16 %v825
    %v2070 = vunpack.c.h.b16 %v825
    %v2071 = vunpack.c.l.b16 %v826
    %v2072 = vunpack.c.h.b16 %v826
    %v2073 = vunpack.c.l.b16 %v827
    %v2074 = vunpack.c.h.b16 %v827
    %v2075 = vunpack.c.l.b16 %v828
    %v2076 = vunpack.c.h.b16 %v828
    %v2077 = vunpack.c.l.b16 %v829
    %v2078 = vunpack.c.h.b16 %v829
    %v2079 = vunpack.c.l.b16 %v830
    %v2080 = vunpack.c.h.b16 %v830
    %v2081 = vunpack.c.l.b16 %v831
    %v2082 = vunpack.c.h.b16 %v831
    %v2083 = vunpack.c.l.b16 %v832
    %v2084 = vunpack.c.h.b16 %v832
    %v2085 = vunpack.c.l.b16 %v833
    %v2086 = vunpack.c.h.b16 %v833
    %v2087 = vunpack.c.l.b16 %v834
    %v2088 = vunpack.c.h.b16 %v834
    %v2089 = vunpack.c.l.b16 %v835
    %v2090 = vunpack.c.h.b16 %v835
    %v2091 = vunpack.c.l.b16 %v836
    %v2092 = vunpack.c.h.b16 %v836
    %v2093 = vunpack.c.l.b16 %v837
    %v2094 = vunpack.c.h.b16 %v837
    %v2095 = vunpack.c.l.b16 %v838
    %v2096 = vunpack.c.h.b16 %v838
    %v2097 = vunpack.c.l.b16 %v839
    %v2098 = vunpack.c.h.b16 %v839
    %v2099 = vunpack.c.l.b16 %v840
    %v2100 = vunpack.c.h.b16 %v840
    %v2101 = vunpack.c.l.b16 %v841
    %v2102 = vunpack.c.h.b16 %v841
    %v2103 = vunpack.c.l.b16 %v842
    %v2104 = vunpack.c.h.b16 %v842
    %v2105 = vunpack.c.l.b16 %v843
    %v2106 = vunpack.c.h.b16 %v843
    %v2107 = vunpack.c.l.b16 %v844
    %v2108 = vunpack.c.h.b16 %v844
    %v2109 = vunpack.c.l.b16 %v845
    %v2110 = vunpack.c.h.b16 %v845
    %v2111 = vunpack.c.l.b16 %v846
    %v2112 = vunpack.c.h.b16 %v846
    %v2113 = vunpack.c.l.b16 %v847
    %v2114 = vunpack.c.h.b16 %v847
    %v2115 = vunpack.c.l.b16 %v848
    %v2116 = vunpack.c.h.b16 %v848
    %v2117 = vunpack.c.l.b16 %v849
    %v2118 = vunpack.c.h.b16 %v849
    %v2119 = vunpack.c.l.b16 %v850
    %v2120 = vunpack.c.h.b16 %v850
    %v2121 = vunpack.c.l.b16 %v851
    %v2122 = vunpack.c.h.b16 %v851
    %v2123 = vunpack.c.l.b16 %v852
    %v2124 = vunpack.c.h.b16 %v852
    %v2125 = vunpack.c.l.b16 %v853
    %v2126 = vunpack.c.h.b16 %v853
    %v2127 = vunpack.c.l.b16 %v854
    %v2128 = vunpack.c.h.b16 %v854
    %v2129 = vunpack.c.l.b16 %v855
    %v2130 = vunpack.c.h.b16 %v855
    %v2131 = vunpack.c.l.b16 %v856
    %v2132 = vunpack.c.h.b16 %v856
    %v2133 = vunpack.c.l.b16 %v857
    %v2134 = vunpack.c.h.b16 %v857
    %v2135 = vunpack.c.l.b16 %v858
    %v2136 = vunpack.c.h.b16 %v858
    %v2137 = vunpack.c.l.b16 %v859
    %v2138 = vunpack.c.h.b16 %v859
    %v2139 = vunpack.c.l.b16 %v860
    %v2140 = vunpack.c.h.b16 %v860
    %v2141 = vunpack.c.l.b16 %v861
    %v2142 = vunpack.c.h.b16 %v861
    %v2143 = vunpack.c.l.b16 %v862
    %v2144 = vunpack.c.h.b16 %v862
    %v2145 = vunpack.c.l.b16 %v863
    %v2146 = vunpack.c.h.b16 %v863
    %v2147 = vunpack.c.l.b16 %v864
    %v2148 = vunpack.c.h.b16 %v864
    %v2149 = vunpack.c.l.b16 %v865
    %v2150 = vunpack.c.h.b16 %v865
    %v2151 = vunpack.c.l.b16 %v866
    %v2152 = vunpack.c.h.b16 %v866
    %v2153 = vunpack.c.l.b16 %v867
    %v2154 = vunpack.c.h.b16 %v867
    %v2155 = vunpack.c.l.b16 %v868
    %v2156 = vunpack.c.h.b16 %v868
    %v2157 = vunpack.c.l.b16 %v869
    %v2158 = vunpack.c.h.b16 %v869
    %v2159 = vunpack.c.l.b16 %v870
    %v2160 = vunpack.c.h.b16 %v870
    %v2161 = vunpack.c.l.b16 %v871
    %v2162 = vunpack.c.h.b16 %v871
    %v2163 = vunpack.c.l.b16 %v872
    %v2164 = vunpack.c.h.b16 %v872
    %v2165 = vunpack.c.l.b16 %v873
    %v2166 = vunpack.c.h.b16 %v873
    %v2167 = vunpack.c.l.b16 %v874
    %v2168 = vunpack.c.h.b16 %v874
    %v2169 = vunpack.c.l.b16 %v875
    %v2170 = vunpack.c.h.b16 %v875
    %v2171 = vunpack.c.l.b16 %v876
    %v2172 = vunpack.c.h.b16 %v876
    %v2173 = vunpack.c.l.b16 %v877
    %v2174 = vunpack.c.h.b16 %v877
    %v2175 = vunpack.c.l.b16 %v878
    %v2176 = vunpack.c.h.b16 %v878
    %v2177 = vunpack.c.l.b16 %v879
    %v2178 = vunpack.c.h.b16 %v879
    %v2179 = vunpack.c.l.b16 %v880
    %v2180 = vunpack.c.h.b16 %v880
    %v2181 = vunpack.c.l.b16 %v881
    %v2182 = vunpack.c.h.b16 %v881
    %v2183 = vunpack.c.l.b16 %v882
    %v2184 = vunpack.c.h.b16 %v882
    %v2185 = vunpack.c.l.b16 %v883
    %v2186 = vunpack.c.h.b16 %v883
    %v2187 = vunpack.c.l.b16 %v884
    %v2188 = vunpack.c.h.b16 %v884
    %v2189 = vunpack.c.l.b16 %v885
    %v2190 = vunpack.c.h.b16 %v885
    %v2191 = vunpack.c.l.b16 %v886
    %v2192 = vunpack.c.h.b16 %v886
    %v2193 = vunpack.c.l.b16 %v887
    %v2194 = vunpack.c.h.b16 %v887
    %v2195 = vunpack.c.l.b16 %v888
    %v2196 = vunpack.c.h.b16 %v888
    %v2197 = vunpack.c.l.b16 %v889
    %v2198 = vunpack.c.h.b16 %v889
    %v2199 = vunpack.c.l.b16 %v890
    %v2200 = vunpack.c.h.b16 %v890
    %v2201 = vunpack.c.l.b16 %v891
    %v2202 = vunpack.c.h.b16 %v891
    %v2203 = vunpack.c.l.b16 %v892
    %v2204 = vunpack.c.h.b16 %v892
    %v2205 = vunpack.c.l.b16 %v893
    %v2206 = vunpack.c.h.b16 %v893
    %v2207 = vunpack.c.l.b16 %v894
    %v2208 = vunpack.c.h.b16 %v894
    %v2209 = vunpack.c.l.b16 %v895
    %v2210 = vunpack.c.h.b16 %v895
    %v2211 = vunpack.c.l.b16 %v896
    %v2212 = vunpack.c.h.b16 %v896
    %v2213 = vunpack.c.l.b16 %v897
    %v2214 = vunpack.c.h.b16 %v897
    %v2215 = vunpack.c.l.b16 %v898
    %v2216 = vunpack.c.h.b16 %v898
    %v2217 = vunpack.c.l.b16 %v899
    %v2218 = vunpack.c.h.b16 %v899
    %v2219 = vunpack.c.l.b16 %v900
    %v2220 = vunpack.c.h.b16 %v900
    %v2221 = vunpack.c.l.b16 %v901
    %v2222 = vunpack.c.h.b16 %v901
    %v2223 = vunpack.c.l.b16 %v902
    %v2224 = vunpack.c.h.b16 %v902
    %v2225 = vunpack.c.l.b16 %v903
    %v2226 = vunpack.c.h.b16 %v903
    %v2227 = vunpack.c.l.b16 %v904
    %v2228 = vunpack.c.h.b16 %v904
    %v2229 = vunpack.c.l.b16 %v905
    %v2230 = vunpack.c.h.b16 %v905
    %v2231 = vunpack.c.l.b16 %v906
    %v2232 = vunpack.c.h.b16 %v906
    %v2233 = vunpack.c.l.b16 %v907
    %v2234 = vunpack.c.h.b16 %v907
    %v2235 = vunpack.c.l.b16 %v908
    %v2236 = vunpack.c.h.b16 %v908
    %v2237 = vunpack.c.l.b16 %v909
    %v2238 = vunpack.c.h.b16 %v909
    %v2239 = vunpack.c.l.b16 %v910
    %v2240 = vunpack.c.h.b16 %v910
    %v2241 = vunpack.c.l.b16 %v911
    %v2242 = vunpack.c.h.b16 %v911
    %v2243 = vunpack.c.l.b16 %v912
    %v2244 = vunpack.c.h.b16 %v912
    %v2245 = vunpack.c.l.b16 %v913
    %v2246 = vunpack.c.h.b16 %v913
    %v2247 = vunpack.c.l.b16 %v914
    %v2248 = vunpack.c.h.b16 %v914
    %v2249 = vunpack.c.l.b16 %v915
    %v2250 = vunpack.c.h.b16 %v915
    %v2251 = vunpack.c.l.b16 %v916
    %v2252 = vunpack.c.h.b16 %v916
    %v2253 = vunpack.c.l.b16 %v917
    %v2254 = vunpack.c.h.b16 %v917
    %v2255 = vunpack.c.l.b16 %v918
    %v2256 = vunpack.c.h.b16 %v918
    %v2257 = vunpack.c.l.b16 %v919
    %v2258 = vunpack.c.h.b16 %v919
    %v2259 = vunpack.c.l.b16 %v920
    %v2260 = vunpack.c.h.b16 %v920
    %v2261 = vunpack.c.l.b16 %v921
    %v2262 = vunpack.c.h.b16 %v921
    %v2263 = vunpack.c.l.b16 %v922
    %v2264 = vunpack.c.h.b16 %v922
    %v2265 = vunpack.c.l.b16 %v923
    %v2266 = vunpack.c.h.b16 %v923
    %v2267 = vunpack.c.l.b16 %v924
    %v2268 = vunpack.c.h.b16 %v924
    %v2269 = vunpack.c.l.b16 %v925
    %v2270 = vunpack.c.h.b16 %v925
    %v2271 = vunpack.c.l.b16 %v926
    %v2272 = vunpack.c.h.b16 %v926
    %v2273 = vunpack.c.l.b16 %v927
    %v2274 = vunpack.c.h.b16 %v927
    %v2275 = vunpack.c.l.b16 %v928
    %v2276 = vunpack.c.h.b16 %v928
    %v2277 = vunpack.c.l.b16 %v929
    %v2278 = vunpack.c.h.b16 %v929
    %v2279 = vunpack.c.l.b16 %v930
    %v2280 = vunpack.c.h.b16 %v930
    %v2281 = vunpack.c.l.b16 %v931
    %v2282 = vunpack.c.h.b16 %v931
    %v2283 = vunpack.c.l.b16 %v932
    %v2284 = vunpack.c.h.b16 %v932
    %v2285 = vunpack.c.l.b16 %v933
    %v2286 = vunpack.c.h.b16 %v933
    %v2287 = vunpack.c.l.b16 %v934
    %v2288 = vunpack.c.h.b16 %v934
    %v2289 = vunpack.c.l.b16 %v935
    %v2290 = vunpack.c.h.b16 %v935
    %v2291 = vunpack.c.l.b16 %v936
    %v2292 = vunpack.c.h.b16 %v936
    %v2293 = vunpack.c.l.b16 %v937
    %v2294 = vunpack.c.h.b16 %v937
    %v2295 = vunpack.c.l.b16 %v938
    %v2296 = vunpack.c.h.b16 %v938
    %v2297 = vunpack.c.l.b16 %v939
    %v2298 = vunpack.c.h.b16 %v939
    %v2299 = vunpack.c.l.b16 %v940
    %v2300 = vunpack.c.h.b16 %v940
    %v2301 = vunpack.c.l.b16 %v941
    %v2302 = vunpack.c.h.b16 %v941
    %v2303 = vunpack.c.l.b16 %v942
    %v2304 = vunpack.c.h.b16 %v942
    %v2305 = vunpack.c.l.b16 %v943
    %v2306 = vunpack.c.h.b16 %v943
    %v2307 = vunpack.c.l.b16 %v944
    %v2308 = vunpack.c.h.b16 %v944
    %v2309 = vunpack.c.l.b16 %v945
    %v2310 = vunpack.c.h.b16 %v945
    %v2311 = vunpack.c.l.b16 %v946
    %v2312 = vunpack.c.h.b16 %v946
    %v2313 = vunpack.c.l.b16 %v947
    %v2314 = vunpack.c.h.b16 %v947
    %v2315 = vunpack.c.l.b16 %v948
    %v2316 = vunpack.c.h.b16 %v948
    %v2317 = vunpack.c.l.b16 %v949
    %v2318 = vunpack.c.h.b16 %v949
    %v2319 = vunpack.c.l.b16 %v950
    %v2320 = vunpack.c.h.b16 %v950
    %v2321 = vunpack.c.l.b16 %v951
    %v2322 = vunpack.c.h.b16 %v951
    %v2323 = vunpack.c.l.b16 %v952
    %v2324 = vunpack.c.h.b16 %v952
    %v2325 = vunpack.c.l.b16 %v953
    %v2326 = vunpack.c.h.b16 %v953
    %v2327 = vunpack.c.l.b16 %v954
    %v2328 = vunpack.c.h.b16 %v954
    %v2329 = vunpack.c.l.b16 %v955
    %v2330 = vunpack.c.h.b16 %v955
    %v2331 = vunpack.c.l.b16 %v956
    %v2332 = vunpack.c.h.b16 %v956
    %v2333 = vunpack.c.l.b16 %v957
    %v2334 = vunpack.c.h.b16 %v957
    %v2335 = vunpack.c.l.b16 %v958
    %v2336 = vunpack.c.h.b16 %v958
    %v2337 = vunpack.c.l.b16 %v959
    %v2338 = vunpack.c.h.b16 %v959
    %v2339 = vunpack.c.l.b16 %v960
    %v2340 = vunpack.c.h.b16 %v960
    %v2341 = vunpack.c.l.b16 %v961
    %v2342 = vunpack.c.h.b16 %v961
    %v2343 = vunpack.c.l.b16 %v962
    %v2344 = vunpack.c.h.b16 %v962
    %v2345 = vunpack.c.l.b16 %v963
    %v2346 = vunpack.c.h.b16 %v963
    %v2347 = vunpack.c.l.b16 %v964
    %v2348 = vunpack.c.h.b16 %v964
    %v2349 = vunpack.c.l.b16 %v965
    %v2350 = vunpack.c.h.b16 %v965
    %v2351 = vunpack.c.l.b16 %v966
    %v2352 = vunpack.c.h.b16 %v966
    %v2353 = vunpack.c.l.b16 %v967
    %v2354 = vunpack.c.h.b16 %v967
    %v2355 = vunpack.c.l.b16 %v968
    %v2356 = vunpack.c.h.b16 %v968
    %v2357 = vunpack.c.l.b16 %v969
    %v2358 = vunpack.c.h.b16 %v969
    %v2359 = vunpack.c.l.b16 %v970
    %v2360 = vunpack.c.h.b16 %v970
    %v2361 = vunpack.c.l.b16 %v971
    %v2362 = vunpack.c.h.b16 %v971
    %v2363 = vunpack.c.l.b16 %v972
    %v2364 = vunpack.c.h.b16 %v972
    %v2365 = vunpack.c.l.b16 %v973
    %v2366 = vunpack.c.h.b16 %v973
    %v2367 = vunpack.c.l.b16 %v974
    %v2368 = vunpack.c.h.b16 %v974
    %v2369 = vunpack.c.l.b16 %v975
    %v2370 = vunpack.c.h.b16 %v975
    %v2371 = vunpack.c.l.b16 %v976
    %v2372 = vunpack.c.h.b16 %v976
    %v2373 = vunpack.c.l.b16 %v977
    %v2374 = vunpack.c.h.b16 %v977
    %v2375 = vunpack.c.l.b16 %v978
    %v2376 = vunpack.c.h.b16 %v978
    %v2377 = vunpack.c.l.b16 %v979
    %v2378 = vunpack.c.h.b16 %v979
    %v2379 = vunpack.c.l.b16 %v980
    %v2380 = vunpack.c.h.b16 %v980
    %v2381 = vunpack.c.l.b16 %v981
    %v2382 = vunpack.c.h.b16 %v981
    %v2383 = vunpack.c.l.b16 %v982
    %v2384 = vunpack.c.h.b16 %v982
    %v2385 = vunpack.c.l.b16 %v983
    %v2386 = vunpack.c.h.b16 %v983
    %v2387 = vunpack.c.l.b16 %v984
    %v2388 = vunpack.c.h.b16 %v984
    %v2389 = vunpack.c.l.b16 %v985
    %v2390 = vunpack.c.h.b16 %v985
    %v2391 = vunpack.c.l.b16 %v986
    %v2392 = vunpack.c.h.b16 %v986
    %v2393 = vunpack.c.l.b16 %v987
    %v2394 = vunpack.c.h.b16 %v987
    %v2395 = vunpack.c.l.b16 %v988
    %v2396 = vunpack.c.h.b16 %v988
    %v2397 = vunpack.c.l.b16 %v989
    %v2398 = vunpack.c.h.b16 %v989
    %v2399 = vunpack.c.l.b16 %v990
    %v2400 = vunpack.c.h.b16 %v990
    %v2401 = vunpack.c.l.b16 %v991
    %v2402 = vunpack.c.h.b16 %v991
    %v2403 = vunpack.c.l.b16 %v992
    %v2404 = vunpack.c.h.b16 %v992
    %v2405 = vunpack.c.l.b16 %v993
    %v2406 = vunpack.c.h.b16 %v993
    %v2407 = vunpack.c.l.b16 %v994
    %v2408 = vunpack.c.h.b16 %v994
    %v2409 = vunpack.c.l.b16 %v995
    %v2410 = vunpack.c.h.b16 %v995
    %v2411 = vunpack.c.l.b16 %v996
    %v2412 = vunpack.c.h.b16 %v996
    %v2413 = vunpack.c.l.b16 %v997
    %v2414 = vunpack.c.h.b16 %v997
    %v2415 = vunpack.c.l.b16 %v998
    %v2416 = vunpack.c.h.b16 %v998
    %v2417 = vunpack.c.l.b16 %v999
    %v2418 = vunpack.c.h.b16 %v999
    %v2419 = vunpack.c.l.b16 %v1000
    %v2420 = vunpack.c.h.b16 %v1000
    %v2421 = vunpack.c.l.b16 %v1001
    %v2422 = vunpack.c.h.b16 %v1001
    %v2423 = vunpack.c.l.b16 %v1002
    %v2424 = vunpack.c.h.b16 %v1002
    %v2425 = vunpack.c.l.b16 %v1003
    %v2426 = vunpack.c.h.b16 %v1003
    %v2427 = vunpack.c.l.b16 %v1004
    %v2428 = vunpack.c.h.b16 %v1004
    %v2429 = vunpack.c.l.b16 %v1005
    %v2430 = vunpack.c.h.b16 %v1005
    %v2431 = vunpack.c.l.b16 %v1006
    %v2432 = vunpack.c.h.b16 %v1006
    %v2433 = vunpack.c.l.b16 %v1007
    %v2434 = vunpack.c.h.b16 %v1007
    %v2435 = vunpack.c.l.b16 %v1008
    %v2436 = vunpack.c.h.b16 %v1008
    %v2437 = vunpack.c.l.b16 %v1009
    %v2438 = vunpack.c.h.b16 %v1009
    %v2439 = vunpack.c.l.b16 %v1010
    %v2440 = vunpack.c.h.b16 %v1010
    %v2441 = vunpack.c.l.b16 %v1011
    %v2442 = vunpack.c.h.b16 %v1011
    %v2443 = vunpack.c.l.b16 %v1012
    %v2444 = vunpack.c.h.b16 %v1012
    %v2445 = vunpack.c.l.b16 %v1013
    %v2446 = vunpack.c.h.b16 %v1013
    %v2447 = vunpack.c.l.b16 %v1014
    %v2448 = vunpack.c.h.b16 %v1014
    %v2449 = vunpack.c.l.b16 %v1015
    %v2450 = vunpack.c.h.b16 %v1015
    %v2451 = vunpack.c.l.b16 %v1016
    %v2452 = vunpack.c.h.b16 %v1016
    %v2453 = vunpack.c.l.b16 %v1017
    %v2454 = vunpack.c.h.b16 %v1017
    %v2455 = vunpack.c.l.b16 %v1018
    %v2456 = vunpack.c.h.b16 %v1018
    %v2457 = vunpack.c.l.b16 %v1019
    %v2458 = vunpack.c.h.b16 %v1019
    %v2459 = vunpack.c.l.b16 %v1020
    %v2460 = vunpack.c.h.b16 %v1020
    %v2461 = vunpack.c.l.b16 %v1021
    %v2462 = vunpack.c.h.b16 %v1021
    %v2463 = vunpack.c.l.b16 %v1022
    %v2464 = vunpack.c.h.b16 %v1022
    %v2465 = vunpack.c.l.b16 %v1023
    %v2466 = vunpack.c.h.b16 %v1023
    %v2467 = vunpack.c.l.b16 %v1024
    %v2468 = vunpack.c.h.b16 %v1024
    %v2469 = vunpack.c.l.b16 %v1025
    %v2470 = vunpack.c.h.b16 %v1025
    %v2471 = vunpack.c.l.b16 %v1026
    %v2472 = vunpack.c.h.b16 %v1026
    %v2473 = vunpack.c.l.b16 %v1027
    %v2474 = vunpack.c.h.b16 %v1027
    %v2475 = vunpack.c.l.b16 %v1028
    %v2476 = vunpack.c.h.b16 %v1028
    %v2477 = vunpack.c.l.b16 %v1029
    %v2478 = vunpack.c.h.b16 %v1029
    %v2479 = vunpack.c.l.b16 %v1030
    %v2480 = vunpack.c.h.b16 %v1030
    %v2481 = vunpack.c.l.b16 %v1031
    %v2482 = vunpack.c.h.b16 %v1031
    %v2483 = vunpack.c.l.b16 %v1032
    %v2484 = vunpack.c.h.b16 %v1032
    %v2485 = vunpack.c.l.b16 %v1033
    %v2486 = vunpack.c.h.b16 %v1033
    %v2487 = vunpack.c.l.b16 %v1034
    %v2488 = vunpack.c.h.b16 %v1034
    %v2489 = vunpack.c.l.b16 %v1035
    %v2490 = vunpack.c.h.b16 %v1035
    %v2491 = vunpack.c.l.b16 %v1036
    %v2492 = vunpack.c.h.b16 %v1036
    %v2493 = vunpack.c.l.b16 %v1037
    %v2494 = vunpack.c.h.b16 %v1037
    %v2495 = vunpack.c.l.b16 %v1038
    %v2496 = vunpack.c.h.b16 %v1038
    %v2497 = vunpack.c.l.b16 %v1039
    %v2498 = vunpack.c.h.b16 %v1039
    %v2499 = vunpack.c.l.b16 %v1040
    %v2500 = vunpack.c.h.b16 %v1040
    %v2501 = vunpack.c.l.b16 %v1041
    %v2502 = vunpack.c.h.b16 %v1041
    %v2503 = vunpack.c.l.b16 %v1042
    %v2504 = vunpack.c.h.b16 %v1042
    %v2505 = vunpack.c.l.b16 %v1043
    %v2506 = vunpack.c.h.b16 %v1043
    %v2507 = vunpack.c.l.b16 %v1044
    %v2508 = vunpack.c.h.b16 %v1044
    %v2509 = vunpack.c.l.b16 %v1045
    %v2510 = vunpack.c.h.b16 %v1045
    %v2511 = vunpack.c.l.b16 %v1046
    %v2512 = vunpack.c.h.b16 %v1046
    %v2513 = vunpack.c.l.b16 %v1047
    %v2514 = vunpack.c.h.b16 %v1047
    %v2515 = vunpack.c.l.b16 %v1048
    %v2516 = vunpack.c.h.b16 %v1048
    %v2517 = vunpack.c.l.b16 %v1049
    %v2518 = vunpack.c.h.b16 %v1049
    %v2519 = vunpack.c.l.b16 %v1050
    %v2520 = vunpack.c.h.b16 %v1050
    %v2521 = vunpack.c.l.b16 %v1051
    %v2522 = vunpack.c.h.b16 %v1051
    %v2523 = vunpack.c.l.b16 %v1052
    %v2524 = vunpack.c.h.b16 %v1052
    %v2525 = vunpack.c.l.b16 %v1053
    %v2526 = vunpack.c.h.b16 %v1053
    %v2527 = vunpack.c.l.b16 %v1054
    %v2528 = vunpack.c.h.b16 %v1054
    %v2529 = vunpack.c.l.b16 %v1055
    %v2530 = vunpack.c.h.b16 %v1055
    %v2531 = vunpack.c.l.b16 %v1056
    %v2532 = vunpack.c.h.b16 %v1056
    %v2533 = vunpack.c.l.b16 %v1057
    %v2534 = vunpack.c.h.b16 %v1057
    %v2535 = vunpack.c.l.b16 %v1058
    %v2536 = vunpack.c.h.b16 %v1058
    %v2537 = vunpack.c.l.b16 %v1059
    %v2538 = vunpack.c.h.b16 %v1059
    %v2539 = vunpack.c.l.b16 %v1060
    %v2540 = vunpack.c.h.b16 %v1060
    %v2541 = vunpack.c.l.b16 %v1061
    %v2542 = vunpack.c.h.b16 %v1061
    %v2543 = vunpack.c.l.b16 %v1062
    %v2544 = vunpack.c.h.b16 %v1062
    %v2545 = vunpack.c.l.b16 %v1063
    %v2546 = vunpack.c.h.b16 %v1063
    %v2547 = vunpack.c.l.b16 %v1064
    %v2548 = vunpack.c.h.b16 %v1064
    %v2549 = vunpack.c.l.b16 %v1065
    %v2550 = vunpack.c.h.b16 %v1065
    %v2551 = vunpack.c.l.b16 %v1066
    %v2552 = vunpack.c.h.b16 %v1066
    %v2553 = vunpack.c.l.b16 %v1067
    %v2554 = vunpack.c.h.b16 %v1067
    %v2555 = vunpack.c.l.b16 %v1068
    %v2556 = vunpack.c.h.b16 %v1068
    %v2557 = vunpack.c.l.b16 %v1069
    %v2558 = vunpack.c.h.b16 %v1069
    %v2559 = vunpack.c.l.b16 %v1070
    %v2560 = vunpack.c.h.b16 %v1070
    %v2561 = vunpack.c.l.b16 %v1071
    %v2562 = vunpack.c.h.b16 %v1071
    %v2563 = vunpack.c.l.b16 %v1072
    %v2564 = vunpack.c.h.b16 %v1072
    %v2565 = vunpack.c.l.b16 %v1073
    %v2566 = vunpack.c.h.b16 %v1073
    %v2567 = vunpack.c.l.b16 %v1074
    %v2568 = vunpack.c.h.b16 %v1074
    %v2569 = vunpack.c.l.b16 %v1075
    %v2570 = vunpack.c.h.b16 %v1075
    %v2571 = vunpack.c.l.b16 %v1076
    %v2572 = vunpack.c.h.b16 %v1076
    %v2573 = vunpack.c.l.b16 %v1077
    %v2574 = vunpack.c.h.b16 %v1077
    %v2575 = vunpack.c.l.b16 %v1078
    %v2576 = vunpack.c.h.b16 %v1078
    %v2577 = vunpack.c.l.b16 %v1079
    %v2578 = vunpack.c.h.b16 %v1079
    %v2579 = vunpack.c.l.b16 %v1080
    %v2580 = vunpack.c.h.b16 %v1080
    %v2581 = vunpack.c.l.b16 %v1081
    %v2582 = vunpack.c.h.b16 %v1081
    %v2583 = vunpack.c.l.b16 %v1082
    %v2584 = vunpack.c.h.b16 %v1082
    %v2585 = vunpack.c.l.b16 %v1083
    %v2586 = vunpack.c.h.b16 %v1083
    %v2587 = vunpack.c.l.b16 %v1084
    %v2588 = vunpack.c.h.b16 %v1084
    %v2589 = vunpack.c.l.b16 %v1085
    %v2590 = vunpack.c.h.b16 %v1085
    %v2591 = vunpack.c.l.b16 %v1086
    %v2592 = vunpack.c.h.b16 %v1086
    %v2593 = vunpack.c.l.b16 %v1087
    %v2594 = vunpack.c.h.b16 %v1087
    %v2595 = vunpack.c.l.b16 %v1088
    %v2596 = vunpack.c.h.b16 %v1088
    %v2597 = vunpack.c.l.b16 %v1089
    %v2598 = vunpack.c.h.b16 %v1089
    %v2599 = vunpack.c.l.b16 %v1090
    %v2600 = vunpack.c.h.b16 %v1090
    %v2601 = vunpack.c.l.b16 %v1091
    %v2602 = vunpack.c.h.b16 %v1091
    %v2603 = vunpack.c.l.b16 %v1092
    %v2604 = vunpack.c.h.b16 %v1092
    %v2605 = vunpack.c.l.b16 %v1093
    %v2606 = vunpack.c.h.b16 %v1093
    %v2607 = vunpack.c.l.b16 %v1094
    %v2608 = vunpack.c.h.b16 %v1094
    %v2609 = vunpack.c.l.b16 %v1095
    %v2610 = vunpack.c.h.b16 %v1095
    %v2611 = vunpack.c.l.b16 %v1096
    %v2612 = vunpack.c.h.b16 %v1096
    %v2613 = vunpack.c.l.b16 %v1097
    %v2614 = vunpack.c.h.b16 %v1097
    %v2615 = vunpack.c.l.b16 %v1098
    %v2616 = vunpack.c.h.b16 %v1098
    %v2617 = vunpack.c.l.b16 %v1099
    %v2618 = vunpack.c.h.b16 %v1099
    %v2619 = vunpack.c.l.b16 %v1100
    %v2620 = vunpack.c.h.b16 %v1100
    %v2621 = vunpack.c.l.b16 %v1101
    %v2622 = vunpack.c.h.b16 %v1101
    %v2623 = vunpack.c.l.b16 %v1102
    %v2624 = vunpack.c.h.b16 %v1102
    %v2625 = vunpack.c.l.b16 %v1103
    %v2626 = vunpack.c.h.b16 %v1103
    %v2627 = vunpack.c.l.b16 %v1104
    %v2628 = vunpack.c.h.b16 %v1104
    %v2629 = vunpack.c.l.b16 %v1105
    %v2630 = vunpack.c.h.b16 %v1105
    %v2631 = vunpack.c.l.b16 %v1106
    %v2632 = vunpack.c.h.b16 %v1106
    %v2633 = vunpack.c.l.b16 %v1107
    %v2634 = vunpack.c.h.b16 %v1107
    %v2635 = vunpack.c.l.b16 %v1108
    %v2636 = vunpack.c.h.b16 %v1108
    %v2637 = vunpack.c.l.b16 %v1109
    %v2638 = vunpack.c.h.b16 %v1109
    %v2639 = vunpack.c.l.b16 %v1110
    %v2640 = vunpack.c.h.b16 %v1110
    %v2641 = vunpack.c.l.b16 %v1111
    %v2642 = vunpack.c.h.b16 %v1111
    %v2643 = vunpack.c.l.b16 %v1112
    %v2644 = vunpack.c.h.b16 %v1112
    %v2645 = vunpack.c.l.b16 %v1113
    %v2646 = vunpack.c.h.b16 %v1113
    %v2647 = vunpack.c.l.b16 %v1114
    %v2648 = vunpack.c.h.b16 %v1114
    %v2649 = vunpack.c.l.b16 %v1115
    %v2650 = vunpack.c.h.b16 %v1115
    %v2651 = vunpack.c.l.b16 %v1116
    %v2652 = vunpack.c.h.b16 %v1116
    %v2653 = vunpack.c.l.b16 %v1117
    %v2654 = vunpack.c.h.b16 %v1117
    %v2655 = vunpack.c.l.b16 %v1118
    %v2656 = vunpack.c.h.b16 %v1118
    %v2657 = vunpack.c.l.b16 %v1119
    %v2658 = vunpack.c.h.b16 %v1119
    %v2659 = vunpack.c.l.b16 %v1120
    %v2660 = vunpack.c.h.b16 %v1120
    %v2661 = vunpack.c.l.b16 %v1121
    %v2662 = vunpack.c.h.b16 %v1121
    %v2663 = vunpack.c.l.b16 %v1122
    %v2664 = vunpack.c.h.b16 %v1122
    %v2665 = vunpack.c.l.b16 %v1123
    %v2666 = vunpack.c.h.b16 %v1123
    %v2667 = vunpack.c.l.b16 %v1124
    %v2668 = vunpack.c.h.b16 %v1124
    %v2669 = vunpack.c.l.b16 %v1125
    %v2670 = vunpack.c.h.b16 %v1125
    %v2671 = vunpack.c.l.b16 %v1126
    %v2672 = vunpack.c.h.b16 %v1126
    %v2673 = vunpack.c.l.b16 %v1127
    %v2674 = vunpack.c.h.b16 %v1127
    %v2675 = vunpack.c.l.b16 %v1128
    %v2676 = vunpack.c.h.b16 %v1128
    %v2677 = vunpack.c.l.b16 %v1129
    %v2678 = vunpack.c.h.b16 %v1129
    %v2679 = vunpack.c.l.b16 %v1130
    %v2680 = vunpack.c.h.b16 %v1130
    %v2681 = vunpack.c.l.b16 %v1131
    %v2682 = vunpack.c.h.b16 %v1131
    %v2683 = vunpack.c.l.b16 %v1132
    %v2684 = vunpack.c.h.b16 %v1132
    %v2685 = vunpack.c.l.b16 %v1133
    %v2686 = vunpack.c.h.b16 %v1133
    %v2687 = vunpack.c.l.b16 %v1134
    %v2688 = vunpack.c.h.b16 %v1134
    %v2689 = vunpack.c.l.b16 %v1135
    %v2690 = vunpack.c.h.b16 %v1135
    %v2691 = vunpack.c.l.b16 %v1136
    %v2692 = vunpack.c.h.b16 %v1136
    %v2693 = vunpack.c.l.b16 %v1137
    %v2694 = vunpack.c.h.b16 %v1137
    %v2695 = vunpack.c.l.b16 %v1138
    %v2696 = vunpack.c.h.b16 %v1138
    %v2697 = vunpack.c.l.b16 %v1139
    %v2698 = vunpack.c.h.b16 %v1139
    %v2699 = vunpack.c.l.b16 %v1140
    %v2700 = vunpack.c.h.b16 %v1140
    %v2701 = vunpack.c.l.b16 %v1141
    %v2702 = vunpack.c.h.b16 %v1141
    %v2703 = vunpack.c.l.b16 %v1142
    %v2704 = vunpack.c.h.b16 %v1142
    %v2705 = vunpack.c.l.b16 %v1143
    %v2706 = vunpack.c.h.b16 %v1143
    %v2707 = vunpack.c.l.b16 %v1144
    %v2708 = vunpack.c.h.b16 %v1144
    %v2709 = vunpack.c.l.b16 %v1145
    %v2710 = vunpack.c.h.b16 %v1145
    %v2711 = vunpack.c.l.b16 %v1146
    %v2712 = vunpack.c.h.b16 %v1146
    %v2713 = vunpack.c.l.b16 %v1147
    %v2714 = vunpack.c.h.b16 %v1147
    %v2715 = vunpack.c.l.b16 %v1148
    %v2716 = vunpack.c.h.b16 %v1148
    %v2717 = vunpack.c.l.b16 %v1149
    %v2718 = vunpack.c.h.b16 %v1149
    %v2719 = vunpack.c.l.b16 %v1150
    %v2720 = vunpack.c.h.b16 %v1150
    %v2721 = vunpack.c.l.b16 %v1151
    %v2722 = vunpack.c.h.b16 %v1151
    %v2723 = vunpack.c.l.b16 %v1152
    %v2724 = vunpack.c.h.b16 %v1152
    %v2725 = vunpack.c.l.b16 %v1153
    %v2726 = vunpack.c.h.b16 %v1153
    %v2727 = vunpack.c.l.b16 %v1154
    %v2728 = vunpack.c.h.b16 %v1154
    %v2729 = vunpack.c.l.b16 %v1155
    %v2730 = vunpack.c.h.b16 %v1155
    %v2731 = vunpack.c.l.b16 %v1156
    %v2732 = vunpack.c.h.b16 %v1156
    %v2733 = vunpack.c.l.b16 %v1157
    %v2734 = vunpack.c.h.b16 %v1157
    %v2735 = vunpack.c.l.b16 %v1158
    %v2736 = vunpack.c.h.b16 %v1158
    %v2737 = vpack.c.b16 %v1721, %v1713
    %v2738 = vpack.c.b16 %v1722, %v1714
    %v2739 = vpack.c.b16 %v1723, %v1715
    %v2740 = vpack.c.b16 %v1724, %v1716
    %v2741 = vpack.c.b16 %v1725, %v1717
    %v2742 = vpack.c.b16 %v1726, %v1718
    %v2743 = vpack.c.b16 %v1727, %v1719
    %v2744 = vpack.c.b16 %v1728, %v1720
    %v2745 = vpack.c.b16 %v1737, %v1729
    %v2746 = vpack.c.b16 %v1738, %v1730
    %v2747 = vpack.c.b16 %v1739, %v1731
    %v2748 = vpack.c.b16 %v1740, %v1732
    %v2749 = vpack.c.b16 %v1741, %v1733
    %v2750 = vpack.c.b16 %v1742, %v1734
    %v2751 = vpack.c.b16 %v1743, %v1735
    %v2752 = vpack.c.b16 %v1744, %v1736
    %v2753 = vpack.c.b16 %v1753, %v1745
    %v2754 = vpack.c.b16 %v1754, %v1746
    %v2755 = vpack.c.b16 %v1755, %v1747
    %v2756 = vpack.c.b16 %v1756, %v1748
    %v2757 = vpack.c.b16 %v1757, %v1749
    %v2758 = vpack.c.b16 %v1758, %v1750
    %v2759 = vpack.c.b16 %v1759, %v1751
    %v2760 = vpack.c.b16 %v1760, %v1752
    %v2761 = vpack.c.b16 %v1769, %v1761
    %v2762 = vpack.c.b16 %v1770, %v1762
    %v2763 = vpack.c.b16 %v1771, %v1763
    %v2764 = vpack.c.b16 %v1772, %v1764
    %v2765 = vpack.c.b16 %v1773, %v1765
    %v2766 = vpack.c.b16 %v1774, %v1766
    %v2767 = vpack.c.b16 %v1775, %v1767
    %v2768 = vpack.c.b16 %v1776, %v1768
    %v2769 = vpack.c.b16 %v1785, %v1777
    %v2770 = vpack.c.b16 %v1786, %v1778
    %v2771 = vpack.c.b16 %v1787, %v1779
    %v2772 = vpack.c.b16 %v1788, %v1780
    %v2773 = vpack.c.b16 %v1789, %v1781
    %v2774 = vpack.c.b16 %v1790, %v1782
    %v2775 = vpack.c.b16 %v1791, %v1783
    %v2776 = vpack.c.b16 %v1792, %v1784
    %v2777 = vpack.c.b16 %v1801, %v1793
    %v2778 = vpack.c.b16 %v1802, %v1794
    %v2779 = vpack.c.b16 %v1803, %v1795
    %v2780 = vpack.c.b16 %v1804, %v1796
    %v2781 = vpack.c.b16 %v1805, %v1797
    %v2782 = vpack.c.b16 %v1806, %v1798
    %v2783 = vpack.c.b16 %v1807, %v1799
    %v2784 = vpack.c.b16 %v1808, %v1800
    %v2785 = vpack.c.b16 %v1817, %v1809
    %v2786 = vpack.c.b16 %v1818, %v1810
    %v2787 = vpack.c.b16 %v1819, %v1811
    %v2788 = vpack.c.b16 %v1820, %v1812
    %v2789 = vpack.c.b16 %v1821, %v1813
    %v2790 = vpack.c.b16 %v1822, %v1814
    %v2791 = vpack.c.b16 %v1823, %v1815
    %v2792 = vpack.c.b16 %v1824, %v1816
    %v2793 = vpack.c.b16 %v1833, %v1825
    %v2794 = vpack.c.b16 %v1834, %v1826
    %v2795 = vpack.c.b16 %v1835, %v1827
    %v2796 = vpack.c.b16 %v1836, %v1828
    %v2797 = vpack.c.b16 %v1837, %v1829
    %v2798 = vpack.c.b16 %v1838, %v1830
    %v2799 = vpack.c.b16 %v1839, %v1831
    %v2800 = vpack.c.b16 %v1840, %v1832
    %v2801 = vpack.c.b16 %v1849, %v1841
    %v2802 = vpack.c.b16 %v1850, %v1842
    %v2803 = vpack.c.b16 %v1851, %v1843
    %v2804 = vpack.c.b16 %v1852, %v1844
    %v2805 = vpack.c.b16 %v1853, %v1845
    %v2806 = vpack.c.b16 %v1854, %v1846
    %v2807 = vpack.c.b16 %v1855, %v1847
    %v2808 = vpack.c.b16 %v1856, %v1848
    %v2809 = vpack.c.b16 %v1865, %v1857
    %v2810 = vpack.c.b16 %v1866, %v1858
    %v2811 = vpack.c.b16 %v1867, %v1859
    %v2812 = vpack.c.b16 %v1868, %v1860
    %v2813 = vpack.c.b16 %v1869, %v1861
    %v2814 = vpack.c.b16 %v1870, %v1862
    %v2815 = vpack.c.b16 %v1871, %v1863
    %v2816 = vpack.c.b16 %v1872, %v1864
    %v2817 = vpack.c.b16 %v1881, %v1873
    %v2818 = vpack.c.b16 %v1882, %v1874
    %v2819 = vpack.c.b16 %v1883, %v1875
    %v2820 = vpack.c.b16 %v1884, %v1876
    %v2821 = vpack.c.b16 %v1885, %v1877
    %v2822 = vpack.c.b16 %v1886, %v1878
    %v2823 = vpack.c.b16 %v1887, %v1879
    %v2824 = vpack.c.b16 %v1888, %v1880
    %v2825 = vpack.c.b16 %v1897, %v1889
    %v2826 = vpack.c.b16 %v1898, %v1890
    %v2827 = vpack.c.b16 %v1899, %v1891
    %v2828 = vpack.c.b16 %v1900, %v1892
    %v2829 = vpack.c.b16 %v1901, %v1893
    %v2830 = vpack.c.b16 %v1902, %v1894
    %v2831 = vpack.c.b16 %v1903, %v1895
    %v2832 = vpack.c.b16 %v1904, %v1896
    %v2833 = vpack.c.b16 %v1913, %v1905
    %v2834 = vpack.c.b16 %v1914, %v1906
    %v2835 = vpack.c.b16 %v1915, %v1907
    %v2836 = vpack.c.b16 %v1916, %v1908
    %v2837 = vpack.c.b16 %v1917, %v1909
    %v2838 = vpack.c.b16 %v1918, %v1910
    %v2839 = vpack.c.b16 %v1919, %v1911
    %v2840 = vpack.c.b16 %v1920, %v1912
    %v2841 = vpack.c.b16 %v1929, %v1921
    %v2842 = vpack.c.b16 %v1930, %v1922
    %v2843 = vpack.c.b16 %v1931, %v1923
    %v2844 = vpack.c.b16 %v1932, %v1924
    %v2845 = vpack.c.b16 %v1933, %v1925
    %v2846 = vpack.c.b16 %v1934, %v1926
    %v2847 = vpack.c.b16 %v1935, %v1927
    %v2848 = vpack.c.b16 %v1936, %v1928
    %v2849 = vpack.c.b16 %v1945, %v1937
    %v2850 = vpack.c.b16 %v1946, %v1938
    %v2851 = vpack.c.b16 %v1947, %v1939
    %v2852 = vpack.c.b16 %v1948, %v1940
    %v2853 = vpack.c.b16 %v1949, %v1941
    %v2854 = vpack.c.b16 %v1950, %v1942
    %v2855 = vpack.c.b16 %v1951, %v1943
    %v2856 = vpack.c.b16 %v1952, %v1944
    %v2857 = vpack.c.b16 %v1961, %v1953
    %v2858 = vpack.c.b16 %v1962, %v1954
    %v2859 = vpack.c.b16 %v1963, %v1955
    %v2860 = vpack.c.b16 %v1964, %v1956
    %v2861 = vpack.c.b16 %v1965, %v1957
    %v2862 = vpack.c.b16 %v1966, %v1958
    %v2863 = vpack.c.b16 %v1967, %v1959
    %v2864 = vpack.c.b16 %v1968, %v1960
    %v2865 = vpack.c.b16 %v1977, %v1969
    %v2866 = vpack.c.b16 %v1978, %v1970
    %v2867 = vpack.c.b16 %v1979, %v1971
    %v2868 = vpack.c.b16 %v1980, %v1972
    %v2869 = vpack.c.b16 %v1981, %v1973
    %v2870 = vpack.c.b16 %v1982, %v1974
    %v2871 = vpack.c.b16 %v1983, %v1975
    %v2872 = vpack.c.b16 %v1984, %v1976
    %v2873 = vpack.c.b16 %v1993, %v1985
    %v2874 = vpack.c.b16 %v1994, %v1986
    %v2875 = vpack.c.b16 %v1995, %v1987
    %v2876 = vpack.c.b16 %v1996, %v1988
    %v2877 = vpack.c.b16 %v1997, %v1989
    %v2878 = vpack.c.b16 %v1998, %v1990
    %v2879 = vpack.c.b16 %v1999, %v1991
    %v2880 = vpack.c.b16 %v2000, %v1992
    %v2881 = vpack.c.b16 %v2009, %v2001
    %v2882 = vpack.c.b16 %v2010, %v2002
    %v2883 = vpack.c.b16 %v2011, %v2003
    %v2884 = vpack.c.b16 %v2012, %v2004
    %v2885 = vpack.c.b16 %v2013, %v2005
    %v2886 = vpack.c.b16 %v2014, %v2006
    %v2887 = vpack.c.b16 %v2015, %v2007
    %v2888 = vpack.c.b16 %v2016, %v2008
    %v2889 = vpack.c.b16 %v2025, %v2017
    %v2890 = vpack.c.b16 %v2026, %v2018
    %v2891 = vpack.c.b16 %v2027, %v2019
    %v2892 = vpack.c.b16 %v2028, %v2020
    %v2893 = vpack.c.b16 %v2029, %v2021
    %v2894 = vpack.c.b16 %v2030, %v2022
    %v2895 = vpack.c.b16 %v2031, %v2023
    %v2896 = vpack.c.b16 %v2032, %v2024
    %v2897 = vpack.c.b16 %v2041, %v2033
    %v2898 = vpack.c.b16 %v2042, %v2034
    %v2899 = vpack.c.b16 %v2043, %v2035
    %v2900 = vpack.c.b16 %v2044, %v2036
    %v2901 = vpack.c.b16 %v2045, %v2037
    %v2902 = vpack.c.b16 %v2046, %v2038
    %v2903 = vpack.c.b16 %v2047, %v2039
    %v2904 = vpack.c.b16 %v2048, %v2040
    %v2905 = vpack.c.b16 %v2057, %v2049
    %v2906 = vpack.c.b16 %v2058, %v2050
    %v2907 = vpack.c.b16 %v2059, %v2051
    %v2908 = vpack.c.b16 %v2060, %v2052
    %v2909 = vpack.c.b16 %v2061, %v2053
    %v2910 = vpack.c.b16 %v2062, %v2054
    %v2911 = vpack.c.b16 %v2063, %v2055
    %v2912 = vpack.c.b16 %v2064, %v2056
    %v2913 = vpack.c.b16 %v2073, %v2065
    %v2914 = vpack.c.b16 %v2074, %v2066
    %v2915 = vpack.c.b16 %v2075, %v2067
    %v2916 = vpack.c.b16 %v2076, %v2068
    %v2917 = vpack.c.b16 %v2077, %v2069
    %v2918 = vpack.c.b16 %v2078, %v2070
    %v2919 = vpack.c.b16 %v2079, %v2071
    %v2920 = vpack.c.b16 %v2080, %v2072
    %v2921 = vpack.c.b16 %v2089, %v2081
    %v2922 = vpack.c.b16 %v2090, %v2082
    %v2923 = vpack.c.b16 %v2091, %v2083
    %v2924 = vpack.c.b16 %v2092, %v2084
    %v2925 = vpack.c.b16 %v2093, %v2085
    %v2926 = vpack.c.b16 %v2094, %v2086
    %v2927 = vpack.c.b16 %v2095, %v2087
    %v2928 = vpack.c.b16 %v2096, %v2088
    %v2929 = vpack.c.b16 %v2105, %v2097
    %v2930 = vpack.c.b16 %v2106, %v2098
    %v2931 = vpack.c.b16 %v2107, %v2099
    %v2932 = vpack.c.b16 %v2108, %v2100
    %v2933 = vpack.c.b16 %v2109, %v2101
    %v2934 = vpack.c.b16 %v2110, %v2102
    %v2935 = vpack.c.b16 %v2111, %v2103
    %v2936 = vpack.c.b16 %v2112, %v2104
    %v2937 = vpack.c.b16 %v2121, %v2113
    %v2938 = vpack.c.b16 %v2122, %v2114
    %v2939 = vpack.c.b16 %v2123, %v2115
    %v2940 = vpack.c.b16 %v2124, %v2116
    %v2941 = vpack.c.b16 %v2125, %v2117
    %v2942 = vpack.c.b16 %v2126, %v2118
    %v2943 = vpack.c.b16 %v2127, %v2119
    %v2944 = vpack.c.b16 %v2128, %v2120
    %v2945 = vpack.c.b16 %v2137, %v2129
    %v2946 = vpack.c.b16 %v2138, %v2130
    %v2947 = vpack.c.b16 %v2139, %v2131
    %v2948 = vpack.c.b16 %v2140, %v2132
    %v2949 = vpack.c.b16 %v2141, %v2133
    %v2950 = vpack.c.b16 %v2142, %v2134
    %v2951 = vpack.c.b16 %v2143, %v2135
    %v2952 = vpack.c.b16 %v2144, %v2136
    %v2953 = vpack.c.b16 %v2153, %v2145
    %v2954 = vpack.c.b16 %v2154, %v2146
    %v2955 = vpack.c.b16 %v2155, %v2147
    %v2956 = vpack.c.b16 %v2156, %v2148
    %v2957 = vpack.c.b16 %v2157, %v2149
    %v2958 = vpack.c.b16 %v2158, %v2150
    %v2959 = vpack.c.b16 %v2159, %v2151
    %v2960 = vpack.c.b16 %v2160, %v2152
    %v2961 = vpack.c.b16 %v2169, %v2161
    %v2962 = vpack.c.b16 %v2170, %v2162
    %v2963 = vpack.c.b16 %v2171, %v2163
    %v2964 = vpack.c.b16 %v2172, %v2164
    %v2965 = vpack.c.b16 %v2173, %v2165
    %v2966 = vpack.c.b16 %v2174, %v2166
    %v2967 = vpack.c.b16 %v2175, %v2167
    %v2968 = vpack.c.b16 %v2176, %v2168
    %v2969 = vpack.c.b16 %v2185, %v2177
    %v2970 = vpack.c.b16 %v2186, %v2178
    %v2971 = vpack.c.b16 %v2187, %v2179
    %v2972 = vpack.c.b16 %v2188, %v2180
    %v2973 = vpack.c.b16 %v2189, %v2181
    %v2974 = vpack.c.b16 %v2190, %v2182
    %v2975 = vpack.c.b16 %v2191, %v2183
    %v2976 = vpack.c.b16 %v2192, %v2184
    %v2977 = vpack.c.b16 %v2201, %v2193
    %v2978 = vpack.c.b16 %v2202, %v2194
    %v2979 = vpack.c.b16 %v2203, %v2195
    %v2980 = vpack.c.b16 %v2204, %v2196
    %v2981 = vpack.c.b16 %v2205, %v2197
    %v2982 = vpack.c.b16 %v2206, %v2198
    %v2983 = vpack.c.b16 %v2207, %v2199
    %v2984 = vpack.c.b16 %v2208, %v2200
    %v2985 = vpack.c.b16 %v2217, %v2209
    %v2986 = vpack.c.b16 %v2218, %v2210
    %v2987 = vpack.c.b16 %v2219, %v2211
    %v2988 = vpack.c.b16 %v2220, %v2212
    %v2989 = vpack.c.b16 %v2221, %v2213
    %v2990 = vpack.c.b16 %v2222, %v2214
    %v2991 = vpack.c.b16 %v2223, %v2215
    %v2992 = vpack.c.b16 %v2224, %v2216
    %v2993 = vpack.c.b16 %v2233, %v2225
    %v2994 = vpack.c.b16 %v2234, %v2226
    %v2995 = vpack.c.b16 %v2235, %v2227
    %v2996 = vpack.c.b16 %v2236, %v2228
    %v2997 = vpack.c.b16 %v2237, %v2229
    %v2998 = vpack.c.b16 %v2238, %v2230
    %v2999 = vpack.c.b16 %v2239, %v2231
    %v3000 = vpack.c.b16 %v2240, %v2232
    %v3001 = vpack.c.b16 %v2249, %v2241
    %v3002 = vpack.c.b16 %v2250, %v2242
    %v3003 = vpack.c.b16 %v2251, %v2243
    %v3004 = vpack.c.b16 %v2252, %v2244
    %v3005 = vpack.c.b16 %v2253, %v2245
    %v3006 = vpack.c.b16 %v2254, %v2246
    %v3007 = vpack.c.b16 %v2255, %v2247
    %v3008 = vpack.c.b16 %v2256, %v2248
    %v3009 = vpack.c.b16 %v2265, %v2257
    %v3010 = vpack.c.b16 %v2266, %v2258
    %v3011 = vpack.c.b16 %v2267, %v2259
    %v3012 = vpack.c.b16 %v2268, %v2260
    %v3013 = vpack.c.b16 %v2269, %v2261
    %v3014 = vpack.c.b16 %v2270, %v2262
    %v3015 = vpack.c.b16 %v2271, %v2263
    %v3016 = vpack.c.b16 %v2272, %v2264
    %v3017 = vpack.c.b16 %v2281, %v2273
    %v3018 = vpack.c.b16 %v2282, %v2274
    %v3019 = vpack.c.b16 %v2283, %v2275
    %v3020 = vpack.c.b16 %v2284, %v2276
    %v3021 = vpack.c.b16 %v2285, %v2277
    %v3022 = vpack.c.b16 %v2286, %v2278
    %v3023 = vpack.c.b16 %v2287, %v2279
    %v3024 = vpack.c.b16 %v2288, %v2280
    %v3025 = vpack.c.b16 %v2297, %v2289
    %v3026 = vpack.c.b16 %v2298, %v2290
    %v3027 = vpack.c.b16 %v2299, %v2291
    %v3028 = vpack.c.b16 %v2300, %v2292
    %v3029 = vpack.c.b16 %v2301, %v2293
    %v3030 = vpack.c.b16 %v2302, %v2294
    %v3031 = vpack.c.b16 %v2303, %v2295
    %v3032 = vpack.c.b16 %v2304, %v2296
    %v3033 = vpack.c.b16 %v2313, %v2305
    %v3034 = vpack.c.b16 %v2314, %v2306
    %v3035 = vpack.c.b16 %v2315, %v2307
    %v3036 = vpack.c.b16 %v2316, %v2308
    %v3037 = vpack.c.b16 %v2317, %v2309
    %v3038 = vpack.c.b16 %v2318, %v2310
    %v3039 = vpack.c.b16 %v2319, %v2311
    %v3040 = vpack.c.b16 %v2320, %v2312
    %v3041 = vpack.c.b16 %v2329, %v2321
    %v3042 = vpack.c.b16 %v2330, %v2322
    %v3043 = vpack.c.b16 %v2331, %v2323
    %v3044 = vpack.c.b16 %v2332, %v2324
    %v3045 = vpack.c.b16 %v2333, %v2325
    %v3046 = vpack.c.b16 %v2334, %v2326
    %v3047 = vpack.c.b16 %v2335, %v2327
    %v3048 = vpack.c.b16 %v2336, %v2328
    %v3049 = vpack.c.b16 %v2345, %v2337
    %v3050 = vpack.c.b16 %v2346, %v2338
    %v3051 = vpack.c.b16 %v2347, %v2339
    %v3052 = vpack.c.b16 %v2348, %v2340
    %v3053 = vpack.c.b16 %v2349, %v2341
    %v3054 = vpack.c.b16 %v2350, %v2342
    %v3055 = vpack.c.b16 %v2351, %v2343
    %v3056 = vpack.c.b16 %v2352, %v2344
    %v3057 = vpack.c.b16 %v2361, %v2353
    %v3058 = vpack.c.b16 %v2362, %v2354
    %v3059 = vpack.c.b16 %v2363, %v2355
    %v3060 = vpack.c.b16 %v2364, %v2356
    %v3061 = vpack.c.b16 %v2365, %v2357
    %v3062 = vpack.c.b16 %v2366, %v2358
    %v3063 = vpack.c.b16 %v2367, %v2359
    %v3064 = vpack.c.b16 %v2368, %v2360
    %v3065 = vpack.c.b16 %v2377, %v2369
    %v3066 = vpack.c.b16 %v2378, %v2370
    %v3067 = vpack.c.b16 %v2379, %v2371
    %v3068 = vpack.c.b16 %v2380, %v2372
    %v3069 = vpack.c.b16 %v2381, %v2373
    %v3070 = vpack.c.b16 %v2382, %v2374
    %v3071 = vpack.c.b16 %v2383, %v2375
    %v3072 = vpack.c.b16 %v2384, %v2376
    %v3073 = vpack.c.b16 %v2393, %v2385
    %v3074 = vpack.c.b16 %v2394, %v2386
    %v3075 = vpack.c.b16 %v2395, %v2387
    %v3076 = vpack.c.b16 %v2396, %v2388
    %v3077 = vpack.c.b16 %v2397, %v2389
    %v3078 = vpack.c.b16 %v2398, %v2390
    %v3079 = vpack.c.b16 %v2399, %v2391
    %v3080 = vpack.c.b16 %v2400, %v2392
    %v3081 = vpack.c.b16 %v2409, %v2401
    %v3082 = vpack.c.b16 %v2410, %v2402
    %v3083 = vpack.c.b16 %v2411, %v2403
    %v3084 = vpack.c.b16 %v2412, %v2404
    %v3085 = vpack.c.b16 %v2413, %v2405
    %v3086 = vpack.c.b16 %v2414, %v2406
    %v3087 = vpack.c.b16 %v2415, %v2407
    %v3088 = vpack.c.b16 %v2416, %v2408
    %v3089 = vpack.c.b16 %v2425, %v2417
    %v3090 = vpack.c.b16 %v2426, %v2418
    %v3091 = vpack.c.b16 %v2427, %v2419
    %v3092 = vpack.c.b16 %v2428, %v2420
    %v3093 = vpack.c.b16 %v2429, %v2421
    %v3094 = vpack.c.b16 %v2430, %v2422
    %v3095 = vpack.c.b16 %v2431, %v2423
    %v3096 = vpack.c.b16 %v2432, %v2424
    %v3097 = vpack.c.b16 %v2441, %v2433
    %v3098 = vpack.c.b16 %v2442, %v2434
    %v3099 = vpack.c.b16 %v2443, %v2435
    %v3100 = vpack.c.b16 %v2444, %v2436
    %v3101 = vpack.c.b16 %v2445, %v2437
    %v3102 = vpack.c.b16 %v2446, %v2438
    %v3103 = vpack.c.b16 %v2447, %v2439
    %v3104 = vpack.c.b16 %v2448, %v2440
    %v3105 = vpack.c.b16 %v2457, %v2449
    %v3106 = vpack.c.b16 %v2458, %v2450
    %v3107 = vpack.c.b16 %v2459, %v2451
    %v3108 = vpack.c.b16 %v2460, %v2452
    %v3109 = vpack.c.b16 %v2461, %v2453
    %v3110 = vpack.c.b16 %v2462, %v2454
    %v3111 = vpack.c.b16 %v2463, %v2455
    %v3112 = vpack.c.b16 %v2464, %v2456
    %v3113 = vpack.c.b16 %v2473, %v2465
    %v3114 = vpack.c.b16 %v2474, %v2466
    %v3115 = vpack.c.b16 %v2475, %v2467
    %v3116 = vpack.c.b16 %v2476, %v2468
    %v3117 = vpack.c.b16 %v2477, %v2469
    %v3118 = vpack.c.b16 %v2478, %v2470
    %v3119 = vpack.c.b16 %v2479, %v2471
    %v3120 = vpack.c.b16 %v2480, %v2472
    %v3121 = vpack.c.b16 %v2489, %v2481
    %v3122 = vpack.c.b16 %v2490, %v2482
    %v3123 = vpack.c.b16 %v2491, %v2483
    %v3124 = vpack.c.b16 %v2492, %v2484
    %v3125 = vpack.c.b16 %v2493, %v2485
    %v3126 = vpack.c.b16 %v2494, %v2486
    %v3127 = vpack.c.b16 %v2495, %v2487
    %v3128 = vpack.c.b16 %v2496, %v2488
    %v3129 = vpack.c.b16 %v2505, %v2497
    %v3130 = vpack.c.b16 %v2506, %v2498
    %v3131 = vpack.c.b16 %v2507, %v2499
    %v3132 = vpack.c.b16 %v2508, %v2500
    %v3133 = vpack.c.b16 %v2509, %v2501
    %v3134 = vpack.c.b16 %v2510, %v2502
    %v3135 = vpack.c.b16 %v2511, %v2503
    %v3136 = vpack.c.b16 %v2512, %v2504
    %v3137 = vpack.c.b16 %v2521, %v2513
    %v3138 = vpack.c.b16 %v2522, %v2514
    %v3139 = vpack.c.b16 %v2523, %v2515
    %v3140 = vpack.c.b16 %v2524, %v2516
    %v3141 = vpack.c.b16 %v2525, %v2517
    %v3142 = vpack.c.b16 %v2526, %v2518
    %v3143 = vpack.c.b16 %v2527, %v2519
    %v3144 = vpack.c.b16 %v2528, %v2520
    %v3145 = vpack.c.b16 %v2537, %v2529
    %v3146 = vpack.c.b16 %v2538, %v2530
    %v3147 = vpack.c.b16 %v2539, %v2531
    %v3148 = vpack.c.b16 %v2540, %v2532
    %v3149 = vpack.c.b16 %v2541, %v2533
    %v3150 = vpack.c.b16 %v2542, %v2534
    %v3151 = vpack.c.b16 %v2543, %v2535
    %v3152 = vpack.c.b16 %v2544, %v2536
    %v3153 = vpack.c.b16 %v2553, %v2545
    %v3154 = vpack.c.b16 %v2554, %v2546
    %v3155 = vpack.c.b16 %v2555, %v2547
    %v3156 = vpack.c.b16 %v2556, %v2548
    %v3157 = vpack.c.b16 %v2557, %v2549
    %v3158 = vpack.c.b16 %v2558, %v2550
    %v3159 = vpack.c.b16 %v2559, %v2551
    %v3160 = vpack.c.b16 %v2560, %v2552
    %v3161 = vpack.c.b16 %v2569, %v2561
    %v3162 = vpack.c.b16 %v2570, %v2562
    %v3163 = vpack.c.b16 %v2571, %v2563
    %v3164 = vpack.c.b16 %v2572, %v2564
    %v3165 = vpack.c.b16 %v2573, %v2565
    %v3166 = vpack.c.b16 %v2574, %v2566
    %v3167 = vpack.c.b16 %v2575, %v2567
    %v3168 = vpack.c.b16 %v2576, %v2568
    %v3169 = vpack.c.b16 %v2585, %v2577
    %v3170 = vpack.c.b16 %v2586, %v2578
    %v3171 = vpack.c.b16 %v2587, %v2579
    %v3172 = vpack.c.b16 %v2588, %v2580
    %v3173 = vpack.c.b16 %v2589, %v2581
    %v3174 = vpack.c.b16 %v2590, %v2582
    %v3175 = vpack.c.b16 %v2591, %v2583
    %v3176 = vpack.c.b16 %v2592, %v2584
    %v3177 = vpack.c.b16 %v2601, %v2593
    %v3178 = vpack.c.b16 %v2602, %v2594
    %v3179 = vpack.c.b16 %v2603, %v2595
    %v3180 = vpack.c.b16 %v2604, %v2596
    %v3181 = vpack.c.b16 %v2605, %v2597
    %v3182 = vpack.c.b16 %v2606, %v2598
    %v3183 = vpack.c.b16 %v2607, %v2599
    %v3184 = vpack.c.b16 %v2608, %v2600
    %v3185 = vpack.c.b16 %v2617, %v2609
    %v3186 = vpack.c.b16 %v2618, %v2610
    %v3187 = vpack.c.b16 %v2619, %v2611
    %v3188 = vpack.c.b16 %v2620, %v2612
    %v3189 = vpack.c.b16 %v2621, %v2613
    %v3190 = vpack.c.b16 %v2622, %v2614
    %v3191 = vpack.c.b16 %v2623, %v2615
    %v3192 = vpack.c.b16 %v2624, %v2616
    %v3193 = vpack.c.b16 %v2633, %v2625
    %v3194 = vpack.c.b16 %v2634, %v2626
    %v3195 = vpack.c.b16 %v2635, %v2627
    %v3196 = vpack.c.b16 %v2636, %v2628
    %v3197 = vpack.c.b16 %v2637, %v2629
    %v3198 = vpack.c.b16 %v2638, %v2630
    %v3199 = vpack.c.b16 %v2639, %v2631
    %v3200 = vpack.c.b16 %v2640, %v2632
    %v3201 = vpack.c.b16 %v2649, %v2641
    %v3202 = vpack.c.b16 %v2650, %v2642
    %v3203 = vpack.c.b16 %v2651, %v2643
    %v3204 = vpack.c.b16 %v2652, %v2644
    %v3205 = vpack.c.b16 %v2653, %v2645
    %v3206 = vpack.c.b16 %v2654, %v2646
    %v3207 = vpack.c.b16 %v2655, %v2647
    %v3208 = vpack.c.b16 %v2656, %v2648
    %v3209 = vpack.c.b16 %v2665, %v2657
    %v3210 = vpack.c.b16 %v2666, %v2658
    %v3211 = vpack.c.b16 %v2667, %v2659
    %v3212 = vpack.c.b16 %v2668, %v2660
    %v3213 = vpack.c.b16 %v2669, %v2661
    %v3214 = vpack.c.b16 %v2670, %v2662
    %v3215 = vpack.c.b16 %v2671, %v2663
    %v3216 = vpack.c.b16 %v2672, %v2664
    %v3217 = vpack.c.b16 %v2681, %v2673
    %v3218 = vpack.c.b16 %v2682, %v2674
    %v3219 = vpack.c.b16 %v2683, %v2675
    %v3220 = vpack.c.b16 %v2684, %v2676
    %v3221 = vpack.c.b16 %v2685, %v2677
    %v3222 = vpack.c.b16 %v2686, %v2678
    %v3223 = vpack.c.b16 %v2687, %v2679
    %v3224 = vpack.c.b16 %v2688, %v2680
    %v3225 = vpack.c.b16 %v2697, %v2689
    %v3226 = vpack.c.b16 %v2698, %v2690
    %v3227 = vpack.c.b16 %v2699, %v2691
    %v3228 = vpack.c.b16 %v2700, %v2692
    %v3229 = vpack.c.b16 %v2701, %v2693
    %v3230 = vpack.c.b16 %v2702, %v2694
    %v3231 = vpack.c.b16 %v2703, %v2695
    %v3232 = vpack.c.b16 %v2704, %v2696
    %v3233 = vpack.c.b16 %v2713, %v2705
    %v3234 = vpack.c.b16 %v2714, %v2706
    %v3235 = vpack.c.b16 %v2715, %v2707
    %v3236 = vpack.c.b16 %v2716, %v2708
    %v3237 = vpack.c.b16 %v2717, %v2709
    %v3238 = vpack.c.b16 %v2718, %v2710
    %v3239 = vpack.c.b16 %v2719, %v2711
    %v3240 = vpack.c.b16 %v2720, %v2712
    %v3241 = vpack.c.b16 %v2729, %v2721
    %v3242 = vpack.c.b16 %v2730, %v2722
    %v3243 = vpack.c.b16 %v2731, %v2723
    %v3244 = vpack.c.b16 %v2732, %v2724
    %v3245 = vpack.c.b16 %v2733, %v2725
    %v3246 = vpack.c.b16 %v2734, %v2726
    %v3247 = vpack.c.b16 %v2735, %v2727
    %v3248 = vpack.c.b16 %v2736, %v2728
    %3761 = vmatprep.subr.bf16.mxu0 %v2738
    %3762 = vmatpush1.bf16.msra.mxu0 %v2737
    %3763 = vmatprep.subr.bf16.mxu0 %v2746
    %3764 = vmatpush1.bf16.msra.mxu0 %v2745
    %3765 = vmatprep.subr.bf16.mxu0 %v2754
    %3766 = vmatpush1.bf16.msra.mxu0 %v2753
    %3767 = vmatprep.subr.bf16.mxu0 %v2762
    %3768 = vmatpush1.bf16.msra.mxu0 %v2761
    %3769 = vmatprep.subr.bf16.mxu0 %v2770
    %3770 = vmatpush1.bf16.msra.mxu0 %v2769
    %3771 = vmatprep.subr.bf16.mxu0 %v2778
    %3772 = vmatpush1.bf16.msra.mxu0 %v2777
    %3773 = vmatprep.subr.bf16.mxu0 %v2786
    %3774 = vmatpush1.bf16.msra.mxu0 %v2785
    %3775 = vmatprep.subr.bf16.mxu0 %v2794
    %3776 = vmatpush1.bf16.msra.mxu0 %v2793
    %3777 = vmatprep.subr.bf16.mxu0 %v2802
    %3778 = vmatpush1.bf16.msra.mxu0 %v2801
    %3779 = vmatprep.subr.bf16.mxu0 %v2810
    %3780 = vmatpush1.bf16.msra.mxu0 %v2809
    %3781 = vmatprep.subr.bf16.mxu0 %v2818
    %3782 = vmatpush1.bf16.msra.mxu0 %v2817
    %3783 = vmatprep.subr.bf16.mxu0 %v2826
    %3784 = vmatpush1.bf16.msra.mxu0 %v2825
    %3785 = vmatprep.subr.bf16.mxu0 %v2834
    %3786 = vmatpush1.bf16.msra.mxu0 %v2833
    %3787 = vmatprep.subr.bf16.mxu0 %v2842
    %3788 = vmatpush1.bf16.msra.mxu0 %v2841
    %3789 = vmatprep.subr.bf16.mxu0 %v2850
    %3790 = vmatpush1.bf16.msra.mxu0 %v2849
    %3791 = vmatprep.subr.bf16.mxu0 %v2858
    %3792 = vmatpush1.bf16.msra.mxu0 %v2857
    %3793 = vmatprep.mubr.bf16.mxu0 %v640
    %3794 = vmatmul.mubr.bf16.gmra.mrb[0].mxu0 %v639
    %v3795 = vpop.f32.mrb[0].mxu0
    %v3796 = vadd.f32 %v1164, %v3795
    %v3797 = vpop.f32.mrb[0].mxu0
    %v3798 = vadd.f32 %v1168, %v3797
    %v3799 = vpop.f32.mrb[0].mxu0
    %v3800 = vpop.f32.mrb[0].mxu0
    %3801 = vdwg.mxu0
    %3802 = vmatprep.subr.bf16.mxu0 %v2866
    %3803 = vmatpush1.bf16.msra.mxu0 %v2865
    %3804 = vmatprep.subr.bf16.mxu0 %v2874
    %3805 = vmatpush1.bf16.msra.mxu0 %v2873
    %3806 = vmatprep.subr.bf16.mxu0 %v2882
    %3807 = vmatpush1.bf16.msra.mxu0 %v2881
    %3808 = vmatprep.subr.bf16.mxu0 %v2890
    %3809 = vmatpush1.bf16.msra.mxu0 %v2889
    %3810 = vmatprep.subr.bf16.mxu0 %v2898
    %3811 = vmatpush1.bf16.msra.mxu0 %v2897
    %3812 = vmatprep.subr.bf16.mxu0 %v2906
    %3813 = vmatpush1.bf16.msra.mxu0 %v2905
    %3814 = vmatprep.subr.bf16.mxu0 %v2914
    %3815 = vmatpush1.bf16.msra.mxu0 %v2913
    %3816 = vmatprep.subr.bf16.mxu0 %v2922
    %3817 = vmatpush1.bf16.msra.mxu0 %v2921
    %3818 = vmatprep.subr.bf16.mxu0 %v2930
    %3819 = vmatpush1.bf16.msra.mxu0 %v2929
    %3820 = vmatprep.subr.bf16.mxu0 %v2938
    %3821 = vmatpush1.bf16.msra.mxu0 %v2937
    %3822 = vmatprep.subr.bf16.mxu0 %v2946
    %3823 = vmatpush1.bf16.msra.mxu0 %v2945
    %3824 = vmatprep.subr.bf16.mxu0 %v2954
    %3825 = vmatpush1.bf16.msra.mxu0 %v2953
    %3826 = vmatprep.subr.bf16.mxu0 %v2962
    %3827 = vmatpush1.bf16.msra.mxu0 %v2961
    %3828 = vmatprep.subr.bf16.mxu0 %v2970
    %3829 = vmatpush1.bf16.msra.mxu0 %v2969
    %3830 = vmatprep.subr.bf16.mxu0 %v2978
    %3831 = vmatpush1.bf16.msra.mxu0 %v2977
    %3832 = vmatprep.subr.bf16.mxu0 %v2986
    %3833 = vmatpush1.bf16.msra.mxu0 %v2985
    %3834 = vmatprep.mubr.bf16.mxu0 %v642
    %3835 = vmatmul.mubr.bf16.gmra.mrb[0].mxu0 %v641
    %v3836 = vpop.f32.mrb[0].mxu0
    %v3837 = vadd.f32 %v3796, %v3836
    %v3838 = vpop.f32.mrb[0].mxu0
    %v3839 = vadd.f32 %v3798, %v3838
    %v3840 = vpop.f32.mrb[0].mxu0
    %v3841 = vpop.f32.mrb[0].mxu0
    %3842 = vdwg.mxu0
    %3843 = vmatprep.subr.bf16.mxu0 %v2994
    %3844 = vmatpush1.bf16.msra.mxu0 %v2993
    %3845 = vmatprep.subr.bf16.mxu0 %v3002
    %3846 = vmatpush1.bf16.msra.mxu0 %v3001
    %3847 = vmatprep.subr.bf16.mxu0 %v3010
    %3848 = vmatpush1.bf16.msra.mxu0 %v3009
    %3849 = vmatprep.subr.bf16.mxu0 %v3018
    %3850 = vmatpush1.bf16.msra.mxu0 %v3017
    %3851 = vmatprep.subr.bf16.mxu0 %v3026
    %3852 = vmatpush1.bf16.msra.mxu0 %v3025
    %3853 = vmatprep.subr.bf16.mxu0 %v3034
    %3854 = vmatpush1.bf16.msra.mxu0 %v3033
    %3855 = vmatprep.subr.bf16.mxu0 %v3042
    %3856 = vmatpush1.bf16.msra.mxu0 %v3041
    %3857 = vmatprep.subr.bf16.mxu0 %v3050
    %3858 = vmatpush1.bf16.msra.mxu0 %v3049
    %3859 = vmatprep.subr.bf16.mxu0 %v3058
    %3860 = vmatpush1.bf16.msra.mxu0 %v3057
    %3861 = vmatprep.subr.bf16.mxu0 %v3066
    %3862 = vmatpush1.bf16.msra.mxu0 %v3065
    %3863 = vmatprep.subr.bf16.mxu0 %v3074
    %3864 = vmatpush1.bf16.msra.mxu0 %v3073
    %3865 = vmatprep.subr.bf16.mxu0 %v3082
    %3866 = vmatpush1.bf16.msra.mxu0 %v3081
    %3867 = vmatprep.subr.bf16.mxu0 %v3090
    %3868 = vmatpush1.bf16.msra.mxu0 %v3089
    %3869 = vmatprep.subr.bf16.mxu0 %v3098
    %3870 = vmatpush1.bf16.msra.mxu0 %v3097
    %3871 = vmatprep.subr.bf16.mxu0 %v3106
    %3872 = vmatpush1.bf16.msra.mxu0 %v3105
    %3873 = vmatprep.subr.bf16.mxu0 %v3114
    %3874 = vmatpush1.bf16.msra.mxu0 %v3113
    %3875 = vmatprep.mubr.bf16.mxu0 %v644
    %3876 = vmatmul.mubr.bf16.gmra.mrb[0].mxu0 %v643
    %v3877 = vpop.f32.mrb[0].mxu0
    %v3878 = vadd.f32 %v3837, %v3877
    %v3879 = vpop.f32.mrb[0].mxu0
    %v3880 = vadd.f32 %v3839, %v3879
    %v3881 = vpop.f32.mrb[0].mxu0
    %v3882 = vpop.f32.mrb[0].mxu0
    %3883 = vdwg.mxu0
    %3884 = vmatprep.subr.bf16.mxu0 %v3122
    %3885 = vmatpush1.bf16.msra.mxu0 %v3121
    %3886 = vmatprep.subr.bf16.mxu0 %v3130
    %3887 = vmatpush1.bf16.msra.mxu0 %v3129
    %3888 = vmatprep.subr.bf16.mxu0 %v3138
    %3889 = vmatpush1.bf16.msra.mxu0 %v3137
    %3890 = vmatprep.subr.bf16.mxu0 %v3146
    %3891 = vmatpush1.bf16.msra.mxu0 %v3145
    %3892 = vmatprep.subr.bf16.mxu0 %v3154
    %3893 = vmatpush1.bf16.msra.mxu0 %v3153
    %3894 = vmatprep.subr.bf16.mxu0 %v3162
    %3895 = vmatpush1.bf16.msra.mxu0 %v3161
    %3896 = vmatprep.subr.bf16.mxu0 %v3170
    %3897 = vmatpush1.bf16.msra.mxu0 %v3169
    %3898 = vmatprep.subr.bf16.mxu0 %v3178
    %3899 = vmatpush1.bf16.msra.mxu0 %v3177
    %3900 = vmatprep.subr.bf16.mxu0 %v3186
    %3901 = vmatpush1.bf16.msra.mxu0 %v3185
    %3902 = vmatprep.subr.bf16.mxu0 %v3194
    %3903 = vmatpush1.bf16.msra.mxu0 %v3193
    %3904 = vmatprep.subr.bf16.mxu0 %v3202
    %3905 = vmatpush1.bf16.msra.mxu0 %v3201
    %3906 = vmatprep.subr.bf16.mxu0 %v3210
    %3907 = vmatpush1.bf16.msra.mxu0 %v3209
    %3908 = vmatprep.subr.bf16.mxu0 %v3218
    %3909 = vmatpush1.bf16.msra.mxu0 %v3217
    %3910 = vmatprep.subr.bf16.mxu0 %v3226
    %3911 = vmatpush1.bf16.msra.mxu0 %v3225
    %3912 = vmatprep.subr.bf16.mxu0 %v3234
    %3913 = vmatpush1.bf16.msra.mxu0 %v3233
    %3914 = vmatprep.subr.bf16.mxu0 %v3242
    %3915 = vmatpush1.bf16.msra.mxu0 %v3241
    %3916 = vmatprep.mubr.bf16.mxu0 %v646
    %3917 = vmatmul.mubr.bf16.gmra.mrb[0].mxu0 %v645
    %v3918 = vpop.f32.mrb[0].mxu0
    %v3919 = vadd.f32 %v3878, %v3918
    %v3920 = vpop.f32.mrb[0].mxu0
    %v3921 = vadd.f32 %v3880, %v3920
    %v3922 = vpop.f32.mrb[0].mxu0
    %v3923 = vpop.f32.mrb[0].mxu0
    %3924 = vdwg.mxu0
    %3925 = vmatprep.subr.bf16.mxu0 %v2740
    %3926 = vmatpush1.bf16.msra.mxu0 %v2739
    %3927 = vmatprep.subr.bf16.mxu0 %v2748
    %3928 = vmatpush1.bf16.msra.mxu0 %v2747
    %3929 = vmatprep.subr.bf16.mxu0 %v2756
    %3930 = vmatpush1.bf16.msra.mxu0 %v2755
    %3931 = vmatprep.subr.bf16.mxu0 %v2764
    %3932 = vmatpush1.bf16.msra.mxu0 %v2763
    %3933 = vmatprep.subr.bf16.mxu0 %v2772
    %3934 = vmatpush1.bf16.msra.mxu0 %v2771
    %3935 = vmatprep.subr.bf16.mxu0 %v2780
    %3936 = vmatpush1.bf16.msra.mxu0 %v2779
    %3937 = vmatprep.subr.bf16.mxu0 %v2788
    %3938 = vmatpush1.bf16.msra.mxu0 %v2787
    %3939 = vmatprep.subr.bf16.mxu0 %v2796
    %3940 = vmatpush1.bf16.msra.mxu0 %v2795
    %3941 = vmatprep.subr.bf16.mxu0 %v2804
    %3942 = vmatpush1.bf16.msra.mxu0 %v2803
    %3943 = vmatprep.subr.bf16.mxu0 %v2812
    %3944 = vmatpush1.bf16.msra.mxu0 %v2811
    %3945 = vmatprep.subr.bf16.mxu0 %v2820
    %3946 = vmatpush1.bf16.msra.mxu0 %v2819
    %3947 = vmatprep.subr.bf16.mxu0 %v2828
    %3948 = vmatpush1.bf16.msra.mxu0 %v2827
    %3949 = vmatprep.subr.bf16.mxu0 %v2836
    %3950 = vmatpush1.bf16.msra.mxu0 %v2835
    %3951 = vmatprep.subr.bf16.mxu0 %v2844
    %3952 = vmatpush1.bf16.msra.mxu0 %v2843
    %3953 = vmatprep.subr.bf16.mxu0 %v2852
    %3954 = vmatpush1.bf16.msra.mxu0 %v2851
    %3955 = vmatprep.subr.bf16.mxu0 %v2860
    %3956 = vmatpush1.bf16.msra.mxu0 %v2859
    %3957 = vmatprep.mubr.bf16.mxu0 %v640
    %3958 = vmatmul.mubr.bf16.gmra.mrb[0].mxu0 %v639
    %v3959 = vpop.f32.mrb[0].mxu0
    %v3960 = vadd.f32 %v1172, %v3959
    %v3961 = vpop.f32.mrb[0].mxu0
    %v3962 = vadd.f32 %v1176, %v3961
    %v3963 = vpop.f32.mrb[0].mxu0
    %v3964 = vpop.f32.mrb[0].mxu0
    %3965 = vdwg.mxu0
    %3966 = vmatprep.subr.bf16.mxu0 %v2868
    %3967 = vmatpush1.bf16.msra.mxu0 %v2867
    %3968 = vmatprep.subr.bf16.mxu0 %v2876
    %3969 = vmatpush1.bf16.msra.mxu0 %v2875
    %3970 = vmatprep.subr.bf16.mxu0 %v2884
    %3971 = vmatpush1.bf16.msra.mxu0 %v2883
    %3972 = vmatprep.subr.bf16.mxu0 %v2892
    %3973 = vmatpush1.bf16.msra.mxu0 %v2891
    %3974 = vmatprep.subr.bf16.mxu0 %v2900
    %3975 = vmatpush1.bf16.msra.mxu0 %v2899
    %3976 = vmatprep.subr.bf16.mxu0 %v2908
    %3977 = vmatpush1.bf16.msra.mxu0 %v2907
    %3978 = vmatprep.subr.bf16.mxu0 %v2916
    %3979 = vmatpush1.bf16.msra.mxu0 %v2915
    %3980 = vmatprep.subr.bf16.mxu0 %v2924
    %3981 = vmatpush1.bf16.msra.mxu0 %v2923
    %3982 = vmatprep.subr.bf16.mxu0 %v2932
    %3983 = vmatpush1.bf16.msra.mxu0 %v2931
    %3984 = vmatprep.subr.bf16.mxu0 %v2940
    %3985 = vmatpush1.bf16.msra.mxu0 %v2939
    %3986 = vmatprep.subr.bf16.mxu0 %v2948
    %3987 = vmatpush1.bf16.msra.mxu0 %v2947
    %3988 = vmatprep.subr.bf16.mxu0 %v2956
    %3989 = vmatpush1.bf16.msra.mxu0 %v2955
    %3990 = vmatprep.subr.bf16.mxu0 %v2964
    %3991 = vmatpush1.bf16.msra.mxu0 %v2963
    %3992 = vmatprep.subr.bf16.mxu0 %v2972
    %3993 = vmatpush1.bf16.msra.mxu0 %v2971
    %3994 = vmatprep.subr.bf16.mxu0 %v2980
    %3995 = vmatpush1.bf16.msra.mxu0 %v2979
    %3996 = vmatprep.subr.bf16.mxu0 %v2988
    %3997 = vmatpush1.bf16.msra.mxu0 %v2987
    %3998 = vmatprep.mubr.bf16.mxu0 %v642
    %3999 = vmatmul.mubr.bf16.gmra.mrb[0].mxu0 %v641
    %v4000 = vpop.f32.mrb[0].mxu0
    %v4001 = vadd.f32 %v3960, %v4000
    %v4002 = vpop.f32.mrb[0].mxu0
    %v4003 = vadd.f32 %v3962, %v4002
    %v4004 = vpop.f32.mrb[0].mxu0
    %v4005 = vpop.f32.mrb[0].mxu0
    %4006 = vdwg.mxu0
    %4007 = vmatprep.subr.bf16.mxu0 %v2996
    %4008 = vmatpush1.bf16.msra.mxu0 %v2995
    %4009 = vmatprep.subr.bf16.mxu0 %v3004
    %4010 = vmatpush1.bf16.msra.mxu0 %v3003
    %4011 = vmatprep.subr.bf16.mxu0 %v3012
    %4012 = vmatpush1.bf16.msra.mxu0 %v3011
    %4013 = vmatprep.subr.bf16.mxu0 %v3020
    %4014 = vmatpush1.bf16.msra.mxu0 %v3019
    %4015 = vmatprep.subr.bf16.mxu0 %v3028
    %4016 = vmatpush1.bf16.msra.mxu0 %v3027
    %4017 = vmatprep.subr.bf16.mxu0 %v3036
    %4018 = vmatpush1.bf16.msra.mxu0 %v3035
    %4019 = vmatprep.subr.bf16.mxu0 %v3044
    %4020 = vmatpush1.bf16.msra.mxu0 %v3043
    %4021 = vmatprep.subr.bf16.mxu0 %v3052
    %4022 = vmatpush1.bf16.msra.mxu0 %v3051
    %4023 = vmatprep.subr.bf16.mxu0 %v3060
    %4024 = vmatpush1.bf16.msra.mxu0 %v3059
    %4025 = vmatprep.subr.bf16.mxu0 %v3068
    %4026 = vmatpush1.bf16.msra.mxu0 %v3067
    %4027 = vmatprep.subr.bf16.mxu0 %v3076
    %4028 = vmatpush1.bf16.msra.mxu0 %v3075
    %4029 = vmatprep.subr.bf16.mxu0 %v3084
    %4030 = vmatpush1.bf16.msra.mxu0 %v3083
    %4031 = vmatprep.subr.bf16.mxu0 %v3092
    %4032 = vmatpush1.bf16.msra.mxu0 %v3091
    %4033 = vmatprep.subr.bf16.mxu0 %v3100
    %4034 = vmatpush1.bf16.msra.mxu0 %v3099
    %4035 = vmatprep.subr.bf16.mxu0 %v3108
    %4036 = vmatpush1.bf16.msra.mxu0 %v3107
    %4037 = vmatprep.subr.bf16.mxu0 %v3116
    %4038 = vmatpush1.bf16.msra.mxu0 %v3115
    %4039 = vmatprep.mubr.bf16.mxu0 %v644
    %4040 = vmatmul.mubr.bf16.gmra.mrb[0].mxu0 %v643
    %v4041 = vpop.f32.mrb[0].mxu0
    %v4042 = vadd.f32 %v4001, %v4041
    %v4043 = vpop.f32.mrb[0].mxu0
    %v4044 = vadd.f32 %v4003, %v4043
    %v4045 = vpop.f32.mrb[0].mxu0
    %v4046 = vpop.f32.mrb[0].mxu0
    %4047 = vdwg.mxu0
    %4048 = vmatprep.subr.bf16.mxu0 %v3124
    %4049 = vmatpush1.bf16.msra.mxu0 %v3123
    %4050 = vmatprep.subr.bf16.mxu0 %v3132
    %4051 = vmatpush1.bf16.msra.mxu0 %v3131
    %4052 = vmatprep.subr.bf16.mxu0 %v3140
    %4053 = vmatpush1.bf16.msra.mxu0 %v3139
    %4054 = vmatprep.subr.bf16.mxu0 %v3148
    %4055 = vmatpush1.bf16.msra.mxu0 %v3147
    %4056 = vmatprep.subr.bf16.mxu0 %v3156
    %4057 = vmatpush1.bf16.msra.mxu0 %v3155
    %4058 = vmatprep.subr.bf16.mxu0 %v3164
    %4059 = vmatpush1.bf16.msra.mxu0 %v3163
    %4060 = vmatprep.subr.bf16.mxu0 %v3172
    %4061 = vmatpush1.bf16.msra.mxu0 %v3171
    %4062 = vmatprep.subr.bf16.mxu0 %v3180
    %4063 = vmatpush1.bf16.msra.mxu0 %v3179
    %4064 = vmatprep.subr.bf16.mxu0 %v3188
    %4065 = vmatpush1.bf16.msra.mxu0 %v3187
    %4066 = vmatprep.subr.bf16.mxu0 %v3196
    %4067 = vmatpush1.bf16.msra.mxu0 %v3195
    %4068 = vmatprep.subr.bf16.mxu0 %v3204
    %4069 = vmatpush1.bf16.msra.mxu0 %v3203
    %4070 = vmatprep.subr.bf16.mxu0 %v3212
    %4071 = vmatpush1.bf16.msra.mxu0 %v3211
    %4072 = vmatprep.subr.bf16.mxu0 %v3220
    %4073 = vmatpush1.bf16.msra.mxu0 %v3219
    %4074 = vmatprep.subr.bf16.mxu0 %v3228
    %4075 = vmatpush1.bf16.msra.mxu0 %v3227
    %4076 = vmatprep.subr.bf16.mxu0 %v3236
    %4077 = vmatpush1.bf16.msra.mxu0 %v3235
    %4078 = vmatprep.subr.bf16.mxu0 %v3244
    %4079 = vmatpush1.bf16.msra.mxu0 %v3243
    %4080 = vmatprep.mubr.bf16.mxu0 %v646
    %4081 = vmatmul.mubr.bf16.gmra.mrb[0].mxu0 %v645
    %v4082 = vpop.f32.mrb[0].mxu0
    %v4083 = vadd.f32 %v4042, %v4082
    %v4084 = vpop.f32.mrb[0].mxu0
    %v4085 = vadd.f32 %v4044, %v4084
    %v4086 = vpop.f32.mrb[0].mxu0
    %v4087 = vpop.f32.mrb[0].mxu0
    %4088 = vdwg.mxu0
    %4089 = vmatprep.subr.bf16.mxu0 %v2742
    %4090 = vmatpush1.bf16.msra.mxu0 %v2741
    %4091 = vmatprep.subr.bf16.mxu0 %v2750
    %4092 = vmatpush1.bf16.msra.mxu0 %v2749
    %4093 = vmatprep.subr.bf16.mxu0 %v2758
    %4094 = vmatpush1.bf16.msra.mxu0 %v2757
    %4095 = vmatprep.subr.bf16.mxu0 %v2766
    %4096 = vmatpush1.bf16.msra.mxu0 %v2765
    %4097 = vmatprep.subr.bf16.mxu0 %v2774
    %4098 = vmatpush1.bf16.msra.mxu0 %v2773
    %4099 = vmatprep.subr.bf16.mxu0 %v2782
    %4100 = vmatpush1.bf16.msra.mxu0 %v2781
    %4101 = vmatprep.subr.bf16.mxu0 %v2790
    %4102 = vmatpush1.bf16.msra.mxu0 %v2789
    %4103 = vmatprep.subr.bf16.mxu0 %v2798
    %4104 = vmatpush1.bf16.msra.mxu0 %v2797
    %4105 = vmatprep.subr.bf16.mxu0 %v2806
    %4106 = vmatpush1.bf16.msra.mxu0 %v2805
    %4107 = vmatprep.subr.bf16.mxu0 %v2814
    %4108 = vmatpush1.bf16.msra.mxu0 %v2813
    %4109 = vmatprep.subr.bf16.mxu0 %v2822
    %4110 = vmatpush1.bf16.msra.mxu0 %v2821
    %4111 = vmatprep.subr.bf16.mxu0 %v2830
    %4112 = vmatpush1.bf16.msra.mxu0 %v2829
    %4113 = vmatprep.subr.bf16.mxu0 %v2838
    %4114 = vmatpush1.bf16.msra.mxu0 %v2837
    %4115 = vmatprep.subr.bf16.mxu0 %v2846
    %4116 = vmatpush1.bf16.msra.mxu0 %v2845
    %4117 = vmatprep.subr.bf16.mxu0 %v2854
    %4118 = vmatpush1.bf16.msra.mxu0 %v2853
    %4119 = vmatprep.subr.bf16.mxu0 %v2862
    %4120 = vmatpush1.bf16.msra.mxu0 %v2861
    %4121 = vmatprep.mubr.bf16.mxu0 %v640
    %4122 = vmatmul.mubr.bf16.gmra.mrb[0].mxu0 %v639
    %v4123 = vpop.f32.mrb[0].mxu0
    %v4124 = vadd.f32 %v1180, %v4123
    %v4125 = vpop.f32.mrb[0].mxu0
    %v4126 = vadd.f32 %v1184, %v4125
    %v4127 = vpop.f32.mrb[0].mxu0
    %v4128 = vpop.f32.mrb[0].mxu0
    %4129 = vdwg.mxu0
    %4130 = vmatprep.subr.bf16.mxu0 %v2870
    %4131 = vmatpush1.bf16.msra.mxu0 %v2869
    %4132 = vmatprep.subr.bf16.mxu0 %v2878
    %4133 = vmatpush1.bf16.msra.mxu0 %v2877
    %4134 = vmatprep.subr.bf16.mxu0 %v2886
    %4135 = vmatpush1.bf16.msra.mxu0 %v2885
    %4136 = vmatprep.subr.bf16.mxu0 %v2894
    %4137 = vmatpush1.bf16.msra.mxu0 %v2893
    %4138 = vmatprep.subr.bf16.mxu0 %v2902
    %4139 = vmatpush1.bf16.msra.mxu0 %v2901
    %4140 = vmatprep.subr.bf16.mxu0 %v2910
    %4141 = vmatpush1.bf16.msra.mxu0 %v2909
    %4142 = vmatprep.subr.bf16.mxu0 %v2918
    %4143 = vmatpush1.bf16.msra.mxu0 %v2917
    %4144 = vmatprep.subr.bf16.mxu0 %v2926
    %4145 = vmatpush1.bf16.msra.mxu0 %v2925
    %4146 = vmatprep.subr.bf16.mxu0 %v2934
    %4147 = vmatpush1.bf16.msra.mxu0 %v2933
    %4148 = vmatprep.subr.bf16.mxu0 %v2942
    %4149 = vmatpush1.bf16.msra.mxu0 %v2941
    %4150 = vmatprep.subr.bf16.mxu0 %v2950
    %4151 = vmatpush1.bf16.msra.mxu0 %v2949
    %4152 = vmatprep.subr.bf16.mxu0 %v2958
    %4153 = vmatpush1.bf16.msra.mxu0 %v2957
    %4154 = vmatprep.subr.bf16.mxu0 %v2966
    %4155 = vmatpush1.bf16.msra.mxu0 %v2965
    %4156 = vmatprep.subr.bf16.mxu0 %v2974
    %4157 = vmatpush1.bf16.msra.mxu0 %v2973
    %4158 = vmatprep.subr.bf16.mxu0 %v2982
    %4159 = vmatpush1.bf16.msra.mxu0 %v2981
    %4160 = vmatprep.subr.bf16.mxu0 %v2990
    %4161 = vmatpush1.bf16.msra.mxu0 %v2989
    %4162 = vmatprep.mubr.bf16.mxu0 %v642
    %4163 = vmatmul.mubr.bf16.gmra.mrb[0].mxu0 %v641
    %v4164 = vpop.f32.mrb[0].mxu0
    %v4165 = vadd.f32 %v4124, %v4164
    %v4166 = vpop.f32.mrb[0].mxu0
    %v4167 = vadd.f32 %v4126, %v4166
    %v4168 = vpop.f32.mrb[0].mxu0
    %v4169 = vpop.f32.mrb[0].mxu0
    %4170 = vdwg.mxu0
    %4171 = vmatprep.subr.bf16.mxu0 %v2998
    %4172 = vmatpush1.bf16.msra.mxu0 %v2997
    %4173 = vmatprep.subr.bf16.mxu0 %v3006
    %4174 = vmatpush1.bf16.msra.mxu0 %v3005
    %4175 = vmatprep.subr.bf16.mxu0 %v3014
    %4176 = vmatpush1.bf16.msra.mxu0 %v3013
    %4177 = vmatprep.subr.bf16.mxu0 %v3022
    %4178 = vmatpush1.bf16.msra.mxu0 %v3021
    %4179 = vmatprep.subr.bf16.mxu0 %v3030
    %4180 = vmatpush1.bf16.msra.mxu0 %v3029
    %4181 = vmatprep.subr.bf16.mxu0 %v3038
    %4182 = vmatpush1.bf16.msra.mxu0 %v3037
    %4183 = vmatprep.subr.bf16.mxu0 %v3046
    %4184 = vmatpush1.bf16.msra.mxu0 %v3045
    %4185 = vmatprep.subr.bf16.mxu0 %v3054
    %4186 = vmatpush1.bf16.msra.mxu0 %v3053
    %4187 = vmatprep.subr.bf16.mxu0 %v3062
    %4188 = vmatpush1.bf16.msra.mxu0 %v3061
    %4189 = vmatprep.subr.bf16.mxu0 %v3070
    %4190 = vmatpush1.bf16.msra.mxu0 %v3069
    %4191 = vmatprep.subr.bf16.mxu0 %v3078
    %4192 = vmatpush1.bf16.msra.mxu0 %v3077
    %4193 = vmatprep.subr.bf16.mxu0 %v3086
    %4194 = vmatpush1.bf16.msra.mxu0 %v3085
    %4195 = vmatprep.subr.bf16.mxu0 %v3094
    %4196 = vmatpush1.bf16.msra.mxu0 %v3093
    %4197 = vmatprep.subr.bf16.mxu0 %v3102
    %4198 = vmatpush1.bf16.msra.mxu0 %v3101
    %4199 = vmatprep.subr.bf16.mxu0 %v3110
    %4200 = vmatpush1.bf16.msra.mxu0 %v3109
    %4201 = vmatprep.subr.bf16.mxu0 %v3118
    %4202 = vmatpush1.bf16.msra.mxu0 %v3117
    %4203 = vmatprep.mubr.bf16.mxu0 %v644
    %4204 = vmatmul.mubr.bf16.gmra.mrb[0].mxu0 %v643
    %v4205 = vpop.f32.mrb[0].mxu0
    %v4206 = vadd.f32 %v4165, %v4205
    %v4207 = vpop.f32.mrb[0].mxu0
    %v4208 = vadd.f32 %v4167, %v4207
    %v4209 = vpop.f32.mrb[0].mxu0
    %v4210 = vpop.f32.mrb[0].mxu0
    %4211 = vdwg.mxu0
    %4212 = vmatprep.subr.bf16.mxu0 %v3126
    %4213 = vmatpush1.bf16.msra.mxu0 %v3125
    %4214 = vmatprep.subr.bf16.mxu0 %v3134
    %4215 = vmatpush1.bf16.msra.mxu0 %v3133
    %4216 = vmatprep.subr.bf16.mxu0 %v3142
    %4217 = vmatpush1.bf16.msra.mxu0 %v3141
    %4218 = vmatprep.subr.bf16.mxu0 %v3150
    %4219 = vmatpush1.bf16.msra.mxu0 %v3149
    %4220 = vmatprep.subr.bf16.mxu0 %v3158
    %4221 = vmatpush1.bf16.msra.mxu0 %v3157
    %4222 = vmatprep.subr.bf16.mxu0 %v3166
    %4223 = vmatpush1.bf16.msra.mxu0 %v3165
    %4224 = vmatprep.subr.bf16.mxu0 %v3174
    %4225 = vmatpush1.bf16.msra.mxu0 %v3173
    %4226 = vmatprep.subr.bf16.mxu0 %v3182
    %4227 = vmatpush1.bf16.msra.mxu0 %v3181
    %4228 = vmatprep.subr.bf16.mxu0 %v3190
    %4229 = vmatpush1.bf16.msra.mxu0 %v3189
    %4230 = vmatprep.subr.bf16.mxu0 %v3198
    %4231 = vmatpush1.bf16.msra.mxu0 %v3197
    %4232 = vmatprep.subr.bf16.mxu0 %v3206
    %4233 = vmatpush1.bf16.msra.mxu0 %v3205
    %4234 = vmatprep.subr.bf16.mxu0 %v3214
    %4235 = vmatpush1.bf16.msra.mxu0 %v3213
    %4236 = vmatprep.subr.bf16.mxu0 %v3222
    %4237 = vmatpush1.bf16.msra.mxu0 %v3221
    %4238 = vmatprep.subr.bf16.mxu0 %v3230
    %4239 = vmatpush1.bf16.msra.mxu0 %v3229
    %4240 = vmatprep.subr.bf16.mxu0 %v3238
    %4241 = vmatpush1.bf16.msra.mxu0 %v3237
    %4242 = vmatprep.subr.bf16.mxu0 %v3246
    %4243 = vmatpush1.bf16.msra.mxu0 %v3245
    %4244 = vmatprep.mubr.bf16.mxu0 %v646
    %4245 = vmatmul.mubr.bf16.gmra.mrb[0].mxu0 %v645
    %v4246 = vpop.f32.mrb[0].mxu0
    %v4247 = vadd.f32 %v4206, %v4246
    %v4248 = vpop.f32.mrb[0].mxu0
    %v4249 = vadd.f32 %v4208, %v4248
    %v4250 = vpop.f32.mrb[0].mxu0
    %v4251 = vpop.f32.mrb[0].mxu0
    %4252 = vdwg.mxu0
    %4253 = vmatprep.subr.bf16.mxu0 %v2744
    %4254 = vmatpush1.bf16.msra.mxu0 %v2743
    %4255 = vmatprep.subr.bf16.mxu0 %v2752
    %4256 = vmatpush1.bf16.msra.mxu0 %v2751
    %4257 = vmatprep.subr.bf16.mxu0 %v2760
    %4258 = vmatpush1.bf16.msra.mxu0 %v2759
    %4259 = vmatprep.subr.bf16.mxu0 %v2768
    %4260 = vmatpush1.bf16.msra.mxu0 %v2767
    %4261 = vmatprep.subr.bf16.mxu0 %v2776
    %4262 = vmatpush1.bf16.msra.mxu0 %v2775
    %4263 = vmatprep.subr.bf16.mxu0 %v2784
    %4264 = vmatpush1.bf16.msra.mxu0 %v2783
    %4265 = vmatprep.subr.bf16.mxu0 %v2792
    %4266 = vmatpush1.bf16.msra.mxu0 %v2791
    %4267 = vmatprep.subr.bf16.mxu0 %v2800
    %4268 = vmatpush1.bf16.msra.mxu0 %v2799
    %4269 = vmatprep.subr.bf16.mxu0 %v2808
    %4270 = vmatpush1.bf16.msra.mxu0 %v2807
    %4271 = vmatprep.subr.bf16.mxu0 %v2816
    %4272 = vmatpush1.bf16.msra.mxu0 %v2815
    %4273 = vmatprep.subr.bf16.mxu0 %v2824
    %4274 = vmatpush1.bf16.msra.mxu0 %v2823
    %4275 = vmatprep.subr.bf16.mxu0 %v2832
    %4276 = vmatpush1.bf16.msra.mxu0 %v2831
    %4277 = vmatprep.subr.bf16.mxu0 %v2840
    %4278 = vmatpush1.bf16.msra.mxu0 %v2839
    %4279 = vmatprep.subr.bf16.mxu0 %v2848
    %4280 = vmatpush1.bf16.msra.mxu0 %v2847
    %4281 = vmatprep.subr.bf16.mxu0 %v2856
    %4282 = vmatpush1.bf16.msra.mxu0 %v2855
    %4283 = vmatprep.subr.bf16.mxu0 %v2864
    %4284 = vmatpush1.bf16.msra.mxu0 %v2863
    %4285 = vmatprep.mubr.bf16.mxu0 %v640
    %4286 = vmatmul.mubr.bf16.gmra.mrb[0].mxu0 %v639
    %v4287 = vpop.f32.mrb[0].mxu0
    %v4288 = vadd.f32 %v1188, %v4287
    %v4289 = vpop.f32.mrb[0].mxu0
    %v4290 = vadd.f32 %v1192, %v4289
    %v4291 = vpop.f32.mrb[0].mxu0
    %v4292 = vpop.f32.mrb[0].mxu0
    %4293 = vdwg.mxu0
    %4294 = vmatprep.subr.bf16.mxu0 %v2872
    %4295 = vmatpush1.bf16.msra.mxu0 %v2871
    %4296 = vmatprep.subr.bf16.mxu0 %v2880
    %4297 = vmatpush1.bf16.msra.mxu0 %v2879
    %4298 = vmatprep.subr.bf16.mxu0 %v2888
    %4299 = vmatpush1.bf16.msra.mxu0 %v2887
    %4300 = vmatprep.subr.bf16.mxu0 %v2896
    %4301 = vmatpush1.bf16.msra.mxu0 %v2895
    %4302 = vmatprep.subr.bf16.mxu0 %v2904
    %4303 = vmatpush1.bf16.msra.mxu0 %v2903
    %4304 = vmatprep.subr.bf16.mxu0 %v2912
    %4305 = vmatpush1.bf16.msra.mxu0 %v2911
    %4306 = vmatprep.subr.bf16.mxu0 %v2920
    %4307 = vmatpush1.bf16.msra.mxu0 %v2919
    %4308 = vmatprep.subr.bf16.mxu0 %v2928
    %4309 = vmatpush1.bf16.msra.mxu0 %v2927
    %4310 = vmatprep.subr.bf16.mxu0 %v2936
    %4311 = vmatpush1.bf16.msra.mxu0 %v2935
    %4312 = vmatprep.subr.bf16.mxu0 %v2944
    %4313 = vmatpush1.bf16.msra.mxu0 %v2943
    %4314 = vmatprep.subr.bf16.mxu0 %v2952
    %4315 = vmatpush1.bf16.msra.mxu0 %v2951
    %4316 = vmatprep.subr.bf16.mxu0 %v2960
    %4317 = vmatpush1.bf16.msra.mxu0 %v2959
    %4318 = vmatprep.subr.bf16.mxu0 %v2968
    %4319 = vmatpush1.bf16.msra.mxu0 %v2967
    %4320 = vmatprep.subr.bf16.mxu0 %v2976
    %4321 = vmatpush1.bf16.msra.mxu0 %v2975
    %4322 = vmatprep.subr.bf16.mxu0 %v2984
    %4323 = vmatpush1.bf16.msra.mxu0 %v2983
    %4324 = vmatprep.subr.bf16.mxu0 %v2992
    %4325 = vmatpush1.bf16.msra.mxu0 %v2991
    %4326 = vmatprep.mubr.bf16.mxu0 %v642
    %4327 = vmatmul.mubr.bf16.gmra.mrb[0].mxu0 %v641
    %v4328 = vpop.f32.mrb[0].mxu0
    %v4329 = vadd.f32 %v4288, %v4328
    %v4330 = vpop.f32.mrb[0].mxu0
    %v4331 = vadd.f32 %v4290, %v4330
    %v4332 = vpop.f32.mrb[0].mxu0
    %v4333 = vpop.f32.mrb[0].mxu0
    %4334 = vdwg.mxu0
    %4335 = vmatprep.subr.bf16.mxu0 %v3000
    %4336 = vmatpush1.bf16.msra.mxu0 %v2999
    %4337 = vmatprep.subr.bf16.mxu0 %v3008
    %4338 = vmatpush1.bf16.msra.mxu0 %v3007
    %4339 = vmatprep.subr.bf16.mxu0 %v3016
    %4340 = vmatpush1.bf16.msra.mxu0 %v3015
    %4341 = vmatprep.subr.bf16.mxu0 %v3024
    %4342 = vmatpush1.bf16.msra.mxu0 %v3023
    %4343 = vmatprep.subr.bf16.mxu0 %v3032
    %4344 = vmatpush1.bf16.msra.mxu0 %v3031
    %4345 = vmatprep.subr.bf16.mxu0 %v3040
    %4346 = vmatpush1.bf16.msra.mxu0 %v3039
    %4347 = vmatprep.subr.bf16.mxu0 %v3048
    %4348 = vmatpush1.bf16.msra.mxu0 %v3047
    %4349 = vmatprep.subr.bf16.mxu0 %v3056
    %4350 = vmatpush1.bf16.msra.mxu0 %v3055
    %4351 = vmatprep.subr.bf16.mxu0 %v3064
    %4352 = vmatpush1.bf16.msra.mxu0 %v3063
    %4353 = vmatprep.subr.bf16.mxu0 %v3072
    %4354 = vmatpush1.bf16.msra.mxu0 %v3071
    %4355 = vmatprep.subr.bf16.mxu0 %v3080
    %4356 = vmatpush1.bf16.msra.mxu0 %v3079
    %4357 = vmatprep.subr.bf16.mxu0 %v3088
    %4358 = vmatpush1.bf16.msra.mxu0 %v3087
    %4359 = vmatprep.subr.bf16.mxu0 %v3096
    %4360 = vmatpush1.bf16.msra.mxu0 %v3095
    %4361 = vmatprep.subr.bf16.mxu0 %v3104
    %4362 = vmatpush1.bf16.msra.mxu0 %v3103
    %4363 = vmatprep.subr.bf16.mxu0 %v3112
    %4364 = vmatpush1.bf16.msra.mxu0 %v3111
    %4365 = vmatprep.subr.bf16.mxu0 %v3120
    %4366 = vmatpush1.bf16.msra.mxu0 %v3119
    %4367 = vmatprep.mubr.bf16.mxu0 %v644
    %4368 = vmatmul.mubr.bf16.gmra.mrb[0].mxu0 %v643
    %v4369 = vpop.f32.mrb[0].mxu0
    %v4370 = vadd.f32 %v4329, %v4369
    %v4371 = vpop.f32.mrb[0].mxu0
    %v4372 = vadd.f32 %v4331, %v4371
    %v4373 = vpop.f32.mrb[0].mxu0
    %v4374 = vpop.f32.mrb[0].mxu0
    %4375 = vdwg.mxu0
    %4376 = vmatprep.subr.bf16.mxu0 %v3128
    %4377 = vmatpush1.bf16.msra.mxu0 %v3127
    %4378 = vmatprep.subr.bf16.mxu0 %v3136
    %4379 = vmatpush1.bf16.msra.mxu0 %v3135
    %4380 = vmatprep.subr.bf16.mxu0 %v3144
    %4381 = vmatpush1.bf16.msra.mxu0 %v3143
    %4382 = vmatprep.subr.bf16.mxu0 %v3152
    %4383 = vmatpush1.bf16.msra.mxu0 %v3151
    %4384 = vmatprep.subr.bf16.mxu0 %v3160
    %4385 = vmatpush1.bf16.msra.mxu0 %v3159
    %4386 = vmatprep.subr.bf16.mxu0 %v3168
    %4387 = vmatpush1.bf16.msra.mxu0 %v3167
    %4388 = vmatprep.subr.bf16.mxu0 %v3176
    %4389 = vmatpush1.bf16.msra.mxu0 %v3175
    %4390 = vmatprep.subr.bf16.mxu0 %v3184
    %4391 = vmatpush1.bf16.msra.mxu0 %v3183
    %4392 = vmatprep.subr.bf16.mxu0 %v3192
    %4393 = vmatpush1.bf16.msra.mxu0 %v3191
    %4394 = vmatprep.subr.bf16.mxu0 %v3200
    %4395 = vmatpush1.bf16.msra.mxu0 %v3199
    %4396 = vmatprep.subr.bf16.mxu0 %v3208
    %4397 = vmatpush1.bf16.msra.mxu0 %v3207
    %4398 = vmatprep.subr.bf16.mxu0 %v3216
    %4399 = vmatpush1.bf16.msra.mxu0 %v3215
    %4400 = vmatprep.subr.bf16.mxu0 %v3224
    %4401 = vmatpush1.bf16.msra.mxu0 %v3223
    %4402 = vmatprep.subr.bf16.mxu0 %v3232
    %4403 = vmatpush1.bf16.msra.mxu0 %v3231
    %4404 = vmatprep.subr.bf16.mxu0 %v3240
    %4405 = vmatpush1.bf16.msra.mxu0 %v3239
    %4406 = vmatprep.subr.bf16.mxu0 %v3248
    %4407 = vmatpush1.bf16.msra.mxu0 %v3247
    %4408 = vmatprep.mubr.bf16.mxu0 %v646
    %4409 = vmatmul.mubr.bf16.gmra.mrb[0].mxu0 %v645
    %v4410 = vpop.f32.mrb[0].mxu0
    %v4411 = vadd.f32 %v4370, %v4410
    %v4412 = vpop.f32.mrb[0].mxu0
    %v4413 = vadd.f32 %v4372, %v4412
    %v4414 = vpop.f32.mrb[0].mxu0
    %v4415 = vpop.f32.mrb[0].mxu0
    %4416 = vdwg.mxu0
    %v4417 = vmax.f32 %v3919, 0.0
    %v4418 = vmax.f32 %v3921, 0.0
    %v4419 = vmax.f32 %v4083, 0.0
    %v4420 = vmax.f32 %v4085, 0.0
    %v4421 = vmax.f32 %v4247, 0.0
    %v4422 = vmax.f32 %v4249, 0.0
    %v4423 = vmax.f32 %v4411, 0.0
    %v4424 = vmax.f32 %v4413, 0.0
    %v4425 = vpack.c.bf16 %v4417, %v4417
    %v4426 = vpack.c.bf16 %v4418, %v4418
    %v4427 = vpack.c.bf16 %v4419, %v4419
    %v4428 = vpack.c.bf16 %v4420, %v4420
    %v4429 = vpack.c.bf16 %v4421, %v4421
    %v4430 = vpack.c.bf16 %v4422, %v4422
    %v4431 = vpack.c.bf16 %v4423, %v4423
    %v4432 = vpack.c.bf16 %v4424, %v4424
    %v4433 = vld [vmem:[%s5] sm:$0xff]
    %v4434 = vld [vmem:[%s5 + $0x8] sm:$0xff]
    %v4435 = vld [vmem:[%s5 + $0x10] sm:$0xff]
    %v4436 = vld [vmem:[%s5 + $0x18] sm:$0xff]
    %v4437 = vld [vmem:[%s5 + $0x20] sm:$0xff]
    %v4438 = vld [vmem:[%s5 + $0x28] sm:$0xff]
    %v4439 = vld [vmem:[%s5 + $0x30] sm:$0xff]
    %v4440 = vld [vmem:[%s5 + $0x38] sm:$0xff]
    %v4441 = vld [vmem:[%s5 + $0x40] sm:$0xff]
    %v4442 = vld [vmem:[%s5 + $0x48] sm:$0xff]
    %v4443 = vld [vmem:[%s5 + $0x50] sm:$0xff]
    %v4444 = vld [vmem:[%s5 + $0x58] sm:$0xff]
    %v4445 = vld [vmem:[%s5 + $0x60] sm:$0xff]
    %v4446 = vld [vmem:[%s5 + $0x68] sm:$0xff]
    %v4447 = vld [vmem:[%s5 + $0x70] sm:$0xff]
    %v4448 = vld [vmem:[%s5 + $0x78] sm:$0xff]
    %v4449 = vld [vmem:[%s5 + $0x80] sm:$0xff]
    %v4450 = vld [vmem:[%s5 + $0x88] sm:$0xff]
    %v4451 = vld [vmem:[%s5 + $0x90] sm:$0xff]
    %v4452 = vld [vmem:[%s5 + $0x98] sm:$0xff]
    %v4453 = vld [vmem:[%s5 + $0xa0] sm:$0xff]
    %v4454 = vld [vmem:[%s5 + $0xa8] sm:$0xff]
    %v4455 = vld [vmem:[%s5 + $0xb0] sm:$0xff]
    %v4456 = vld [vmem:[%s5 + $0xb8] sm:$0xff]
    %v4457 = vld [vmem:[%s5 + $0xc0] sm:$0xff]
    %v4458 = vld [vmem:[%s5 + $0xc8] sm:$0xff]
    %v4459 = vld [vmem:[%s5 + $0xd0] sm:$0xff]
    %v4460 = vld [vmem:[%s5 + $0xd8] sm:$0xff]
    %v4461 = vld [vmem:[%s5 + $0xe0] sm:$0xff]
    %v4462 = vld [vmem:[%s5 + $0xe8] sm:$0xff]
    %v4463 = vld [vmem:[%s5 + $0xf0] sm:$0xff]
    %v4464 = vld [vmem:[%s5 + $0xf8] sm:$0xff]
    %v4465 = vld [vmem:[%s5 + $0x100] sm:$0xff]
    %v4466 = vld [vmem:[%s5 + $0x108] sm:$0xff]
    %v4467 = vld [vmem:[%s5 + $0x110] sm:$0xff]
    %v4468 = vld [vmem:[%s5 + $0x118] sm:$0xff]
    %v4469 = vld [vmem:[%s5 + $0x120] sm:$0xff]
    %v4470 = vld [vmem:[%s5 + $0x128] sm:$0xff]
    %v4471 = vld [vmem:[%s5 + $0x130] sm:$0xff]
    %v4472 = vld [vmem:[%s5 + $0x138] sm:$0xff]
    %v4473 = vld [vmem:[%s5 + $0x140] sm:$0xff]
    %v4474 = vld [vmem:[%s5 + $0x148] sm:$0xff]
    %v4475 = vld [vmem:[%s5 + $0x150] sm:$0xff]
    %v4476 = vld [vmem:[%s5 + $0x158] sm:$0xff]
    %v4477 = vld [vmem:[%s5 + $0x160] sm:$0xff]
    %v4478 = vld [vmem:[%s5 + $0x168] sm:$0xff]
    %v4479 = vld [vmem:[%s5 + $0x170] sm:$0xff]
    %v4480 = vld [vmem:[%s5 + $0x178] sm:$0xff]
    %v4481 = vld [vmem:[%s5 + $0x180] sm:$0xff]
    %v4482 = vld [vmem:[%s5 + $0x188] sm:$0xff]
    %v4483 = vld [vmem:[%s5 + $0x190] sm:$0xff]
    %v4484 = vld [vmem:[%s5 + $0x198] sm:$0xff]
    %v4485 = vld [vmem:[%s5 + $0x1a0] sm:$0xff]
    %v4486 = vld [vmem:[%s5 + $0x1a8] sm:$0xff]
    %v4487 = vld [vmem:[%s5 + $0x1b0] sm:$0xff]
    %v4488 = vld [vmem:[%s5 + $0x1b8] sm:$0xff]
    %v4489 = vld [vmem:[%s5 + $0x1c0] sm:$0xff]
    %v4490 = vld [vmem:[%s5 + $0x1c8] sm:$0xff]
    %v4491 = vld [vmem:[%s5 + $0x1d0] sm:$0xff]
    %v4492 = vld [vmem:[%s5 + $0x1d8] sm:$0xff]
    %v4493 = vld [vmem:[%s5 + $0x1e0] sm:$0xff]
    %v4494 = vld [vmem:[%s5 + $0x1e8] sm:$0xff]
    %v4495 = vld [vmem:[%s5 + $0x1f0] sm:$0xff]
    %v4496 = vld [vmem:[%s5 + $0x1f8] sm:$0xff]
    %v4497 = vld [vmem:[%s5 + $0x200] sm:$0xff]
    %v4498 = vld [vmem:[%s5 + $0x208] sm:$0xff]
    %v4499 = vld [vmem:[%s5 + $0x210] sm:$0xff]
    %v4500 = vld [vmem:[%s5 + $0x218] sm:$0xff]
    %v4501 = vld [vmem:[%s5 + $0x220] sm:$0xff]
    %v4502 = vld [vmem:[%s5 + $0x228] sm:$0xff]
    %v4503 = vld [vmem:[%s5 + $0x230] sm:$0xff]
    %v4504 = vld [vmem:[%s5 + $0x238] sm:$0xff]
    %v4505 = vld [vmem:[%s5 + $0x240] sm:$0xff]
    %v4506 = vld [vmem:[%s5 + $0x248] sm:$0xff]
    %v4507 = vld [vmem:[%s5 + $0x250] sm:$0xff]
    %v4508 = vld [vmem:[%s5 + $0x258] sm:$0xff]
    %v4509 = vld [vmem:[%s5 + $0x260] sm:$0xff]
    %v4510 = vld [vmem:[%s5 + $0x268] sm:$0xff]
    %v4511 = vld [vmem:[%s5 + $0x270] sm:$0xff]
    %v4512 = vld [vmem:[%s5 + $0x278] sm:$0xff]
    %v4513 = vld [vmem:[%s5 + $0x280] sm:$0xff]
    %v4514 = vld [vmem:[%s5 + $0x288] sm:$0xff]
    %v4515 = vld [vmem:[%s5 + $0x290] sm:$0xff]
    %v4516 = vld [vmem:[%s5 + $0x298] sm:$0xff]
    %v4517 = vld [vmem:[%s5 + $0x2a0] sm:$0xff]
    %v4518 = vld [vmem:[%s5 + $0x2a8] sm:$0xff]
    %v4519 = vld [vmem:[%s5 + $0x2b0] sm:$0xff]
    %v4520 = vld [vmem:[%s5 + $0x2b8] sm:$0xff]
    %v4521 = vld [vmem:[%s5 + $0x2c0] sm:$0xff]
    %v4522 = vld [vmem:[%s5 + $0x2c8] sm:$0xff]
    %v4523 = vld [vmem:[%s5 + $0x2d0] sm:$0xff]
    %v4524 = vld [vmem:[%s5 + $0x2d8] sm:$0xff]
    %v4525 = vld [vmem:[%s5 + $0x2e0] sm:$0xff]
    %v4526 = vld [vmem:[%s5 + $0x2e8] sm:$0xff]
    %v4527 = vld [vmem:[%s5 + $0x2f0] sm:$0xff]
    %v4528 = vld [vmem:[%s5 + $0x2f8] sm:$0xff]
    %v4529 = vld [vmem:[%s5 + $0x300] sm:$0xff]
    %v4530 = vld [vmem:[%s5 + $0x308] sm:$0xff]
    %v4531 = vld [vmem:[%s5 + $0x310] sm:$0xff]
    %v4532 = vld [vmem:[%s5 + $0x318] sm:$0xff]
    %v4533 = vld [vmem:[%s5 + $0x320] sm:$0xff]
    %v4534 = vld [vmem:[%s5 + $0x328] sm:$0xff]
    %v4535 = vld [vmem:[%s5 + $0x330] sm:$0xff]
    %v4536 = vld [vmem:[%s5 + $0x338] sm:$0xff]
    %v4537 = vld [vmem:[%s5 + $0x340] sm:$0xff]
    %v4538 = vld [vmem:[%s5 + $0x348] sm:$0xff]
    %v4539 = vld [vmem:[%s5 + $0x350] sm:$0xff]
    %v4540 = vld [vmem:[%s5 + $0x358] sm:$0xff]
    %v4541 = vld [vmem:[%s5 + $0x360] sm:$0xff]
    %v4542 = vld [vmem:[%s5 + $0x368] sm:$0xff]
    %v4543 = vld [vmem:[%s5 + $0x370] sm:$0xff]
    %v4544 = vld [vmem:[%s5 + $0x378] sm:$0xff]
    %v4545 = vld [vmem:[%s5 + $0x380] sm:$0xff]
    %v4546 = vld [vmem:[%s5 + $0x388] sm:$0xff]
    %v4547 = vld [vmem:[%s5 + $0x390] sm:$0xff]
    %v4548 = vld [vmem:[%s5 + $0x398] sm:$0xff]
    %v4549 = vld [vmem:[%s5 + $0x3a0] sm:$0xff]
    %v4550 = vld [vmem:[%s5 + $0x3a8] sm:$0xff]
    %v4551 = vld [vmem:[%s5 + $0x3b0] sm:$0xff]
    %v4552 = vld [vmem:[%s5 + $0x3b8] sm:$0xff]
    %v4553 = vld [vmem:[%s5 + $0x3c0] sm:$0xff]
    %v4554 = vld [vmem:[%s5 + $0x3c8] sm:$0xff]
    %v4555 = vld [vmem:[%s5 + $0x3d0] sm:$0xff]
    %v4556 = vld [vmem:[%s5 + $0x3d8] sm:$0xff]
    %v4557 = vld [vmem:[%s5 + $0x3e0] sm:$0xff]
    %v4558 = vld [vmem:[%s5 + $0x3e8] sm:$0xff]
    %v4559 = vld [vmem:[%s5 + $0x3f0] sm:$0xff]
    %v4560 = vld [vmem:[%s5 + $0x3f8] sm:$0xff]
    %v4561 = vld [vmem:[%s5 + $0x400] sm:$0xff]
    %v4562 = vld [vmem:[%s5 + $0x408] sm:$0xff]
    %v4563 = vld [vmem:[%s5 + $0x410] sm:$0xff]
    %v4564 = vld [vmem:[%s5 + $0x418] sm:$0xff]
    %v4565 = vld [vmem:[%s5 + $0x420] sm:$0xff]
    %v4566 = vld [vmem:[%s5 + $0x428] sm:$0xff]
    %v4567 = vld [vmem:[%s5 + $0x430] sm:$0xff]
    %v4568 = vld [vmem:[%s5 + $0x438] sm:$0xff]
    %v4569 = vld [vmem:[%s5 + $0x440] sm:$0xff]
    %v4570 = vld [vmem:[%s5 + $0x448] sm:$0xff]
    %v4571 = vld [vmem:[%s5 + $0x450] sm:$0xff]
    %v4572 = vld [vmem:[%s5 + $0x458] sm:$0xff]
    %v4573 = vld [vmem:[%s5 + $0x460] sm:$0xff]
    %v4574 = vld [vmem:[%s5 + $0x468] sm:$0xff]
    %v4575 = vld [vmem:[%s5 + $0x470] sm:$0xff]
    %v4576 = vld [vmem:[%s5 + $0x478] sm:$0xff]
    %v4577 = vld [vmem:[%s5 + $0x480] sm:$0xff]
    %v4578 = vld [vmem:[%s5 + $0x488] sm:$0xff]
    %v4579 = vld [vmem:[%s5 + $0x490] sm:$0xff]
    %v4580 = vld [vmem:[%s5 + $0x498] sm:$0xff]
    %v4581 = vld [vmem:[%s5 + $0x4a0] sm:$0xff]
    %v4582 = vld [vmem:[%s5 + $0x4a8] sm:$0xff]
    %v4583 = vld [vmem:[%s5 + $0x4b0] sm:$0xff]
    %v4584 = vld [vmem:[%s5 + $0x4b8] sm:$0xff]
    %v4585 = vld [vmem:[%s5 + $0x4c0] sm:$0xff]
    %v4586 = vld [vmem:[%s5 + $0x4c8] sm:$0xff]
    %v4587 = vld [vmem:[%s5 + $0x4d0] sm:$0xff]
    %v4588 = vld [vmem:[%s5 + $0x4d8] sm:$0xff]
    %v4589 = vld [vmem:[%s5 + $0x4e0] sm:$0xff]
    %v4590 = vld [vmem:[%s5 + $0x4e8] sm:$0xff]
    %v4591 = vld [vmem:[%s5 + $0x4f0] sm:$0xff]
    %v4592 = vld [vmem:[%s5 + $0x4f8] sm:$0xff]
    %v4593 = vld [vmem:[%s5 + $0x500] sm:$0xff]
    %v4594 = vld [vmem:[%s5 + $0x508] sm:$0xff]
    %v4595 = vld [vmem:[%s5 + $0x510] sm:$0xff]
    %v4596 = vld [vmem:[%s5 + $0x518] sm:$0xff]
    %v4597 = vld [vmem:[%s5 + $0x520] sm:$0xff]
    %v4598 = vld [vmem:[%s5 + $0x528] sm:$0xff]
    %v4599 = vld [vmem:[%s5 + $0x530] sm:$0xff]
    %v4600 = vld [vmem:[%s5 + $0x538] sm:$0xff]
    %v4601 = vld [vmem:[%s5 + $0x540] sm:$0xff]
    %v4602 = vld [vmem:[%s5 + $0x548] sm:$0xff]
    %v4603 = vld [vmem:[%s5 + $0x550] sm:$0xff]
    %v4604 = vld [vmem:[%s5 + $0x558] sm:$0xff]
    %v4605 = vld [vmem:[%s5 + $0x560] sm:$0xff]
    %v4606 = vld [vmem:[%s5 + $0x568] sm:$0xff]
    %v4607 = vld [vmem:[%s5 + $0x570] sm:$0xff]
    %v4608 = vld [vmem:[%s5 + $0x578] sm:$0xff]
    %v4609 = vld [vmem:[%s5 + $0x580] sm:$0xff]
    %v4610 = vld [vmem:[%s5 + $0x588] sm:$0xff]
    %v4611 = vld [vmem:[%s5 + $0x590] sm:$0xff]
    %v4612 = vld [vmem:[%s5 + $0x598] sm:$0xff]
    %v4613 = vld [vmem:[%s5 + $0x5a0] sm:$0xff]
    %v4614 = vld [vmem:[%s5 + $0x5a8] sm:$0xff]
    %v4615 = vld [vmem:[%s5 + $0x5b0] sm:$0xff]
    %v4616 = vld [vmem:[%s5 + $0x5b8] sm:$0xff]
    %v4617 = vld [vmem:[%s5 + $0x5c0] sm:$0xff]
    %v4618 = vld [vmem:[%s5 + $0x5c8] sm:$0xff]
    %v4619 = vld [vmem:[%s5 + $0x5d0] sm:$0xff]
    %v4620 = vld [vmem:[%s5 + $0x5d8] sm:$0xff]
    %v4621 = vld [vmem:[%s5 + $0x5e0] sm:$0xff]
    %v4622 = vld [vmem:[%s5 + $0x5e8] sm:$0xff]
    %v4623 = vld [vmem:[%s5 + $0x5f0] sm:$0xff]
    %v4624 = vld [vmem:[%s5 + $0x5f8] sm:$0xff]
    %v4625 = vld [vmem:[%s5 + $0x600] sm:$0xff]
    %v4626 = vld [vmem:[%s5 + $0x608] sm:$0xff]
    %v4627 = vld [vmem:[%s5 + $0x610] sm:$0xff]
    %v4628 = vld [vmem:[%s5 + $0x618] sm:$0xff]
    %v4629 = vld [vmem:[%s5 + $0x620] sm:$0xff]
    %v4630 = vld [vmem:[%s5 + $0x628] sm:$0xff]
    %v4631 = vld [vmem:[%s5 + $0x630] sm:$0xff]
    %v4632 = vld [vmem:[%s5 + $0x638] sm:$0xff]
    %v4633 = vld [vmem:[%s5 + $0x640] sm:$0xff]
    %v4634 = vld [vmem:[%s5 + $0x648] sm:$0xff]
    %v4635 = vld [vmem:[%s5 + $0x650] sm:$0xff]
    %v4636 = vld [vmem:[%s5 + $0x658] sm:$0xff]
    %v4637 = vld [vmem:[%s5 + $0x660] sm:$0xff]
    %v4638 = vld [vmem:[%s5 + $0x668] sm:$0xff]
    %v4639 = vld [vmem:[%s5 + $0x670] sm:$0xff]
    %v4640 = vld [vmem:[%s5 + $0x678] sm:$0xff]
    %v4641 = vld [vmem:[%s5 + $0x680] sm:$0xff]
    %v4642 = vld [vmem:[%s5 + $0x688] sm:$0xff]
    %v4643 = vld [vmem:[%s5 + $0x690] sm:$0xff]
    %v4644 = vld [vmem:[%s5 + $0x698] sm:$0xff]
    %v4645 = vld [vmem:[%s5 + $0x6a0] sm:$0xff]
    %v4646 = vld [vmem:[%s5 + $0x6a8] sm:$0xff]
    %v4647 = vld [vmem:[%s5 + $0x6b0] sm:$0xff]
    %v4648 = vld [vmem:[%s5 + $0x6b8] sm:$0xff]
    %v4649 = vld [vmem:[%s5 + $0x6c0] sm:$0xff]
    %v4650 = vld [vmem:[%s5 + $0x6c8] sm:$0xff]
    %v4651 = vld [vmem:[%s5 + $0x6d0] sm:$0xff]
    %v4652 = vld [vmem:[%s5 + $0x6d8] sm:$0xff]
    %v4653 = vld [vmem:[%s5 + $0x6e0] sm:$0xff]
    %v4654 = vld [vmem:[%s5 + $0x6e8] sm:$0xff]
    %v4655 = vld [vmem:[%s5 + $0x6f0] sm:$0xff]
    %v4656 = vld [vmem:[%s5 + $0x6f8] sm:$0xff]
    %v4657 = vld [vmem:[%s5 + $0x700] sm:$0xff]
    %v4658 = vld [vmem:[%s5 + $0x708] sm:$0xff]
    %v4659 = vld [vmem:[%s5 + $0x710] sm:$0xff]
    %v4660 = vld [vmem:[%s5 + $0x718] sm:$0xff]
    %v4661 = vld [vmem:[%s5 + $0x720] sm:$0xff]
    %v4662 = vld [vmem:[%s5 + $0x728] sm:$0xff]
    %v4663 = vld [vmem:[%s5 + $0x730] sm:$0xff]
    %v4664 = vld [vmem:[%s5 + $0x738] sm:$0xff]
    %v4665 = vld [vmem:[%s5 + $0x740] sm:$0xff]
    %v4666 = vld [vmem:[%s5 + $0x748] sm:$0xff]
    %v4667 = vld [vmem:[%s5 + $0x750] sm:$0xff]
    %v4668 = vld [vmem:[%s5 + $0x758] sm:$0xff]
    %v4669 = vld [vmem:[%s5 + $0x760] sm:$0xff]
    %v4670 = vld [vmem:[%s5 + $0x768] sm:$0xff]
    %v4671 = vld [vmem:[%s5 + $0x770] sm:$0xff]
    %v4672 = vld [vmem:[%s5 + $0x778] sm:$0xff]
    %v4673 = vld [vmem:[%s5 + $0x780] sm:$0xff]
    %v4674 = vld [vmem:[%s5 + $0x788] sm:$0xff]
    %v4675 = vld [vmem:[%s5 + $0x790] sm:$0xff]
    %v4676 = vld [vmem:[%s5 + $0x798] sm:$0xff]
    %v4677 = vld [vmem:[%s5 + $0x7a0] sm:$0xff]
    %v4678 = vld [vmem:[%s5 + $0x7a8] sm:$0xff]
    %v4679 = vld [vmem:[%s5 + $0x7b0] sm:$0xff]
    %v4680 = vld [vmem:[%s5 + $0x7b8] sm:$0xff]
    %v4681 = vld [vmem:[%s5 + $0x7c0] sm:$0xff]
    %v4682 = vld [vmem:[%s5 + $0x7c8] sm:$0xff]
    %v4683 = vld [vmem:[%s5 + $0x7d0] sm:$0xff]
    %v4684 = vld [vmem:[%s5 + $0x7d8] sm:$0xff]
    %v4685 = vld [vmem:[%s5 + $0x7e0] sm:$0xff]
    %v4686 = vld [vmem:[%s5 + $0x7e8] sm:$0xff]
    %v4687 = vld [vmem:[%s5 + $0x7f0] sm:$0xff]
    %v4688 = vld [vmem:[%s5 + $0x7f8] sm:$0xff]
    %v4689 = vld [vmem:[%s6] sm:$0xf]
    %v4691 = vlaneseq
    %v4692 = vshrl.u32 %v4691, 7
    %v4693 = vsub.s32 0, %v4692
    %v4694 = vrot.slane %v4689, %v4693
    %v4695 = vlaneseq
    %v4696 = vshrl.u32 %v4695, 7
    %v4697 = vsub.s32 1, %v4696
    %v4698 = vrot.slane %v4689, %v4697
    %v4699 = vlaneseq
    %v4700 = vshrl.u32 %v4699, 7
    %v4701 = vsub.s32 2, %v4700
    %v4702 = vrot.slane %v4689, %v4701
    %v4703 = vlaneseq
    %v4704 = vshrl.u32 %v4703, 7
    %v4705 = vsub.s32 3, %v4704
    %v4706 = vrot.slane %v4689, %v4705
    %v4967 = vunpack.c.l.b16 %v4433
    %v4968 = vunpack.c.h.b16 %v4433
    %v4969 = vunpack.c.l.b16 %v4434
    %v4970 = vunpack.c.h.b16 %v4434
    %v4971 = vunpack.c.l.b16 %v4435
    %v4972 = vunpack.c.h.b16 %v4435
    %v4973 = vunpack.c.l.b16 %v4436
    %v4974 = vunpack.c.h.b16 %v4436
    %v4975 = vunpack.c.l.b16 %v4437
    %v4976 = vunpack.c.h.b16 %v4437
    %v4977 = vunpack.c.l.b16 %v4438
    %v4978 = vunpack.c.h.b16 %v4438
    %v4979 = vunpack.c.l.b16 %v4439
    %v4980 = vunpack.c.h.b16 %v4439
    %v4981 = vunpack.c.l.b16 %v4440
    %v4982 = vunpack.c.h.b16 %v4440
    %v4983 = vunpack.c.l.b16 %v4441
    %v4984 = vunpack.c.h.b16 %v4441
    %v4985 = vunpack.c.l.b16 %v4442
    %v4986 = vunpack.c.h.b16 %v4442
    %v4987 = vunpack.c.l.b16 %v4443
    %v4988 = vunpack.c.h.b16 %v4443
    %v4989 = vunpack.c.l.b16 %v4444
    %v4990 = vunpack.c.h.b16 %v4444
    %v4991 = vunpack.c.l.b16 %v4445
    %v4992 = vunpack.c.h.b16 %v4445
    %v4993 = vunpack.c.l.b16 %v4446
    %v4994 = vunpack.c.h.b16 %v4446
    %v4995 = vunpack.c.l.b16 %v4447
    %v4996 = vunpack.c.h.b16 %v4447
    %v4997 = vunpack.c.l.b16 %v4448
    %v4998 = vunpack.c.h.b16 %v4448
    %v4999 = vunpack.c.l.b16 %v4449
    %v5000 = vunpack.c.h.b16 %v4449
    %v5001 = vunpack.c.l.b16 %v4450
    %v5002 = vunpack.c.h.b16 %v4450
    %v5003 = vunpack.c.l.b16 %v4451
    %v5004 = vunpack.c.h.b16 %v4451
    %v5005 = vunpack.c.l.b16 %v4452
    %v5006 = vunpack.c.h.b16 %v4452
    %v5007 = vunpack.c.l.b16 %v4453
    %v5008 = vunpack.c.h.b16 %v4453
    %v5009 = vunpack.c.l.b16 %v4454
    %v5010 = vunpack.c.h.b16 %v4454
    %v5011 = vunpack.c.l.b16 %v4455
    %v5012 = vunpack.c.h.b16 %v4455
    %v5013 = vunpack.c.l.b16 %v4456
    %v5014 = vunpack.c.h.b16 %v4456
    %v5015 = vunpack.c.l.b16 %v4457
    %v5016 = vunpack.c.h.b16 %v4457
    %v5017 = vunpack.c.l.b16 %v4458
    %v5018 = vunpack.c.h.b16 %v4458
    %v5019 = vunpack.c.l.b16 %v4459
    %v5020 = vunpack.c.h.b16 %v4459
    %v5021 = vunpack.c.l.b16 %v4460
    %v5022 = vunpack.c.h.b16 %v4460
    %v5023 = vunpack.c.l.b16 %v4461
    %v5024 = vunpack.c.h.b16 %v4461
    %v5025 = vunpack.c.l.b16 %v4462
    %v5026 = vunpack.c.h.b16 %v4462
    %v5027 = vunpack.c.l.b16 %v4463
    %v5028 = vunpack.c.h.b16 %v4463
    %v5029 = vunpack.c.l.b16 %v4464
    %v5030 = vunpack.c.h.b16 %v4464
    %v5031 = vunpack.c.l.b16 %v4465
    %v5032 = vunpack.c.h.b16 %v4465
    %v5033 = vunpack.c.l.b16 %v4466
    %v5034 = vunpack.c.h.b16 %v4466
    %v5035 = vunpack.c.l.b16 %v4467
    %v5036 = vunpack.c.h.b16 %v4467
    %v5037 = vunpack.c.l.b16 %v4468
    %v5038 = vunpack.c.h.b16 %v4468
    %v5039 = vunpack.c.l.b16 %v4469
    %v5040 = vunpack.c.h.b16 %v4469
    %v5041 = vunpack.c.l.b16 %v4470
    %v5042 = vunpack.c.h.b16 %v4470
    %v5043 = vunpack.c.l.b16 %v4471
    %v5044 = vunpack.c.h.b16 %v4471
    %v5045 = vunpack.c.l.b16 %v4472
    %v5046 = vunpack.c.h.b16 %v4472
    %v5047 = vunpack.c.l.b16 %v4473
    %v5048 = vunpack.c.h.b16 %v4473
    %v5049 = vunpack.c.l.b16 %v4474
    %v5050 = vunpack.c.h.b16 %v4474
    %v5051 = vunpack.c.l.b16 %v4475
    %v5052 = vunpack.c.h.b16 %v4475
    %v5053 = vunpack.c.l.b16 %v4476
    %v5054 = vunpack.c.h.b16 %v4476
    %v5055 = vunpack.c.l.b16 %v4477
    %v5056 = vunpack.c.h.b16 %v4477
    %v5057 = vunpack.c.l.b16 %v4478
    %v5058 = vunpack.c.h.b16 %v4478
    %v5059 = vunpack.c.l.b16 %v4479
    %v5060 = vunpack.c.h.b16 %v4479
    %v5061 = vunpack.c.l.b16 %v4480
    %v5062 = vunpack.c.h.b16 %v4480
    %v5063 = vunpack.c.l.b16 %v4481
    %v5064 = vunpack.c.h.b16 %v4481
    %v5065 = vunpack.c.l.b16 %v4482
    %v5066 = vunpack.c.h.b16 %v4482
    %v5067 = vunpack.c.l.b16 %v4483
    %v5068 = vunpack.c.h.b16 %v4483
    %v5069 = vunpack.c.l.b16 %v4484
    %v5070 = vunpack.c.h.b16 %v4484
    %v5071 = vunpack.c.l.b16 %v4485
    %v5072 = vunpack.c.h.b16 %v4485
    %v5073 = vunpack.c.l.b16 %v4486
    %v5074 = vunpack.c.h.b16 %v4486
    %v5075 = vunpack.c.l.b16 %v4487
    %v5076 = vunpack.c.h.b16 %v4487
    %v5077 = vunpack.c.l.b16 %v4488
    %v5078 = vunpack.c.h.b16 %v4488
    %v5079 = vunpack.c.l.b16 %v4489
    %v5080 = vunpack.c.h.b16 %v4489
    %v5081 = vunpack.c.l.b16 %v4490
    %v5082 = vunpack.c.h.b16 %v4490
    %v5083 = vunpack.c.l.b16 %v4491
    %v5084 = vunpack.c.h.b16 %v4491
    %v5085 = vunpack.c.l.b16 %v4492
    %v5086 = vunpack.c.h.b16 %v4492
    %v5087 = vunpack.c.l.b16 %v4493
    %v5088 = vunpack.c.h.b16 %v4493
    %v5089 = vunpack.c.l.b16 %v4494
    %v5090 = vunpack.c.h.b16 %v4494
    %v5091 = vunpack.c.l.b16 %v4495
    %v5092 = vunpack.c.h.b16 %v4495
    %v5093 = vunpack.c.l.b16 %v4496
    %v5094 = vunpack.c.h.b16 %v4496
    %v5095 = vunpack.c.l.b16 %v4497
    %v5096 = vunpack.c.h.b16 %v4497
    %v5097 = vunpack.c.l.b16 %v4498
    %v5098 = vunpack.c.h.b16 %v4498
    %v5099 = vunpack.c.l.b16 %v4499
    %v5100 = vunpack.c.h.b16 %v4499
    %v5101 = vunpack.c.l.b16 %v4500
    %v5102 = vunpack.c.h.b16 %v4500
    %v5103 = vunpack.c.l.b16 %v4501
    %v5104 = vunpack.c.h.b16 %v4501
    %v5105 = vunpack.c.l.b16 %v4502
    %v5106 = vunpack.c.h.b16 %v4502
    %v5107 = vunpack.c.l.b16 %v4503
    %v5108 = vunpack.c.h.b16 %v4503
    %v5109 = vunpack.c.l.b16 %v4504
    %v5110 = vunpack.c.h.b16 %v4504
    %v5111 = vunpack.c.l.b16 %v4505
    %v5112 = vunpack.c.h.b16 %v4505
    %v5113 = vunpack.c.l.b16 %v4506
    %v5114 = vunpack.c.h.b16 %v4506
    %v5115 = vunpack.c.l.b16 %v4507
    %v5116 = vunpack.c.h.b16 %v4507
    %v5117 = vunpack.c.l.b16 %v4508
    %v5118 = vunpack.c.h.b16 %v4508
    %v5119 = vunpack.c.l.b16 %v4509
    %v5120 = vunpack.c.h.b16 %v4509
    %v5121 = vunpack.c.l.b16 %v4510
    %v5122 = vunpack.c.h.b16 %v4510
    %v5123 = vunpack.c.l.b16 %v4511
    %v5124 = vunpack.c.h.b16 %v4511
    %v5125 = vunpack.c.l.b16 %v4512
    %v5126 = vunpack.c.h.b16 %v4512
    %v5127 = vunpack.c.l.b16 %v4513
    %v5128 = vunpack.c.h.b16 %v4513
    %v5129 = vunpack.c.l.b16 %v4514
    %v5130 = vunpack.c.h.b16 %v4514
    %v5131 = vunpack.c.l.b16 %v4515
    %v5132 = vunpack.c.h.b16 %v4515
    %v5133 = vunpack.c.l.b16 %v4516
    %v5134 = vunpack.c.h.b16 %v4516
    %v5135 = vunpack.c.l.b16 %v4517
    %v5136 = vunpack.c.h.b16 %v4517
    %v5137 = vunpack.c.l.b16 %v4518
    %v5138 = vunpack.c.h.b16 %v4518
    %v5139 = vunpack.c.l.b16 %v4519
    %v5140 = vunpack.c.h.b16 %v4519
    %v5141 = vunpack.c.l.b16 %v4520
    %v5142 = vunpack.c.h.b16 %v4520
    %v5143 = vunpack.c.l.b16 %v4521
    %v5144 = vunpack.c.h.b16 %v4521
    %v5145 = vunpack.c.l.b16 %v4522
    %v5146 = vunpack.c.h.b16 %v4522
    %v5147 = vunpack.c.l.b16 %v4523
    %v5148 = vunpack.c.h.b16 %v4523
    %v5149 = vunpack.c.l.b16 %v4524
    %v5150 = vunpack.c.h.b16 %v4524
    %v5151 = vunpack.c.l.b16 %v4525
    %v5152 = vunpack.c.h.b16 %v4525
    %v5153 = vunpack.c.l.b16 %v4526
    %v5154 = vunpack.c.h.b16 %v4526
    %v5155 = vunpack.c.l.b16 %v4527
    %v5156 = vunpack.c.h.b16 %v4527
    %v5157 = vunpack.c.l.b16 %v4528
    %v5158 = vunpack.c.h.b16 %v4528
    %v5159 = vunpack.c.l.b16 %v4529
    %v5160 = vunpack.c.h.b16 %v4529
    %v5161 = vunpack.c.l.b16 %v4530
    %v5162 = vunpack.c.h.b16 %v4530
    %v5163 = vunpack.c.l.b16 %v4531
    %v5164 = vunpack.c.h.b16 %v4531
    %v5165 = vunpack.c.l.b16 %v4532
    %v5166 = vunpack.c.h.b16 %v4532
    %v5167 = vunpack.c.l.b16 %v4533
    %v5168 = vunpack.c.h.b16 %v4533
    %v5169 = vunpack.c.l.b16 %v4534
    %v5170 = vunpack.c.h.b16 %v4534
    %v5171 = vunpack.c.l.b16 %v4535
    %v5172 = vunpack.c.h.b16 %v4535
    %v5173 = vunpack.c.l.b16 %v4536
    %v5174 = vunpack.c.h.b16 %v4536
    %v5175 = vunpack.c.l.b16 %v4537
    %v5176 = vunpack.c.h.b16 %v4537
    %v5177 = vunpack.c.l.b16 %v4538
    %v5178 = vunpack.c.h.b16 %v4538
    %v5179 = vunpack.c.l.b16 %v4539
    %v5180 = vunpack.c.h.b16 %v4539
    %v5181 = vunpack.c.l.b16 %v4540
    %v5182 = vunpack.c.h.b16 %v4540
    %v5183 = vunpack.c.l.b16 %v4541
    %v5184 = vunpack.c.h.b16 %v4541
    %v5185 = vunpack.c.l.b16 %v4542
    %v5186 = vunpack.c.h.b16 %v4542
    %v5187 = vunpack.c.l.b16 %v4543
    %v5188 = vunpack.c.h.b16 %v4543
    %v5189 = vunpack.c.l.b16 %v4544
    %v5190 = vunpack.c.h.b16 %v4544
    %v5191 = vunpack.c.l.b16 %v4545
    %v5192 = vunpack.c.h.b16 %v4545
    %v5193 = vunpack.c.l.b16 %v4546
    %v5194 = vunpack.c.h.b16 %v4546
    %v5195 = vunpack.c.l.b16 %v4547
    %v5196 = vunpack.c.h.b16 %v4547
    %v5197 = vunpack.c.l.b16 %v4548
    %v5198 = vunpack.c.h.b16 %v4548
    %v5199 = vunpack.c.l.b16 %v4549
    %v5200 = vunpack.c.h.b16 %v4549
    %v5201 = vunpack.c.l.b16 %v4550
    %v5202 = vunpack.c.h.b16 %v4550
    %v5203 = vunpack.c.l.b16 %v4551
    %v5204 = vunpack.c.h.b16 %v4551
    %v5205 = vunpack.c.l.b16 %v4552
    %v5206 = vunpack.c.h.b16 %v4552
    %v5207 = vunpack.c.l.b16 %v4553
    %v5208 = vunpack.c.h.b16 %v4553
    %v5209 = vunpack.c.l.b16 %v4554
    %v5210 = vunpack.c.h.b16 %v4554
    %v5211 = vunpack.c.l.b16 %v4555
    %v5212 = vunpack.c.h.b16 %v4555
    %v5213 = vunpack.c.l.b16 %v4556
    %v5214 = vunpack.c.h.b16 %v4556
    %v5215 = vunpack.c.l.b16 %v4557
    %v5216 = vunpack.c.h.b16 %v4557
    %v5217 = vunpack.c.l.b16 %v4558
    %v5218 = vunpack.c.h.b16 %v4558
    %v5219 = vunpack.c.l.b16 %v4559
    %v5220 = vunpack.c.h.b16 %v4559
    %v5221 = vunpack.c.l.b16 %v4560
    %v5222 = vunpack.c.h.b16 %v4560
    %v5223 = vunpack.c.l.b16 %v4561
    %v5224 = vunpack.c.h.b16 %v4561
    %v5225 = vunpack.c.l.b16 %v4562
    %v5226 = vunpack.c.h.b16 %v4562
    %v5227 = vunpack.c.l.b16 %v4563
    %v5228 = vunpack.c.h.b16 %v4563
    %v5229 = vunpack.c.l.b16 %v4564
    %v5230 = vunpack.c.h.b16 %v4564
    %v5231 = vunpack.c.l.b16 %v4565
    %v5232 = vunpack.c.h.b16 %v4565
    %v5233 = vunpack.c.l.b16 %v4566
    %v5234 = vunpack.c.h.b16 %v4566
    %v5235 = vunpack.c.l.b16 %v4567
    %v5236 = vunpack.c.h.b16 %v4567
    %v5237 = vunpack.c.l.b16 %v4568
    %v5238 = vunpack.c.h.b16 %v4568
    %v5239 = vunpack.c.l.b16 %v4569
    %v5240 = vunpack.c.h.b16 %v4569
    %v5241 = vunpack.c.l.b16 %v4570
    %v5242 = vunpack.c.h.b16 %v4570
    %v5243 = vunpack.c.l.b16 %v4571
    %v5244 = vunpack.c.h.b16 %v4571
    %v5245 = vunpack.c.l.b16 %v4572
    %v5246 = vunpack.c.h.b16 %v4572
    %v5247 = vunpack.c.l.b16 %v4573
    %v5248 = vunpack.c.h.b16 %v4573
    %v5249 = vunpack.c.l.b16 %v4574
    %v5250 = vunpack.c.h.b16 %v4574
    %v5251 = vunpack.c.l.b16 %v4575
    %v5252 = vunpack.c.h.b16 %v4575
    %v5253 = vunpack.c.l.b16 %v4576
    %v5254 = vunpack.c.h.b16 %v4576
    %v5255 = vunpack.c.l.b16 %v4577
    %v5256 = vunpack.c.h.b16 %v4577
    %v5257 = vunpack.c.l.b16 %v4578
    %v5258 = vunpack.c.h.b16 %v4578
    %v5259 = vunpack.c.l.b16 %v4579
    %v5260 = vunpack.c.h.b16 %v4579
    %v5261 = vunpack.c.l.b16 %v4580
    %v5262 = vunpack.c.h.b16 %v4580
    %v5263 = vunpack.c.l.b16 %v4581
    %v5264 = vunpack.c.h.b16 %v4581
    %v5265 = vunpack.c.l.b16 %v4582
    %v5266 = vunpack.c.h.b16 %v4582
    %v5267 = vunpack.c.l.b16 %v4583
    %v5268 = vunpack.c.h.b16 %v4583
    %v5269 = vunpack.c.l.b16 %v4584
    %v5270 = vunpack.c.h.b16 %v4584
    %v5271 = vunpack.c.l.b16 %v4585
    %v5272 = vunpack.c.h.b16 %v4585
    %v5273 = vunpack.c.l.b16 %v4586
    %v5274 = vunpack.c.h.b16 %v4586
    %v5275 = vunpack.c.l.b16 %v4587
    %v5276 = vunpack.c.h.b16 %v4587
    %v5277 = vunpack.c.l.b16 %v4588
    %v5278 = vunpack.c.h.b16 %v4588
    %v5279 = vunpack.c.l.b16 %v4589
    %v5280 = vunpack.c.h.b16 %v4589
    %v5281 = vunpack.c.l.b16 %v4590
    %v5282 = vunpack.c.h.b16 %v4590
    %v5283 = vunpack.c.l.b16 %v4591
    %v5284 = vunpack.c.h.b16 %v4591
    %v5285 = vunpack.c.l.b16 %v4592
    %v5286 = vunpack.c.h.b16 %v4592
    %v5287 = vunpack.c.l.b16 %v4593
    %v5288 = vunpack.c.h.b16 %v4593
    %v5289 = vunpack.c.l.b16 %v4594
    %v5290 = vunpack.c.h.b16 %v4594
    %v5291 = vunpack.c.l.b16 %v4595
    %v5292 = vunpack.c.h.b16 %v4595
    %v5293 = vunpack.c.l.b16 %v4596
    %v5294 = vunpack.c.h.b16 %v4596
    %v5295 = vunpack.c.l.b16 %v4597
    %v5296 = vunpack.c.h.b16 %v4597
    %v5297 = vunpack.c.l.b16 %v4598
    %v5298 = vunpack.c.h.b16 %v4598
    %v5299 = vunpack.c.l.b16 %v4599
    %v5300 = vunpack.c.h.b16 %v4599
    %v5301 = vunpack.c.l.b16 %v4600
    %v5302 = vunpack.c.h.b16 %v4600
    %v5303 = vunpack.c.l.b16 %v4601
    %v5304 = vunpack.c.h.b16 %v4601
    %v5305 = vunpack.c.l.b16 %v4602
    %v5306 = vunpack.c.h.b16 %v4602
    %v5307 = vunpack.c.l.b16 %v4603
    %v5308 = vunpack.c.h.b16 %v4603
    %v5309 = vunpack.c.l.b16 %v4604
    %v5310 = vunpack.c.h.b16 %v4604
    %v5311 = vunpack.c.l.b16 %v4605
    %v5312 = vunpack.c.h.b16 %v4605
    %v5313 = vunpack.c.l.b16 %v4606
    %v5314 = vunpack.c.h.b16 %v4606
    %v5315 = vunpack.c.l.b16 %v4607
    %v5316 = vunpack.c.h.b16 %v4607
    %v5317 = vunpack.c.l.b16 %v4608
    %v5318 = vunpack.c.h.b16 %v4608
    %v5319 = vunpack.c.l.b16 %v4609
    %v5320 = vunpack.c.h.b16 %v4609
    %v5321 = vunpack.c.l.b16 %v4610
    %v5322 = vunpack.c.h.b16 %v4610
    %v5323 = vunpack.c.l.b16 %v4611
    %v5324 = vunpack.c.h.b16 %v4611
    %v5325 = vunpack.c.l.b16 %v4612
    %v5326 = vunpack.c.h.b16 %v4612
    %v5327 = vunpack.c.l.b16 %v4613
    %v5328 = vunpack.c.h.b16 %v4613
    %v5329 = vunpack.c.l.b16 %v4614
    %v5330 = vunpack.c.h.b16 %v4614
    %v5331 = vunpack.c.l.b16 %v4615
    %v5332 = vunpack.c.h.b16 %v4615
    %v5333 = vunpack.c.l.b16 %v4616
    %v5334 = vunpack.c.h.b16 %v4616
    %v5335 = vunpack.c.l.b16 %v4617
    %v5336 = vunpack.c.h.b16 %v4617
    %v5337 = vunpack.c.l.b16 %v4618
    %v5338 = vunpack.c.h.b16 %v4618
    %v5339 = vunpack.c.l.b16 %v4619
    %v5340 = vunpack.c.h.b16 %v4619
    %v5341 = vunpack.c.l.b16 %v4620
    %v5342 = vunpack.c.h.b16 %v4620
    %v5343 = vunpack.c.l.b16 %v4621
    %v5344 = vunpack.c.h.b16 %v4621
    %v5345 = vunpack.c.l.b16 %v4622
    %v5346 = vunpack.c.h.b16 %v4622
    %v5347 = vunpack.c.l.b16 %v4623
    %v5348 = vunpack.c.h.b16 %v4623
    %v5349 = vunpack.c.l.b16 %v4624
    %v5350 = vunpack.c.h.b16 %v4624
    %v5351 = vunpack.c.l.b16 %v4625
    %v5352 = vunpack.c.h.b16 %v4625
    %v5353 = vunpack.c.l.b16 %v4626
    %v5354 = vunpack.c.h.b16 %v4626
    %v5355 = vunpack.c.l.b16 %v4627
    %v5356 = vunpack.c.h.b16 %v4627
    %v5357 = vunpack.c.l.b16 %v4628
    %v5358 = vunpack.c.h.b16 %v4628
    %v5359 = vunpack.c.l.b16 %v4629
    %v5360 = vunpack.c.h.b16 %v4629
    %v5361 = vunpack.c.l.b16 %v4630
    %v5362 = vunpack.c.h.b16 %v4630
    %v5363 = vunpack.c.l.b16 %v4631
    %v5364 = vunpack.c.h.b16 %v4631
    %v5365 = vunpack.c.l.b16 %v4632
    %v5366 = vunpack.c.h.b16 %v4632
    %v5367 = vunpack.c.l.b16 %v4633
    %v5368 = vunpack.c.h.b16 %v4633
    %v5369 = vunpack.c.l.b16 %v4634
    %v5370 = vunpack.c.h.b16 %v4634
    %v5371 = vunpack.c.l.b16 %v4635
    %v5372 = vunpack.c.h.b16 %v4635
    %v5373 = vunpack.c.l.b16 %v4636
    %v5374 = vunpack.c.h.b16 %v4636
    %v5375 = vunpack.c.l.b16 %v4637
    %v5376 = vunpack.c.h.b16 %v4637
    %v5377 = vunpack.c.l.b16 %v4638
    %v5378 = vunpack.c.h.b16 %v4638
    %v5379 = vunpack.c.l.b16 %v4639
    %v5380 = vunpack.c.h.b16 %v4639
    %v5381 = vunpack.c.l.b16 %v4640
    %v5382 = vunpack.c.h.b16 %v4640
    %v5383 = vunpack.c.l.b16 %v4641
    %v5384 = vunpack.c.h.b16 %v4641
    %v5385 = vunpack.c.l.b16 %v4642
    %v5386 = vunpack.c.h.b16 %v4642
    %v5387 = vunpack.c.l.b16 %v4643
    %v5388 = vunpack.c.h.b16 %v4643
    %v5389 = vunpack.c.l.b16 %v4644
    %v5390 = vunpack.c.h.b16 %v4644
    %v5391 = vunpack.c.l.b16 %v4645
    %v5392 = vunpack.c.h.b16 %v4645
    %v5393 = vunpack.c.l.b16 %v4646
    %v5394 = vunpack.c.h.b16 %v4646
    %v5395 = vunpack.c.l.b16 %v4647
    %v5396 = vunpack.c.h.b16 %v4647
    %v5397 = vunpack.c.l.b16 %v4648
    %v5398 = vunpack.c.h.b16 %v4648
    %v5399 = vunpack.c.l.b16 %v4649
    %v5400 = vunpack.c.h.b16 %v4649
    %v5401 = vunpack.c.l.b16 %v4650
    %v5402 = vunpack.c.h.b16 %v4650
    %v5403 = vunpack.c.l.b16 %v4651
    %v5404 = vunpack.c.h.b16 %v4651
    %v5405 = vunpack.c.l.b16 %v4652
    %v5406 = vunpack.c.h.b16 %v4652
    %v5407 = vunpack.c.l.b16 %v4653
    %v5408 = vunpack.c.h.b16 %v4653
    %v5409 = vunpack.c.l.b16 %v4654
    %v5410 = vunpack.c.h.b16 %v4654
    %v5411 = vunpack.c.l.b16 %v4655
    %v5412 = vunpack.c.h.b16 %v4655
    %v5413 = vunpack.c.l.b16 %v4656
    %v5414 = vunpack.c.h.b16 %v4656
    %v5415 = vunpack.c.l.b16 %v4657
    %v5416 = vunpack.c.h.b16 %v4657
    %v5417 = vunpack.c.l.b16 %v4658
    %v5418 = vunpack.c.h.b16 %v4658
    %v5419 = vunpack.c.l.b16 %v4659
    %v5420 = vunpack.c.h.b16 %v4659
    %v5421 = vunpack.c.l.b16 %v4660
    %v5422 = vunpack.c.h.b16 %v4660
    %v5423 = vunpack.c.l.b16 %v4661
    %v5424 = vunpack.c.h.b16 %v4661
    %v5425 = vunpack.c.l.b16 %v4662
    %v5426 = vunpack.c.h.b16 %v4662
    %v5427 = vunpack.c.l.b16 %v4663
    %v5428 = vunpack.c.h.b16 %v4663
    %v5429 = vunpack.c.l.b16 %v4664
    %v5430 = vunpack.c.h.b16 %v4664
    %v5431 = vunpack.c.l.b16 %v4665
    %v5432 = vunpack.c.h.b16 %v4665
    %v5433 = vunpack.c.l.b16 %v4666
    %v5434 = vunpack.c.h.b16 %v4666
    %v5435 = vunpack.c.l.b16 %v4667
    %v5436 = vunpack.c.h.b16 %v4667
    %v5437 = vunpack.c.l.b16 %v4668
    %v5438 = vunpack.c.h.b16 %v4668
    %v5439 = vunpack.c.l.b16 %v4669
    %v5440 = vunpack.c.h.b16 %v4669
    %v5441 = vunpack.c.l.b16 %v4670
    %v5442 = vunpack.c.h.b16 %v4670
    %v5443 = vunpack.c.l.b16 %v4671
    %v5444 = vunpack.c.h.b16 %v4671
    %v5445 = vunpack.c.l.b16 %v4672
    %v5446 = vunpack.c.h.b16 %v4672
    %v5447 = vunpack.c.l.b16 %v4673
    %v5448 = vunpack.c.h.b16 %v4673
    %v5449 = vunpack.c.l.b16 %v4674
    %v5450 = vunpack.c.h.b16 %v4674
    %v5451 = vunpack.c.l.b16 %v4675
    %v5452 = vunpack.c.h.b16 %v4675
    %v5453 = vunpack.c.l.b16 %v4676
    %v5454 = vunpack.c.h.b16 %v4676
    %v5455 = vunpack.c.l.b16 %v4677
    %v5456 = vunpack.c.h.b16 %v4677
    %v5457 = vunpack.c.l.b16 %v4678
    %v5458 = vunpack.c.h.b16 %v4678
    %v5459 = vunpack.c.l.b16 %v4679
    %v5460 = vunpack.c.h.b16 %v4679
    %v5461 = vunpack.c.l.b16 %v4680
    %v5462 = vunpack.c.h.b16 %v4680
    %v5463 = vunpack.c.l.b16 %v4681
    %v5464 = vunpack.c.h.b16 %v4681
    %v5465 = vunpack.c.l.b16 %v4682
    %v5466 = vunpack.c.h.b16 %v4682
    %v5467 = vunpack.c.l.b16 %v4683
    %v5468 = vunpack.c.h.b16 %v4683
    %v5469 = vunpack.c.l.b16 %v4684
    %v5470 = vunpack.c.h.b16 %v4684
    %v5471 = vunpack.c.l.b16 %v4685
    %v5472 = vunpack.c.h.b16 %v4685
    %v5473 = vunpack.c.l.b16 %v4686
    %v5474 = vunpack.c.h.b16 %v4686
    %v5475 = vunpack.c.l.b16 %v4687
    %v5476 = vunpack.c.h.b16 %v4687
    %v5477 = vunpack.c.l.b16 %v4688
    %v5478 = vunpack.c.h.b16 %v4688
    %v5479 = vpack.c.b16 %v4971, %v4967
    %v5480 = vpack.c.b16 %v4972, %v4968
    %v5481 = vpack.c.b16 %v4973, %v4969
    %v5482 = vpack.c.b16 %v4974, %v4970
    %v5483 = vpack.c.b16 %v4979, %v4975
    %v5484 = vpack.c.b16 %v4980, %v4976
    %v5485 = vpack.c.b16 %v4981, %v4977
    %v5486 = vpack.c.b16 %v4982, %v4978
    %v5487 = vpack.c.b16 %v4987, %v4983
    %v5488 = vpack.c.b16 %v4988, %v4984
    %v5489 = vpack.c.b16 %v4989, %v4985
    %v5490 = vpack.c.b16 %v4990, %v4986
    %v5491 = vpack.c.b16 %v4995, %v4991
    %v5492 = vpack.c.b16 %v4996, %v4992
    %v5493 = vpack.c.b16 %v4997, %v4993
    %v5494 = vpack.c.b16 %v4998, %v4994
    %v5495 = vpack.c.b16 %v5003, %v4999
    %v5496 = vpack.c.b16 %v5004, %v5000
    %v5497 = vpack.c.b16 %v5005, %v5001
    %v5498 = vpack.c.b16 %v5006, %v5002
    %v5499 = vpack.c.b16 %v5011, %v5007
    %v5500 = vpack.c.b16 %v5012, %v5008
    %v5501 = vpack.c.b16 %v5013, %v5009
    %v5502 = vpack.c.b16 %v5014, %v5010
    %v5503 = vpack.c.b16 %v5019, %v5015
    %v5504 = vpack.c.b16 %v5020, %v5016
    %v5505 = vpack.c.b16 %v5021, %v5017
    %v5506 = vpack.c.b16 %v5022, %v5018
    %v5507 = vpack.c.b16 %v5027, %v5023
    %v5508 = vpack.c.b16 %v5028, %v5024
    %v5509 = vpack.c.b16 %v5029, %v5025
    %v5510 = vpack.c.b16 %v5030, %v5026
    %v5511 = vpack.c.b16 %v5035, %v5031
    %v5512 = vpack.c.b16 %v5036, %v5032
    %v5513 = vpack.c.b16 %v5037, %v5033
    %v5514 = vpack.c.b16 %v5038, %v5034
    %v5515 = vpack.c.b16 %v5043, %v5039
    %v5516 = vpack.c.b16 %v5044, %v5040
    %v5517 = vpack.c.b16 %v5045, %v5041
    %v5518 = vpack.c.b16 %v5046, %v5042
    %v5519 = vpack.c.b16 %v5051, %v5047
    %v5520 = vpack.c.b16 %v5052, %v5048
    %v5521 = vpack.c.b16 %v5053, %v5049
    %v5522 = vpack.c.b16 %v5054, %v5050
    %v5523 = vpack.c.b16 %v5059, %v5055
    %v5524 = vpack.c.b16 %v5060, %v5056
    %v5525 = vpack.c.b16 %v5061, %v5057
    %v5526 = vpack.c.b16 %v5062, %v5058
    %v5527 = vpack.c.b16 %v5067, %v5063
    %v5528 = vpack.c.b16 %v5068, %v5064
    %v5529 = vpack.c.b16 %v5069, %v5065
    %v5530 = vpack.c.b16 %v5070, %v5066
    %v5531 = vpack.c.b16 %v5075, %v5071
    %v5532 = vpack.c.b16 %v5076, %v5072
    %v5533 = vpack.c.b16 %v5077, %v5073
    %v5534 = vpack.c.b16 %v5078, %v5074
    %v5535 = vpack.c.b16 %v5083, %v5079
    %v5536 = vpack.c.b16 %v5084, %v5080
    %v5537 = vpack.c.b16 %v5085, %v5081
    %v5538 = vpack.c.b16 %v5086, %v5082
    %v5539 = vpack.c.b16 %v5091, %v5087
    %v5540 = vpack.c.b16 %v5092, %v5088
    %v5541 = vpack.c.b16 %v5093, %v5089
    %v5542 = vpack.c.b16 %v5094, %v5090
    %v5543 = vpack.c.b16 %v5099, %v5095
    %v5544 = vpack.c.b16 %v5100, %v5096
    %v5545 = vpack.c.b16 %v5101, %v5097
    %v5546 = vpack.c.b16 %v5102, %v5098
    %v5547 = vpack.c.b16 %v5107, %v5103
    %v5548 = vpack.c.b16 %v5108, %v5104
    %v5549 = vpack.c.b16 %v5109, %v5105
    %v5550 = vpack.c.b16 %v5110, %v5106
    %v5551 = vpack.c.b16 %v5115, %v5111
    %v5552 = vpack.c.b16 %v5116, %v5112
    %v5553 = vpack.c.b16 %v5117, %v5113
    %v5554 = vpack.c.b16 %v5118, %v5114
    %v5555 = vpack.c.b16 %v5123, %v5119
    %v5556 = vpack.c.b16 %v5124, %v5120
    %v5557 = vpack.c.b16 %v5125, %v5121
    %v5558 = vpack.c.b16 %v5126, %v5122
    %v5559 = vpack.c.b16 %v5131, %v5127
    %v5560 = vpack.c.b16 %v5132, %v5128
    %v5561 = vpack.c.b16 %v5133, %v5129
    %v5562 = vpack.c.b16 %v5134, %v5130
    %v5563 = vpack.c.b16 %v5139, %v5135
    %v5564 = vpack.c.b16 %v5140, %v5136
    %v5565 = vpack.c.b16 %v5141, %v5137
    %v5566 = vpack.c.b16 %v5142, %v5138
    %v5567 = vpack.c.b16 %v5147, %v5143
    %v5568 = vpack.c.b16 %v5148, %v5144
    %v5569 = vpack.c.b16 %v5149, %v5145
    %v5570 = vpack.c.b16 %v5150, %v5146
    %v5571 = vpack.c.b16 %v5155, %v5151
    %v5572 = vpack.c.b16 %v5156, %v5152
    %v5573 = vpack.c.b16 %v5157, %v5153
    %v5574 = vpack.c.b16 %v5158, %v5154
    %v5575 = vpack.c.b16 %v5163, %v5159
    %v5576 = vpack.c.b16 %v5164, %v5160
    %v5577 = vpack.c.b16 %v5165, %v5161
    %v5578 = vpack.c.b16 %v5166, %v5162
    %v5579 = vpack.c.b16 %v5171, %v5167
    %v5580 = vpack.c.b16 %v5172, %v5168
    %v5581 = vpack.c.b16 %v5173, %v5169
    %v5582 = vpack.c.b16 %v5174, %v5170
    %v5583 = vpack.c.b16 %v5179, %v5175
    %v5584 = vpack.c.b16 %v5180, %v5176
    %v5585 = vpack.c.b16 %v5181, %v5177
    %v5586 = vpack.c.b16 %v5182, %v5178
    %v5587 = vpack.c.b16 %v5187, %v5183
    %v5588 = vpack.c.b16 %v5188, %v5184
    %v5589 = vpack.c.b16 %v5189, %v5185
    %v5590 = vpack.c.b16 %v5190, %v5186
    %v5591 = vpack.c.b16 %v5195, %v5191
    %v5592 = vpack.c.b16 %v5196, %v5192
    %v5593 = vpack.c.b16 %v5197, %v5193
    %v5594 = vpack.c.b16 %v5198, %v5194
    %v5595 = vpack.c.b16 %v5203, %v5199
    %v5596 = vpack.c.b16 %v5204, %v5200
    %v5597 = vpack.c.b16 %v5205, %v5201
    %v5598 = vpack.c.b16 %v5206, %v5202
    %v5599 = vpack.c.b16 %v5211, %v5207
    %v5600 = vpack.c.b16 %v5212, %v5208
    %v5601 = vpack.c.b16 %v5213, %v5209
    %v5602 = vpack.c.b16 %v5214, %v5210
    %v5603 = vpack.c.b16 %v5219, %v5215
    %v5604 = vpack.c.b16 %v5220, %v5216
    %v5605 = vpack.c.b16 %v5221, %v5217
    %v5606 = vpack.c.b16 %v5222, %v5218
    %v5607 = vpack.c.b16 %v5227, %v5223
    %v5608 = vpack.c.b16 %v5228, %v5224
    %v5609 = vpack.c.b16 %v5229, %v5225
    %v5610 = vpack.c.b16 %v5230, %v5226
    %v5611 = vpack.c.b16 %v5235, %v5231
    %v5612 = vpack.c.b16 %v5236, %v5232
    %v5613 = vpack.c.b16 %v5237, %v5233
    %v5614 = vpack.c.b16 %v5238, %v5234
    %v5615 = vpack.c.b16 %v5243, %v5239
    %v5616 = vpack.c.b16 %v5244, %v5240
    %v5617 = vpack.c.b16 %v5245, %v5241
    %v5618 = vpack.c.b16 %v5246, %v5242
    %v5619 = vpack.c.b16 %v5251, %v5247
    %v5620 = vpack.c.b16 %v5252, %v5248
    %v5621 = vpack.c.b16 %v5253, %v5249
    %v5622 = vpack.c.b16 %v5254, %v5250
    %v5623 = vpack.c.b16 %v5259, %v5255
    %v5624 = vpack.c.b16 %v5260, %v5256
    %v5625 = vpack.c.b16 %v5261, %v5257
    %v5626 = vpack.c.b16 %v5262, %v5258
    %v5627 = vpack.c.b16 %v5267, %v5263
    %v5628 = vpack.c.b16 %v5268, %v5264
    %v5629 = vpack.c.b16 %v5269, %v5265
    %v5630 = vpack.c.b16 %v5270, %v5266
    %v5631 = vpack.c.b16 %v5275, %v5271
    %v5632 = vpack.c.b16 %v5276, %v5272
    %v5633 = vpack.c.b16 %v5277, %v5273
    %v5634 = vpack.c.b16 %v5278, %v5274
    %v5635 = vpack.c.b16 %v5283, %v5279
    %v5636 = vpack.c.b16 %v5284, %v5280
    %v5637 = vpack.c.b16 %v5285, %v5281
    %v5638 = vpack.c.b16 %v5286, %v5282
    %v5639 = vpack.c.b16 %v5291, %v5287
    %v5640 = vpack.c.b16 %v5292, %v5288
    %v5641 = vpack.c.b16 %v5293, %v5289
    %v5642 = vpack.c.b16 %v5294, %v5290
    %v5643 = vpack.c.b16 %v5299, %v5295
    %v5644 = vpack.c.b16 %v5300, %v5296
    %v5645 = vpack.c.b16 %v5301, %v5297
    %v5646 = vpack.c.b16 %v5302, %v5298
    %v5647 = vpack.c.b16 %v5307, %v5303
    %v5648 = vpack.c.b16 %v5308, %v5304
    %v5649 = vpack.c.b16 %v5309, %v5305
    %v5650 = vpack.c.b16 %v5310, %v5306
    %v5651 = vpack.c.b16 %v5315, %v5311
    %v5652 = vpack.c.b16 %v5316, %v5312
    %v5653 = vpack.c.b16 %v5317, %v5313
    %v5654 = vpack.c.b16 %v5318, %v5314
    %v5655 = vpack.c.b16 %v5323, %v5319
    %v5656 = vpack.c.b16 %v5324, %v5320
    %v5657 = vpack.c.b16 %v5325, %v5321
    %v5658 = vpack.c.b16 %v5326, %v5322
    %v5659 = vpack.c.b16 %v5331, %v5327
    %v5660 = vpack.c.b16 %v5332, %v5328
    %v5661 = vpack.c.b16 %v5333, %v5329
    %v5662 = vpack.c.b16 %v5334, %v5330
    %v5663 = vpack.c.b16 %v5339, %v5335
    %v5664 = vpack.c.b16 %v5340, %v5336
    %v5665 = vpack.c.b16 %v5341, %v5337
    %v5666 = vpack.c.b16 %v5342, %v5338
    %v5667 = vpack.c.b16 %v5347, %v5343
    %v5668 = vpack.c.b16 %v5348, %v5344
    %v5669 = vpack.c.b16 %v5349, %v5345
    %v5670 = vpack.c.b16 %v5350, %v5346
    %v5671 = vpack.c.b16 %v5355, %v5351
    %v5672 = vpack.c.b16 %v5356, %v5352
    %v5673 = vpack.c.b16 %v5357, %v5353
    %v5674 = vpack.c.b16 %v5358, %v5354
    %v5675 = vpack.c.b16 %v5363, %v5359
    %v5676 = vpack.c.b16 %v5364, %v5360
    %v5677 = vpack.c.b16 %v5365, %v5361
    %v5678 = vpack.c.b16 %v5366, %v5362
    %v5679 = vpack.c.b16 %v5371, %v5367
    %v5680 = vpack.c.b16 %v5372, %v5368
    %v5681 = vpack.c.b16 %v5373, %v5369
    %v5682 = vpack.c.b16 %v5374, %v5370
    %v5683 = vpack.c.b16 %v5379, %v5375
    %v5684 = vpack.c.b16 %v5380, %v5376
    %v5685 = vpack.c.b16 %v5381, %v5377
    %v5686 = vpack.c.b16 %v5382, %v5378
    %v5687 = vpack.c.b16 %v5387, %v5383
    %v5688 = vpack.c.b16 %v5388, %v5384
    %v5689 = vpack.c.b16 %v5389, %v5385
    %v5690 = vpack.c.b16 %v5390, %v5386
    %v5691 = vpack.c.b16 %v5395, %v5391
    %v5692 = vpack.c.b16 %v5396, %v5392
    %v5693 = vpack.c.b16 %v5397, %v5393
    %v5694 = vpack.c.b16 %v5398, %v5394
    %v5695 = vpack.c.b16 %v5403, %v5399
    %v5696 = vpack.c.b16 %v5404, %v5400
    %v5697 = vpack.c.b16 %v5405, %v5401
    %v5698 = vpack.c.b16 %v5406, %v5402
    %v5699 = vpack.c.b16 %v5411, %v5407
    %v5700 = vpack.c.b16 %v5412, %v5408
    %v5701 = vpack.c.b16 %v5413, %v5409
    %v5702 = vpack.c.b16 %v5414, %v5410
    %v5703 = vpack.c.b16 %v5419, %v5415
    %v5704 = vpack.c.b16 %v5420, %v5416
    %v5705 = vpack.c.b16 %v5421, %v5417
    %v5706 = vpack.c.b16 %v5422, %v5418
    %v5707 = vpack.c.b16 %v5427, %v5423
    %v5708 = vpack.c.b16 %v5428, %v5424
    %v5709 = vpack.c.b16 %v5429, %v5425
    %v5710 = vpack.c.b16 %v5430, %v5426
    %v5711 = vpack.c.b16 %v5435, %v5431
    %v5712 = vpack.c.b16 %v5436, %v5432
    %v5713 = vpack.c.b16 %v5437, %v5433
    %v5714 = vpack.c.b16 %v5438, %v5434
    %v5715 = vpack.c.b16 %v5443, %v5439
    %v5716 = vpack.c.b16 %v5444, %v5440
    %v5717 = vpack.c.b16 %v5445, %v5441
    %v5718 = vpack.c.b16 %v5446, %v5442
    %v5719 = vpack.c.b16 %v5451, %v5447
    %v5720 = vpack.c.b16 %v5452, %v5448
    %v5721 = vpack.c.b16 %v5453, %v5449
    %v5722 = vpack.c.b16 %v5454, %v5450
    %v5723 = vpack.c.b16 %v5459, %v5455
    %v5724 = vpack.c.b16 %v5460, %v5456
    %v5725 = vpack.c.b16 %v5461, %v5457
    %v5726 = vpack.c.b16 %v5462, %v5458
    %v5727 = vpack.c.b16 %v5467, %v5463
    %v5728 = vpack.c.b16 %v5468, %v5464
    %v5729 = vpack.c.b16 %v5469, %v5465
    %v5730 = vpack.c.b16 %v5470, %v5466
    %v5731 = vpack.c.b16 %v5475, %v5471
    %v5732 = vpack.c.b16 %v5476, %v5472
    %v5733 = vpack.c.b16 %v5477, %v5473
    %v5734 = vpack.c.b16 %v5478, %v5474
    %5991 = vmatprep.subr.bf16.mxu0 %v5480
    %5992 = vmatpush1.bf16.msra.mxu0 %v5479
    %5993 = vmatprep.subr.bf16.mxu0 %v5484
    %5994 = vmatpush1.bf16.msra.mxu0 %v5483
    %5995 = vmatprep.subr.bf16.mxu0 %v5488
    %5996 = vmatpush1.bf16.msra.mxu0 %v5487
    %5997 = vmatprep.subr.bf16.mxu0 %v5492
    %5998 = vmatpush1.bf16.msra.mxu0 %v5491
    %5999 = vmatprep.subr.bf16.mxu0 %v5496
    %6000 = vmatpush1.bf16.msra.mxu0 %v5495
    %6001 = vmatprep.subr.bf16.mxu0 %v5500
    %6002 = vmatpush1.bf16.msra.mxu0 %v5499
    %6003 = vmatprep.subr.bf16.mxu0 %v5504
    %6004 = vmatpush1.bf16.msra.mxu0 %v5503
    %6005 = vmatprep.subr.bf16.mxu0 %v5508
    %6006 = vmatpush1.bf16.msra.mxu0 %v5507
    %6007 = vmatprep.subr.bf16.mxu0 %v5512
    %6008 = vmatpush1.bf16.msra.mxu0 %v5511
    %6009 = vmatprep.subr.bf16.mxu0 %v5516
    %6010 = vmatpush1.bf16.msra.mxu0 %v5515
    %6011 = vmatprep.subr.bf16.mxu0 %v5520
    %6012 = vmatpush1.bf16.msra.mxu0 %v5519
    %6013 = vmatprep.subr.bf16.mxu0 %v5524
    %6014 = vmatpush1.bf16.msra.mxu0 %v5523
    %6015 = vmatprep.subr.bf16.mxu0 %v5528
    %6016 = vmatpush1.bf16.msra.mxu0 %v5527
    %6017 = vmatprep.subr.bf16.mxu0 %v5532
    %6018 = vmatpush1.bf16.msra.mxu0 %v5531
    %6019 = vmatprep.subr.bf16.mxu0 %v5536
    %6020 = vmatpush1.bf16.msra.mxu0 %v5535
    %6021 = vmatprep.subr.bf16.mxu0 %v5540
    %6022 = vmatpush1.bf16.msra.mxu0 %v5539
    %6023 = vmatprep.mubr.bf16.mxu0 %v4426
    %6024 = vmatmul.mubr.bf16.gmra.mrb[0].mxu0 %v4425
    %v6025 = vpop.f32.mrb[0].mxu0
    %v6026 = vadd.f32 %v4694, %v6025
    %v6027 = vpop.f32.mrb[0].mxu0
    %v6028 = vadd.f32 %v4698, %v6027
    %v6029 = vpop.f32.mrb[0].mxu0
    %v6030 = vpop.f32.mrb[0].mxu0
    %6031 = vdwg.mxu0
    %6032 = vmatprep.subr.bf16.mxu0 %v5544
    %6033 = vmatpush1.bf16.msra.mxu0 %v5543
    %6034 = vmatprep.subr.bf16.mxu0 %v5548
    %6035 = vmatpush1.bf16.msra.mxu0 %v5547
    %6036 = vmatprep.subr.bf16.mxu0 %v5552
    %6037 = vmatpush1.bf16.msra.mxu0 %v5551
    %6038 = vmatprep.subr.bf16.mxu0 %v5556
    %6039 = vmatpush1.bf16.msra.mxu0 %v5555
    %6040 = vmatprep.subr.bf16.mxu0 %v5560
    %6041 = vmatpush1.bf16.msra.mxu0 %v5559
    %6042 = vmatprep.subr.bf16.mxu0 %v5564
    %6043 = vmatpush1.bf16.msra.mxu0 %v5563
    %6044 = vmatprep.subr.bf16.mxu0 %v5568
    %6045 = vmatpush1.bf16.msra.mxu0 %v5567
    %6046 = vmatprep.subr.bf16.mxu0 %v5572
    %6047 = vmatpush1.bf16.msra.mxu0 %v5571
    %6048 = vmatprep.subr.bf16.mxu0 %v5576
    %6049 = vmatpush1.bf16.msra.mxu0 %v5575
    %6050 = vmatprep.subr.bf16.mxu0 %v5580
    %6051 = vmatpush1.bf16.msra.mxu0 %v5579
    %6052 = vmatprep.subr.bf16.mxu0 %v5584
    %6053 = vmatpush1.bf16.msra.mxu0 %v5583
    %6054 = vmatprep.subr.bf16.mxu0 %v5588
    %6055 = vmatpush1.bf16.msra.mxu0 %v5587
    %6056 = vmatprep.subr.bf16.mxu0 %v5592
    %6057 = vmatpush1.bf16.msra.mxu0 %v5591
    %6058 = vmatprep.subr.bf16.mxu0 %v5596
    %6059 = vmatpush1.bf16.msra.mxu0 %v5595
    %6060 = vmatprep.subr.bf16.mxu0 %v5600
    %6061 = vmatpush1.bf16.msra.mxu0 %v5599
    %6062 = vmatprep.subr.bf16.mxu0 %v5604
    %6063 = vmatpush1.bf16.msra.mxu0 %v5603
    %6064 = vmatprep.mubr.bf16.mxu0 %v4428
    %6065 = vmatmul.mubr.bf16.gmra.mrb[0].mxu0 %v4427
    %v6066 = vpop.f32.mrb[0].mxu0
    %v6067 = vadd.f32 %v6026, %v6066
    %v6068 = vpop.f32.mrb[0].mxu0
    %v6069 = vadd.f32 %v6028, %v6068
    %v6070 = vpop.f32.mrb[0].mxu0
    %v6071 = vpop.f32.mrb[0].mxu0
    %6072 = vdwg.mxu0
    %6073 = vmatprep.subr.bf16.mxu0 %v5608
    %6074 = vmatpush1.bf16.msra.mxu0 %v5607
    %6075 = vmatprep.subr.bf16.mxu0 %v5612
    %6076 = vmatpush1.bf16.msra.mxu0 %v5611
    %6077 = vmatprep.subr.bf16.mxu0 %v5616
    %6078 = vmatpush1.bf16.msra.mxu0 %v5615
    %6079 = vmatprep.subr.bf16.mxu0 %v5620
    %6080 = vmatpush1.bf16.msra.mxu0 %v5619
    %6081 = vmatprep.subr.bf16.mxu0 %v5624
    %6082 = vmatpush1.bf16.msra.mxu0 %v5623
    %6083 = vmatprep.subr.bf16.mxu0 %v5628
    %6084 = vmatpush1.bf16.msra.mxu0 %v5627
    %6085 = vmatprep.subr.bf16.mxu0 %v5632
    %6086 = vmatpush1.bf16.msra.mxu0 %v5631
    %6087 = vmatprep.subr.bf16.mxu0 %v5636
    %6088 = vmatpush1.bf16.msra.mxu0 %v5635
    %6089 = vmatprep.subr.bf16.mxu0 %v5640
    %6090 = vmatpush1.bf16.msra.mxu0 %v5639
    %6091 = vmatprep.subr.bf16.mxu0 %v5644
    %6092 = vmatpush1.bf16.msra.mxu0 %v5643
    %6093 = vmatprep.subr.bf16.mxu0 %v5648
    %6094 = vmatpush1.bf16.msra.mxu0 %v5647
    %6095 = vmatprep.subr.bf16.mxu0 %v5652
    %6096 = vmatpush1.bf16.msra.mxu0 %v5651
    %6097 = vmatprep.subr.bf16.mxu0 %v5656
    %6098 = vmatpush1.bf16.msra.mxu0 %v5655
    %6099 = vmatprep.subr.bf16.mxu0 %v5660
    %6100 = vmatpush1.bf16.msra.mxu0 %v5659
    %6101 = vmatprep.subr.bf16.mxu0 %v5664
    %6102 = vmatpush1.bf16.msra.mxu0 %v5663
    %6103 = vmatprep.subr.bf16.mxu0 %v5668
    %6104 = vmatpush1.bf16.msra.mxu0 %v5667
    %6105 = vmatprep.mubr.bf16.mxu0 %v4430
    %6106 = vmatmul.mubr.bf16.gmra.mrb[0].mxu0 %v4429
    %v6107 = vpop.f32.mrb[0].mxu0
    %v6108 = vadd.f32 %v6067, %v6107
    %v6109 = vpop.f32.mrb[0].mxu0
    %v6110 = vadd.f32 %v6069, %v6109
    %v6111 = vpop.f32.mrb[0].mxu0
    %v6112 = vpop.f32.mrb[0].mxu0
    %6113 = vdwg.mxu0
    %6114 = vmatprep.subr.bf16.mxu0 %v5672
    %6115 = vmatpush1.bf16.msra.mxu0 %v5671
    %6116 = vmatprep.subr.bf16.mxu0 %v5676
    %6117 = vmatpush1.bf16.msra.mxu0 %v5675
    %6118 = vmatprep.subr.bf16.mxu0 %v5680
    %6119 = vmatpush1.bf16.msra.mxu0 %v5679
    %6120 = vmatprep.subr.bf16.mxu0 %v5684
    %6121 = vmatpush1.bf16.msra.mxu0 %v5683
    %6122 = vmatprep.subr.bf16.mxu0 %v5688
    %6123 = vmatpush1.bf16.msra.mxu0 %v5687
    %6124 = vmatprep.subr.bf16.mxu0 %v5692
    %6125 = vmatpush1.bf16.msra.mxu0 %v5691
    %6126 = vmatprep.subr.bf16.mxu0 %v5696
    %6127 = vmatpush1.bf16.msra.mxu0 %v5695
    %6128 = vmatprep.subr.bf16.mxu0 %v5700
    %6129 = vmatpush1.bf16.msra.mxu0 %v5699
    %6130 = vmatprep.subr.bf16.mxu0 %v5704
    %6131 = vmatpush1.bf16.msra.mxu0 %v5703
    %6132 = vmatprep.subr.bf16.mxu0 %v5708
    %6133 = vmatpush1.bf16.msra.mxu0 %v5707
    %6134 = vmatprep.subr.bf16.mxu0 %v5712
    %6135 = vmatpush1.bf16.msra.mxu0 %v5711
    %6136 = vmatprep.subr.bf16.mxu0 %v5716
    %6137 = vmatpush1.bf16.msra.mxu0 %v5715
    %6138 = vmatprep.subr.bf16.mxu0 %v5720
    %6139 = vmatpush1.bf16.msra.mxu0 %v5719
    %6140 = vmatprep.subr.bf16.mxu0 %v5724
    %6141 = vmatpush1.bf16.msra.mxu0 %v5723
    %6142 = vmatprep.subr.bf16.mxu0 %v5728
    %6143 = vmatpush1.bf16.msra.mxu0 %v5727
    %6144 = vmatprep.subr.bf16.mxu0 %v5732
    %6145 = vmatpush1.bf16.msra.mxu0 %v5731
    %6146 = vmatprep.mubr.bf16.mxu0 %v4432
    %6147 = vmatmul.mubr.bf16.gmra.mrb[0].mxu0 %v4431
    %v6148 = vpop.f32.mrb[0].mxu0
    %v6149 = vadd.f32 %v6108, %v6148
    %v6150 = vpop.f32.mrb[0].mxu0
    %v6151 = vadd.f32 %v6110, %v6150
    %v6152 = vpop.f32.mrb[0].mxu0
    %v6153 = vpop.f32.mrb[0].mxu0
    %6154 = vdwg.mxu0
    %6155 = vmatprep.subr.bf16.mxu0 %v5482
    %6156 = vmatpush1.bf16.msra.mxu0 %v5481
    %6157 = vmatprep.subr.bf16.mxu0 %v5486
    %6158 = vmatpush1.bf16.msra.mxu0 %v5485
    %6159 = vmatprep.subr.bf16.mxu0 %v5490
    %6160 = vmatpush1.bf16.msra.mxu0 %v5489
    %6161 = vmatprep.subr.bf16.mxu0 %v5494
    %6162 = vmatpush1.bf16.msra.mxu0 %v5493
    %6163 = vmatprep.subr.bf16.mxu0 %v5498
    %6164 = vmatpush1.bf16.msra.mxu0 %v5497
    %6165 = vmatprep.subr.bf16.mxu0 %v5502
    %6166 = vmatpush1.bf16.msra.mxu0 %v5501
    %6167 = vmatprep.subr.bf16.mxu0 %v5506
    %6168 = vmatpush1.bf16.msra.mxu0 %v5505
    %6169 = vmatprep.subr.bf16.mxu0 %v5510
    %6170 = vmatpush1.bf16.msra.mxu0 %v5509
    %6171 = vmatprep.subr.bf16.mxu0 %v5514
    %6172 = vmatpush1.bf16.msra.mxu0 %v5513
    %6173 = vmatprep.subr.bf16.mxu0 %v5518
    %6174 = vmatpush1.bf16.msra.mxu0 %v5517
    %6175 = vmatprep.subr.bf16.mxu0 %v5522
    %6176 = vmatpush1.bf16.msra.mxu0 %v5521
    %6177 = vmatprep.subr.bf16.mxu0 %v5526
    %6178 = vmatpush1.bf16.msra.mxu0 %v5525
    %6179 = vmatprep.subr.bf16.mxu0 %v5530
    %6180 = vmatpush1.bf16.msra.mxu0 %v5529
    %6181 = vmatprep.subr.bf16.mxu0 %v5534
    %6182 = vmatpush1.bf16.msra.mxu0 %v5533
    %6183 = vmatprep.subr.bf16.mxu0 %v5538
    %6184 = vmatpush1.bf16.msra.mxu0 %v5537
    %6185 = vmatprep.subr.bf16.mxu0 %v5542
    %6186 = vmatpush1.bf16.msra.mxu0 %v5541
    %6187 = vmatprep.mubr.bf16.mxu0 %v4426
    %6188 = vmatmul.mubr.bf16.gmra.mrb[0].mxu0 %v4425
    %v6189 = vpop.f32.mrb[0].mxu0
    %v6190 = vadd.f32 %v4702, %v6189
    %v6191 = vpop.f32.mrb[0].mxu0
    %v6192 = vadd.f32 %v4706, %v6191
    %v6193 = vpop.f32.mrb[0].mxu0
    %v6194 = vpop.f32.mrb[0].mxu0
    %6195 = vdwg.mxu0
    %6196 = vmatprep.subr.bf16.mxu0 %v5546
    %6197 = vmatpush1.bf16.msra.mxu0 %v5545
    %6198 = vmatprep.subr.bf16.mxu0 %v5550
    %6199 = vmatpush1.bf16.msra.mxu0 %v5549
    %6200 = vmatprep.subr.bf16.mxu0 %v5554
    %6201 = vmatpush1.bf16.msra.mxu0 %v5553
    %6202 = vmatprep.subr.bf16.mxu0 %v5558
    %6203 = vmatpush1.bf16.msra.mxu0 %v5557
    %6204 = vmatprep.subr.bf16.mxu0 %v5562
    %6205 = vmatpush1.bf16.msra.mxu0 %v5561
    %6206 = vmatprep.subr.bf16.mxu0 %v5566
    %6207 = vmatpush1.bf16.msra.mxu0 %v5565
    %6208 = vmatprep.subr.bf16.mxu0 %v5570
    %6209 = vmatpush1.bf16.msra.mxu0 %v5569
    %6210 = vmatprep.subr.bf16.mxu0 %v5574
    %6211 = vmatpush1.bf16.msra.mxu0 %v5573
    %6212 = vmatprep.subr.bf16.mxu0 %v5578
    %6213 = vmatpush1.bf16.msra.mxu0 %v5577
    %6214 = vmatprep.subr.bf16.mxu0 %v5582
    %6215 = vmatpush1.bf16.msra.mxu0 %v5581
    %6216 = vmatprep.subr.bf16.mxu0 %v5586
    %6217 = vmatpush1.bf16.msra.mxu0 %v5585
    %6218 = vmatprep.subr.bf16.mxu0 %v5590
    %6219 = vmatpush1.bf16.msra.mxu0 %v5589
    %6220 = vmatprep.subr.bf16.mxu0 %v5594
    %6221 = vmatpush1.bf16.msra.mxu0 %v5593
    %6222 = vmatprep.subr.bf16.mxu0 %v5598
    %6223 = vmatpush1.bf16.msra.mxu0 %v5597
    %6224 = vmatprep.subr.bf16.mxu0 %v5602
    %6225 = vmatpush1.bf16.msra.mxu0 %v5601
    %6226 = vmatprep.subr.bf16.mxu0 %v5606
    %6227 = vmatpush1.bf16.msra.mxu0 %v5605
    %6228 = vmatprep.mubr.bf16.mxu0 %v4428
    %6229 = vmatmul.mubr.bf16.gmra.mrb[0].mxu0 %v4427
    %v6230 = vpop.f32.mrb[0].mxu0
    %v6231 = vadd.f32 %v6190, %v6230
    %v6232 = vpop.f32.mrb[0].mxu0
    %v6233 = vadd.f32 %v6192, %v6232
    %v6234 = vpop.f32.mrb[0].mxu0
    %v6235 = vpop.f32.mrb[0].mxu0
    %6236 = vdwg.mxu0
    %6237 = vmatprep.subr.bf16.mxu0 %v5610
    %6238 = vmatpush1.bf16.msra.mxu0 %v5609
    %6239 = vmatprep.subr.bf16.mxu0 %v5614
    %6240 = vmatpush1.bf16.msra.mxu0 %v5613
    %6241 = vmatprep.subr.bf16.mxu0 %v5618
    %6242 = vmatpush1.bf16.msra.mxu0 %v5617
    %6243 = vmatprep.subr.bf16.mxu0 %v5622
    %6244 = vmatpush1.bf16.msra.mxu0 %v5621
    %6245 = vmatprep.subr.bf16.mxu0 %v5626
    %6246 = vmatpush1.bf16.msra.mxu0 %v5625
    %6247 = vmatprep.subr.bf16.mxu0 %v5630
    %6248 = vmatpush1.bf16.msra.mxu0 %v5629
    %6249 = vmatprep.subr.bf16.mxu0 %v5634
    %6250 = vmatpush1.bf16.msra.mxu0 %v5633
    %6251 = vmatprep.subr.bf16.mxu0 %v5638
    %6252 = vmatpush1.bf16.msra.mxu0 %v5637
    %6253 = vmatprep.subr.bf16.mxu0 %v5642
    %6254 = vmatpush1.bf16.msra.mxu0 %v5641
    %6255 = vmatprep.subr.bf16.mxu0 %v5646
    %6256 = vmatpush1.bf16.msra.mxu0 %v5645
    %6257 = vmatprep.subr.bf16.mxu0 %v5650
    %6258 = vmatpush1.bf16.msra.mxu0 %v5649
    %6259 = vmatprep.subr.bf16.mxu0 %v5654
    %6260 = vmatpush1.bf16.msra.mxu0 %v5653
    %6261 = vmatprep.subr.bf16.mxu0 %v5658
    %6262 = vmatpush1.bf16.msra.mxu0 %v5657
    %6263 = vmatprep.subr.bf16.mxu0 %v5662
    %6264 = vmatpush1.bf16.msra.mxu0 %v5661
    %6265 = vmatprep.subr.bf16.mxu0 %v5666
    %6266 = vmatpush1.bf16.msra.mxu0 %v5665
    %6267 = vmatprep.subr.bf16.mxu0 %v5670
    %6268 = vmatpush1.bf16.msra.mxu0 %v5669
    %6269 = vmatprep.mubr.bf16.mxu0 %v4430
    %6270 = vmatmul.mubr.bf16.gmra.mrb[0].mxu0 %v4429
    %v6271 = vpop.f32.mrb[0].mxu0
    %v6272 = vadd.f32 %v6231, %v6271
    %v6273 = vpop.f32.mrb[0].mxu0
    %v6274 = vadd.f32 %v6233, %v6273
    %v6275 = vpop.f32.mrb[0].mxu0
    %v6276 = vpop.f32.mrb[0].mxu0
    %6277 = vdwg.mxu0
    %6278 = vmatprep.subr.bf16.mxu0 %v5674
    %6279 = vmatpush1.bf16.msra.mxu0 %v5673
    %6280 = vmatprep.subr.bf16.mxu0 %v5678
    %6281 = vmatpush1.bf16.msra.mxu0 %v5677
    %6282 = vmatprep.subr.bf16.mxu0 %v5682
    %6283 = vmatpush1.bf16.msra.mxu0 %v5681
    %6284 = vmatprep.subr.bf16.mxu0 %v5686
    %6285 = vmatpush1.bf16.msra.mxu0 %v5685
    %6286 = vmatprep.subr.bf16.mxu0 %v5690
    %6287 = vmatpush1.bf16.msra.mxu0 %v5689
    %6288 = vmatprep.subr.bf16.mxu0 %v5694
    %6289 = vmatpush1.bf16.msra.mxu0 %v5693
    %6290 = vmatprep.subr.bf16.mxu0 %v5698
    %6291 = vmatpush1.bf16.msra.mxu0 %v5697
    %6292 = vmatprep.subr.bf16.mxu0 %v5702
    %6293 = vmatpush1.bf16.msra.mxu0 %v5701
    %6294 = vmatprep.subr.bf16.mxu0 %v5706
    %6295 = vmatpush1.bf16.msra.mxu0 %v5705
    %6296 = vmatprep.subr.bf16.mxu0 %v5710
    %6297 = vmatpush1.bf16.msra.mxu0 %v5709
    %6298 = vmatprep.subr.bf16.mxu0 %v5714
    %6299 = vmatpush1.bf16.msra.mxu0 %v5713
    %6300 = vmatprep.subr.bf16.mxu0 %v5718
    %6301 = vmatpush1.bf16.msra.mxu0 %v5717
    %6302 = vmatprep.subr.bf16.mxu0 %v5722
    %6303 = vmatpush1.bf16.msra.mxu0 %v5721
    %6304 = vmatprep.subr.bf16.mxu0 %v5726
    %6305 = vmatpush1.bf16.msra.mxu0 %v5725
    %6306 = vmatprep.subr.bf16.mxu0 %v5730
    %6307 = vmatpush1.bf16.msra.mxu0 %v5729
    %6308 = vmatprep.subr.bf16.mxu0 %v5734
    %6309 = vmatpush1.bf16.msra.mxu0 %v5733
    %6310 = vmatprep.mubr.bf16.mxu0 %v4432
    %6311 = vmatmul.mubr.bf16.gmra.mrb[0].mxu0 %v4431
    %v6312 = vpop.f32.mrb[0].mxu0
    %v6313 = vadd.f32 %v6272, %v6312
    %v6314 = vpop.f32.mrb[0].mxu0
    %v6315 = vadd.f32 %v6274, %v6314
    %v6316 = vpop.f32.mrb[0].mxu0
    %v6317 = vpop.f32.mrb[0].mxu0
    %6318 = vdwg.mxu0
    %v6319 = vmax.f32 %v6149, 0.0
    %v6320 = vmax.f32 %v6151, 0.0
    %v6321 = vmax.f32 %v6313, 0.0
    %v6322 = vmax.f32 %v6315, 0.0
    %v6323 = vpack.c.bf16 %v6319, %v6319
    %v6324 = vpack.c.bf16 %v6320, %v6320
    %v6325 = vpack.c.bf16 %v6321, %v6321
    %v6326 = vpack.c.bf16 %v6322, %v6322
    %v6327 = vld [vmem:[%s7] sm:$0xff]
    %v6328 = vld [vmem:[%s7 + $0x8] sm:$0xff]
    %v6329 = vld [vmem:[%s7 + $0x10] sm:$0xff]
    %v6330 = vld [vmem:[%s7 + $0x18] sm:$0xff]
    %v6331 = vld [vmem:[%s7 + $0x20] sm:$0xff]
    %v6332 = vld [vmem:[%s7 + $0x28] sm:$0xff]
    %v6333 = vld [vmem:[%s7 + $0x30] sm:$0xff]
    %v6334 = vld [vmem:[%s7 + $0x38] sm:$0xff]
    %v6335 = vld [vmem:[%s7 + $0x40] sm:$0xff]
    %v6336 = vld [vmem:[%s7 + $0x48] sm:$0xff]
    %v6337 = vld [vmem:[%s7 + $0x50] sm:$0xff]
    %v6338 = vld [vmem:[%s7 + $0x58] sm:$0xff]
    %v6339 = vld [vmem:[%s7 + $0x60] sm:$0xff]
    %v6340 = vld [vmem:[%s7 + $0x68] sm:$0xff]
    %v6341 = vld [vmem:[%s7 + $0x70] sm:$0xff]
    %v6342 = vld [vmem:[%s7 + $0x78] sm:$0xff]
    %v6343 = vld [vmem:[%s7 + $0x80] sm:$0xff]
    %v6344 = vld [vmem:[%s7 + $0x88] sm:$0xff]
    %v6345 = vld [vmem:[%s7 + $0x90] sm:$0xff]
    %v6346 = vld [vmem:[%s7 + $0x98] sm:$0xff]
    %v6347 = vld [vmem:[%s7 + $0xa0] sm:$0xff]
    %v6348 = vld [vmem:[%s7 + $0xa8] sm:$0xff]
    %v6349 = vld [vmem:[%s7 + $0xb0] sm:$0xff]
    %v6350 = vld [vmem:[%s7 + $0xb8] sm:$0xff]
    %v6351 = vld [vmem:[%s7 + $0xc0] sm:$0xff]
    %v6352 = vld [vmem:[%s7 + $0xc8] sm:$0xff]
    %v6353 = vld [vmem:[%s7 + $0xd0] sm:$0xff]
    %v6354 = vld [vmem:[%s7 + $0xd8] sm:$0xff]
    %v6355 = vld [vmem:[%s7 + $0xe0] sm:$0xff]
    %v6356 = vld [vmem:[%s7 + $0xe8] sm:$0xff]
    %v6357 = vld [vmem:[%s7 + $0xf0] sm:$0xff]
    %v6358 = vld [vmem:[%s7 + $0xf8] sm:$0xff]
    %v6359 = vld [vmem:[%s7 + $0x100] sm:$0xff]
    %v6360 = vld [vmem:[%s7 + $0x108] sm:$0xff]
    %v6361 = vld [vmem:[%s7 + $0x110] sm:$0xff]
    %v6362 = vld [vmem:[%s7 + $0x118] sm:$0xff]
    %v6363 = vld [vmem:[%s7 + $0x120] sm:$0xff]
    %v6364 = vld [vmem:[%s7 + $0x128] sm:$0xff]
    %v6365 = vld [vmem:[%s7 + $0x130] sm:$0xff]
    %v6366 = vld [vmem:[%s7 + $0x138] sm:$0xff]
    %v6367 = vld [vmem:[%s7 + $0x140] sm:$0xff]
    %v6368 = vld [vmem:[%s7 + $0x148] sm:$0xff]
    %v6369 = vld [vmem:[%s7 + $0x150] sm:$0xff]
    %v6370 = vld [vmem:[%s7 + $0x158] sm:$0xff]
    %v6371 = vld [vmem:[%s7 + $0x160] sm:$0xff]
    %v6372 = vld [vmem:[%s7 + $0x168] sm:$0xff]
    %v6373 = vld [vmem:[%s7 + $0x170] sm:$0xff]
    %v6374 = vld [vmem:[%s7 + $0x178] sm:$0xff]
    %v6375 = vld [vmem:[%s7 + $0x180] sm:$0xff]
    %v6376 = vld [vmem:[%s7 + $0x188] sm:$0xff]
    %v6377 = vld [vmem:[%s7 + $0x190] sm:$0xff]
    %v6378 = vld [vmem:[%s7 + $0x198] sm:$0xff]
    %v6379 = vld [vmem:[%s7 + $0x1a0] sm:$0xff]
    %v6380 = vld [vmem:[%s7 + $0x1a8] sm:$0xff]
    %v6381 = vld [vmem:[%s7 + $0x1b0] sm:$0xff]
    %v6382 = vld [vmem:[%s7 + $0x1b8] sm:$0xff]
    %v6383 = vld [vmem:[%s7 + $0x1c0] sm:$0xff]
    %v6384 = vld [vmem:[%s7 + $0x1c8] sm:$0xff]
    %v6385 = vld [vmem:[%s7 + $0x1d0] sm:$0xff]
    %v6386 = vld [vmem:[%s7 + $0x1d8] sm:$0xff]
    %v6387 = vld [vmem:[%s7 + $0x1e0] sm:$0xff]
    %v6388 = vld [vmem:[%s7 + $0x1e8] sm:$0xff]
    %v6389 = vld [vmem:[%s7 + $0x1f0] sm:$0xff]
    %v6390 = vld [vmem:[%s7 + $0x1f8] sm:$0xff]
    %v6391 = vld [vmem:[%s8] sm:$0x3]
    %v6393 = vlaneseq
    %v6394 = vshrl.u32 %v6393, 7
    %v6395 = vsub.s32 0, %v6394
    %v6396 = vrot.slane %v6391, %v6395
    %v6397 = vlaneseq
    %v6398 = vshrl.u32 %v6397, 7
    %v6399 = vsub.s32 1, %v6398
    %v6400 = vrot.slane %v6391, %v6399
    %v6467 = vunpack.c.l.b16 %v6327
    %v6468 = vunpack.c.h.b16 %v6327
    %v6469 = vunpack.c.l.b16 %v6328
    %v6470 = vunpack.c.h.b16 %v6328
    %v6471 = vunpack.c.l.b16 %v6329
    %v6472 = vunpack.c.h.b16 %v6329
    %v6473 = vunpack.c.l.b16 %v6330
    %v6474 = vunpack.c.h.b16 %v6330
    %v6475 = vunpack.c.l.b16 %v6331
    %v6476 = vunpack.c.h.b16 %v6331
    %v6477 = vunpack.c.l.b16 %v6332
    %v6478 = vunpack.c.h.b16 %v6332
    %v6479 = vunpack.c.l.b16 %v6333
    %v6480 = vunpack.c.h.b16 %v6333
    %v6481 = vunpack.c.l.b16 %v6334
    %v6482 = vunpack.c.h.b16 %v6334
    %v6483 = vunpack.c.l.b16 %v6335
    %v6484 = vunpack.c.h.b16 %v6335
    %v6485 = vunpack.c.l.b16 %v6336
    %v6486 = vunpack.c.h.b16 %v6336
    %v6487 = vunpack.c.l.b16 %v6337
    %v6488 = vunpack.c.h.b16 %v6337
    %v6489 = vunpack.c.l.b16 %v6338
    %v6490 = vunpack.c.h.b16 %v6338
    %v6491 = vunpack.c.l.b16 %v6339
    %v6492 = vunpack.c.h.b16 %v6339
    %v6493 = vunpack.c.l.b16 %v6340
    %v6494 = vunpack.c.h.b16 %v6340
    %v6495 = vunpack.c.l.b16 %v6341
    %v6496 = vunpack.c.h.b16 %v6341
    %v6497 = vunpack.c.l.b16 %v6342
    %v6498 = vunpack.c.h.b16 %v6342
    %v6499 = vunpack.c.l.b16 %v6343
    %v6500 = vunpack.c.h.b16 %v6343
    %v6501 = vunpack.c.l.b16 %v6344
    %v6502 = vunpack.c.h.b16 %v6344
    %v6503 = vunpack.c.l.b16 %v6345
    %v6504 = vunpack.c.h.b16 %v6345
    %v6505 = vunpack.c.l.b16 %v6346
    %v6506 = vunpack.c.h.b16 %v6346
    %v6507 = vunpack.c.l.b16 %v6347
    %v6508 = vunpack.c.h.b16 %v6347
    %v6509 = vunpack.c.l.b16 %v6348
    %v6510 = vunpack.c.h.b16 %v6348
    %v6511 = vunpack.c.l.b16 %v6349
    %v6512 = vunpack.c.h.b16 %v6349
    %v6513 = vunpack.c.l.b16 %v6350
    %v6514 = vunpack.c.h.b16 %v6350
    %v6515 = vunpack.c.l.b16 %v6351
    %v6516 = vunpack.c.h.b16 %v6351
    %v6517 = vunpack.c.l.b16 %v6352
    %v6518 = vunpack.c.h.b16 %v6352
    %v6519 = vunpack.c.l.b16 %v6353
    %v6520 = vunpack.c.h.b16 %v6353
    %v6521 = vunpack.c.l.b16 %v6354
    %v6522 = vunpack.c.h.b16 %v6354
    %v6523 = vunpack.c.l.b16 %v6355
    %v6524 = vunpack.c.h.b16 %v6355
    %v6525 = vunpack.c.l.b16 %v6356
    %v6526 = vunpack.c.h.b16 %v6356
    %v6527 = vunpack.c.l.b16 %v6357
    %v6528 = vunpack.c.h.b16 %v6357
    %v6529 = vunpack.c.l.b16 %v6358
    %v6530 = vunpack.c.h.b16 %v6358
    %v6531 = vunpack.c.l.b16 %v6359
    %v6532 = vunpack.c.h.b16 %v6359
    %v6533 = vunpack.c.l.b16 %v6360
    %v6534 = vunpack.c.h.b16 %v6360
    %v6535 = vunpack.c.l.b16 %v6361
    %v6536 = vunpack.c.h.b16 %v6361
    %v6537 = vunpack.c.l.b16 %v6362
    %v6538 = vunpack.c.h.b16 %v6362
    %v6539 = vunpack.c.l.b16 %v6363
    %v6540 = vunpack.c.h.b16 %v6363
    %v6541 = vunpack.c.l.b16 %v6364
    %v6542 = vunpack.c.h.b16 %v6364
    %v6543 = vunpack.c.l.b16 %v6365
    %v6544 = vunpack.c.h.b16 %v6365
    %v6545 = vunpack.c.l.b16 %v6366
    %v6546 = vunpack.c.h.b16 %v6366
    %v6547 = vunpack.c.l.b16 %v6367
    %v6548 = vunpack.c.h.b16 %v6367
    %v6549 = vunpack.c.l.b16 %v6368
    %v6550 = vunpack.c.h.b16 %v6368
    %v6551 = vunpack.c.l.b16 %v6369
    %v6552 = vunpack.c.h.b16 %v6369
    %v6553 = vunpack.c.l.b16 %v6370
    %v6554 = vunpack.c.h.b16 %v6370
    %v6555 = vunpack.c.l.b16 %v6371
    %v6556 = vunpack.c.h.b16 %v6371
    %v6557 = vunpack.c.l.b16 %v6372
    %v6558 = vunpack.c.h.b16 %v6372
    %v6559 = vunpack.c.l.b16 %v6373
    %v6560 = vunpack.c.h.b16 %v6373
    %v6561 = vunpack.c.l.b16 %v6374
    %v6562 = vunpack.c.h.b16 %v6374
    %v6563 = vunpack.c.l.b16 %v6375
    %v6564 = vunpack.c.h.b16 %v6375
    %v6565 = vunpack.c.l.b16 %v6376
    %v6566 = vunpack.c.h.b16 %v6376
    %v6567 = vunpack.c.l.b16 %v6377
    %v6568 = vunpack.c.h.b16 %v6377
    %v6569 = vunpack.c.l.b16 %v6378
    %v6570 = vunpack.c.h.b16 %v6378
    %v6571 = vunpack.c.l.b16 %v6379
    %v6572 = vunpack.c.h.b16 %v6379
    %v6573 = vunpack.c.l.b16 %v6380
    %v6574 = vunpack.c.h.b16 %v6380
    %v6575 = vunpack.c.l.b16 %v6381
    %v6576 = vunpack.c.h.b16 %v6381
    %v6577 = vunpack.c.l.b16 %v6382
    %v6578 = vunpack.c.h.b16 %v6382
    %v6579 = vunpack.c.l.b16 %v6383
    %v6580 = vunpack.c.h.b16 %v6383
    %v6581 = vunpack.c.l.b16 %v6384
    %v6582 = vunpack.c.h.b16 %v6384
    %v6583 = vunpack.c.l.b16 %v6385
    %v6584 = vunpack.c.h.b16 %v6385
    %v6585 = vunpack.c.l.b16 %v6386
    %v6586 = vunpack.c.h.b16 %v6386
    %v6587 = vunpack.c.l.b16 %v6387
    %v6588 = vunpack.c.h.b16 %v6387
    %v6589 = vunpack.c.l.b16 %v6388
    %v6590 = vunpack.c.h.b16 %v6388
    %v6591 = vunpack.c.l.b16 %v6389
    %v6592 = vunpack.c.h.b16 %v6389
    %v6593 = vunpack.c.l.b16 %v6390
    %v6594 = vunpack.c.h.b16 %v6390
    %v6595 = vpack.c.b16 %v6469, %v6467
    %v6596 = vpack.c.b16 %v6470, %v6468
    %v6597 = vpack.c.b16 %v6473, %v6471
    %v6598 = vpack.c.b16 %v6474, %v6472
    %v6599 = vpack.c.b16 %v6477, %v6475
    %v6600 = vpack.c.b16 %v6478, %v6476
    %v6601 = vpack.c.b16 %v6481, %v6479
    %v6602 = vpack.c.b16 %v6482, %v6480
    %v6603 = vpack.c.b16 %v6485, %v6483
    %v6604 = vpack.c.b16 %v6486, %v6484
    %v6605 = vpack.c.b16 %v6489, %v6487
    %v6606 = vpack.c.b16 %v6490, %v6488
    %v6607 = vpack.c.b16 %v6493, %v6491
    %v6608 = vpack.c.b16 %v6494, %v6492
    %v6609 = vpack.c.b16 %v6497, %v6495
    %v6610 = vpack.c.b16 %v6498, %v6496
    %v6611 = vpack.c.b16 %v6501, %v6499
    %v6612 = vpack.c.b16 %v6502, %v6500
    %v6613 = vpack.c.b16 %v6505, %v6503
    %v6614 = vpack.c.b16 %v6506, %v6504
    %v6615 = vpack.c.b16 %v6509, %v6507
    %v6616 = vpack.c.b16 %v6510, %v6508
    %v6617 = vpack.c.b16 %v6513, %v6511
    %v6618 = vpack.c.b16 %v6514, %v6512
    %v6619 = vpack.c.b16 %v6517, %v6515
    %v6620 = vpack.c.b16 %v6518, %v6516
    %v6621 = vpack.c.b16 %v6521, %v6519
    %v6622 = vpack.c.b16 %v6522, %v6520
    %v6623 = vpack.c.b16 %v6525, %v6523
    %v6624 = vpack.c.b16 %v6526, %v6524
    %v6625 = vpack.c.b16 %v6529, %v6527
    %v6626 = vpack.c.b16 %v6530, %v6528
    %v6627 = vpack.c.b16 %v6533, %v6531
    %v6628 = vpack.c.b16 %v6534, %v6532
    %v6629 = vpack.c.b16 %v6537, %v6535
    %v6630 = vpack.c.b16 %v6538, %v6536
    %v6631 = vpack.c.b16 %v6541, %v6539
    %v6632 = vpack.c.b16 %v6542, %v6540
    %v6633 = vpack.c.b16 %v6545, %v6543
    %v6634 = vpack.c.b16 %v6546, %v6544
    %v6635 = vpack.c.b16 %v6549, %v6547
    %v6636 = vpack.c.b16 %v6550, %v6548
    %v6637 = vpack.c.b16 %v6553, %v6551
    %v6638 = vpack.c.b16 %v6554, %v6552
    %v6639 = vpack.c.b16 %v6557, %v6555
    %v6640 = vpack.c.b16 %v6558, %v6556
    %v6641 = vpack.c.b16 %v6561, %v6559
    %v6642 = vpack.c.b16 %v6562, %v6560
    %v6643 = vpack.c.b16 %v6565, %v6563
    %v6644 = vpack.c.b16 %v6566, %v6564
    %v6645 = vpack.c.b16 %v6569, %v6567
    %v6646 = vpack.c.b16 %v6570, %v6568
    %v6647 = vpack.c.b16 %v6573, %v6571
    %v6648 = vpack.c.b16 %v6574, %v6572
    %v6649 = vpack.c.b16 %v6577, %v6575
    %v6650 = vpack.c.b16 %v6578, %v6576
    %v6651 = vpack.c.b16 %v6581, %v6579
    %v6652 = vpack.c.b16 %v6582, %v6580
    %v6653 = vpack.c.b16 %v6585, %v6583
    %v6654 = vpack.c.b16 %v6586, %v6584
    %v6655 = vpack.c.b16 %v6589, %v6587
    %v6656 = vpack.c.b16 %v6590, %v6588
    %v6657 = vpack.c.b16 %v6593, %v6591
    %v6658 = vpack.c.b16 %v6594, %v6592
    %6723 = vmatprep.subr.bf16.mxu0 %v6596
    %6724 = vmatpush1.bf16.msra.mxu0 %v6595
    %6725 = vmatprep.subr.bf16.mxu0 %v6598
    %6726 = vmatpush1.bf16.msra.mxu0 %v6597
    %6727 = vmatprep.subr.bf16.mxu0 %v6600
    %6728 = vmatpush1.bf16.msra.mxu0 %v6599
    %6729 = vmatprep.subr.bf16.mxu0 %v6602
    %6730 = vmatpush1.bf16.msra.mxu0 %v6601
    %6731 = vmatprep.subr.bf16.mxu0 %v6604
    %6732 = vmatpush1.bf16.msra.mxu0 %v6603
    %6733 = vmatprep.subr.bf16.mxu0 %v6606
    %6734 = vmatpush1.bf16.msra.mxu0 %v6605
    %6735 = vmatprep.subr.bf16.mxu0 %v6608
    %6736 = vmatpush1.bf16.msra.mxu0 %v6607
    %6737 = vmatprep.subr.bf16.mxu0 %v6610
    %6738 = vmatpush1.bf16.msra.mxu0 %v6609
    %6739 = vmatprep.subr.bf16.mxu0 %v6612
    %6740 = vmatpush1.bf16.msra.mxu0 %v6611
    %6741 = vmatprep.subr.bf16.mxu0 %v6614
    %6742 = vmatpush1.bf16.msra.mxu0 %v6613
    %6743 = vmatprep.subr.bf16.mxu0 %v6616
    %6744 = vmatpush1.bf16.msra.mxu0 %v6615
    %6745 = vmatprep.subr.bf16.mxu0 %v6618
    %6746 = vmatpush1.bf16.msra.mxu0 %v6617
    %6747 = vmatprep.subr.bf16.mxu0 %v6620
    %6748 = vmatpush1.bf16.msra.mxu0 %v6619
    %6749 = vmatprep.subr.bf16.mxu0 %v6622
    %6750 = vmatpush1.bf16.msra.mxu0 %v6621
    %6751 = vmatprep.subr.bf16.mxu0 %v6624
    %6752 = vmatpush1.bf16.msra.mxu0 %v6623
    %6753 = vmatprep.subr.bf16.mxu0 %v6626
    %6754 = vmatpush1.bf16.msra.mxu0 %v6625
    %6755 = vmatprep.mubr.bf16.mxu0 %v6324
    %6756 = vmatmul.mubr.bf16.gmra.mrb[0].mxu0 %v6323
    %v6757 = vpop.f32.mrb[0].mxu0
    %v6758 = vadd.f32 %v6396, %v6757
    %v6759 = vpop.f32.mrb[0].mxu0
    %v6760 = vadd.f32 %v6400, %v6759
    %v6761 = vpop.f32.mrb[0].mxu0
    %v6762 = vpop.f32.mrb[0].mxu0
    %6763 = vdwg.mxu0
    %6764 = vmatprep.subr.bf16.mxu0 %v6628
    %6765 = vmatpush1.bf16.msra.mxu0 %v6627
    %6766 = vmatprep.subr.bf16.mxu0 %v6630
    %6767 = vmatpush1.bf16.msra.mxu0 %v6629
    %6768 = vmatprep.subr.bf16.mxu0 %v6632
    %6769 = vmatpush1.bf16.msra.mxu0 %v6631
    %6770 = vmatprep.subr.bf16.mxu0 %v6634
    %6771 = vmatpush1.bf16.msra.mxu0 %v6633
    %6772 = vmatprep.subr.bf16.mxu0 %v6636
    %6773 = vmatpush1.bf16.msra.mxu0 %v6635
    %6774 = vmatprep.subr.bf16.mxu0 %v6638
    %6775 = vmatpush1.bf16.msra.mxu0 %v6637
    %6776 = vmatprep.subr.bf16.mxu0 %v6640
    %6777 = vmatpush1.bf16.msra.mxu0 %v6639
    %6778 = vmatprep.subr.bf16.mxu0 %v6642
    %6779 = vmatpush1.bf16.msra.mxu0 %v6641
    %6780 = vmatprep.subr.bf16.mxu0 %v6644
    %6781 = vmatpush1.bf16.msra.mxu0 %v6643
    %6782 = vmatprep.subr.bf16.mxu0 %v6646
    %6783 = vmatpush1.bf16.msra.mxu0 %v6645
    %6784 = vmatprep.subr.bf16.mxu0 %v6648
    %6785 = vmatpush1.bf16.msra.mxu0 %v6647
    %6786 = vmatprep.subr.bf16.mxu0 %v6650
    %6787 = vmatpush1.bf16.msra.mxu0 %v6649
    %6788 = vmatprep.subr.bf16.mxu0 %v6652
    %6789 = vmatpush1.bf16.msra.mxu0 %v6651
    %6790 = vmatprep.subr.bf16.mxu0 %v6654
    %6791 = vmatpush1.bf16.msra.mxu0 %v6653
    %6792 = vmatprep.subr.bf16.mxu0 %v6656
    %6793 = vmatpush1.bf16.msra.mxu0 %v6655
    %6794 = vmatprep.subr.bf16.mxu0 %v6658
    %6795 = vmatpush1.bf16.msra.mxu0 %v6657
    %6796 = vmatprep.mubr.bf16.mxu0 %v6326
    %6797 = vmatmul.mubr.bf16.gmra.mrb[0].mxu0 %v6325
    %v6798 = vpop.f32.mrb[0].mxu0
    %v6799 = vadd.f32 %v6758, %v6798
    %v6800 = vpop.f32.mrb[0].mxu0
    %v6801 = vadd.f32 %v6760, %v6800
    %v6802 = vpop.f32.mrb[0].mxu0
    %v6803 = vpop.f32.mrb[0].mxu0
    %6804 = vdwg.mxu0
    %v6805 = vmax.f32 %v6799, 0.0
    %v6806 = vmax.f32 %v6801, 0.0
    %v6807 = vpack.c.bf16 %v6805, %v6805
    %v6808 = vpack.c.bf16 %v6806, %v6806
    %v6809 = vld [vmem:[%s9] sm:$0xf]
    %v6810 = vld [vmem:[%s9 + $0x4] sm:$0xf]
    %v6811 = vld [vmem:[%s9 + $0x8] sm:$0xf]
    %v6812 = vld [vmem:[%s9 + $0xc] sm:$0xf]
    %v6813 = vld [vmem:[%s9 + $0x10] sm:$0xf]
    %v6814 = vld [vmem:[%s9 + $0x14] sm:$0xf]
    %v6815 = vld [vmem:[%s9 + $0x18] sm:$0xf]
    %v6816 = vld [vmem:[%s9 + $0x1c] sm:$0xf]
    %v6817 = vld [vmem:[%s9 + $0x20] sm:$0xf]
    %v6818 = vld [vmem:[%s9 + $0x24] sm:$0xf]
    %v6819 = vld [vmem:[%s9 + $0x28] sm:$0xf]
    %v6820 = vld [vmem:[%s9 + $0x2c] sm:$0xf]
    %v6821 = vld [vmem:[%s9 + $0x30] sm:$0xf]
    %v6822 = vld [vmem:[%s9 + $0x34] sm:$0xf]
    %v6823 = vld [vmem:[%s9 + $0x38] sm:$0xf]
    %v6824 = vld [vmem:[%s9 + $0x3c] sm:$0xf]
    %v6825 = vld [vmem:[%s9 + $0x40] sm:$0xf]
    %v6826 = vld [vmem:[%s9 + $0x44] sm:$0xf]
    %v6827 = vld [vmem:[%s9 + $0x48] sm:$0xf]
    %v6828 = vld [vmem:[%s9 + $0x4c] sm:$0xf]
    %v6829 = vld [vmem:[%s9 + $0x50] sm:$0xf]
    %v6830 = vld [vmem:[%s9 + $0x54] sm:$0xf]
    %v6831 = vld [vmem:[%s9 + $0x58] sm:$0xf]
    %v6832 = vld [vmem:[%s9 + $0x5c] sm:$0xf]
    %v6833 = vld [vmem:[%s9 + $0x60] sm:$0xf]
    %v6834 = vld [vmem:[%s9 + $0x64] sm:$0xf]
    %v6835 = vld [vmem:[%s9 + $0x68] sm:$0xf]
    %v6836 = vld [vmem:[%s9 + $0x6c] sm:$0xf]
    %v6837 = vld [vmem:[%s9 + $0x70] sm:$0xf]
    %v6838 = vld [vmem:[%s9 + $0x74] sm:$0xf]
    %v6839 = vld [vmem:[%s9 + $0x78] sm:$0xf]
    %v6840 = vld [vmem:[%s9 + $0x7c] sm:$0xf]
    %v6841 = vld [vmem:[%s10] sm:$0x1]
    %v6843 = vlaneseq
    %v6844 = vshrl.u32 %v6843, 7
    %v6845 = vsub.s32 0, %v6844
    %v6846 = vrot.slane %v6841, %v6845
    %v6880 = vunpack.c.l.b16 %v6809
    %v6881 = vunpack.c.l.b16 %v6810
    %v6882 = vunpack.c.l.b16 %v6811
    %v6883 = vunpack.c.l.b16 %v6812
    %v6884 = vunpack.c.l.b16 %v6813
    %v6885 = vunpack.c.l.b16 %v6814
    %v6886 = vunpack.c.l.b16 %v6815
    %v6887 = vunpack.c.l.b16 %v6816
    %v6888 = vunpack.c.l.b16 %v6817
    %v6889 = vunpack.c.l.b16 %v6818
    %v6890 = vunpack.c.l.b16 %v6819
    %v6891 = vunpack.c.l.b16 %v6820
    %v6892 = vunpack.c.l.b16 %v6821
    %v6893 = vunpack.c.l.b16 %v6822
    %v6894 = vunpack.c.l.b16 %v6823
    %v6895 = vunpack.c.l.b16 %v6824
    %v6896 = vunpack.c.l.b16 %v6825
    %v6897 = vunpack.c.l.b16 %v6826
    %v6898 = vunpack.c.l.b16 %v6827
    %v6899 = vunpack.c.l.b16 %v6828
    %v6900 = vunpack.c.l.b16 %v6829
    %v6901 = vunpack.c.l.b16 %v6830
    %v6902 = vunpack.c.l.b16 %v6831
    %v6903 = vunpack.c.l.b16 %v6832
    %v6904 = vunpack.c.l.b16 %v6833
    %v6905 = vunpack.c.l.b16 %v6834
    %v6906 = vunpack.c.l.b16 %v6835
    %v6907 = vunpack.c.l.b16 %v6836
    %v6908 = vunpack.c.l.b16 %v6837
    %v6909 = vunpack.c.l.b16 %v6838
    %v6910 = vunpack.c.l.b16 %v6839
    %v6911 = vunpack.c.l.b16 %v6840
    %v6912 = vpack.c.b16 %v6881, %v6880
    %v6913 = vpack.c.b16 %v6883, %v6882
    %v6914 = vpack.c.b16 %v6885, %v6884
    %v6915 = vpack.c.b16 %v6887, %v6886
    %v6916 = vpack.c.b16 %v6889, %v6888
    %v6917 = vpack.c.b16 %v6891, %v6890
    %v6918 = vpack.c.b16 %v6893, %v6892
    %v6919 = vpack.c.b16 %v6895, %v6894
    %v6920 = vpack.c.b16 %v6897, %v6896
    %v6921 = vpack.c.b16 %v6899, %v6898
    %v6922 = vpack.c.b16 %v6901, %v6900
    %v6923 = vpack.c.b16 %v6903, %v6902
    %v6924 = vpack.c.b16 %v6905, %v6904
    %v6925 = vpack.c.b16 %v6907, %v6906
    %v6926 = vpack.c.b16 %v6909, %v6908
    %v6927 = vpack.c.b16 %v6911, %v6910
    %6944 = vmatprep.subr.bf16.mxu0 0
    %6945 = vmatpush1.bf16.msra.mxu0 %v6912
    %6946 = vmatprep.subr.bf16.mxu0 0
    %6947 = vmatpush1.bf16.msra.mxu0 %v6913
    %6948 = vmatprep.subr.bf16.mxu0 0
    %6949 = vmatpush1.bf16.msra.mxu0 %v6914
    %6950 = vmatprep.subr.bf16.mxu0 0
    %6951 = vmatpush1.bf16.msra.mxu0 %v6915
    %6952 = vmatprep.subr.bf16.mxu0 0
    %6953 = vmatpush1.bf16.msra.mxu0 %v6916
    %6954 = vmatprep.subr.bf16.mxu0 0
    %6955 = vmatpush1.bf16.msra.mxu0 %v6917
    %6956 = vmatprep.subr.bf16.mxu0 0
    %6957 = vmatpush1.bf16.msra.mxu0 %v6918
    %6958 = vmatprep.subr.bf16.mxu0 0
    %6959 = vmatpush1.bf16.msra.mxu0 %v6919
    %6960 = vmatprep.subr.bf16.mxu0 0
    %6961 = vmatpush1.bf16.msra.mxu0 %v6920
    %6962 = vmatprep.subr.bf16.mxu0 0
    %6963 = vmatpush1.bf16.msra.mxu0 %v6921
    %6964 = vmatprep.subr.bf16.mxu0 0
    %6965 = vmatpush1.bf16.msra.mxu0 %v6922
    %6966 = vmatprep.subr.bf16.mxu0 0
    %6967 = vmatpush1.bf16.msra.mxu0 %v6923
    %6968 = vmatprep.subr.bf16.mxu0 0
    %6969 = vmatpush1.bf16.msra.mxu0 %v6924
    %6970 = vmatprep.subr.bf16.mxu0 0
    %6971 = vmatpush1.bf16.msra.mxu0 %v6925
    %6972 = vmatprep.subr.bf16.mxu0 0
    %6973 = vmatpush1.bf16.msra.mxu0 %v6926
    %6974 = vmatprep.subr.bf16.mxu0 0
    %6975 = vmatpush1.bf16.msra.mxu0 %v6927
    %6976 = vmatprep.mubr.bf16.mxu0 %v6808
    %6977 = vmatmul.mubr.bf16.gmra.mrb[0].mxu0 %v6807
    %v6978 = vpop.f32.mrb[0].mxu0
    %v6979 = vadd.f32 %v6846, %v6978
    %v6980 = vpop.f32.mrb[0].mxu0
    %v6981 = vpop.f32.mrb[0].mxu0
    %v6982 = vpop.f32.mrb[0].mxu0
    %6983 = vdwg.mxu0
    %v6992 = vcombine.low %v510, %v512
    %v6993 = vcombine.low %v551, %v553
    %v6995 = vunpack.c.l.s4 1983009808
    %v6996 = vunpack.c.0.s8 %v6995
    %v6997 = vlaneseq
    %v6998 = vshrl.u32 %v6997, 7
    %v6999 = vsub.s32 %v6996, %v6998
    %v7000 = vrot.slane %v6992, %v6999
    %v7002 = vunpack.c.l.s4 1983009808
    %v7003 = vunpack.c.0.s8 %v7002
    %v7004 = vlaneseq
    %v7005 = vshrl.u32 %v7004, 7
    %v7006 = vsub.s32 %v7003, %v7005
    %v7007 = vrot.slane %v6993, %v7006
    %v7008 = vcombine.low %v7000, %v7007
    %v7009 = vcombine.low %v592, %v594
    %v7010 = vcombine.low %v633, %v635
    %v7012 = vunpack.c.l.s4 1983009808
    %v7013 = vunpack.c.0.s8 %v7012
    %v7014 = vlaneseq
    %v7015 = vshrl.u32 %v7014, 7
    %v7016 = vsub.s32 %v7013, %v7015
    %v7017 = vrot.slane %v7009, %v7016
    %v7019 = vunpack.c.l.s4 1983009808
    %v7020 = vunpack.c.0.s8 %v7019
    %v7021 = vlaneseq
    %v7022 = vshrl.u32 %v7021, 7
    %v7023 = vsub.s32 %v7020, %v7022
    %v7024 = vrot.slane %v7010, %v7023
    %v7025 = vcombine.low %v7017, %v7024
    %7028 = vst [vmem:[#allocation2] sm:$0xff] %v7008
    %7029 = vst [vmem:[#allocation2 + $0x8] sm:$0xff] %v7025
    %v7038 = vcombine.low %v4417, %v4418
    %v7039 = vcombine.low %v4419, %v4420
    %v7041 = vunpack.c.l.s4 1983009808
    %v7042 = vunpack.c.0.s8 %v7041
    %v7043 = vlaneseq
    %v7044 = vshrl.u32 %v7043, 7
    %v7045 = vsub.s32 %v7042, %v7044
    %v7046 = vrot.slane %v7038, %v7045
    %v7048 = vunpack.c.l.s4 1983009808
    %v7049 = vunpack.c.0.s8 %v7048
    %v7050 = vlaneseq
    %v7051 = vshrl.u32 %v7050, 7
    %v7052 = vsub.s32 %v7049, %v7051
    %v7053 = vrot.slane %v7039, %v7052
    %v7054 = vcombine.low %v7046, %v7053
    %v7055 = vcombine.low %v4421, %v4422
    %v7056 = vcombine.low %v4423, %v4424
    %v7058 = vunpack.c.l.s4 1983009808
    %v7059 = vunpack.c.0.s8 %v7058
    %v7060 = vlaneseq
    %v7061 = vshrl.u32 %v7060, 7
    %v7062 = vsub.s32 %v7059, %v7061
    %v7063 = vrot.slane %v7055, %v7062
    %v7065 = vunpack.c.l.s4 1983009808
    %v7066 = vunpack.c.0.s8 %v7065
    %v7067 = vlaneseq
    %v7068 = vshrl.u32 %v7067, 7
    %v7069 = vsub.s32 %v7066, %v7068
    %v7070 = vrot.slane %v7056, %v7069
    %v7071 = vcombine.low %v7063, %v7070
    %7074 = vst [vmem:[#allocation4] sm:$0xff] %v7054
    %7075 = vst [vmem:[#allocation4 + $0x8] sm:$0xff] %v7071
    %v7080 = vcombine.low %v6319, %v6320
    %v7081 = vcombine.low %v6321, %v6322
    %v7083 = vunpack.c.l.s4 1983009808
    %v7084 = vunpack.c.0.s8 %v7083
    %v7085 = vlaneseq
    %v7086 = vshrl.u32 %v7085, 7
    %v7087 = vsub.s32 %v7084, %v7086
    %v7088 = vrot.slane %v7080, %v7087
    %v7090 = vunpack.c.l.s4 1983009808
    %v7091 = vunpack.c.0.s8 %v7090
    %v7092 = vlaneseq
    %v7093 = vshrl.u32 %v7092, 7
    %v7094 = vsub.s32 %v7091, %v7093
    %v7095 = vrot.slane %v7081, %v7094
    %v7096 = vcombine.low %v7088, %v7095
    %7098 = vst [vmem:[#allocation6] sm:$0xff] %v7096
    %v7101 = vcombine.low %v6805, %v6806
    %v7103 = vunpack.c.l.s4 1983009808
    %v7104 = vunpack.c.0.s8 %v7103
    %v7105 = vlaneseq
    %v7106 = vshrl.u32 %v7105, 7
    %v7107 = vsub.s32 %v7104, %v7106
    %v7108 = vrot.slane %v7101, %v7107
    %7110 = vst [vmem:[#allocation7] sm:$0xf] %v7108
    %7111 = vst [vmem:[#allocation9] sm:$0x3] %v6979
    // Predicated region
    $region46: #{custom_inception_v3_forward.3} parent=1 // pred_check
      _
    $region47: #{custom_inception_v3_forward.3} parent=1 // pred_check_branch
      %7113 = sbr.rel (0) target = $region49
    $region48: #{custom_inception_v3_forward.3} parent=1 // pred_region
      %s7115 = ssub.s32 256, 256
      %7116 = vsyncadd [#allocation3], %s7115
      %s7118 = sshll.u32 [#allocation2], 4
      %s7119 = int_to_ptr.vmem [resolvable:$true] %s7118
      %7121 = dma.vmem_to_hbm [thread:$0]  %s7119, 256, %s11, [#allocation3]
    $region49: #{custom_inception_v3_forward.3} parent=1 // pred_fallthru
      _
    // Predicated region
    $region50: #{custom_inception_v3_forward.3} parent=1 // pred_check
      _
    $region51: #{custom_inception_v3_forward.3} parent=1 // pred_check_branch
      %7123 = sbr.rel (0) target = $region53
    $region52: #{custom_inception_v3_forward.3} parent=1 // pred_region
      %s7125 = ssub.s32 256, 256
      %7126 = vsyncadd [#allocation5], %s7125
      %s7128 = sshll.u32 [#allocation4], 4
      %s7129 = int_to_ptr.vmem [resolvable:$true] %s7128
      %7131 = dma.vmem_to_hbm [thread:$0]  %s7129, 256, %s12, [#allocation5]
    $region53: #{custom_inception_v3_forward.3} parent=1 // pred_fallthru
      _
    // Predicated region
    $region54: #{custom_inception_v3_forward.3} parent=1 // pred_check
      _
    $region55: #{custom_inception_v3_forward.3} parent=1 // pred_check_branch
      %7133 = sbr.rel (0) target = $region57
    $region56: #{custom_inception_v3_forward.3} parent=1 // pred_region
      %s7135 = ssub.s32 128, 128
      %7136 = vsyncadd [#allocation5], %s7135
      %s7138 = sshll.u32 [#allocation6], 4
      %s7139 = int_to_ptr.vmem [resolvable:$true] %s7138
      %7141 = dma.vmem_to_hbm [thread:$0]  %s7139, 128, %s13, [#allocation5]
    $region57: #{custom_inception_v3_forward.3} parent=1 // pred_fallthru
      _
    // Predicated region
    $region58: #{custom_inception_v3_forward.3} parent=1 // pred_check
      _
    $region59: #{custom_inception_v3_forward.3} parent=1 // pred_check_branch
      %7143 = sbr.rel (0) target = $region61
    $region60: #{custom_inception_v3_forward.3} parent=1 // pred_region
      %s7145 = ssub.s32 64, 64
      %7146 = vsyncadd [#allocation8], %s7145
      %s7148 = sshll.u32 [#allocation7], 4
      %s7149 = int_to_ptr.vmem [resolvable:$true] %s7148
      %7151 = dma.vmem_to_hbm [thread:$0]  %s7149, 64, %s14, [#allocation8]
    $region61: #{custom_inception_v3_forward.3} parent=1 // pred_fallthru
      _
    // Predicated region
    $region62: #{custom_inception_v3_forward.3} parent=1 // pred_check
      _
    $region63: #{custom_inception_v3_forward.3} parent=1 // pred_check_branch
      %7153 = sbr.rel (0) target = $region65
    $region64: #{custom_inception_v3_forward.3} parent=1 // pred_region
      %s7155 = ssub.s32 32, 32
      %7156 = vsyncadd [#allocation8], %s7155
      %s7158 = sshll.u32 [#allocation9], 4
      %s7159 = int_to_ptr.vmem [resolvable:$true] %s7158
      %7161 = dma.vmem_to_hbm [thread:$0]  %s7159, 32, %s15, [#allocation8]
    $region65: #{custom_inception_v3_forward.3} parent=1 // pred_fallthru
      _
    // Predicated region
    $region66: #{custom_inception_v3_forward.3} parent=1 // pred_check
      _
    $region67: #{custom_inception_v3_forward.3} parent=1 // pred_check_branch
      %7163 = sbr.rel (0) target = $region69
    $region68: #{custom_inception_v3_forward.3} parent=1 // pred_region
      %7164 = dma.done [#allocation3], 256
    $region69: #{custom_inception_v3_forward.3} parent=1 // pred_fallthru
      _
    // Predicated region
    $region70: #{custom_inception_v3_forward.3} parent=1 // pred_check
      _
    $region71: #{custom_inception_v3_forward.3} parent=1 // pred_check_branch
      %7166 = sbr.rel (0) target = $region73
    $region72: #{custom_inception_v3_forward.3} parent=1 // pred_region
      %7167 = dma.done [#allocation5], 256
    $region73: #{custom_inception_v3_forward.3} parent=1 // pred_fallthru
      _
    // Predicated region
    $region74: #{custom_inception_v3_forward.3} parent=1 // pred_check
      _
    $region75: #{custom_inception_v3_forward.3} parent=1 // pred_check_branch
      %7169 = sbr.rel (0) target = $region77
    $region76: #{custom_inception_v3_forward.3} parent=1 // pred_region
      %7170 = dma.done [#allocation5], 128
    $region77: #{custom_inception_v3_forward.3} parent=1 // pred_fallthru
      _
    // Predicated region
    $region78: #{custom_inception_v3_forward.3} parent=1 // pred_check
      _
    $region79: #{custom_inception_v3_forward.3} parent=1 // pred_check_branch
      %7172 = sbr.rel (0) target = $region81
    $region80: #{custom_inception_v3_forward.3} parent=1 // pred_region
      %7173 = dma.done [#allocation8], 64
    $region81: #{custom_inception_v3_forward.3} parent=1 // pred_fallthru
      _
    // Predicated region
    $region82: #{custom_inception_v3_forward.3} parent=1 // pred_check
      _
    $region83: #{custom_inception_v3_forward.3} parent=1 // pred_check_branch
      %7175 = sbr.rel (0) target = $region85
    $region84: #{custom_inception_v3_forward.3} parent=1 // pred_region
      %7176 = dma.done [#allocation8], 32
    $region85: #{custom_inception_v3_forward.3} parent=1 // pred_fallthru
      _
    %7177 = vsyncpa [#allocation3], 1
    %7178 = vsyncpa [#allocation5], 1
    %7179 = vsyncpa [#allocation8], 1

</llo_original>
